<compile_context>
chip_gen: v6e
topology: v6e:2x2x1
jax: 0.10.0
libtpu: 0.0.40
codegen_flags: <defaults>
</compile_context>

<pallas_src>
import numpy as np
import jax
import jax.numpy as jnp
from jax import lax
from jax.experimental import pallas as pl
from jax.experimental.pallas import tpu as pltpu

BN_EPS = 1e-5


# --------------------------------------------------------------------------
# Host-side operator / mask construction (tiny, batch-free)
# --------------------------------------------------------------------------
def _bilinear_matrix(out_size, in_size):
    """Row-interpolation matrix for bilinear upsampling, align_corners=True."""
    M = np.zeros((out_size, in_size), np.float32)
    if out_size == 1 or in_size == 1:
        M[:, 0] = 1.0
        return M
    scale = (in_size - 1) / (out_size - 1)
    for i in range(out_size):
        src = i * scale
        i0 = min(int(np.floor(src)), in_size - 1)
        i1 = min(i0 + 1, in_size - 1)
        w1 = src - i0
        M[i, i0] += 1.0 - w1
        M[i, i1] += w1
    return M


def _build_upsample_operator(H1, W1, H2, W2):
    """Per-image upsample(2x, bilinear, align_corners=True) + F.pad operator."""
    H2p, W2p = 2 * H1, 2 * W1
    diffY, diffX = H2 - H2p, W2 - W2p
    Uh = _bilinear_matrix(H2p, H1)
    Uw = _bilinear_matrix(W2p, W1)
    Uh_p = np.concatenate([np.zeros((diffY // 2, H1), np.float32), Uh,
                           np.zeros((diffY - diffY // 2, H1), np.float32)], axis=0)
    Uw_p = np.concatenate([np.zeros((diffX // 2, W1), np.float32), Uw,
                           np.zeros((diffX - diffX // 2, W1), np.float32)], axis=0)
    U_img = np.kron(Uh_p, Uw_p)               # (H2*W2, H1*W1) — NO batch kron
    return U_img, Uh_p, Uw_p


def _build_tap_masks(N, H2, W2):
    """mask[r, t] = 1 iff tap t=(dy,dx) reads inside the same image at row r."""
    r = np.arange(N * H2 * W2)
    h = (r // W2) % H2
    w = r % W2
    cols = []
    for t in range(9):
        dy, dx = t // 3 - 1, t % 3 - 1
        ok = (h + dy >= 0) & (h + dy < H2) & (w + dx >= 0) & (w + dx < W2)
        cols.append(ok.astype(np.float32))
    return np.stack(cols, axis=1)              # (N*H2*W2, 9)


# --------------------------------------------------------------------------
# Pallas kernel (closure over static geometry)
# --------------------------------------------------------------------------
def _make_kernel(N, H2, W2, c_mid, c_out):
    PAD = ((W2 + 1 + 7) // 8) * 8              # sublane-aligned zero padding

    def conv3x3(proj, mask):
        """proj: (R, 9*C) f32 from the wide matmul -> (R, C) conv output."""
        R = proj.shape[0]
        C = proj.shape[1] // 9
        zpad = jnp.zeros((PAD, proj.shape[1]), jnp.float32)
        padded = jnp.concatenate([zpad, proj, zpad], axis=0)   # (R + 2*PAD, 9*C)
        acc = jnp.zeros((R, C), jnp.float32)
        for t in range(9):                                     # 9 static taps
            dy, dx = t // 3 - 1, t % 3 - 1
            k = dy * W2 + dx                                   # row shift
            sl = padded[PAD + k:PAD + k + R, t * C:(t + 1) * C]
            acc = acc + sl * mask[:, t:t + 1]                  # zero invalid taps
        return acc

    def batchnorm_relu(h, g, be):
        mu = jnp.mean(h, axis=0, keepdims=True)
        var = jnp.mean((h - mu) ** 2, axis=0, keepdims=True)
        h = (h - mu) * lax.rsqrt(var + BN_EPS)
        return jnp.maximum(h * g + be, 0.0)

    def kernel(x1_ref, x2_ref, u_ref, m_ref,
               w1_ref, b1_ref, g1_ref, be1_ref,
               w2_ref, b2_ref, g2_ref, be2_ref, o_ref):
        # ---- bilinear upsample + F.pad: one small per-image matmul (static N loop)
        U = u_ref[...]                                          # (H2*W2, H1*W1) bf16
        up = jnp.concatenate(
            [jnp.dot(U, x1_ref[n], preferred_element_type=jnp.float32)
             for n in range(N)], axis=0)                        # (R2, C1) f32

        x_cat = jnp.concatenate([x2_ref[...].astype(jnp.float32), up], axis=1)
        mask = m_ref[...]                                       # (R2, 9) f32

        # ---- conv1: one wide bf16 matmul + shifted-slice accumulation
        proj1 = jnp.dot(x_cat.astype(jnp.bfloat16), w1_ref[...],
                        preferred_element_type=jnp.float32)     # (R2, 9*c_mid)
        h1 = conv3x3(proj1, mask) + b1_ref[...]
        h1 = batchnorm_relu(h1, g1_ref[...], be1_ref[...])

        # ---- conv2
        proj2 = jnp.dot(h1.astype(jnp.bfloat16), w2_ref[...],
                        preferred_element_type=jnp.float32)     # (R2, 9*c_out)
        h2 = conv3x3(proj2, mask) + b2_ref[...]
        o_ref[...] = batchnorm_relu(h2, g2_ref[...], be2_ref[...])

    return kernel


# --------------------------------------------------------------------------
# Wrapper: layout plumbing (NCHW <-> channels-last rows), weight repacking
# --------------------------------------------------------------------------
def up_pallas(x1, x2, params):
    """x1, x2: NCHW float32.  Returns NCHW float32, same semantics as Up.forward."""
    N, C1, H1, W1 = x1.shape
    _, C2, H2, W2 = x2.shape
    in_ch = C1 + C2
    c_mid = params["w1"].shape[0]
    c_out = params["w2"].shape[0]
    R2 = N * H2 * W2

    U_img, _, _ = _build_upsample_operator(H1, W1, H2, W2)
    mask9 = _build_tap_masks(N, H2, W2)

    # Conv weights -> wide layout (Cin, 9*Cout): w_wide[ci, t*C + o] = w[o, ci, ky, kx]
    w1w = jnp.transpose(params["w1"], (1, 2, 3, 0)).reshape(in_ch, 9 * c_mid)
    w2w = jnp.transpose(params["w2"], (1, 2, 3, 0)).reshape(c_mid, 9 * c_out)

    x1f = jnp.transpose(x1, (0, 2, 3, 1)).reshape(N, H1 * W1, C1)
    x2f = jnp.transpose(x2, (0, 2, 3, 1)).reshape(R2, C2)

    vspec = pl.BlockSpec(memory_space=pltpu.MemorySpace.VMEM)
    kernel = _make_kernel(N, H2, W2, c_mid, c_out)

    out_flat = pl.pallas_call(
        kernel,
        out_shape=jax.ShapeDtypeStruct((R2, c_out), jnp.float32),
        in_specs=[vspec] * 12,
        out_specs=vspec,
        compiler_params=pltpu.CompilerParams(vmem_limit_bytes=64 * 1024 * 1024),
    )(x1f.astype(jnp.bfloat16), x2f.astype(jnp.bfloat16),
      jnp.asarray(U_img, jnp.bfloat16), jnp.asarray(mask9, jnp.float32),
      w1w.astype(jnp.bfloat16),
      params["b1"].reshape(1, -1).astype(jnp.float32),
      params["g1"].reshape(1, -1).astype(jnp.float32),
      params["be1"].reshape(1, -1).astype(jnp.float32),
      w2w.astype(jnp.bfloat16),
      params["b2"].reshape(1, -1).astype(jnp.float32),
      params["g2"].reshape(1, -1).astype(jnp.float32),
      params["be2"].reshape(1, -1).astype(jnp.float32))

    return out_flat.reshape(N, H2, W2, c_out).transpose(0, 3, 1, 2)


# --------------------------------------------------------------------------
# Pure-JAX reference (independent conv path via lax.conv) for verification
# --------------------------------------------------------------------------
def up_ref(x1, x2, params):
    N, C1, H1, W1 = x1.shape
    _, C2, H2, W2 = x2.shape
    _, Uh_p, Uw_p = _build_upsample_operator(H1, W1, H2, W2)
    up = jnp.einsum("ah,nchw->ncaw", jnp.asarray(Uh_p), x1,
                    precision=lax.Precision.HIGHEST)
    up = jnp.einsum("bw,ncaw->ncab", jnp.asarray(Uw_p), up,
                    precision=lax.Precision.HIGHEST)
    x = jnp.concatenate([x2, up], axis=1)

    def block(y, w, b, g, be):
        y = lax.conv_general_dilated(y, w, (1, 1), ((1, 1), (1, 1)),
                                     dimension_numbers=("NCHW", "OIHW", "NCHW"),
                                     precision=lax.Precision.HIGHEST)
        y = y + b[None, :, None, None]
        mu = jnp.mean(y, axis=(0, 2, 3), keepdims=True)
        var = jnp.mean((y - mu) ** 2, axis=(0, 2, 3), keepdims=True)
        y = (y - mu) * lax.rsqrt(var + BN_EPS)
        y = y * g[None, :, None, None] + be[None, :, None, None]
        return jnp.maximum(y, 0.0)

    y = block(x, params["w1"], params["b1"], params["g1"], params["be1"])
    return block(y, params["w2"], params["b2"], params["g2"], params["be2"])


if __name__ == "__main__":
    # Up(in_channels=8, out_channels=4, bilinear=True):
    #   x1: (N, 4, 8, 8) -> upsampled to 16x16,  x2: (N, 4, 16, 16)
    #   cat -> 8 channels, DoubleConv(8, 4, mid=4)
    N, in_channels, out_channels = 2, 8, 4
    C1 = C2 = in_channels // 2
    mid = in_channels // 2

    keys = jax.random.split(jax.random.PRNGKey(0), 10)
    x1 = jax.random.normal(keys[0], (N, C1, 8, 8), jnp.float32)
    x2 = jax.random.normal(keys[1], (N, C2, 16, 16), jnp.float32)

    params = dict(
        w1=0.25 * jax.random.normal(keys[2], (mid, in_channels, 3, 3), jnp.float32),
        b1=0.10 * jax.random.normal(keys[3], (mid,), jnp.float32),
        g1=1.0 + 0.10 * jax.random.normal(keys[4], (mid,), jnp.float32),
        be1=0.10 * jax.random.normal(keys[5], (mid,), jnp.float32),
        w2=0.25 * jax.random.normal(keys[6], (out_channels, mid, 3, 3), jnp.float32),
        b2=0.10 * jax.random.normal(keys[7], (out_channels,), jnp.float32),
        g2=1.0 + 0.10 * jax.random.normal(keys[8], (out_channels,), jnp.float32),
        be2=0.10 * jax.random.normal(keys[9], (out_channels,), jnp.float32),
    )

    out = jax.block_until_ready(up_pallas(x1, x2, params))
    ref = jax.block_until_ready(up_ref(x1, x2, params))
    np.testing.assert_allclose(np.asarray(out), np.asarray(ref), rtol=2e-2, atol=2e-2)

    print("KERNEL_OK")
</pallas_src>

<mosaic_0001>
module attributes {stable_mosaic.version = 11 : i64} {
  func.func @kernel(%arg0: memref<2x64x4xbf16, #tpu.memory_space<vmem>>, %arg1: memref<512x4xbf16, #tpu.memory_space<vmem>>, %arg2: memref<256x64xbf16, #tpu.memory_space<vmem>>, %arg3: memref<512x9xf32, #tpu.memory_space<vmem>>, %arg4: memref<8x36xbf16, #tpu.memory_space<vmem>>, %arg5: memref<1x4xf32, #tpu.memory_space<vmem>>, %arg6: memref<1x4xf32, #tpu.memory_space<vmem>>, %arg7: memref<1x4xf32, #tpu.memory_space<vmem>>, %arg8: memref<4x36xbf16, #tpu.memory_space<vmem>>, %arg9: memref<1x4xf32, #tpu.memory_space<vmem>>, %arg10: memref<1x4xf32, #tpu.memory_space<vmem>>, %arg11: memref<1x4xf32, #tpu.memory_space<vmem>>, %arg12: memref<512x4xf32, #tpu.memory_space<vmem>>) attributes {dimension_semantics = [], scalar_prefetch = 0 : i64, scratch_operands = 0 : i64, tpu.core_type = #tpu.core_type<tc>} {
    %c0 = arith.constant 0 : index
    %c0_0 = arith.constant 0 : index
    %0 = vector.load %arg2[%c0, %c0_0] : memref<256x64xbf16, #tpu.memory_space<vmem>>, vector<256x64xbf16>
    %c0_1 = arith.constant 0 : index
    %c0_2 = arith.constant 0 : index
    %c0_3 = arith.constant 0 : index
    %1 = vector.load %arg0[%c0_1, %c0_2, %c0_3] : memref<2x64x4xbf16, #tpu.memory_space<vmem>>, vector<1x64x4xbf16>
    %2 = vector.shape_cast %1 : vector<1x64x4xbf16> to vector<64x4xbf16>
    %cst = arith.constant dense<0.000000e+00> : vector<256x4xf32>
    %3 = tpu.matmul %0, %2, %cst {dimension_numbers = #tpu.dot_dimension_numbers<[1], [0], [0], [1], [0, 0, 1, 1], [], []>} : vector<256x64xbf16>, vector<64x4xbf16>, vector<256x4xf32> -> vector<256x4xf32>
    %c1 = arith.constant 1 : index
    %c0_4 = arith.constant 0 : index
    %c0_5 = arith.constant 0 : index
    %4 = vector.load %arg0[%c1, %c0_4, %c0_5] : memref<2x64x4xbf16, #tpu.memory_space<vmem>>, vector<1x64x4xbf16>
    %5 = vector.shape_cast %4 : vector<1x64x4xbf16> to vector<64x4xbf16>
    %cst_6 = arith.constant dense<0.000000e+00> : vector<256x4xf32>
    %6 = tpu.matmul %0, %5, %cst_6 {dimension_numbers = #tpu.dot_dimension_numbers<[1], [0], [0], [1], [0, 0, 1, 1], [], []>} : vector<256x64xbf16>, vector<64x4xbf16>, vector<256x4xf32> -> vector<256x4xf32>
    %7 = tpu.concatenate %3, %6 in 0 : vector<256x4xf32>, vector<256x4xf32> -> vector<512x4xf32>
    %c0_7 = arith.constant 0 : index
    %c0_8 = arith.constant 0 : index
    %8 = vector.load %arg1[%c0_7, %c0_8] : memref<512x4xbf16, #tpu.memory_space<vmem>>, vector<512x4xbf16>
    %9 = arith.extf %8 : vector<512x4xbf16> to vector<512x4xf32>
    %10 = tpu.concatenate %9, %7 in 1 : vector<512x4xf32>, vector<512x4xf32> -> vector<512x8xf32>
    %c0_9 = arith.constant 0 : index
    %c0_10 = arith.constant 0 : index
    %11 = vector.load %arg3[%c0_9, %c0_10] : memref<512x9xf32, #tpu.memory_space<vmem>>, vector<512x9xf32>
    %12 = arith.truncf %10 : vector<512x8xf32> to vector<512x8xbf16>
    %c0_11 = arith.constant 0 : index
    %c0_12 = arith.constant 0 : index
    %13 = vector.load %arg4[%c0_11, %c0_12] : memref<8x36xbf16, #tpu.memory_space<vmem>>, vector<8x36xbf16>
    %cst_13 = arith.constant dense<0.000000e+00> : vector<512x36xf32>
    %14 = tpu.matmul %12, %13, %cst_13 {dimension_numbers = #tpu.dot_dimension_numbers<[1], [0], [0], [1], [0, 0, 1, 1], [], []>} : vector<512x8xbf16>, vector<8x36xbf16>, vector<512x36xf32> -> vector<512x36xf32>
    %cst_14 = arith.constant 0.000000e+00 : f32
    %15 = vector.broadcast %cst_14 : f32 to vector<24x36xf32>
    %16 = tpu.concatenate %15, %14, %15 in 0 : vector<24x36xf32>, vector<512x36xf32>, vector<24x36xf32> -> vector<560x36xf32>
    %cst_15 = arith.constant 0.000000e+00 : f32
    %17 = vector.broadcast %cst_15 : f32 to vector<512x4xf32>
    %18 = vector.extract_strided_slice %16 {offsets = [7, 0], sizes = [512, 4], strides = [1, 1]} : vector<560x36xf32> to vector<512x4xf32>
    %19 = vector.extract_strided_slice %11 {offsets = [0, 0], sizes = [512, 1], strides = [1, 1]} : vector<512x9xf32> to vector<512x1xf32>
    %20 = vector.broadcast %19 : vector<512x1xf32> to vector<512x4xf32>
    %21 = arith.mulf %18, %20 : vector<512x4xf32>
    %22 = arith.addf %17, %21 : vector<512x4xf32>
    %23 = vector.extract_strided_slice %16 {offsets = [8, 4], sizes = [512, 4], strides = [1, 1]} : vector<560x36xf32> to vector<512x4xf32>
    %24 = vector.extract_strided_slice %11 {offsets = [0, 1], sizes = [512, 1], strides = [1, 1]} : vector<512x9xf32> to vector<512x1xf32>
    %25 = vector.broadcast %24 : vector<512x1xf32> to vector<512x4xf32>
    %26 = arith.mulf %23, %25 : vector<512x4xf32>
    %27 = arith.addf %22, %26 : vector<512x4xf32>
    %28 = vector.extract_strided_slice %16 {offsets = [9, 8], sizes = [512, 4], strides = [1, 1]} : vector<560x36xf32> to vector<512x4xf32>
    %29 = vector.extract_strided_slice %11 {offsets = [0, 2], sizes = [512, 1], strides = [1, 1]} : vector<512x9xf32> to vector<512x1xf32>
    %30 = vector.broadcast %29 : vector<512x1xf32> to vector<512x4xf32>
    %31 = arith.mulf %28, %30 : vector<512x4xf32>
    %32 = arith.addf %27, %31 : vector<512x4xf32>
    %33 = vector.extract_strided_slice %16 {offsets = [23, 12], sizes = [512, 4], strides = [1, 1]} : vector<560x36xf32> to vector<512x4xf32>
    %34 = vector.extract_strided_slice %11 {offsets = [0, 3], sizes = [512, 1], strides = [1, 1]} : vector<512x9xf32> to vector<512x1xf32>
    %35 = vector.broadcast %34 : vector<512x1xf32> to vector<512x4xf32>
    %36 = arith.mulf %33, %35 : vector<512x4xf32>
    %37 = arith.addf %32, %36 : vector<512x4xf32>
    %38 = vector.extract_strided_slice %16 {offsets = [24, 16], sizes = [512, 4], strides = [1, 1]} : vector<560x36xf32> to vector<512x4xf32>
    %39 = vector.extract_strided_slice %11 {offsets = [0, 4], sizes = [512, 1], strides = [1, 1]} : vector<512x9xf32> to vector<512x1xf32>
    %40 = vector.broadcast %39 : vector<512x1xf32> to vector<512x4xf32>
    %41 = arith.mulf %38, %40 : vector<512x4xf32>
    %42 = arith.addf %37, %41 : vector<512x4xf32>
    %43 = vector.extract_strided_slice %16 {offsets = [25, 20], sizes = [512, 4], strides = [1, 1]} : vector<560x36xf32> to vector<512x4xf32>
    %44 = vector.extract_strided_slice %11 {offsets = [0, 5], sizes = [512, 1], strides = [1, 1]} : vector<512x9xf32> to vector<512x1xf32>
    %45 = vector.broadcast %44 : vector<512x1xf32> to vector<512x4xf32>
    %46 = arith.mulf %43, %45 : vector<512x4xf32>
    %47 = arith.addf %42, %46 : vector<512x4xf32>
    %48 = vector.extract_strided_slice %16 {offsets = [39, 24], sizes = [512, 4], strides = [1, 1]} : vector<560x36xf32> to vector<512x4xf32>
    %49 = vector.extract_strided_slice %11 {offsets = [0, 6], sizes = [512, 1], strides = [1, 1]} : vector<512x9xf32> to vector<512x1xf32>
    %50 = vector.broadcast %49 : vector<512x1xf32> to vector<512x4xf32>
    %51 = arith.mulf %48, %50 : vector<512x4xf32>
    %52 = arith.addf %47, %51 : vector<512x4xf32>
    %53 = vector.extract_strided_slice %16 {offsets = [40, 28], sizes = [512, 4], strides = [1, 1]} : vector<560x36xf32> to vector<512x4xf32>
    %54 = vector.extract_strided_slice %11 {offsets = [0, 7], sizes = [512, 1], strides = [1, 1]} : vector<512x9xf32> to vector<512x1xf32>
    %55 = vector.broadcast %54 : vector<512x1xf32> to vector<512x4xf32>
    %56 = arith.mulf %53, %55 : vector<512x4xf32>
    %57 = arith.addf %52, %56 : vector<512x4xf32>
    %58 = vector.extract_strided_slice %16 {offsets = [41, 32], sizes = [512, 4], strides = [1, 1]} : vector<560x36xf32> to vector<512x4xf32>
    %59 = vector.extract_strided_slice %11 {offsets = [0, 8], sizes = [512, 1], strides = [1, 1]} : vector<512x9xf32> to vector<512x1xf32>
    %60 = vector.broadcast %59 : vector<512x1xf32> to vector<512x4xf32>
    %61 = arith.mulf %58, %60 : vector<512x4xf32>
    %62 = arith.addf %57, %61 : vector<512x4xf32>
    %c0_16 = arith.constant 0 : index
    %c0_17 = arith.constant 0 : index
    %63 = vector.load %arg5[%c0_16, %c0_17] : memref<1x4xf32, #tpu.memory_space<vmem>>, vector<1x4xf32>
    %64 = vector.broadcast %63 : vector<1x4xf32> to vector<512x4xf32>
    %65 = arith.addf %62, %64 : vector<512x4xf32>
    %c0_18 = arith.constant 0 : index
    %c0_19 = arith.constant 0 : index
    %66 = vector.load %arg6[%c0_18, %c0_19] : memref<1x4xf32, #tpu.memory_space<vmem>>, vector<1x4xf32>
    %c0_20 = arith.constant 0 : index
    %c0_21 = arith.constant 0 : index
    %67 = vector.load %arg7[%c0_20, %c0_21] : memref<1x4xf32, #tpu.memory_space<vmem>>, vector<1x4xf32>
    %cst_22 = arith.constant dense<0.000000e+00> : vector<4xf32>
    %68 = vector.multi_reduction <add>, %65, %cst_22 [0] : vector<512x4xf32> to vector<4xf32>
    %69 = vector.shape_cast %68 : vector<4xf32> to vector<1x4xf32>
    %cst_23 = arith.constant 5.120000e+02 : f32
    %70 = vector.broadcast %cst_23 : f32 to vector<1x4xf32>
    %71 = arith.divf %69, %70 : vector<1x4xf32>
    %72 = vector.broadcast %71 : vector<1x4xf32> to vector<512x4xf32>
    %73 = arith.subf %65, %72 : vector<512x4xf32>
    %74 = arith.mulf %73, %73 : vector<512x4xf32>
    %cst_24 = arith.constant dense<0.000000e+00> : vector<4xf32>
    %75 = vector.multi_reduction <add>, %74, %cst_24 [0] : vector<512x4xf32> to vector<4xf32>
    %76 = vector.shape_cast %75 : vector<4xf32> to vector<1x4xf32>
    %cst_25 = arith.constant 5.120000e+02 : f32
    %77 = vector.broadcast %cst_25 : f32 to vector<1x4xf32>
    %78 = arith.divf %76, %77 : vector<1x4xf32>
    %79 = vector.broadcast %71 : vector<1x4xf32> to vector<512x4xf32>
    %80 = arith.subf %65, %79 : vector<512x4xf32>
    %cst_26 = arith.constant 9.99999974E-6 : f32
    %81 = vector.broadcast %cst_26 : f32 to vector<1x4xf32>
    %82 = arith.addf %78, %81 : vector<1x4xf32>
    %83 = math.rsqrt %82 : vector<1x4xf32>
    %84 = vector.broadcast %83 : vector<1x4xf32> to vector<512x4xf32>
    %85 = arith.mulf %80, %84 : vector<512x4xf32>
    %86 = vector.broadcast %66 : vector<1x4xf32> to vector<512x4xf32>
    %87 = arith.mulf %85, %86 : vector<512x4xf32>
    %88 = vector.broadcast %67 : vector<1x4xf32> to vector<512x4xf32>
    %89 = arith.addf %87, %88 : vector<512x4xf32>
    %cst_27 = arith.constant 0.000000e+00 : f32
    %90 = vector.broadcast %cst_27 : f32 to vector<512x4xf32>
    %91 = arith.maximumf %89, %90 : vector<512x4xf32>
    %92 = arith.truncf %91 : vector<512x4xf32> to vector<512x4xbf16>
    %c0_28 = arith.constant 0 : index
    %c0_29 = arith.constant 0 : index
    %93 = vector.load %arg8[%c0_28, %c0_29] : memref<4x36xbf16, #tpu.memory_space<vmem>>, vector<4x36xbf16>
    %cst_30 = arith.constant dense<0.000000e+00> : vector<512x36xf32>
    %94 = tpu.matmul %92, %93, %cst_30 {dimension_numbers = #tpu.dot_dimension_numbers<[1], [0], [0], [1], [0, 0, 1, 1], [], []>} : vector<512x4xbf16>, vector<4x36xbf16>, vector<512x36xf32> -> vector<512x36xf32>
    %cst_31 = arith.constant 0.000000e+00 : f32
    %95 = vector.broadcast %cst_31 : f32 to vector<24x36xf32>
    %96 = tpu.concatenate %95, %94, %95 in 0 : vector<24x36xf32>, vector<512x36xf32>, vector<24x36xf32> -> vector<560x36xf32>
    %cst_32 = arith.constant 0.000000e+00 : f32
    %97 = vector.broadcast %cst_32 : f32 to vector<512x4xf32>
    %98 = vector.extract_strided_slice %96 {offsets = [7, 0], sizes = [512, 4], strides = [1, 1]} : vector<560x36xf32> to vector<512x4xf32>
    %99 = vector.extract_strided_slice %11 {offsets = [0, 0], sizes = [512, 1], strides = [1, 1]} : vector<512x9xf32> to vector<512x1xf32>
    %100 = vector.broadcast %99 : vector<512x1xf32> to vector<512x4xf32>
    %101 = arith.mulf %98, %100 : vector<512x4xf32>
    %102 = arith.addf %97, %101 : vector<512x4xf32>
    %103 = vector.extract_strided_slice %96 {offsets = [8, 4], sizes = [512, 4], strides = [1, 1]} : vector<560x36xf32> to vector<512x4xf32>
    %104 = vector.extract_strided_slice %11 {offsets = [0, 1], sizes = [512, 1], strides = [1, 1]} : vector<512x9xf32> to vector<512x1xf32>
    %105 = vector.broadcast %104 : vector<512x1xf32> to vector<512x4xf32>
    %106 = arith.mulf %103, %105 : vector<512x4xf32>
    %107 = arith.addf %102, %106 : vector<512x4xf32>
    %108 = vector.extract_strided_slice %96 {offsets = [9, 8], sizes = [512, 4], strides = [1, 1]} : vector<560x36xf32> to vector<512x4xf32>
    %109 = vector.extract_strided_slice %11 {offsets = [0, 2], sizes = [512, 1], strides = [1, 1]} : vector<512x9xf32> to vector<512x1xf32>
    %110 = vector.broadcast %109 : vector<512x1xf32> to vector<512x4xf32>
    %111 = arith.mulf %108, %110 : vector<512x4xf32>
    %112 = arith.addf %107, %111 : vector<512x4xf32>
    %113 = vector.extract_strided_slice %96 {offsets = [23, 12], sizes = [512, 4], strides = [1, 1]} : vector<560x36xf32> to vector<512x4xf32>
    %114 = vector.extract_strided_slice %11 {offsets = [0, 3], sizes = [512, 1], strides = [1, 1]} : vector<512x9xf32> to vector<512x1xf32>
    %115 = vector.broadcast %114 : vector<512x1xf32> to vector<512x4xf32>
    %116 = arith.mulf %113, %115 : vector<512x4xf32>
    %117 = arith.addf %112, %116 : vector<512x4xf32>
    %118 = vector.extract_strided_slice %96 {offsets = [24, 16], sizes = [512, 4], strides = [1, 1]} : vector<560x36xf32> to vector<512x4xf32>
    %119 = vector.extract_strided_slice %11 {offsets = [0, 4], sizes = [512, 1], strides = [1, 1]} : vector<512x9xf32> to vector<512x1xf32>
    %120 = vector.broadcast %119 : vector<512x1xf32> to vector<512x4xf32>
    %121 = arith.mulf %118, %120 : vector<512x4xf32>
    %122 = arith.addf %117, %121 : vector<512x4xf32>
    %123 = vector.extract_strided_slice %96 {offsets = [25, 20], sizes = [512, 4], strides = [1, 1]} : vector<560x36xf32> to vector<512x4xf32>
    %124 = vector.extract_strided_slice %11 {offsets = [0, 5], sizes = [512, 1], strides = [1, 1]} : vector<512x9xf32> to vector<512x1xf32>
    %125 = vector.broadcast %124 : vector<512x1xf32> to vector<512x4xf32>
    %126 = arith.mulf %123, %125 : vector<512x4xf32>
    %127 = arith.addf %122, %126 : vector<512x4xf32>
    %128 = vector.extract_strided_slice %96 {offsets = [39, 24], sizes = [512, 4], strides = [1, 1]} : vector<560x36xf32> to vector<512x4xf32>
    %129 = vector.extract_strided_slice %11 {offsets = [0, 6], sizes = [512, 1], strides = [1, 1]} : vector<512x9xf32> to vector<512x1xf32>
    %130 = vector.broadcast %129 : vector<512x1xf32> to vector<512x4xf32>
    %131 = arith.mulf %128, %130 : vector<512x4xf32>
    %132 = arith.addf %127, %131 : vector<512x4xf32>
    %133 = vector.extract_strided_slice %96 {offsets = [40, 28], sizes = [512, 4], strides = [1, 1]} : vector<560x36xf32> to vector<512x4xf32>
    %134 = vector.extract_strided_slice %11 {offsets = [0, 7], sizes = [512, 1], strides = [1, 1]} : vector<512x9xf32> to vector<512x1xf32>
    %135 = vector.broadcast %134 : vector<512x1xf32> to vector<512x4xf32>
    %136 = arith.mulf %133, %135 : vector<512x4xf32>
    %137 = arith.addf %132, %136 : vector<512x4xf32>
    %138 = vector.extract_strided_slice %96 {offsets = [41, 32], sizes = [512, 4], strides = [1, 1]} : vector<560x36xf32> to vector<512x4xf32>
    %139 = vector.extract_strided_slice %11 {offsets = [0, 8], sizes = [512, 1], strides = [1, 1]} : vector<512x9xf32> to vector<512x1xf32>
    %140 = vector.broadcast %139 : vector<512x1xf32> to vector<512x4xf32>
    %141 = arith.mulf %138, %140 : vector<512x4xf32>
    %142 = arith.addf %137, %141 : vector<512x4xf32>
    %c0_33 = arith.constant 0 : index
    %c0_34 = arith.constant 0 : index
    %143 = vector.load %arg9[%c0_33, %c0_34] : memref<1x4xf32, #tpu.memory_space<vmem>>, vector<1x4xf32>
    %144 = vector.broadcast %143 : vector<1x4xf32> to vector<512x4xf32>
    %145 = arith.addf %142, %144 : vector<512x4xf32>
    %c0_35 = arith.constant 0 : index
    %c0_36 = arith.constant 0 : index
    %146 = vector.load %arg10[%c0_35, %c0_36] : memref<1x4xf32, #tpu.memory_space<vmem>>, vector<1x4xf32>
    %c0_37 = arith.constant 0 : index
    %c0_38 = arith.constant 0 : index
    %147 = vector.load %arg11[%c0_37, %c0_38] : memref<1x4xf32, #tpu.memory_space<vmem>>, vector<1x4xf32>
    %cst_39 = arith.constant dense<0.000000e+00> : vector<4xf32>
    %148 = vector.multi_reduction <add>, %145, %cst_39 [0] : vector<512x4xf32> to vector<4xf32>
    %149 = vector.shape_cast %148 : vector<4xf32> to vector<1x4xf32>
    %cst_40 = arith.constant 5.120000e+02 : f32
    %150 = vector.broadcast %cst_40 : f32 to vector<1x4xf32>
    %151 = arith.divf %149, %150 : vector<1x4xf32>
    %152 = vector.broadcast %151 : vector<1x4xf32> to vector<512x4xf32>
    %153 = arith.subf %145, %152 : vector<512x4xf32>
    %154 = arith.mulf %153, %153 : vector<512x4xf32>
    %cst_41 = arith.constant dense<0.000000e+00> : vector<4xf32>
    %155 = vector.multi_reduction <add>, %154, %cst_41 [0] : vector<512x4xf32> to vector<4xf32>
    %156 = vector.shape_cast %155 : vector<4xf32> to vector<1x4xf32>
    %cst_42 = arith.constant 5.120000e+02 : f32
    %157 = vector.broadcast %cst_42 : f32 to vector<1x4xf32>
    %158 = arith.divf %156, %157 : vector<1x4xf32>
    %159 = vector.broadcast %151 : vector<1x4xf32> to vector<512x4xf32>
    %160 = arith.subf %145, %159 : vector<512x4xf32>
    %cst_43 = arith.constant 9.99999974E-6 : f32
    %161 = vector.broadcast %cst_43 : f32 to vector<1x4xf32>
    %162 = arith.addf %158, %161 : vector<1x4xf32>
    %163 = math.rsqrt %162 : vector<1x4xf32>
    %164 = vector.broadcast %163 : vector<1x4xf32> to vector<512x4xf32>
    %165 = arith.mulf %160, %164 : vector<512x4xf32>
    %166 = vector.broadcast %146 : vector<1x4xf32> to vector<512x4xf32>
    %167 = arith.mulf %165, %166 : vector<512x4xf32>
    %168 = vector.broadcast %147 : vector<1x4xf32> to vector<512x4xf32>
    %169 = arith.addf %167, %168 : vector<512x4xf32>
    %cst_44 = arith.constant 0.000000e+00 : f32
    %170 = vector.broadcast %cst_44 : f32 to vector<512x4xf32>
    %171 = arith.maximumf %169, %170 : vector<512x4xf32>
    %c0_45 = arith.constant 0 : index
    %c0_46 = arith.constant 0 : index
    %172 = vector.load %arg12[%c0_45, %c0_46] : memref<512x4xf32, #tpu.memory_space<vmem>>, vector<512x4xf32>
    tpu.vector_store %arg12[%c0_45, %c0_46], %171 {strides = array<i32>} : memref<512x4xf32, #tpu.memory_space<vmem>>, vector<512x4xf32>,
    return
  }
}

</mosaic_0001>

<llo_original>
// kernel: tpu_custom_call.1
$region0: #{tpu_custom_call.1}
  #allocation0 [shape = 'u32[]', space=smem, size = 0x4, offset = 0x4, fixed_abs, tag = 'smem constant byte address 0x4 - core index']
  #allocation1 [shape = 'u32[144,128]{1,0:T(1,128)}', space=vmem, size = 0x12000, scoped, tag = 'internal scratch']
  %s0 = inlined_call_operand.vmem [shape: bf16[2,64,4], index: 0, kind: input, shape index: {}]
  %s1 = inlined_call_operand.vmem [shape: bf16[512,4], index: 1, kind: input, shape index: {}]
  %s2 = inlined_call_operand.vmem [shape: bf16[256,64], index: 2, kind: input, shape index: {}]
  %s3 = inlined_call_operand.vmem [shape: f32[512,9], index: 3, kind: input, shape index: {}]
  %s4 = inlined_call_operand.vmem [shape: bf16[8,36], index: 4, kind: input, shape index: {}]
  %s5 = inlined_call_operand.vmem [shape: f32[1,4], index: 5, kind: input, shape index: {}]
  %s6 = inlined_call_operand.vmem [shape: f32[1,4], index: 6, kind: input, shape index: {}]
  %s7 = inlined_call_operand.vmem [shape: f32[1,4], index: 7, kind: input, shape index: {}]
  %s8 = inlined_call_operand.vmem [shape: bf16[4,36], index: 8, kind: input, shape index: {}]
  %s9 = inlined_call_operand.vmem [shape: f32[1,4], index: 9, kind: input, shape index: {}]
  %s10 = inlined_call_operand.vmem [shape: f32[1,4], index: 10, kind: input, shape index: {}]
  %s11 = inlined_call_operand.vmem [shape: f32[1,4], index: 11, kind: input, shape index: {}]
  %s12 = inlined_call_operand.vmem [shape: f32[512,4], index: 12, kind: output, shape index: {}]
  %s13 = sld [smem:[#allocation0]]
  $region58: #{tpu_custom_call.1} parent=0
    _
  %s15 = ssub.s32 1, %s13
  %s16 = scalar_select 0, %s15, %s13
  // Predicated region
  $region2: #{tpu_custom_call.1} parent=0 // pred_check
    _
  $region3: #{tpu_custom_call.1} parent=0 // pred_check_branch
    %18 = sbr.rel (0) target = $region5
  $region4: #{tpu_custom_call.1} parent=0 // pred_region
    _
  $region5: #{tpu_custom_call.1} parent=0 // pred_fallthru
    _
  // Predicated region
  $region6: #{tpu_custom_call.1} parent=0 // pred_check
    _
  $region7: #{tpu_custom_call.1} parent=0 // pred_check_branch
    %20 = sbr.rel (0) target = $region9
  $region8: #{tpu_custom_call.1} parent=0 // pred_region
    _
  $region9: #{tpu_custom_call.1} parent=0 // pred_fallthru
    _
  // Predicated region
  $region10: #{tpu_custom_call.1} parent=0 // pred_check
    _
  $region11: #{tpu_custom_call.1} parent=0 // pred_check_branch
    %22 = sbr.rel (0) target = $region13
  $region12: #{tpu_custom_call.1} parent=0 // pred_region
    _
  $region13: #{tpu_custom_call.1} parent=0 // pred_fallthru
    _
  // Predicated region
  $region14: #{tpu_custom_call.1} parent=0 // pred_check
    _
  $region15: #{tpu_custom_call.1} parent=0 // pred_check_branch
    %24 = sbr.rel (0) target = $region17
  $region16: #{tpu_custom_call.1} parent=0 // pred_region
    _
  $region17: #{tpu_custom_call.1} parent=0 // pred_fallthru
    _
  // Predicated region
  $region18: #{tpu_custom_call.1} parent=0 // pred_check
    _
  $region19: #{tpu_custom_call.1} parent=0 // pred_check_branch
    %26 = sbr.rel (0) target = $region21
  $region20: #{tpu_custom_call.1} parent=0 // pred_region
    _
  $region21: #{tpu_custom_call.1} parent=0 // pred_fallthru
    _
  // Predicated region
  $region22: #{tpu_custom_call.1} parent=0 // pred_check
    _
  $region23: #{tpu_custom_call.1} parent=0 // pred_check_branch
    %28 = sbr.rel (0) target = $region25
  $region24: #{tpu_custom_call.1} parent=0 // pred_region
    _
  $region25: #{tpu_custom_call.1} parent=0 // pred_fallthru
    _
  // Predicated region
  $region26: #{tpu_custom_call.1} parent=0 // pred_check
    _
  $region27: #{tpu_custom_call.1} parent=0 // pred_check_branch
    %30 = sbr.rel (0) target = $region29
  $region28: #{tpu_custom_call.1} parent=0 // pred_region
    _
  $region29: #{tpu_custom_call.1} parent=0 // pred_fallthru
    _
  // Predicated region
  $region30: #{tpu_custom_call.1} parent=0 // pred_check
    _
  $region31: #{tpu_custom_call.1} parent=0 // pred_check_branch
    %32 = sbr.rel (0) target = $region33
  $region32: #{tpu_custom_call.1} parent=0 // pred_region
    _
  $region33: #{tpu_custom_call.1} parent=0 // pred_fallthru
    _
  // Predicated region
  $region34: #{tpu_custom_call.1} parent=0 // pred_check
    _
  $region35: #{tpu_custom_call.1} parent=0 // pred_check_branch
    %34 = sbr.rel (0) target = $region37
  $region36: #{tpu_custom_call.1} parent=0 // pred_region
    _
  $region37: #{tpu_custom_call.1} parent=0 // pred_fallthru
    _
  // Predicated region
  $region38: #{tpu_custom_call.1} parent=0 // pred_check
    _
  $region39: #{tpu_custom_call.1} parent=0 // pred_check_branch
    %36 = sbr.rel (0) target = $region41
  $region40: #{tpu_custom_call.1} parent=0 // pred_region
    _
  $region41: #{tpu_custom_call.1} parent=0 // pred_fallthru
    _
  // Predicated region
  $region42: #{tpu_custom_call.1} parent=0 // pred_check
    _
  $region43: #{tpu_custom_call.1} parent=0 // pred_check_branch
    %38 = sbr.rel (0) target = $region45
  $region44: #{tpu_custom_call.1} parent=0 // pred_region
    _
  $region45: #{tpu_custom_call.1} parent=0 // pred_fallthru
    _
  // Predicated region
  $region46: #{tpu_custom_call.1} parent=0 // pred_check
    _
  $region47: #{tpu_custom_call.1} parent=0 // pred_check_branch
    %40 = sbr.rel (0) target = $region49
  $region48: #{tpu_custom_call.1} parent=0 // pred_region
    _
  $region49: #{tpu_custom_call.1} parent=0 // pred_fallthru
    _
  %v42 = vld [vmem:[%s2] sm:$0xf]
  %v43 = vld [vmem:[%s2 + $0x4] sm:$0xf]
  %v44 = vld [vmem:[%s2 + $0x8] sm:$0xf]
  %v45 = vld [vmem:[%s2 + $0xc] sm:$0xf]
  %v46 = vld [vmem:[%s2 + $0x10] sm:$0xf]
  %v47 = vld [vmem:[%s2 + $0x14] sm:$0xf]
  %v48 = vld [vmem:[%s2 + $0x18] sm:$0xf]
  %v49 = vld [vmem:[%s2 + $0x1c] sm:$0xf]
  %v50 = vld [vmem:[%s2 + $0x20] sm:$0xf]
  %v51 = vld [vmem:[%s2 + $0x24] sm:$0xf]
  %v52 = vld [vmem:[%s2 + $0x28] sm:$0xf]
  %v53 = vld [vmem:[%s2 + $0x2c] sm:$0xf]
  %v54 = vld [vmem:[%s2 + $0x30] sm:$0xf]
  %v55 = vld [vmem:[%s2 + $0x34] sm:$0xf]
  %v56 = vld [vmem:[%s2 + $0x38] sm:$0xf]
  %v57 = vld [vmem:[%s2 + $0x3c] sm:$0xf]
  %v58 = vld [vmem:[%s2 + $0x40] sm:$0xf]
  %v59 = vld [vmem:[%s2 + $0x44] sm:$0xf]
  %v60 = vld [vmem:[%s2 + $0x48] sm:$0xf]
  %v61 = vld [vmem:[%s2 + $0x4c] sm:$0xf]
  %v62 = vld [vmem:[%s2 + $0x50] sm:$0xf]
  %v63 = vld [vmem:[%s2 + $0x54] sm:$0xf]
  %v64 = vld [vmem:[%s2 + $0x58] sm:$0xf]
  %v65 = vld [vmem:[%s2 + $0x5c] sm:$0xf]
  %v66 = vld [vmem:[%s2 + $0x60] sm:$0xf]
  %v67 = vld [vmem:[%s2 + $0x64] sm:$0xf]
  %v68 = vld [vmem:[%s2 + $0x68] sm:$0xf]
  %v69 = vld [vmem:[%s2 + $0x6c] sm:$0xf]
  %v70 = vld [vmem:[%s2 + $0x70] sm:$0xf]
  %v71 = vld [vmem:[%s2 + $0x74] sm:$0xf]
  %v72 = vld [vmem:[%s2 + $0x78] sm:$0xf]
  %v73 = vld [vmem:[%s2 + $0x7c] sm:$0xf]
  %v74 = vld [vmem:[%s0] sm:$0xf]
  %v75 = vld [vmem:[%s0 + $0x4] sm:$0xf]
  %v76 = vld [vmem:[%s0 + $0x8] sm:$0xf]
  %v77 = vld [vmem:[%s0 + $0xc] sm:$0xf]
  %v78 = vld [vmem:[%s0 + $0x10] sm:$0xf]
  %v79 = vld [vmem:[%s0 + $0x14] sm:$0xf]
  %v80 = vld [vmem:[%s0 + $0x18] sm:$0xf]
  %v81 = vld [vmem:[%s0 + $0x1c] sm:$0xf]
  %v114 = vunpack.c.l.b16 %v42
  %v115 = vunpack.c.l.b16 %v43
  %v116 = vunpack.c.l.b16 %v44
  %v117 = vunpack.c.l.b16 %v45
  %v118 = vunpack.c.l.b16 %v46
  %v119 = vunpack.c.l.b16 %v47
  %v120 = vunpack.c.l.b16 %v48
  %v121 = vunpack.c.l.b16 %v49
  %v122 = vunpack.c.l.b16 %v50
  %v123 = vunpack.c.l.b16 %v51
  %v124 = vunpack.c.l.b16 %v52
  %v125 = vunpack.c.l.b16 %v53
  %v126 = vunpack.c.l.b16 %v54
  %v127 = vunpack.c.l.b16 %v55
  %v128 = vunpack.c.l.b16 %v56
  %v129 = vunpack.c.l.b16 %v57
  %v130 = vunpack.c.l.b16 %v58
  %v131 = vunpack.c.l.b16 %v59
  %v132 = vunpack.c.l.b16 %v60
  %v133 = vunpack.c.l.b16 %v61
  %v134 = vunpack.c.l.b16 %v62
  %v135 = vunpack.c.l.b16 %v63
  %v136 = vunpack.c.l.b16 %v64
  %v137 = vunpack.c.l.b16 %v65
  %v138 = vunpack.c.l.b16 %v66
  %v139 = vunpack.c.l.b16 %v67
  %v140 = vunpack.c.l.b16 %v68
  %v141 = vunpack.c.l.b16 %v69
  %v142 = vunpack.c.l.b16 %v70
  %v143 = vunpack.c.l.b16 %v71
  %v144 = vunpack.c.l.b16 %v72
  %v145 = vunpack.c.l.b16 %v73
  %v146 = vpack.c.b16 %v115, %v114
  %v147 = vpack.c.b16 %v117, %v116
  %v148 = vpack.c.b16 %v119, %v118
  %v149 = vpack.c.b16 %v121, %v120
  %v150 = vpack.c.b16 %v123, %v122
  %v151 = vpack.c.b16 %v125, %v124
  %v152 = vpack.c.b16 %v127, %v126
  %v153 = vpack.c.b16 %v129, %v128
  %v154 = vpack.c.b16 %v131, %v130
  %v155 = vpack.c.b16 %v133, %v132
  %v156 = vpack.c.b16 %v135, %v134
  %v157 = vpack.c.b16 %v137, %v136
  %v158 = vpack.c.b16 %v139, %v138
  %v159 = vpack.c.b16 %v141, %v140
  %v160 = vpack.c.b16 %v143, %v142
  %v161 = vpack.c.b16 %v145, %v144
  %v170 = vunpack.c.l.b16 %v74
  %v171 = vunpack.c.l.b16 %v75
  %v172 = vunpack.c.l.b16 %v76
  %v173 = vunpack.c.l.b16 %v77
  %v174 = vunpack.c.l.b16 %v78
  %v175 = vunpack.c.l.b16 %v79
  %v176 = vunpack.c.l.b16 %v80
  %v177 = vunpack.c.l.b16 %v81
  %v178 = vpack.c.b16 %v171, %v170
  %v179 = vpack.c.b16 %v173, %v172
  %v180 = vpack.c.b16 %v175, %v174
  %v181 = vpack.c.b16 %v177, %v176
  %vm186 = vcmask 523264
  %v188 = vsel %vm186, %v146, 0
  %v191 = vsel %vm186, %v147, 0
  %v194 = vsel %vm186, %v148, 0
  %v197 = vsel %vm186, %v149, 0
  %v200 = vsel %vm186, %v150, 0
  %v203 = vsel %vm186, %v151, 0
  %v206 = vsel %vm186, %v152, 0
  %v209 = vsel %vm186, %v153, 0
  %v212 = vsel %vm186, %v154, 0
  %v215 = vsel %vm186, %v155, 0
  %v218 = vsel %vm186, %v156, 0
  %v221 = vsel %vm186, %v157, 0
  %v224 = vsel %vm186, %v158, 0
  %v227 = vsel %vm186, %v159, 0
  %v230 = vsel %vm186, %v160, 0
  %v233 = vsel %vm186, %v161, 0
  %235 = vmatprep.subr.bf16.mxu0 0
  %236 = vmatpush1.bf16.msra.mxu0 0
  %237 = vmatprep.subr.bf16.mxu0 0
  %238 = vmatpush1.bf16.msra.mxu0 0
  %239 = vmatprep.subr.bf16.mxu0 0
  %240 = vmatpush1.bf16.msra.mxu0 0
  %241 = vmatprep.subr.bf16.mxu0 0
  %242 = vmatpush1.bf16.msra.mxu0 0
  %243 = vmatprep.subr.bf16.mxu0 0
  %244 = vmatpush1.bf16.msra.mxu0 %v181
  %245 = vmatprep.subr.bf16.mxu0 0
  %246 = vmatpush1.bf16.msra.mxu0 %v180
  %247 = vmatprep.subr.bf16.mxu0 0
  %248 = vmatpush1.bf16.msra.mxu0 %v179
  %249 = vmatprep.subr.bf16.mxu0 0
  %250 = vmatpush1.bf16.msra.mxu0 %v178
  %251 = vmatprep.subr.bf16.mxu0 0
  %252 = vmatpush2.bf16.msra.mxu0 0
  %253 = vmatprep.subr.bf16.mxu0 0
  %254 = vmatpush2.bf16.msra.mxu0 0
  %255 = vmatprep.subr.bf16.mxu0 0
  %256 = vmatpush2.bf16.msra.mxu0 0
  %257 = vmatprep.subr.bf16.mxu0 0
  %258 = vmatpush2.bf16.msra.mxu0 0
  %259 = vmatprep.subr.bf16.mxu0 0
  %260 = vmatpush2.bf16.msra.mxu0 0
  %261 = vmatprep.subr.bf16.mxu0 0
  %262 = vmatpush2.bf16.msra.mxu0 0
  %263 = vmatprep.subr.bf16.mxu0 0
  %264 = vmatpush2.bf16.msra.mxu0 0
  %265 = vmatprep.subr.bf16.mxu0 0
  %266 = vmatpush2.bf16.msra.mxu0 0
  %267 = vmatprep.mubr.bf16.mxu0 0
  %268 = vmatmul.mubr.bf16.gmra.mxu0 %v188
  %v269 = vpop.f32.mrf.mxu0
  %v270 = vadd.f32 0.0, %v269
  %v271 = vpop.f32.mrf.mxu0
  %v272 = vpop.f32.mrf.mxu0
  %v273 = vadd.f32 0.0, %v272
  %v274 = vpop.f32.mrf.mxu0
  %275 = vmatprep.mubr.bf16.mxu0 0
  %276 = vmatmul.mubr.bf16.gmra.mxu0 %v191
  %v277 = vpop.f32.mrf.mxu0
  %v278 = vadd.f32 0.0, %v277
  %v279 = vpop.f32.mrf.mxu0
  %v280 = vpop.f32.mrf.mxu0
  %v281 = vadd.f32 0.0, %v280
  %v282 = vpop.f32.mrf.mxu0
  %283 = vmatprep.mubr.bf16.mxu0 0
  %284 = vmatmul.mubr.bf16.gmra.mxu0 %v194
  %v285 = vpop.f32.mrf.mxu0
  %v286 = vadd.f32 0.0, %v285
  %v287 = vpop.f32.mrf.mxu0
  %v288 = vpop.f32.mrf.mxu0
  %v289 = vadd.f32 0.0, %v288
  %v290 = vpop.f32.mrf.mxu0
  %291 = vmatprep.mubr.bf16.mxu0 0
  %292 = vmatmul.mubr.bf16.gmra.mxu0 %v197
  %v293 = vpop.f32.mrf.mxu0
  %v294 = vadd.f32 0.0, %v293
  %v295 = vpop.f32.mrf.mxu0
  %v296 = vpop.f32.mrf.mxu0
  %v297 = vadd.f32 0.0, %v296
  %v298 = vpop.f32.mrf.mxu0
  %299 = vmatprep.mubr.bf16.mxu0 0
  %300 = vmatmul.mubr.bf16.gmra.mxu0 %v200
  %v301 = vpop.f32.mrf.mxu0
  %v302 = vadd.f32 0.0, %v301
  %v303 = vpop.f32.mrf.mxu0
  %v304 = vpop.f32.mrf.mxu0
  %v305 = vadd.f32 0.0, %v304
  %v306 = vpop.f32.mrf.mxu0
  %307 = vmatprep.mubr.bf16.mxu0 0
  %308 = vmatmul.mubr.bf16.gmra.mxu0 %v203
  %v309 = vpop.f32.mrf.mxu0
  %v310 = vadd.f32 0.0, %v309
  %v311 = vpop.f32.mrf.mxu0
  %v312 = vpop.f32.mrf.mxu0
  %v313 = vadd.f32 0.0, %v312
  %v314 = vpop.f32.mrf.mxu0
  %315 = vmatprep.mubr.bf16.mxu0 0
  %316 = vmatmul.mubr.bf16.gmra.mxu0 %v206
  %v317 = vpop.f32.mrf.mxu0
  %v318 = vadd.f32 0.0, %v317
  %v319 = vpop.f32.mrf.mxu0
  %v320 = vpop.f32.mrf.mxu0
  %v321 = vadd.f32 0.0, %v320
  %v322 = vpop.f32.mrf.mxu0
  %323 = vmatprep.mubr.bf16.mxu0 0
  %324 = vmatmul.mubr.bf16.gmra.mxu0 %v209
  %v325 = vpop.f32.mrf.mxu0
  %v326 = vadd.f32 0.0, %v325
  %v327 = vpop.f32.mrf.mxu0
  %v328 = vpop.f32.mrf.mxu0
  %v329 = vadd.f32 0.0, %v328
  %v330 = vpop.f32.mrf.mxu0
  %331 = vmatprep.mubr.bf16.mxu0 0
  %332 = vmatmul.mubr.bf16.gmra.mxu0 %v212
  %v333 = vpop.f32.mrf.mxu0
  %v334 = vadd.f32 0.0, %v333
  %v335 = vpop.f32.mrf.mxu0
  %v336 = vpop.f32.mrf.mxu0
  %v337 = vadd.f32 0.0, %v336
  %v338 = vpop.f32.mrf.mxu0
  %339 = vmatprep.mubr.bf16.mxu0 0
  %340 = vmatmul.mubr.bf16.gmra.mxu0 %v215
  %v341 = vpop.f32.mrf.mxu0
  %v342 = vadd.f32 0.0, %v341
  %v343 = vpop.f32.mrf.mxu0
  %v344 = vpop.f32.mrf.mxu0
  %v345 = vadd.f32 0.0, %v344
  %v346 = vpop.f32.mrf.mxu0
  %347 = vmatprep.mubr.bf16.mxu0 0
  %348 = vmatmul.mubr.bf16.gmra.mxu0 %v218
  %v349 = vpop.f32.mrf.mxu0
  %v350 = vadd.f32 0.0, %v349
  %v351 = vpop.f32.mrf.mxu0
  %v352 = vpop.f32.mrf.mxu0
  %v353 = vadd.f32 0.0, %v352
  %v354 = vpop.f32.mrf.mxu0
  %355 = vmatprep.mubr.bf16.mxu0 0
  %356 = vmatmul.mubr.bf16.gmra.mxu0 %v221
  %v357 = vpop.f32.mrf.mxu0
  %v358 = vadd.f32 0.0, %v357
  %v359 = vpop.f32.mrf.mxu0
  %v360 = vpop.f32.mrf.mxu0
  %v361 = vadd.f32 0.0, %v360
  %v362 = vpop.f32.mrf.mxu0
  %363 = vmatprep.mubr.bf16.mxu0 0
  %364 = vmatmul.mubr.bf16.gmra.mxu0 %v224
  %v365 = vpop.f32.mrf.mxu0
  %v366 = vadd.f32 0.0, %v365
  %v367 = vpop.f32.mrf.mxu0
  %v368 = vpop.f32.mrf.mxu0
  %v369 = vadd.f32 0.0, %v368
  %v370 = vpop.f32.mrf.mxu0
  %371 = vmatprep.mubr.bf16.mxu0 0
  %372 = vmatmul.mubr.bf16.gmra.mxu0 %v227
  %v373 = vpop.f32.mrf.mxu0
  %v374 = vadd.f32 0.0, %v373
  %v375 = vpop.f32.mrf.mxu0
  %v376 = vpop.f32.mrf.mxu0
  %v377 = vadd.f32 0.0, %v376
  %v378 = vpop.f32.mrf.mxu0
  %379 = vmatprep.mubr.bf16.mxu0 0
  %380 = vmatmul.mubr.bf16.gmra.mxu0 %v230
  %v381 = vpop.f32.mrf.mxu0
  %v382 = vadd.f32 0.0, %v381
  %v383 = vpop.f32.mrf.mxu0
  %v384 = vpop.f32.mrf.mxu0
  %v385 = vadd.f32 0.0, %v384
  %v386 = vpop.f32.mrf.mxu0
  %387 = vmatprep.mubr.bf16.mxu0 0
  %388 = vmatmul.mubr.bf16.gmra.mxu0 %v233
  %v389 = vpop.f32.mrf.mxu0
  %v390 = vadd.f32 0.0, %v389
  %v391 = vpop.f32.mrf.mxu0
  %v392 = vpop.f32.mrf.mxu0
  %v393 = vadd.f32 0.0, %v392
  %v394 = vpop.f32.mrf.mxu0
  %395 = vdwg.mxu0
  %s396 = scalar_lea.vmem %s0, 32
  %v397 = vld [vmem:[%s396] sm:$0xf]
  %v398 = vld [vmem:[%s396 + $0x4] sm:$0xf]
  %v399 = vld [vmem:[%s396 + $0x8] sm:$0xf]
  %v400 = vld [vmem:[%s396 + $0xc] sm:$0xf]
  %v401 = vld [vmem:[%s396 + $0x10] sm:$0xf]
  %v402 = vld [vmem:[%s396 + $0x14] sm:$0xf]
  %v403 = vld [vmem:[%s396 + $0x18] sm:$0xf]
  %v404 = vld [vmem:[%s396 + $0x1c] sm:$0xf]
  %v413 = vunpack.c.l.b16 %v397
  %v414 = vunpack.c.l.b16 %v398
  %v415 = vunpack.c.l.b16 %v399
  %v416 = vunpack.c.l.b16 %v400
  %v417 = vunpack.c.l.b16 %v401
  %v418 = vunpack.c.l.b16 %v402
  %v419 = vunpack.c.l.b16 %v403
  %v420 = vunpack.c.l.b16 %v404
  %v421 = vpack.c.b16 %v414, %v413
  %v422 = vpack.c.b16 %v416, %v415
  %v423 = vpack.c.b16 %v418, %v417
  %v424 = vpack.c.b16 %v420, %v419
  %429 = vmatprep.subr.bf16.mxu0 0
  %430 = vmatpush1.bf16.msra.mxu0 0
  %431 = vmatprep.subr.bf16.mxu0 0
  %432 = vmatpush1.bf16.msra.mxu0 0
  %433 = vmatprep.subr.bf16.mxu0 0
  %434 = vmatpush1.bf16.msra.mxu0 0
  %435 = vmatprep.subr.bf16.mxu0 0
  %436 = vmatpush1.bf16.msra.mxu0 0
  %437 = vmatprep.subr.bf16.mxu0 0
  %438 = vmatpush1.bf16.msra.mxu0 %v424
  %439 = vmatprep.subr.bf16.mxu0 0
  %440 = vmatpush1.bf16.msra.mxu0 %v423
  %441 = vmatprep.subr.bf16.mxu0 0
  %442 = vmatpush1.bf16.msra.mxu0 %v422
  %443 = vmatprep.subr.bf16.mxu0 0
  %444 = vmatpush1.bf16.msra.mxu0 %v421
  %445 = vmatprep.subr.bf16.mxu0 0
  %446 = vmatpush2.bf16.msra.mxu0 0
  %447 = vmatprep.subr.bf16.mxu0 0
  %448 = vmatpush2.bf16.msra.mxu0 0
  %449 = vmatprep.subr.bf16.mxu0 0
  %450 = vmatpush2.bf16.msra.mxu0 0
  %451 = vmatprep.subr.bf16.mxu0 0
  %452 = vmatpush2.bf16.msra.mxu0 0
  %453 = vmatprep.subr.bf16.mxu0 0
  %454 = vmatpush2.bf16.msra.mxu0 0
  %455 = vmatprep.subr.bf16.mxu0 0
  %456 = vmatpush2.bf16.msra.mxu0 0
  %457 = vmatprep.subr.bf16.mxu0 0
  %458 = vmatpush2.bf16.msra.mxu0 0
  %459 = vmatprep.subr.bf16.mxu0 0
  %460 = vmatpush2.bf16.msra.mxu0 0
  %461 = vmatprep.mubr.bf16.mxu0 0
  %462 = vmatmul.mubr.bf16.gmra.mxu0 %v188
  %v463 = vpop.f32.mrf.mxu0
  %v464 = vadd.f32 0.0, %v463
  %v465 = vpop.f32.mrf.mxu0
  %v466 = vpop.f32.mrf.mxu0
  %v467 = vadd.f32 0.0, %v466
  %v468 = vpop.f32.mrf.mxu0
  %469 = vmatprep.mubr.bf16.mxu0 0
  %470 = vmatmul.mubr.bf16.gmra.mxu0 %v191
  %v471 = vpop.f32.mrf.mxu0
  %v472 = vadd.f32 0.0, %v471
  %v473 = vpop.f32.mrf.mxu0
  %v474 = vpop.f32.mrf.mxu0
  %v475 = vadd.f32 0.0, %v474
  %v476 = vpop.f32.mrf.mxu0
  %477 = vmatprep.mubr.bf16.mxu0 0
  %478 = vmatmul.mubr.bf16.gmra.mxu0 %v194
  %v479 = vpop.f32.mrf.mxu0
  %v480 = vadd.f32 0.0, %v479
  %v481 = vpop.f32.mrf.mxu0
  %v482 = vpop.f32.mrf.mxu0
  %v483 = vadd.f32 0.0, %v482
  %v484 = vpop.f32.mrf.mxu0
  %485 = vmatprep.mubr.bf16.mxu0 0
  %486 = vmatmul.mubr.bf16.gmra.mxu0 %v197
  %v487 = vpop.f32.mrf.mxu0
  %v488 = vadd.f32 0.0, %v487
  %v489 = vpop.f32.mrf.mxu0
  %v490 = vpop.f32.mrf.mxu0
  %v491 = vadd.f32 0.0, %v490
  %v492 = vpop.f32.mrf.mxu0
  %493 = vmatprep.mubr.bf16.mxu0 0
  %494 = vmatmul.mubr.bf16.gmra.mxu0 %v200
  %v495 = vpop.f32.mrf.mxu0
  %v496 = vadd.f32 0.0, %v495
  %v497 = vpop.f32.mrf.mxu0
  %v498 = vpop.f32.mrf.mxu0
  %v499 = vadd.f32 0.0, %v498
  %v500 = vpop.f32.mrf.mxu0
  %501 = vmatprep.mubr.bf16.mxu0 0
  %502 = vmatmul.mubr.bf16.gmra.mxu0 %v203
  %v503 = vpop.f32.mrf.mxu0
  %v504 = vadd.f32 0.0, %v503
  %v505 = vpop.f32.mrf.mxu0
  %v506 = vpop.f32.mrf.mxu0
  %v507 = vadd.f32 0.0, %v506
  %v508 = vpop.f32.mrf.mxu0
  %509 = vmatprep.mubr.bf16.mxu0 0
  %510 = vmatmul.mubr.bf16.gmra.mxu0 %v206
  %v511 = vpop.f32.mrf.mxu0
  %v512 = vadd.f32 0.0, %v511
  %v513 = vpop.f32.mrf.mxu0
  %v514 = vpop.f32.mrf.mxu0
  %v515 = vadd.f32 0.0, %v514
  %v516 = vpop.f32.mrf.mxu0
  %517 = vmatprep.mubr.bf16.mxu0 0
  %518 = vmatmul.mubr.bf16.gmra.mxu0 %v209
  %v519 = vpop.f32.mrf.mxu0
  %v520 = vadd.f32 0.0, %v519
  %v521 = vpop.f32.mrf.mxu0
  %v522 = vpop.f32.mrf.mxu0
  %v523 = vadd.f32 0.0, %v522
  %v524 = vpop.f32.mrf.mxu0
  %525 = vmatprep.mubr.bf16.mxu0 0
  %526 = vmatmul.mubr.bf16.gmra.mxu0 %v212
  %v527 = vpop.f32.mrf.mxu0
  %v528 = vadd.f32 0.0, %v527
  %v529 = vpop.f32.mrf.mxu0
  %v530 = vpop.f32.mrf.mxu0
  %v531 = vadd.f32 0.0, %v530
  %v532 = vpop.f32.mrf.mxu0
  %533 = vmatprep.mubr.bf16.mxu0 0
  %534 = vmatmul.mubr.bf16.gmra.mxu0 %v215
  %v535 = vpop.f32.mrf.mxu0
  %v536 = vadd.f32 0.0, %v535
  %v537 = vpop.f32.mrf.mxu0
  %v538 = vpop.f32.mrf.mxu0
  %v539 = vadd.f32 0.0, %v538
  %v540 = vpop.f32.mrf.mxu0
  %541 = vmatprep.mubr.bf16.mxu0 0
  %542 = vmatmul.mubr.bf16.gmra.mxu0 %v218
  %v543 = vpop.f32.mrf.mxu0
  %v544 = vadd.f32 0.0, %v543
  %v545 = vpop.f32.mrf.mxu0
  %v546 = vpop.f32.mrf.mxu0
  %v547 = vadd.f32 0.0, %v546
  %v548 = vpop.f32.mrf.mxu0
  %549 = vmatprep.mubr.bf16.mxu0 0
  %550 = vmatmul.mubr.bf16.gmra.mxu0 %v221
  %v551 = vpop.f32.mrf.mxu0
  %v552 = vadd.f32 0.0, %v551
  %v553 = vpop.f32.mrf.mxu0
  %v554 = vpop.f32.mrf.mxu0
  %v555 = vadd.f32 0.0, %v554
  %v556 = vpop.f32.mrf.mxu0
  %557 = vmatprep.mubr.bf16.mxu0 0
  %558 = vmatmul.mubr.bf16.gmra.mxu0 %v224
  %v559 = vpop.f32.mrf.mxu0
  %v560 = vadd.f32 0.0, %v559
  %v561 = vpop.f32.mrf.mxu0
  %v562 = vpop.f32.mrf.mxu0
  %v563 = vadd.f32 0.0, %v562
  %v564 = vpop.f32.mrf.mxu0
  %565 = vmatprep.mubr.bf16.mxu0 0
  %566 = vmatmul.mubr.bf16.gmra.mxu0 %v227
  %v567 = vpop.f32.mrf.mxu0
  %v568 = vadd.f32 0.0, %v567
  %v569 = vpop.f32.mrf.mxu0
  %v570 = vpop.f32.mrf.mxu0
  %v571 = vadd.f32 0.0, %v570
  %v572 = vpop.f32.mrf.mxu0
  %573 = vmatprep.mubr.bf16.mxu0 0
  %574 = vmatmul.mubr.bf16.gmra.mxu0 %v230
  %v575 = vpop.f32.mrf.mxu0
  %v576 = vadd.f32 0.0, %v575
  %v577 = vpop.f32.mrf.mxu0
  %v578 = vpop.f32.mrf.mxu0
  %v579 = vadd.f32 0.0, %v578
  %v580 = vpop.f32.mrf.mxu0
  %581 = vmatprep.mubr.bf16.mxu0 0
  %582 = vmatmul.mubr.bf16.gmra.mxu0 %v233
  %v583 = vpop.f32.mrf.mxu0
  %v584 = vadd.f32 0.0, %v583
  %v585 = vpop.f32.mrf.mxu0
  %v586 = vpop.f32.mrf.mxu0
  %v587 = vadd.f32 0.0, %v586
  %v588 = vpop.f32.mrf.mxu0
  %589 = vdwg.mxu0
  %v590 = vld [vmem:[%s1] sm:$0xf]
  %v591 = vld [vmem:[%s1 + $0x4] sm:$0xf]
  %v592 = vld [vmem:[%s1 + $0x8] sm:$0xf]
  %v593 = vld [vmem:[%s1 + $0xc] sm:$0xf]
  %v594 = vld [vmem:[%s1 + $0x10] sm:$0xf]
  %v595 = vld [vmem:[%s1 + $0x14] sm:$0xf]
  %v596 = vld [vmem:[%s1 + $0x18] sm:$0xf]
  %v597 = vld [vmem:[%s1 + $0x1c] sm:$0xf]
  %v598 = vld [vmem:[%s1 + $0x20] sm:$0xf]
  %v599 = vld [vmem:[%s1 + $0x24] sm:$0xf]
  %v600 = vld [vmem:[%s1 + $0x28] sm:$0xf]
  %v601 = vld [vmem:[%s1 + $0x2c] sm:$0xf]
  %v602 = vld [vmem:[%s1 + $0x30] sm:$0xf]
  %v603 = vld [vmem:[%s1 + $0x34] sm:$0xf]
  %v604 = vld [vmem:[%s1 + $0x38] sm:$0xf]
  %v605 = vld [vmem:[%s1 + $0x3c] sm:$0xf]
  %v606 = vld [vmem:[%s1 + $0x40] sm:$0xf]
  %v607 = vld [vmem:[%s1 + $0x44] sm:$0xf]
  %v608 = vld [vmem:[%s1 + $0x48] sm:$0xf]
  %v609 = vld [vmem:[%s1 + $0x4c] sm:$0xf]
  %v610 = vld [vmem:[%s1 + $0x50] sm:$0xf]
  %v611 = vld [vmem:[%s1 + $0x54] sm:$0xf]
  %v612 = vld [vmem:[%s1 + $0x58] sm:$0xf]
  %v613 = vld [vmem:[%s1 + $0x5c] sm:$0xf]
  %v614 = vld [vmem:[%s1 + $0x60] sm:$0xf]
  %v615 = vld [vmem:[%s1 + $0x64] sm:$0xf]
  %v616 = vld [vmem:[%s1 + $0x68] sm:$0xf]
  %v617 = vld [vmem:[%s1 + $0x6c] sm:$0xf]
  %v618 = vld [vmem:[%s1 + $0x70] sm:$0xf]
  %v619 = vld [vmem:[%s1 + $0x74] sm:$0xf]
  %v620 = vld [vmem:[%s1 + $0x78] sm:$0xf]
  %v621 = vld [vmem:[%s1 + $0x7c] sm:$0xf]
  %v622 = vld [vmem:[%s1 + $0x80] sm:$0xf]
  %v623 = vld [vmem:[%s1 + $0x84] sm:$0xf]
  %v624 = vld [vmem:[%s1 + $0x88] sm:$0xf]
  %v625 = vld [vmem:[%s1 + $0x8c] sm:$0xf]
  %v626 = vld [vmem:[%s1 + $0x90] sm:$0xf]
  %v627 = vld [vmem:[%s1 + $0x94] sm:$0xf]
  %v628 = vld [vmem:[%s1 + $0x98] sm:$0xf]
  %v629 = vld [vmem:[%s1 + $0x9c] sm:$0xf]
  %v630 = vld [vmem:[%s1 + $0xa0] sm:$0xf]
  %v631 = vld [vmem:[%s1 + $0xa4] sm:$0xf]
  %v632 = vld [vmem:[%s1 + $0xa8] sm:$0xf]
  %v633 = vld [vmem:[%s1 + $0xac] sm:$0xf]
  %v634 = vld [vmem:[%s1 + $0xb0] sm:$0xf]
  %v635 = vld [vmem:[%s1 + $0xb4] sm:$0xf]
  %v636 = vld [vmem:[%s1 + $0xb8] sm:$0xf]
  %v637 = vld [vmem:[%s1 + $0xbc] sm:$0xf]
  %v638 = vld [vmem:[%s1 + $0xc0] sm:$0xf]
  %v639 = vld [vmem:[%s1 + $0xc4] sm:$0xf]
  %v640 = vld [vmem:[%s1 + $0xc8] sm:$0xf]
  %v641 = vld [vmem:[%s1 + $0xcc] sm:$0xf]
  %v642 = vld [vmem:[%s1 + $0xd0] sm:$0xf]
  %v643 = vld [vmem:[%s1 + $0xd4] sm:$0xf]
  %v644 = vld [vmem:[%s1 + $0xd8] sm:$0xf]
  %v645 = vld [vmem:[%s1 + $0xdc] sm:$0xf]
  %v646 = vld [vmem:[%s1 + $0xe0] sm:$0xf]
  %v647 = vld [vmem:[%s1 + $0xe4] sm:$0xf]
  %v648 = vld [vmem:[%s1 + $0xe8] sm:$0xf]
  %v649 = vld [vmem:[%s1 + $0xec] sm:$0xf]
  %v650 = vld [vmem:[%s1 + $0xf0] sm:$0xf]
  %v651 = vld [vmem:[%s1 + $0xf4] sm:$0xf]
  %v652 = vld [vmem:[%s1 + $0xf8] sm:$0xf]
  %v653 = vld [vmem:[%s1 + $0xfc] sm:$0xf]
  %v654 = vunpack.c.l.bf16 %v590
  %v655 = vunpack.c.l.bf16 %v591
  %v656 = vunpack.c.l.bf16 %v592
  %v657 = vunpack.c.l.bf16 %v593
  %v658 = vunpack.c.l.bf16 %v594
  %v659 = vunpack.c.l.bf16 %v595
  %v660 = vunpack.c.l.bf16 %v596
  %v661 = vunpack.c.l.bf16 %v597
  %v662 = vunpack.c.l.bf16 %v598
  %v663 = vunpack.c.l.bf16 %v599
  %v664 = vunpack.c.l.bf16 %v600
  %v665 = vunpack.c.l.bf16 %v601
  %v666 = vunpack.c.l.bf16 %v602
  %v667 = vunpack.c.l.bf16 %v603
  %v668 = vunpack.c.l.bf16 %v604
  %v669 = vunpack.c.l.bf16 %v605
  %v670 = vunpack.c.l.bf16 %v606
  %v671 = vunpack.c.l.bf16 %v607
  %v672 = vunpack.c.l.bf16 %v608
  %v673 = vunpack.c.l.bf16 %v609
  %v674 = vunpack.c.l.bf16 %v610
  %v675 = vunpack.c.l.bf16 %v611
  %v676 = vunpack.c.l.bf16 %v612
  %v677 = vunpack.c.l.bf16 %v613
  %v678 = vunpack.c.l.bf16 %v614
  %v679 = vunpack.c.l.bf16 %v615
  %v680 = vunpack.c.l.bf16 %v616
  %v681 = vunpack.c.l.bf16 %v617
  %v682 = vunpack.c.l.bf16 %v618
  %v683 = vunpack.c.l.bf16 %v619
  %v684 = vunpack.c.l.bf16 %v620
  %v685 = vunpack.c.l.bf16 %v621
  %v686 = vunpack.c.l.bf16 %v622
  %v687 = vunpack.c.l.bf16 %v623
  %v688 = vunpack.c.l.bf16 %v624
  %v689 = vunpack.c.l.bf16 %v625
  %v690 = vunpack.c.l.bf16 %v626
  %v691 = vunpack.c.l.bf16 %v627
  %v692 = vunpack.c.l.bf16 %v628
  %v693 = vunpack.c.l.bf16 %v629
  %v694 = vunpack.c.l.bf16 %v630
  %v695 = vunpack.c.l.bf16 %v631
  %v696 = vunpack.c.l.bf16 %v632
  %v697 = vunpack.c.l.bf16 %v633
  %v698 = vunpack.c.l.bf16 %v634
  %v699 = vunpack.c.l.bf16 %v635
  %v700 = vunpack.c.l.bf16 %v636
  %v701 = vunpack.c.l.bf16 %v637
  %v702 = vunpack.c.l.bf16 %v638
  %v703 = vunpack.c.l.bf16 %v639
  %v704 = vunpack.c.l.bf16 %v640
  %v705 = vunpack.c.l.bf16 %v641
  %v706 = vunpack.c.l.bf16 %v642
  %v707 = vunpack.c.l.bf16 %v643
  %v708 = vunpack.c.l.bf16 %v644
  %v709 = vunpack.c.l.bf16 %v645
  %v710 = vunpack.c.l.bf16 %v646
  %v711 = vunpack.c.l.bf16 %v647
  %v712 = vunpack.c.l.bf16 %v648
  %v713 = vunpack.c.l.bf16 %v649
  %v714 = vunpack.c.l.bf16 %v650
  %v715 = vunpack.c.l.bf16 %v651
  %v716 = vunpack.c.l.bf16 %v652
  %v717 = vunpack.c.l.bf16 %v653
  %782 = vrot.lane.b32.xlu0 %v270, 4
  %v783 = vpop.permute.xlu0 %782
  %784 = vrot.lane.b32.xlu0 %v273, 4
  %v785 = vpop.permute.xlu0 %784
  %786 = vrot.lane.b32.xlu0 %v278, 4
  %v787 = vpop.permute.xlu0 %786
  %788 = vrot.lane.b32.xlu0 %v281, 4
  %v789 = vpop.permute.xlu0 %788
  %790 = vrot.lane.b32.xlu0 %v286, 4
  %v791 = vpop.permute.xlu0 %790
  %792 = vrot.lane.b32.xlu0 %v289, 4
  %v793 = vpop.permute.xlu0 %792
  %794 = vrot.lane.b32.xlu0 %v294, 4
  %v795 = vpop.permute.xlu0 %794
  %796 = vrot.lane.b32.xlu0 %v297, 4
  %v797 = vpop.permute.xlu0 %796
  %798 = vrot.lane.b32.xlu0 %v302, 4
  %v799 = vpop.permute.xlu0 %798
  %800 = vrot.lane.b32.xlu0 %v305, 4
  %v801 = vpop.permute.xlu0 %800
  %802 = vrot.lane.b32.xlu0 %v310, 4
  %v803 = vpop.permute.xlu0 %802
  %804 = vrot.lane.b32.xlu0 %v313, 4
  %v805 = vpop.permute.xlu0 %804
  %806 = vrot.lane.b32.xlu0 %v318, 4
  %v807 = vpop.permute.xlu0 %806
  %808 = vrot.lane.b32.xlu0 %v321, 4
  %v809 = vpop.permute.xlu0 %808
  %810 = vrot.lane.b32.xlu0 %v326, 4
  %v811 = vpop.permute.xlu0 %810
  %812 = vrot.lane.b32.xlu0 %v329, 4
  %v813 = vpop.permute.xlu0 %812
  %814 = vrot.lane.b32.xlu0 %v334, 4
  %v815 = vpop.permute.xlu0 %814
  %816 = vrot.lane.b32.xlu0 %v337, 4
  %v817 = vpop.permute.xlu0 %816
  %818 = vrot.lane.b32.xlu0 %v342, 4
  %v819 = vpop.permute.xlu0 %818
  %820 = vrot.lane.b32.xlu0 %v345, 4
  %v821 = vpop.permute.xlu0 %820
  %822 = vrot.lane.b32.xlu0 %v350, 4
  %v823 = vpop.permute.xlu0 %822
  %824 = vrot.lane.b32.xlu0 %v353, 4
  %v825 = vpop.permute.xlu0 %824
  %826 = vrot.lane.b32.xlu0 %v358, 4
  %v827 = vpop.permute.xlu0 %826
  %828 = vrot.lane.b32.xlu0 %v361, 4
  %v829 = vpop.permute.xlu0 %828
  %830 = vrot.lane.b32.xlu0 %v366, 4
  %v831 = vpop.permute.xlu0 %830
  %832 = vrot.lane.b32.xlu0 %v369, 4
  %v833 = vpop.permute.xlu0 %832
  %834 = vrot.lane.b32.xlu0 %v374, 4
  %v835 = vpop.permute.xlu0 %834
  %836 = vrot.lane.b32.xlu0 %v377, 4
  %v837 = vpop.permute.xlu0 %836
  %838 = vrot.lane.b32.xlu0 %v382, 4
  %v839 = vpop.permute.xlu0 %838
  %840 = vrot.lane.b32.xlu0 %v385, 4
  %v841 = vpop.permute.xlu0 %840
  %842 = vrot.lane.b32.xlu0 %v390, 4
  %v843 = vpop.permute.xlu0 %842
  %844 = vrot.lane.b32.xlu0 %v393, 4
  %v845 = vpop.permute.xlu0 %844
  %846 = vrot.lane.b32.xlu0 %v464, 4
  %v847 = vpop.permute.xlu0 %846
  %848 = vrot.lane.b32.xlu0 %v467, 4
  %v849 = vpop.permute.xlu0 %848
  %850 = vrot.lane.b32.xlu0 %v472, 4
  %v851 = vpop.permute.xlu0 %850
  %852 = vrot.lane.b32.xlu0 %v475, 4
  %v853 = vpop.permute.xlu0 %852
  %854 = vrot.lane.b32.xlu0 %v480, 4
  %v855 = vpop.permute.xlu0 %854
  %856 = vrot.lane.b32.xlu0 %v483, 4
  %v857 = vpop.permute.xlu0 %856
  %858 = vrot.lane.b32.xlu0 %v488, 4
  %v859 = vpop.permute.xlu0 %858
  %860 = vrot.lane.b32.xlu0 %v491, 4
  %v861 = vpop.permute.xlu0 %860
  %862 = vrot.lane.b32.xlu0 %v496, 4
  %v863 = vpop.permute.xlu0 %862
  %864 = vrot.lane.b32.xlu0 %v499, 4
  %v865 = vpop.permute.xlu0 %864
  %866 = vrot.lane.b32.xlu0 %v504, 4
  %v867 = vpop.permute.xlu0 %866
  %868 = vrot.lane.b32.xlu0 %v507, 4
  %v869 = vpop.permute.xlu0 %868
  %870 = vrot.lane.b32.xlu0 %v512, 4
  %v871 = vpop.permute.xlu0 %870
  %872 = vrot.lane.b32.xlu0 %v515, 4
  %v873 = vpop.permute.xlu0 %872
  %874 = vrot.lane.b32.xlu0 %v520, 4
  %v875 = vpop.permute.xlu0 %874
  %876 = vrot.lane.b32.xlu0 %v523, 4
  %v877 = vpop.permute.xlu0 %876
  %878 = vrot.lane.b32.xlu0 %v528, 4
  %v879 = vpop.permute.xlu0 %878
  %880 = vrot.lane.b32.xlu0 %v531, 4
  %v881 = vpop.permute.xlu0 %880
  %882 = vrot.lane.b32.xlu0 %v536, 4
  %v883 = vpop.permute.xlu0 %882
  %884 = vrot.lane.b32.xlu0 %v539, 4
  %v885 = vpop.permute.xlu0 %884
  %886 = vrot.lane.b32.xlu0 %v544, 4
  %v887 = vpop.permute.xlu0 %886
  %888 = vrot.lane.b32.xlu0 %v547, 4
  %v889 = vpop.permute.xlu0 %888
  %890 = vrot.lane.b32.xlu0 %v552, 4
  %v891 = vpop.permute.xlu0 %890
  %892 = vrot.lane.b32.xlu0 %v555, 4
  %v893 = vpop.permute.xlu0 %892
  %894 = vrot.lane.b32.xlu0 %v560, 4
  %v895 = vpop.permute.xlu0 %894
  %896 = vrot.lane.b32.xlu0 %v563, 4
  %v897 = vpop.permute.xlu0 %896
  %898 = vrot.lane.b32.xlu0 %v568, 4
  %v899 = vpop.permute.xlu0 %898
  %900 = vrot.lane.b32.xlu0 %v571, 4
  %v901 = vpop.permute.xlu0 %900
  %902 = vrot.lane.b32.xlu0 %v576, 4
  %v903 = vpop.permute.xlu0 %902
  %904 = vrot.lane.b32.xlu0 %v579, 4
  %v905 = vpop.permute.xlu0 %904
  %906 = vrot.lane.b32.xlu0 %v584, 4
  %v907 = vpop.permute.xlu0 %906
  %908 = vrot.lane.b32.xlu0 %v587, 4
  %v909 = vpop.permute.xlu0 %908
  %vm974 = vcmask 31744
  %v975 = vsel %vm974, %v654, %v783
  %v976 = vsel %vm974, %v655, %v785
  %v977 = vsel %vm974, %v656, %v787
  %v978 = vsel %vm974, %v657, %v789
  %v979 = vsel %vm974, %v658, %v791
  %v980 = vsel %vm974, %v659, %v793
  %v981 = vsel %vm974, %v660, %v795
  %v982 = vsel %vm974, %v661, %v797
  %v983 = vsel %vm974, %v662, %v799
  %v984 = vsel %vm974, %v663, %v801
  %v985 = vsel %vm974, %v664, %v803
  %v986 = vsel %vm974, %v665, %v805
  %v987 = vsel %vm974, %v666, %v807
  %v988 = vsel %vm974, %v667, %v809
  %v989 = vsel %vm974, %v668, %v811
  %v990 = vsel %vm974, %v669, %v813
  %v991 = vsel %vm974, %v670, %v815
  %v992 = vsel %vm974, %v671, %v817
  %v993 = vsel %vm974, %v672, %v819
  %v994 = vsel %vm974, %v673, %v821
  %v995 = vsel %vm974, %v674, %v823
  %v996 = vsel %vm974, %v675, %v825
  %v997 = vsel %vm974, %v676, %v827
  %v998 = vsel %vm974, %v677, %v829
  %v999 = vsel %vm974, %v678, %v831
  %v1000 = vsel %vm974, %v679, %v833
  %v1001 = vsel %vm974, %v680, %v835
  %v1002 = vsel %vm974, %v681, %v837
  %v1003 = vsel %vm974, %v682, %v839
  %v1004 = vsel %vm974, %v683, %v841
  %v1005 = vsel %vm974, %v684, %v843
  %v1006 = vsel %vm974, %v685, %v845
  %v1007 = vsel %vm974, %v686, %v847
  %v1008 = vsel %vm974, %v687, %v849
  %v1009 = vsel %vm974, %v688, %v851
  %v1010 = vsel %vm974, %v689, %v853
  %v1011 = vsel %vm974, %v690, %v855
  %v1012 = vsel %vm974, %v691, %v857
  %v1013 = vsel %vm974, %v692, %v859
  %v1014 = vsel %vm974, %v693, %v861
  %v1015 = vsel %vm974, %v694, %v863
  %v1016 = vsel %vm974, %v695, %v865
  %v1017 = vsel %vm974, %v696, %v867
  %v1018 = vsel %vm974, %v697, %v869
  %v1019 = vsel %vm974, %v698, %v871
  %v1020 = vsel %vm974, %v699, %v873
  %v1021 = vsel %vm974, %v700, %v875
  %v1022 = vsel %vm974, %v701, %v877
  %v1023 = vsel %vm974, %v702, %v879
  %v1024 = vsel %vm974, %v703, %v881
  %v1025 = vsel %vm974, %v704, %v883
  %v1026 = vsel %vm974, %v705, %v885
  %v1027 = vsel %vm974, %v706, %v887
  %v1028 = vsel %vm974, %v707, %v889
  %v1029 = vsel %vm974, %v708, %v891
  %v1030 = vsel %vm974, %v709, %v893
  %v1031 = vsel %vm974, %v710, %v895
  %v1032 = vsel %vm974, %v711, %v897
  %v1033 = vsel %vm974, %v712, %v899
  %v1034 = vsel %vm974, %v713, %v901
  %v1035 = vsel %vm974, %v714, %v903
  %v1036 = vsel %vm974, %v715, %v905
  %v1037 = vsel %vm974, %v716, %v907
  %v1038 = vsel %vm974, %v717, %v909
  %v1039 = vld [vmem:[%s3] sm:$0xff]
  %v1040 = vld [vmem:[%s3 + $0x8] sm:$0xff]
  %v1041 = vld [vmem:[%s3 + $0x10] sm:$0xff]
  %v1042 = vld [vmem:[%s3 + $0x18] sm:$0xff]
  %v1043 = vld [vmem:[%s3 + $0x20] sm:$0xff]
  %v1044 = vld [vmem:[%s3 + $0x28] sm:$0xff]
  %v1045 = vld [vmem:[%s3 + $0x30] sm:$0xff]
  %v1046 = vld [vmem:[%s3 + $0x38] sm:$0xff]
  %v1047 = vld [vmem:[%s3 + $0x40] sm:$0xff]
  %v1048 = vld [vmem:[%s3 + $0x48] sm:$0xff]
  %v1049 = vld [vmem:[%s3 + $0x50] sm:$0xff]
  %v1050 = vld [vmem:[%s3 + $0x58] sm:$0xff]
  %v1051 = vld [vmem:[%s3 + $0x60] sm:$0xff]
  %v1052 = vld [vmem:[%s3 + $0x68] sm:$0xff]
  %v1053 = vld [vmem:[%s3 + $0x70] sm:$0xff]
  %v1054 = vld [vmem:[%s3 + $0x78] sm:$0xff]
  %v1055 = vld [vmem:[%s3 + $0x80] sm:$0xff]
  %v1056 = vld [vmem:[%s3 + $0x88] sm:$0xff]
  %v1057 = vld [vmem:[%s3 + $0x90] sm:$0xff]
  %v1058 = vld [vmem:[%s3 + $0x98] sm:$0xff]
  %v1059 = vld [vmem:[%s3 + $0xa0] sm:$0xff]
  %v1060 = vld [vmem:[%s3 + $0xa8] sm:$0xff]
  %v1061 = vld [vmem:[%s3 + $0xb0] sm:$0xff]
  %v1062 = vld [vmem:[%s3 + $0xb8] sm:$0xff]
  %v1063 = vld [vmem:[%s3 + $0xc0] sm:$0xff]
  %v1064 = vld [vmem:[%s3 + $0xc8] sm:$0xff]
  %v1065 = vld [vmem:[%s3 + $0xd0] sm:$0xff]
  %v1066 = vld [vmem:[%s3 + $0xd8] sm:$0xff]
  %v1067 = vld [vmem:[%s3 + $0xe0] sm:$0xff]
  %v1068 = vld [vmem:[%s3 + $0xe8] sm:$0xff]
  %v1069 = vld [vmem:[%s3 + $0xf0] sm:$0xff]
  %v1070 = vld [vmem:[%s3 + $0xf8] sm:$0xff]
  %v1071 = vld [vmem:[%s3 + $0x100] sm:$0xff]
  %v1072 = vld [vmem:[%s3 + $0x108] sm:$0xff]
  %v1073 = vld [vmem:[%s3 + $0x110] sm:$0xff]
  %v1074 = vld [vmem:[%s3 + $0x118] sm:$0xff]
  %v1075 = vld [vmem:[%s3 + $0x120] sm:$0xff]
  %v1076 = vld [vmem:[%s3 + $0x128] sm:$0xff]
  %v1077 = vld [vmem:[%s3 + $0x130] sm:$0xff]
  %v1078 = vld [vmem:[%s3 + $0x138] sm:$0xff]
  %v1079 = vld [vmem:[%s3 + $0x140] sm:$0xff]
  %v1080 = vld [vmem:[%s3 + $0x148] sm:$0xff]
  %v1081 = vld [vmem:[%s3 + $0x150] sm:$0xff]
  %v1082 = vld [vmem:[%s3 + $0x158] sm:$0xff]
  %v1083 = vld [vmem:[%s3 + $0x160] sm:$0xff]
  %v1084 = vld [vmem:[%s3 + $0x168] sm:$0xff]
  %v1085 = vld [vmem:[%s3 + $0x170] sm:$0xff]
  %v1086 = vld [vmem:[%s3 + $0x178] sm:$0xff]
  %v1087 = vld [vmem:[%s3 + $0x180] sm:$0xff]
  %v1088 = vld [vmem:[%s3 + $0x188] sm:$0xff]
  %v1089 = vld [vmem:[%s3 + $0x190] sm:$0xff]
  %v1090 = vld [vmem:[%s3 + $0x198] sm:$0xff]
  %v1091 = vld [vmem:[%s3 + $0x1a0] sm:$0xff]
  %v1092 = vld [vmem:[%s3 + $0x1a8] sm:$0xff]
  %v1093 = vld [vmem:[%s3 + $0x1b0] sm:$0xff]
  %v1094 = vld [vmem:[%s3 + $0x1b8] sm:$0xff]
  %v1095 = vld [vmem:[%s3 + $0x1c0] sm:$0xff]
  %v1096 = vld [vmem:[%s3 + $0x1c8] sm:$0xff]
  %v1097 = vld [vmem:[%s3 + $0x1d0] sm:$0xff]
  %v1098 = vld [vmem:[%s3 + $0x1d8] sm:$0xff]
  %v1099 = vld [vmem:[%s3 + $0x1e0] sm:$0xff]
  %v1100 = vld [vmem:[%s3 + $0x1e8] sm:$0xff]
  %v1101 = vld [vmem:[%s3 + $0x1f0] sm:$0xff]
  %v1102 = vld [vmem:[%s3 + $0x1f8] sm:$0xff]
  %v1103 = vpack.c.bf16 %v976, %v975
  %v1104 = vpack.c.bf16 %v978, %v977
  %v1105 = vpack.c.bf16 %v980, %v979
  %v1106 = vpack.c.bf16 %v982, %v981
  %v1107 = vpack.c.bf16 %v984, %v983
  %v1108 = vpack.c.bf16 %v986, %v985
  %v1109 = vpack.c.bf16 %v988, %v987
  %v1110 = vpack.c.bf16 %v990, %v989
  %v1111 = vpack.c.bf16 %v992, %v991
  %v1112 = vpack.c.bf16 %v994, %v993
  %v1113 = vpack.c.bf16 %v996, %v995
  %v1114 = vpack.c.bf16 %v998, %v997
  %v1115 = vpack.c.bf16 %v1000, %v999
  %v1116 = vpack.c.bf16 %v1002, %v1001
  %v1117 = vpack.c.bf16 %v1004, %v1003
  %v1118 = vpack.c.bf16 %v1006, %v1005
  %v1119 = vpack.c.bf16 %v1008, %v1007
  %v1120 = vpack.c.bf16 %v1010, %v1009
  %v1121 = vpack.c.bf16 %v1012, %v1011
  %v1122 = vpack.c.bf16 %v1014, %v1013
  %v1123 = vpack.c.bf16 %v1016, %v1015
  %v1124 = vpack.c.bf16 %v1018, %v1017
  %v1125 = vpack.c.bf16 %v1020, %v1019
  %v1126 = vpack.c.bf16 %v1022, %v1021
  %v1127 = vpack.c.bf16 %v1024, %v1023
  %v1128 = vpack.c.bf16 %v1026, %v1025
  %v1129 = vpack.c.bf16 %v1028, %v1027
  %v1130 = vpack.c.bf16 %v1030, %v1029
  %v1131 = vpack.c.bf16 %v1032, %v1031
  %v1132 = vpack.c.bf16 %v1034, %v1033
  %v1133 = vpack.c.bf16 %v1036, %v1035
  %v1134 = vpack.c.bf16 %v1038, %v1037
  %v1135 = vld [vmem:[%s4] sm:$0xf]
  %vm1136 = vcmask 64512
  %v1138 = vsel %vm1136, %v1103, 0
  %v1141 = vsel %vm1136, %v1104, 0
  %v1144 = vsel %vm1136, %v1105, 0
  %v1147 = vsel %vm1136, %v1106, 0
  %v1150 = vsel %vm1136, %v1107, 0
  %v1153 = vsel %vm1136, %v1108, 0
  %v1156 = vsel %vm1136, %v1109, 0
  %v1159 = vsel %vm1136, %v1110, 0
  %v1162 = vsel %vm1136, %v1111, 0
  %v1165 = vsel %vm1136, %v1112, 0
  %v1168 = vsel %vm1136, %v1113, 0
  %v1171 = vsel %vm1136, %v1114, 0
  %v1174 = vsel %vm1136, %v1115, 0
  %v1177 = vsel %vm1136, %v1116, 0
  %v1180 = vsel %vm1136, %v1117, 0
  %v1183 = vsel %vm1136, %v1118, 0
  %v1186 = vsel %vm1136, %v1119, 0
  %v1189 = vsel %vm1136, %v1120, 0
  %v1192 = vsel %vm1136, %v1121, 0
  %v1195 = vsel %vm1136, %v1122, 0
  %v1198 = vsel %vm1136, %v1123, 0
  %v1201 = vsel %vm1136, %v1124, 0
  %v1204 = vsel %vm1136, %v1125, 0
  %v1207 = vsel %vm1136, %v1126, 0
  %v1210 = vsel %vm1136, %v1127, 0
  %v1213 = vsel %vm1136, %v1128, 0
  %v1216 = vsel %vm1136, %v1129, 0
  %v1219 = vsel %vm1136, %v1130, 0
  %v1222 = vsel %vm1136, %v1131, 0
  %v1225 = vsel %vm1136, %v1132, 0
  %v1228 = vsel %vm1136, %v1133, 0
  %v1231 = vsel %vm1136, %v1134, 0
  %vm1233 = vcmask 1043456
  %v1235 = vsel %vm1233, %v1135, 0
  %1237 = vmatprep.subr.bf16.mxu0 0
  %1238 = vmatpush1.bf16.msra.mxu0 0
  %1239 = vmatprep.subr.bf16.mxu0 0
  %1240 = vmatpush1.bf16.msra.mxu0 0
  %1241 = vmatprep.subr.bf16.mxu0 0
  %1242 = vmatpush1.bf16.msra.mxu0 0
  %1243 = vmatprep.subr.bf16.mxu0 0
  %1244 = vmatpush1.bf16.msra.mxu0 0
  %1245 = vmatprep.subr.bf16.mxu0 0
  %1246 = vmatpush1.bf16.msra.mxu0 0
  %1247 = vmatprep.subr.bf16.mxu0 0
  %1248 = vmatpush1.bf16.msra.mxu0 0
  %1249 = vmatprep.subr.bf16.mxu0 0
  %1250 = vmatpush1.bf16.msra.mxu0 0
  %1251 = vmatprep.subr.bf16.mxu0 0
  %1252 = vmatpush1.bf16.msra.mxu0 %v1235
  %1253 = vmatprep.subr.bf16.mxu0 0
  %1254 = vmatpush2.bf16.msra.mxu0 0
  %1255 = vmatprep.subr.bf16.mxu0 0
  %1256 = vmatpush2.bf16.msra.mxu0 0
  %1257 = vmatprep.subr.bf16.mxu0 0
  %1258 = vmatpush2.bf16.msra.mxu0 0
  %1259 = vmatprep.subr.bf16.mxu0 0
  %1260 = vmatpush2.bf16.msra.mxu0 0
  %1261 = vmatprep.subr.bf16.mxu0 0
  %1262 = vmatpush2.bf16.msra.mxu0 0
  %1263 = vmatprep.subr.bf16.mxu0 0
  %1264 = vmatpush2.bf16.msra.mxu0 0
  %1265 = vmatprep.subr.bf16.mxu0 0
  %1266 = vmatpush2.bf16.msra.mxu0 0
  %1267 = vmatprep.subr.bf16.mxu0 0
  %1268 = vmatpush2.bf16.msra.mxu0 0
  %1269 = vmatprep.mubr.bf16.mxu0 0
  %1270 = vmatmul.mubr.bf16.gmra.mxu0 %v1138
  %v1271 = vpop.f32.mrf.mxu0
  %v1272 = vadd.f32 0.0, %v1271
  %v1273 = vpop.f32.mrf.mxu0
  %v1274 = vpop.f32.mrf.mxu0
  %v1275 = vadd.f32 0.0, %v1274
  %v1276 = vpop.f32.mrf.mxu0
  %1277 = vmatprep.mubr.bf16.mxu0 0
  %1278 = vmatmul.mubr.bf16.gmra.mxu0 %v1141
  %v1279 = vpop.f32.mrf.mxu0
  %v1280 = vadd.f32 0.0, %v1279
  %v1281 = vpop.f32.mrf.mxu0
  %v1282 = vpop.f32.mrf.mxu0
  %v1283 = vadd.f32 0.0, %v1282
  %v1284 = vpop.f32.mrf.mxu0
  %1285 = vmatprep.mubr.bf16.mxu0 0
  %1286 = vmatmul.mubr.bf16.gmra.mxu0 %v1144
  %v1287 = vpop.f32.mrf.mxu0
  %v1288 = vadd.f32 0.0, %v1287
  %v1289 = vpop.f32.mrf.mxu0
  %v1290 = vpop.f32.mrf.mxu0
  %v1291 = vadd.f32 0.0, %v1290
  %v1292 = vpop.f32.mrf.mxu0
  %1293 = vmatprep.mubr.bf16.mxu0 0
  %1294 = vmatmul.mubr.bf16.gmra.mxu0 %v1147
  %v1295 = vpop.f32.mrf.mxu0
  %v1296 = vadd.f32 0.0, %v1295
  %v1297 = vpop.f32.mrf.mxu0
  %v1298 = vpop.f32.mrf.mxu0
  %v1299 = vadd.f32 0.0, %v1298
  %v1300 = vpop.f32.mrf.mxu0
  %1301 = vmatprep.mubr.bf16.mxu0 0
  %1302 = vmatmul.mubr.bf16.gmra.mxu0 %v1150
  %v1303 = vpop.f32.mrf.mxu0
  %v1304 = vadd.f32 0.0, %v1303
  %v1305 = vpop.f32.mrf.mxu0
  %v1306 = vpop.f32.mrf.mxu0
  %v1307 = vadd.f32 0.0, %v1306
  %v1308 = vpop.f32.mrf.mxu0
  %1309 = vmatprep.mubr.bf16.mxu0 0
  %1310 = vmatmul.mubr.bf16.gmra.mxu0 %v1153
  %v1311 = vpop.f32.mrf.mxu0
  %v1312 = vadd.f32 0.0, %v1311
  %v1313 = vpop.f32.mrf.mxu0
  %v1314 = vpop.f32.mrf.mxu0
  %v1315 = vadd.f32 0.0, %v1314
  %v1316 = vpop.f32.mrf.mxu0
  %1317 = vmatprep.mubr.bf16.mxu0 0
  %1318 = vmatmul.mubr.bf16.gmra.mxu0 %v1156
  %v1319 = vpop.f32.mrf.mxu0
  %v1320 = vadd.f32 0.0, %v1319
  %v1321 = vpop.f32.mrf.mxu0
  %v1322 = vpop.f32.mrf.mxu0
  %v1323 = vadd.f32 0.0, %v1322
  %v1324 = vpop.f32.mrf.mxu0
  %1325 = vmatprep.mubr.bf16.mxu0 0
  %1326 = vmatmul.mubr.bf16.gmra.mxu0 %v1159
  %v1327 = vpop.f32.mrf.mxu0
  %v1328 = vadd.f32 0.0, %v1327
  %v1329 = vpop.f32.mrf.mxu0
  %v1330 = vpop.f32.mrf.mxu0
  %v1331 = vadd.f32 0.0, %v1330
  %v1332 = vpop.f32.mrf.mxu0
  %1333 = vmatprep.mubr.bf16.mxu0 0
  %1334 = vmatmul.mubr.bf16.gmra.mxu0 %v1162
  %v1335 = vpop.f32.mrf.mxu0
  %v1336 = vadd.f32 0.0, %v1335
  %v1337 = vpop.f32.mrf.mxu0
  %v1338 = vpop.f32.mrf.mxu0
  %v1339 = vadd.f32 0.0, %v1338
  %v1340 = vpop.f32.mrf.mxu0
  %1341 = vmatprep.mubr.bf16.mxu0 0
  %1342 = vmatmul.mubr.bf16.gmra.mxu0 %v1165
  %v1343 = vpop.f32.mrf.mxu0
  %v1344 = vadd.f32 0.0, %v1343
  %v1345 = vpop.f32.mrf.mxu0
  %v1346 = vpop.f32.mrf.mxu0
  %v1347 = vadd.f32 0.0, %v1346
  %v1348 = vpop.f32.mrf.mxu0
  %1349 = vmatprep.mubr.bf16.mxu0 0
  %1350 = vmatmul.mubr.bf16.gmra.mxu0 %v1168
  %v1351 = vpop.f32.mrf.mxu0
  %v1352 = vadd.f32 0.0, %v1351
  %v1353 = vpop.f32.mrf.mxu0
  %v1354 = vpop.f32.mrf.mxu0
  %v1355 = vadd.f32 0.0, %v1354
  %v1356 = vpop.f32.mrf.mxu0
  %1357 = vmatprep.mubr.bf16.mxu0 0
  %1358 = vmatmul.mubr.bf16.gmra.mxu0 %v1171
  %v1359 = vpop.f32.mrf.mxu0
  %v1360 = vadd.f32 0.0, %v1359
  %v1361 = vpop.f32.mrf.mxu0
  %v1362 = vpop.f32.mrf.mxu0
  %v1363 = vadd.f32 0.0, %v1362
  %v1364 = vpop.f32.mrf.mxu0
  %1365 = vmatprep.mubr.bf16.mxu0 0
  %1366 = vmatmul.mubr.bf16.gmra.mxu0 %v1174
  %v1367 = vpop.f32.mrf.mxu0
  %v1368 = vadd.f32 0.0, %v1367
  %v1369 = vpop.f32.mrf.mxu0
  %v1370 = vpop.f32.mrf.mxu0
  %v1371 = vadd.f32 0.0, %v1370
  %v1372 = vpop.f32.mrf.mxu0
  %1373 = vmatprep.mubr.bf16.mxu0 0
  %1374 = vmatmul.mubr.bf16.gmra.mxu0 %v1177
  %v1375 = vpop.f32.mrf.mxu0
  %v1376 = vadd.f32 0.0, %v1375
  %v1377 = vpop.f32.mrf.mxu0
  %v1378 = vpop.f32.mrf.mxu0
  %v1379 = vadd.f32 0.0, %v1378
  %v1380 = vpop.f32.mrf.mxu0
  %1381 = vmatprep.mubr.bf16.mxu0 0
  %1382 = vmatmul.mubr.bf16.gmra.mxu0 %v1180
  %v1383 = vpop.f32.mrf.mxu0
  %v1384 = vadd.f32 0.0, %v1383
  %v1385 = vpop.f32.mrf.mxu0
  %v1386 = vpop.f32.mrf.mxu0
  %v1387 = vadd.f32 0.0, %v1386
  %v1388 = vpop.f32.mrf.mxu0
  %1389 = vmatprep.mubr.bf16.mxu0 0
  %1390 = vmatmul.mubr.bf16.gmra.mxu0 %v1183
  %v1391 = vpop.f32.mrf.mxu0
  %v1392 = vadd.f32 0.0, %v1391
  %v1393 = vpop.f32.mrf.mxu0
  %v1394 = vpop.f32.mrf.mxu0
  %v1395 = vadd.f32 0.0, %v1394
  %v1396 = vpop.f32.mrf.mxu0
  %1397 = vmatprep.mubr.bf16.mxu0 0
  %1398 = vmatmul.mubr.bf16.gmra.mxu0 %v1186
  %v1399 = vpop.f32.mrf.mxu0
  %v1400 = vadd.f32 0.0, %v1399
  %v1401 = vpop.f32.mrf.mxu0
  %v1402 = vpop.f32.mrf.mxu0
  %v1403 = vadd.f32 0.0, %v1402
  %v1404 = vpop.f32.mrf.mxu0
  %1405 = vmatprep.mubr.bf16.mxu0 0
  %1406 = vmatmul.mubr.bf16.gmra.mxu0 %v1189
  %v1407 = vpop.f32.mrf.mxu0
  %v1408 = vadd.f32 0.0, %v1407
  %v1409 = vpop.f32.mrf.mxu0
  %v1410 = vpop.f32.mrf.mxu0
  %v1411 = vadd.f32 0.0, %v1410
  %v1412 = vpop.f32.mrf.mxu0
  %1413 = vmatprep.mubr.bf16.mxu0 0
  %1414 = vmatmul.mubr.bf16.gmra.mxu0 %v1192
  %v1415 = vpop.f32.mrf.mxu0
  %v1416 = vadd.f32 0.0, %v1415
  %v1417 = vpop.f32.mrf.mxu0
  %v1418 = vpop.f32.mrf.mxu0
  %v1419 = vadd.f32 0.0, %v1418
  %v1420 = vpop.f32.mrf.mxu0
  %1421 = vmatprep.mubr.bf16.mxu0 0
  %1422 = vmatmul.mubr.bf16.gmra.mxu0 %v1195
  %v1423 = vpop.f32.mrf.mxu0
  %v1424 = vadd.f32 0.0, %v1423
  %v1425 = vpop.f32.mrf.mxu0
  %v1426 = vpop.f32.mrf.mxu0
  %v1427 = vadd.f32 0.0, %v1426
  %v1428 = vpop.f32.mrf.mxu0
  %1429 = vmatprep.mubr.bf16.mxu0 0
  %1430 = vmatmul.mubr.bf16.gmra.mxu0 %v1198
  %v1431 = vpop.f32.mrf.mxu0
  %v1432 = vadd.f32 0.0, %v1431
  %v1433 = vpop.f32.mrf.mxu0
  %v1434 = vpop.f32.mrf.mxu0
  %v1435 = vadd.f32 0.0, %v1434
  %v1436 = vpop.f32.mrf.mxu0
  %1437 = vmatprep.mubr.bf16.mxu0 0
  %1438 = vmatmul.mubr.bf16.gmra.mxu0 %v1201
  %v1439 = vpop.f32.mrf.mxu0
  %v1440 = vadd.f32 0.0, %v1439
  %v1441 = vpop.f32.mrf.mxu0
  %v1442 = vpop.f32.mrf.mxu0
  %v1443 = vadd.f32 0.0, %v1442
  %v1444 = vpop.f32.mrf.mxu0
  %1445 = vmatprep.mubr.bf16.mxu0 0
  %1446 = vmatmul.mubr.bf16.gmra.mxu0 %v1204
  %v1447 = vpop.f32.mrf.mxu0
  %v1448 = vadd.f32 0.0, %v1447
  %v1449 = vpop.f32.mrf.mxu0
  %v1450 = vpop.f32.mrf.mxu0
  %v1451 = vadd.f32 0.0, %v1450
  %v1452 = vpop.f32.mrf.mxu0
  %1453 = vmatprep.mubr.bf16.mxu0 0
  %1454 = vmatmul.mubr.bf16.gmra.mxu0 %v1207
  %v1455 = vpop.f32.mrf.mxu0
  %v1456 = vadd.f32 0.0, %v1455
  %v1457 = vpop.f32.mrf.mxu0
  %v1458 = vpop.f32.mrf.mxu0
  %v1459 = vadd.f32 0.0, %v1458
  %v1460 = vpop.f32.mrf.mxu0
  %1461 = vmatprep.mubr.bf16.mxu0 0
  %1462 = vmatmul.mubr.bf16.gmra.mxu0 %v1210
  %v1463 = vpop.f32.mrf.mxu0
  %v1464 = vadd.f32 0.0, %v1463
  %v1465 = vpop.f32.mrf.mxu0
  %v1466 = vpop.f32.mrf.mxu0
  %v1467 = vadd.f32 0.0, %v1466
  %v1468 = vpop.f32.mrf.mxu0
  %1469 = vmatprep.mubr.bf16.mxu0 0
  %1470 = vmatmul.mubr.bf16.gmra.mxu0 %v1213
  %v1471 = vpop.f32.mrf.mxu0
  %v1472 = vadd.f32 0.0, %v1471
  %v1473 = vpop.f32.mrf.mxu0
  %v1474 = vpop.f32.mrf.mxu0
  %v1475 = vadd.f32 0.0, %v1474
  %v1476 = vpop.f32.mrf.mxu0
  %1477 = vmatprep.mubr.bf16.mxu0 0
  %1478 = vmatmul.mubr.bf16.gmra.mxu0 %v1216
  %v1479 = vpop.f32.mrf.mxu0
  %v1480 = vadd.f32 0.0, %v1479
  %v1481 = vpop.f32.mrf.mxu0
  %v1482 = vpop.f32.mrf.mxu0
  %v1483 = vadd.f32 0.0, %v1482
  %v1484 = vpop.f32.mrf.mxu0
  %1485 = vmatprep.mubr.bf16.mxu0 0
  %1486 = vmatmul.mubr.bf16.gmra.mxu0 %v1219
  %v1487 = vpop.f32.mrf.mxu0
  %v1488 = vadd.f32 0.0, %v1487
  %v1489 = vpop.f32.mrf.mxu0
  %v1490 = vpop.f32.mrf.mxu0
  %v1491 = vadd.f32 0.0, %v1490
  %v1492 = vpop.f32.mrf.mxu0
  %1493 = vmatprep.mubr.bf16.mxu0 0
  %1494 = vmatmul.mubr.bf16.gmra.mxu0 %v1222
  %v1495 = vpop.f32.mrf.mxu0
  %v1496 = vadd.f32 0.0, %v1495
  %v1497 = vpop.f32.mrf.mxu0
  %v1498 = vpop.f32.mrf.mxu0
  %v1499 = vadd.f32 0.0, %v1498
  %v1500 = vpop.f32.mrf.mxu0
  %1501 = vmatprep.mubr.bf16.mxu0 0
  %1502 = vmatmul.mubr.bf16.gmra.mxu0 %v1225
  %v1503 = vpop.f32.mrf.mxu0
  %v1504 = vadd.f32 0.0, %v1503
  %v1505 = vpop.f32.mrf.mxu0
  %v1506 = vpop.f32.mrf.mxu0
  %v1507 = vadd.f32 0.0, %v1506
  %v1508 = vpop.f32.mrf.mxu0
  %1509 = vmatprep.mubr.bf16.mxu0 0
  %1510 = vmatmul.mubr.bf16.gmra.mxu0 %v1228
  %v1511 = vpop.f32.mrf.mxu0
  %v1512 = vadd.f32 0.0, %v1511
  %v1513 = vpop.f32.mrf.mxu0
  %v1514 = vpop.f32.mrf.mxu0
  %v1515 = vadd.f32 0.0, %v1514
  %v1516 = vpop.f32.mrf.mxu0
  %1517 = vmatprep.mubr.bf16.mxu0 0
  %1518 = vmatmul.mubr.bf16.gmra.mxu0 %v1231
  %v1519 = vpop.f32.mrf.mxu0
  %v1520 = vadd.f32 0.0, %v1519
  %v1521 = vpop.f32.mrf.mxu0
  %v1522 = vpop.f32.mrf.mxu0
  %v1523 = vadd.f32 0.0, %v1522
  %v1524 = vpop.f32.mrf.mxu0
  %1525 = vdwg.mxu0
  %1527 = vset.pattern.permute.xlu0 0
  %1528 = vperm.xlu0 %1527, %v1039
  %v1529 = vpop.permute.xlu0 %1528
  %1531 = vset.pattern.permute.xlu0 0
  %1532 = vperm.xlu0 %1531, %v1040
  %v1533 = vpop.permute.xlu0 %1532
  %1535 = vset.pattern.permute.xlu0 0
  %1536 = vperm.xlu0 %1535, %v1041
  %v1537 = vpop.permute.xlu0 %1536
  %1539 = vset.pattern.permute.xlu0 0
  %1540 = vperm.xlu0 %1539, %v1042
  %v1541 = vpop.permute.xlu0 %1540
  %1543 = vset.pattern.permute.xlu0 0
  %1544 = vperm.xlu0 %1543, %v1043
  %v1545 = vpop.permute.xlu0 %1544
  %1547 = vset.pattern.permute.xlu0 0
  %1548 = vperm.xlu0 %1547, %v1044
  %v1549 = vpop.permute.xlu0 %1548
  %1551 = vset.pattern.permute.xlu0 0
  %1552 = vperm.xlu0 %1551, %v1045
  %v1553 = vpop.permute.xlu0 %1552
  %1555 = vset.pattern.permute.xlu0 0
  %1556 = vperm.xlu0 %1555, %v1046
  %v1557 = vpop.permute.xlu0 %1556
  %1559 = vset.pattern.permute.xlu0 0
  %1560 = vperm.xlu0 %1559, %v1047
  %v1561 = vpop.permute.xlu0 %1560
  %1563 = vset.pattern.permute.xlu0 0
  %1564 = vperm.xlu0 %1563, %v1048
  %v1565 = vpop.permute.xlu0 %1564
  %1567 = vset.pattern.permute.xlu0 0
  %1568 = vperm.xlu0 %1567, %v1049
  %v1569 = vpop.permute.xlu0 %1568
  %1571 = vset.pattern.permute.xlu0 0
  %1572 = vperm.xlu0 %1571, %v1050
  %v1573 = vpop.permute.xlu0 %1572
  %1575 = vset.pattern.permute.xlu0 0
  %1576 = vperm.xlu0 %1575, %v1051
  %v1577 = vpop.permute.xlu0 %1576
  %1579 = vset.pattern.permute.xlu0 0
  %1580 = vperm.xlu0 %1579, %v1052
  %v1581 = vpop.permute.xlu0 %1580
  %1583 = vset.pattern.permute.xlu0 0
  %1584 = vperm.xlu0 %1583, %v1053
  %v1585 = vpop.permute.xlu0 %1584
  %1587 = vset.pattern.permute.xlu0 0
  %1588 = vperm.xlu0 %1587, %v1054
  %v1589 = vpop.permute.xlu0 %1588
  %1591 = vset.pattern.permute.xlu0 0
  %1592 = vperm.xlu0 %1591, %v1055
  %v1593 = vpop.permute.xlu0 %1592
  %1595 = vset.pattern.permute.xlu0 0
  %1596 = vperm.xlu0 %1595, %v1056
  %v1597 = vpop.permute.xlu0 %1596
  %1599 = vset.pattern.permute.xlu0 0
  %1600 = vperm.xlu0 %1599, %v1057
  %v1601 = vpop.permute.xlu0 %1600
  %1603 = vset.pattern.permute.xlu0 0
  %1604 = vperm.xlu0 %1603, %v1058
  %v1605 = vpop.permute.xlu0 %1604
  %1607 = vset.pattern.permute.xlu0 0
  %1608 = vperm.xlu0 %1607, %v1059
  %v1609 = vpop.permute.xlu0 %1608
  %1611 = vset.pattern.permute.xlu0 0
  %1612 = vperm.xlu0 %1611, %v1060
  %v1613 = vpop.permute.xlu0 %1612
  %1615 = vset.pattern.permute.xlu0 0
  %1616 = vperm.xlu0 %1615, %v1061
  %v1617 = vpop.permute.xlu0 %1616
  %1619 = vset.pattern.permute.xlu0 0
  %1620 = vperm.xlu0 %1619, %v1062
  %v1621 = vpop.permute.xlu0 %1620
  %1623 = vset.pattern.permute.xlu0 0
  %1624 = vperm.xlu0 %1623, %v1063
  %v1625 = vpop.permute.xlu0 %1624
  %1627 = vset.pattern.permute.xlu0 0
  %1628 = vperm.xlu0 %1627, %v1064
  %v1629 = vpop.permute.xlu0 %1628
  %1631 = vset.pattern.permute.xlu0 0
  %1632 = vperm.xlu0 %1631, %v1065
  %v1633 = vpop.permute.xlu0 %1632
  %1635 = vset.pattern.permute.xlu0 0
  %1636 = vperm.xlu0 %1635, %v1066
  %v1637 = vpop.permute.xlu0 %1636
  %1639 = vset.pattern.permute.xlu0 0
  %1640 = vperm.xlu0 %1639, %v1067
  %v1641 = vpop.permute.xlu0 %1640
  %1643 = vset.pattern.permute.xlu0 0
  %1644 = vperm.xlu0 %1643, %v1068
  %v1645 = vpop.permute.xlu0 %1644
  %1647 = vset.pattern.permute.xlu0 0
  %1648 = vperm.xlu0 %1647, %v1069
  %v1649 = vpop.permute.xlu0 %1648
  %1651 = vset.pattern.permute.xlu0 0
  %1652 = vperm.xlu0 %1651, %v1070
  %v1653 = vpop.permute.xlu0 %1652
  %1655 = vset.pattern.permute.xlu0 0
  %1656 = vperm.xlu0 %1655, %v1071
  %v1657 = vpop.permute.xlu0 %1656
  %1659 = vset.pattern.permute.xlu0 0
  %1660 = vperm.xlu0 %1659, %v1072
  %v1661 = vpop.permute.xlu0 %1660
  %1663 = vset.pattern.permute.xlu0 0
  %1664 = vperm.xlu0 %1663, %v1073
  %v1665 = vpop.permute.xlu0 %1664
  %1667 = vset.pattern.permute.xlu0 0
  %1668 = vperm.xlu0 %1667, %v1074
  %v1669 = vpop.permute.xlu0 %1668
  %1671 = vset.pattern.permute.xlu0 0
  %1672 = vperm.xlu0 %1671, %v1075
  %v1673 = vpop.permute.xlu0 %1672
  %1675 = vset.pattern.permute.xlu0 0
  %1676 = vperm.xlu0 %1675, %v1076
  %v1677 = vpop.permute.xlu0 %1676
  %1679 = vset.pattern.permute.xlu0 0
  %1680 = vperm.xlu0 %1679, %v1077
  %v1681 = vpop.permute.xlu0 %1680
  %1683 = vset.pattern.permute.xlu0 0
  %1684 = vperm.xlu0 %1683, %v1078
  %v1685 = vpop.permute.xlu0 %1684
  %1687 = vset.pattern.permute.xlu0 0
  %1688 = vperm.xlu0 %1687, %v1079
  %v1689 = vpop.permute.xlu0 %1688
  %1691 = vset.pattern.permute.xlu0 0
  %1692 = vperm.xlu0 %1691, %v1080
  %v1693 = vpop.permute.xlu0 %1692
  %1695 = vset.pattern.permute.xlu0 0
  %1696 = vperm.xlu0 %1695, %v1081
  %v1697 = vpop.permute.xlu0 %1696
  %1699 = vset.pattern.permute.xlu0 0
  %1700 = vperm.xlu0 %1699, %v1082
  %v1701 = vpop.permute.xlu0 %1700
  %1703 = vset.pattern.permute.xlu0 0
  %1704 = vperm.xlu0 %1703, %v1083
  %v1705 = vpop.permute.xlu0 %1704
  %1707 = vset.pattern.permute.xlu0 0
  %1708 = vperm.xlu0 %1707, %v1084
  %v1709 = vpop.permute.xlu0 %1708
  %1711 = vset.pattern.permute.xlu0 0
  %1712 = vperm.xlu0 %1711, %v1085
  %v1713 = vpop.permute.xlu0 %1712
  %1715 = vset.pattern.permute.xlu0 0
  %1716 = vperm.xlu0 %1715, %v1086
  %v1717 = vpop.permute.xlu0 %1716
  %1719 = vset.pattern.permute.xlu0 0
  %1720 = vperm.xlu0 %1719, %v1087
  %v1721 = vpop.permute.xlu0 %1720
  %1723 = vset.pattern.permute.xlu0 0
  %1724 = vperm.xlu0 %1723, %v1088
  %v1725 = vpop.permute.xlu0 %1724
  %1727 = vset.pattern.permute.xlu0 0
  %1728 = vperm.xlu0 %1727, %v1089
  %v1729 = vpop.permute.xlu0 %1728
  %1731 = vset.pattern.permute.xlu0 0
  %1732 = vperm.xlu0 %1731, %v1090
  %v1733 = vpop.permute.xlu0 %1732
  %1735 = vset.pattern.permute.xlu0 0
  %1736 = vperm.xlu0 %1735, %v1091
  %v1737 = vpop.permute.xlu0 %1736
  %1739 = vset.pattern.permute.xlu0 0
  %1740 = vperm.xlu0 %1739, %v1092
  %v1741 = vpop.permute.xlu0 %1740
  %1743 = vset.pattern.permute.xlu0 0
  %1744 = vperm.xlu0 %1743, %v1093
  %v1745 = vpop.permute.xlu0 %1744
  %1747 = vset.pattern.permute.xlu0 0
  %1748 = vperm.xlu0 %1747, %v1094
  %v1749 = vpop.permute.xlu0 %1748
  %1751 = vset.pattern.permute.xlu0 0
  %1752 = vperm.xlu0 %1751, %v1095
  %v1753 = vpop.permute.xlu0 %1752
  %1755 = vset.pattern.permute.xlu0 0
  %1756 = vperm.xlu0 %1755, %v1096
  %v1757 = vpop.permute.xlu0 %1756
  %1759 = vset.pattern.permute.xlu0 0
  %1760 = vperm.xlu0 %1759, %v1097
  %v1761 = vpop.permute.xlu0 %1760
  %1763 = vset.pattern.permute.xlu0 0
  %1764 = vperm.xlu0 %1763, %v1098
  %v1765 = vpop.permute.xlu0 %1764
  %1767 = vset.pattern.permute.xlu0 0
  %1768 = vperm.xlu0 %1767, %v1099
  %v1769 = vpop.permute.xlu0 %1768
  %1771 = vset.pattern.permute.xlu0 0
  %1772 = vperm.xlu0 %1771, %v1100
  %v1773 = vpop.permute.xlu0 %1772
  %1775 = vset.pattern.permute.xlu0 0
  %1776 = vperm.xlu0 %1775, %v1101
  %v1777 = vpop.permute.xlu0 %1776
  %1779 = vset.pattern.permute.xlu0 0
  %1780 = vperm.xlu0 %1779, %v1102
  %v1781 = vpop.permute.xlu0 %1780
  %vm1782 = vcmask 1046528
  %v1783 = vrot.slane %v1529, 1
  %v1784 = vrot.slane %v1533, 1
  %v1785 = vsel %vm1782, %v1783, %v1784
  %v1786 = vrot.slane %v1537, 1
  %v1787 = vsel %vm1782, %v1784, %v1786
  %v1788 = vrot.slane %v1541, 1
  %v1789 = vsel %vm1782, %v1786, %v1788
  %v1790 = vrot.slane %v1545, 1
  %v1791 = vsel %vm1782, %v1788, %v1790
  %v1792 = vrot.slane %v1549, 1
  %v1793 = vsel %vm1782, %v1790, %v1792
  %v1794 = vrot.slane %v1553, 1
  %v1795 = vsel %vm1782, %v1792, %v1794
  %v1796 = vrot.slane %v1557, 1
  %v1797 = vsel %vm1782, %v1794, %v1796
  %v1798 = vrot.slane %v1561, 1
  %v1799 = vsel %vm1782, %v1796, %v1798
  %v1800 = vrot.slane %v1565, 1
  %v1801 = vsel %vm1782, %v1798, %v1800
  %v1802 = vrot.slane %v1569, 1
  %v1803 = vsel %vm1782, %v1800, %v1802
  %v1804 = vrot.slane %v1573, 1
  %v1805 = vsel %vm1782, %v1802, %v1804
  %v1806 = vrot.slane %v1577, 1
  %v1807 = vsel %vm1782, %v1804, %v1806
  %v1808 = vrot.slane %v1581, 1
  %v1809 = vsel %vm1782, %v1806, %v1808
  %v1810 = vrot.slane %v1585, 1
  %v1811 = vsel %vm1782, %v1808, %v1810
  %v1812 = vrot.slane %v1589, 1
  %v1813 = vsel %vm1782, %v1810, %v1812
  %v1814 = vrot.slane %v1593, 1
  %v1815 = vsel %vm1782, %v1812, %v1814
  %v1816 = vrot.slane %v1597, 1
  %v1817 = vsel %vm1782, %v1814, %v1816
  %v1818 = vrot.slane %v1601, 1
  %v1819 = vsel %vm1782, %v1816, %v1818
  %v1820 = vrot.slane %v1605, 1
  %v1821 = vsel %vm1782, %v1818, %v1820
  %v1822 = vrot.slane %v1609, 1
  %v1823 = vsel %vm1782, %v1820, %v1822
  %v1824 = vrot.slane %v1613, 1
  %v1825 = vsel %vm1782, %v1822, %v1824
  %v1826 = vrot.slane %v1617, 1
  %v1827 = vsel %vm1782, %v1824, %v1826
  %v1828 = vrot.slane %v1621, 1
  %v1829 = vsel %vm1782, %v1826, %v1828
  %v1830 = vrot.slane %v1625, 1
  %v1831 = vsel %vm1782, %v1828, %v1830
  %v1832 = vrot.slane %v1629, 1
  %v1833 = vsel %vm1782, %v1830, %v1832
  %v1834 = vrot.slane %v1633, 1
  %v1835 = vsel %vm1782, %v1832, %v1834
  %v1836 = vrot.slane %v1637, 1
  %v1837 = vsel %vm1782, %v1834, %v1836
  %v1838 = vrot.slane %v1641, 1
  %v1839 = vsel %vm1782, %v1836, %v1838
  %v1840 = vrot.slane %v1645, 1
  %v1841 = vsel %vm1782, %v1838, %v1840
  %v1842 = vrot.slane %v1649, 1
  %v1843 = vsel %vm1782, %v1840, %v1842
  %v1844 = vrot.slane %v1653, 1
  %v1845 = vsel %vm1782, %v1842, %v1844
  %v1846 = vrot.slane %v1657, 1
  %v1847 = vsel %vm1782, %v1844, %v1846
  %v1848 = vrot.slane %v1661, 1
  %v1849 = vsel %vm1782, %v1846, %v1848
  %v1850 = vrot.slane %v1665, 1
  %v1851 = vsel %vm1782, %v1848, %v1850
  %v1852 = vrot.slane %v1669, 1
  %v1853 = vsel %vm1782, %v1850, %v1852
  %v1854 = vrot.slane %v1673, 1
  %v1855 = vsel %vm1782, %v1852, %v1854
  %v1856 = vrot.slane %v1677, 1
  %v1857 = vsel %vm1782, %v1854, %v1856
  %v1858 = vrot.slane %v1681, 1
  %v1859 = vsel %vm1782, %v1856, %v1858
  %v1860 = vrot.slane %v1685, 1
  %v1861 = vsel %vm1782, %v1858, %v1860
  %v1862 = vrot.slane %v1689, 1
  %v1863 = vsel %vm1782, %v1860, %v1862
  %v1864 = vrot.slane %v1693, 1
  %v1865 = vsel %vm1782, %v1862, %v1864
  %v1866 = vrot.slane %v1697, 1
  %v1867 = vsel %vm1782, %v1864, %v1866
  %v1868 = vrot.slane %v1701, 1
  %v1869 = vsel %vm1782, %v1866, %v1868
  %v1870 = vrot.slane %v1705, 1
  %v1871 = vsel %vm1782, %v1868, %v1870
  %v1872 = vrot.slane %v1709, 1
  %v1873 = vsel %vm1782, %v1870, %v1872
  %v1874 = vrot.slane %v1713, 1
  %v1875 = vsel %vm1782, %v1872, %v1874
  %v1876 = vrot.slane %v1717, 1
  %v1877 = vsel %vm1782, %v1874, %v1876
  %v1878 = vrot.slane %v1721, 1
  %v1879 = vsel %vm1782, %v1876, %v1878
  %v1880 = vrot.slane %v1725, 1
  %v1881 = vsel %vm1782, %v1878, %v1880
  %v1882 = vrot.slane %v1729, 1
  %v1883 = vsel %vm1782, %v1880, %v1882
  %v1884 = vrot.slane %v1733, 1
  %v1885 = vsel %vm1782, %v1882, %v1884
  %v1886 = vrot.slane %v1737, 1
  %v1887 = vsel %vm1782, %v1884, %v1886
  %v1888 = vrot.slane %v1741, 1
  %v1889 = vsel %vm1782, %v1886, %v1888
  %v1890 = vrot.slane %v1745, 1
  %v1891 = vsel %vm1782, %v1888, %v1890
  %v1892 = vrot.slane %v1749, 1
  %v1893 = vsel %vm1782, %v1890, %v1892
  %v1894 = vrot.slane %v1753, 1
  %v1895 = vsel %vm1782, %v1892, %v1894
  %v1896 = vrot.slane %v1757, 1
  %v1897 = vsel %vm1782, %v1894, %v1896
  %v1898 = vrot.slane %v1761, 1
  %v1899 = vsel %vm1782, %v1896, %v1898
  %v1900 = vrot.slane %v1765, 1
  %v1901 = vsel %vm1782, %v1898, %v1900
  %v1902 = vrot.slane %v1769, 1
  %v1903 = vsel %vm1782, %v1900, %v1902
  %v1904 = vrot.slane %v1773, 1
  %v1905 = vsel %vm1782, %v1902, %v1904
  %v1906 = vrot.slane %v1777, 1
  %v1907 = vsel %vm1782, %v1904, %v1906
  %v1908 = vrot.slane %v1781, 1
  %v1909 = vsel %vm1782, %v1906, %v1908
  %v1975 = vmul.f32 %v1783, 0.0
  %v1976 = vmul.f32 %v1785, 0.0
  %v1977 = vmul.f32 %v1787, 0.0
  %v1978 = vmul.f32 %v1272, %v1789
  %v1979 = vmul.f32 %v1275, %v1791
  %v1980 = vmul.f32 %v1280, %v1793
  %v1981 = vmul.f32 %v1283, %v1795
  %v1982 = vmul.f32 %v1288, %v1797
  %v1983 = vmul.f32 %v1291, %v1799
  %v1984 = vmul.f32 %v1296, %v1801
  %v1985 = vmul.f32 %v1299, %v1803
  %v1986 = vmul.f32 %v1304, %v1805
  %v1987 = vmul.f32 %v1307, %v1807
  %v1988 = vmul.f32 %v1312, %v1809
  %v1989 = vmul.f32 %v1315, %v1811
  %v1990 = vmul.f32 %v1320, %v1813
  %v1991 = vmul.f32 %v1323, %v1815
  %v1992 = vmul.f32 %v1328, %v1817
  %v1993 = vmul.f32 %v1331, %v1819
  %v1994 = vmul.f32 %v1336, %v1821
  %v1995 = vmul.f32 %v1339, %v1823
  %v1996 = vmul.f32 %v1344, %v1825
  %v1997 = vmul.f32 %v1347, %v1827
  %v1998 = vmul.f32 %v1352, %v1829
  %v1999 = vmul.f32 %v1355, %v1831
  %v2000 = vmul.f32 %v1360, %v1833
  %v2001 = vmul.f32 %v1363, %v1835
  %v2002 = vmul.f32 %v1368, %v1837
  %v2003 = vmul.f32 %v1371, %v1839
  %v2004 = vmul.f32 %v1376, %v1841
  %v2005 = vmul.f32 %v1379, %v1843
  %v2006 = vmul.f32 %v1384, %v1845
  %v2007 = vmul.f32 %v1387, %v1847
  %v2008 = vmul.f32 %v1392, %v1849
  %v2009 = vmul.f32 %v1395, %v1851
  %v2010 = vmul.f32 %v1400, %v1853
  %v2011 = vmul.f32 %v1403, %v1855
  %v2012 = vmul.f32 %v1408, %v1857
  %v2013 = vmul.f32 %v1411, %v1859
  %v2014 = vmul.f32 %v1416, %v1861
  %v2015 = vmul.f32 %v1419, %v1863
  %v2016 = vmul.f32 %v1424, %v1865
  %v2017 = vmul.f32 %v1427, %v1867
  %v2018 = vmul.f32 %v1432, %v1869
  %v2019 = vmul.f32 %v1435, %v1871
  %v2020 = vmul.f32 %v1440, %v1873
  %v2021 = vmul.f32 %v1443, %v1875
  %v2022 = vmul.f32 %v1448, %v1877
  %v2023 = vmul.f32 %v1451, %v1879
  %v2024 = vmul.f32 %v1456, %v1881
  %v2025 = vmul.f32 %v1459, %v1883
  %v2026 = vmul.f32 %v1464, %v1885
  %v2027 = vmul.f32 %v1467, %v1887
  %v2028 = vmul.f32 %v1472, %v1889
  %v2029 = vmul.f32 %v1475, %v1891
  %v2030 = vmul.f32 %v1480, %v1893
  %v2031 = vmul.f32 %v1483, %v1895
  %v2032 = vmul.f32 %v1488, %v1897
  %v2033 = vmul.f32 %v1491, %v1899
  %v2034 = vmul.f32 %v1496, %v1901
  %v2035 = vmul.f32 %v1499, %v1903
  %v2036 = vmul.f32 %v1504, %v1905
  %v2037 = vmul.f32 %v1507, %v1907
  %v2038 = vmul.f32 %v1512, %v1909
  %v2039 = vmul.f32 %v1515, %v1908
  %v2040 = vadd.f32 %v1975, 0.0
  %v2041 = vadd.f32 %v1976, 0.0
  %v2042 = vadd.f32 %v1977, 0.0
  %v2043 = vadd.f32 %v1978, 0.0
  %v2044 = vadd.f32 %v1979, 0.0
  %v2045 = vadd.f32 %v1980, 0.0
  %v2046 = vadd.f32 %v1981, 0.0
  %v2047 = vadd.f32 %v1982, 0.0
  %v2048 = vadd.f32 %v1983, 0.0
  %v2049 = vadd.f32 %v1984, 0.0
  %v2050 = vadd.f32 %v1985, 0.0
  %v2051 = vadd.f32 %v1986, 0.0
  %v2052 = vadd.f32 %v1987, 0.0
  %v2053 = vadd.f32 %v1988, 0.0
  %v2054 = vadd.f32 %v1989, 0.0
  %v2055 = vadd.f32 %v1990, 0.0
  %v2056 = vadd.f32 %v1991, 0.0
  %v2057 = vadd.f32 %v1992, 0.0
  %v2058 = vadd.f32 %v1993, 0.0
  %v2059 = vadd.f32 %v1994, 0.0
  %v2060 = vadd.f32 %v1995, 0.0
  %v2061 = vadd.f32 %v1996, 0.0
  %v2062 = vadd.f32 %v1997, 0.0
  %v2063 = vadd.f32 %v1998, 0.0
  %v2064 = vadd.f32 %v1999, 0.0
  %v2065 = vadd.f32 %v2000, 0.0
  %v2066 = vadd.f32 %v2001, 0.0
  %v2067 = vadd.f32 %v2002, 0.0
  %v2068 = vadd.f32 %v2003, 0.0
  %v2069 = vadd.f32 %v2004, 0.0
  %v2070 = vadd.f32 %v2005, 0.0
  %v2071 = vadd.f32 %v2006, 0.0
  %v2072 = vadd.f32 %v2007, 0.0
  %v2073 = vadd.f32 %v2008, 0.0
  %v2074 = vadd.f32 %v2009, 0.0
  %v2075 = vadd.f32 %v2010, 0.0
  %v2076 = vadd.f32 %v2011, 0.0
  %v2077 = vadd.f32 %v2012, 0.0
  %v2078 = vadd.f32 %v2013, 0.0
  %v2079 = vadd.f32 %v2014, 0.0
  %v2080 = vadd.f32 %v2015, 0.0
  %v2081 = vadd.f32 %v2016, 0.0
  %v2082 = vadd.f32 %v2017, 0.0
  %v2083 = vadd.f32 %v2018, 0.0
  %v2084 = vadd.f32 %v2019, 0.0
  %v2085 = vadd.f32 %v2020, 0.0
  %v2086 = vadd.f32 %v2021, 0.0
  %v2087 = vadd.f32 %v2022, 0.0
  %v2088 = vadd.f32 %v2023, 0.0
  %v2089 = vadd.f32 %v2024, 0.0
  %v2090 = vadd.f32 %v2025, 0.0
  %v2091 = vadd.f32 %v2026, 0.0
  %v2092 = vadd.f32 %v2027, 0.0
  %v2093 = vadd.f32 %v2028, 0.0
  %v2094 = vadd.f32 %v2029, 0.0
  %v2095 = vadd.f32 %v2030, 0.0
  %v2096 = vadd.f32 %v2031, 0.0
  %v2097 = vadd.f32 %v2032, 0.0
  %v2098 = vadd.f32 %v2033, 0.0
  %v2099 = vadd.f32 %v2034, 0.0
  %v2100 = vadd.f32 %v2035, 0.0
  %v2101 = vadd.f32 %v2036, 0.0
  %v2102 = vadd.f32 %v2037, 0.0
  %v2103 = vadd.f32 %v2038, 0.0
  %v2104 = vadd.f32 %v2039, 0.0
  %2105 = vset.pattern.permute.xlu0 1
  %2106 = vperm.xlu0 %2105, %v1039
  %v2107 = vpop.permute.xlu0 %2106
  %2109 = vset.pattern.permute.xlu0 1
  %2110 = vperm.xlu0 %2109, %v1040
  %v2111 = vpop.permute.xlu0 %2110
  %2113 = vset.pattern.permute.xlu0 1
  %2114 = vperm.xlu0 %2113, %v1041
  %v2115 = vpop.permute.xlu0 %2114
  %2117 = vset.pattern.permute.xlu0 1
  %2118 = vperm.xlu0 %2117, %v1042
  %v2119 = vpop.permute.xlu0 %2118
  %2121 = vset.pattern.permute.xlu0 1
  %2122 = vperm.xlu0 %2121, %v1043
  %v2123 = vpop.permute.xlu0 %2122
  %2125 = vset.pattern.permute.xlu0 1
  %2126 = vperm.xlu0 %2125, %v1044
  %v2127 = vpop.permute.xlu0 %2126
  %2129 = vset.pattern.permute.xlu0 1
  %2130 = vperm.xlu0 %2129, %v1045
  %v2131 = vpop.permute.xlu0 %2130
  %2133 = vset.pattern.permute.xlu0 1
  %2134 = vperm.xlu0 %2133, %v1046
  %v2135 = vpop.permute.xlu0 %2134
  %2137 = vset.pattern.permute.xlu0 1
  %2138 = vperm.xlu0 %2137, %v1047
  %v2139 = vpop.permute.xlu0 %2138
  %2141 = vset.pattern.permute.xlu0 1
  %2142 = vperm.xlu0 %2141, %v1048
  %v2143 = vpop.permute.xlu0 %2142
  %2145 = vset.pattern.permute.xlu0 1
  %2146 = vperm.xlu0 %2145, %v1049
  %v2147 = vpop.permute.xlu0 %2146
  %2149 = vset.pattern.permute.xlu0 1
  %2150 = vperm.xlu0 %2149, %v1050
  %v2151 = vpop.permute.xlu0 %2150
  %2153 = vset.pattern.permute.xlu0 1
  %2154 = vperm.xlu0 %2153, %v1051
  %v2155 = vpop.permute.xlu0 %2154
  %2157 = vset.pattern.permute.xlu0 1
  %2158 = vperm.xlu0 %2157, %v1052
  %v2159 = vpop.permute.xlu0 %2158
  %2161 = vset.pattern.permute.xlu0 1
  %2162 = vperm.xlu0 %2161, %v1053
  %v2163 = vpop.permute.xlu0 %2162
  %2165 = vset.pattern.permute.xlu0 1
  %2166 = vperm.xlu0 %2165, %v1054
  %v2167 = vpop.permute.xlu0 %2166
  %2169 = vset.pattern.permute.xlu0 1
  %2170 = vperm.xlu0 %2169, %v1055
  %v2171 = vpop.permute.xlu0 %2170
  %2173 = vset.pattern.permute.xlu0 1
  %2174 = vperm.xlu0 %2173, %v1056
  %v2175 = vpop.permute.xlu0 %2174
  %2177 = vset.pattern.permute.xlu0 1
  %2178 = vperm.xlu0 %2177, %v1057
  %v2179 = vpop.permute.xlu0 %2178
  %2181 = vset.pattern.permute.xlu0 1
  %2182 = vperm.xlu0 %2181, %v1058
  %v2183 = vpop.permute.xlu0 %2182
  %2185 = vset.pattern.permute.xlu0 1
  %2186 = vperm.xlu0 %2185, %v1059
  %v2187 = vpop.permute.xlu0 %2186
  %2189 = vset.pattern.permute.xlu0 1
  %2190 = vperm.xlu0 %2189, %v1060
  %v2191 = vpop.permute.xlu0 %2190
  %2193 = vset.pattern.permute.xlu0 1
  %2194 = vperm.xlu0 %2193, %v1061
  %v2195 = vpop.permute.xlu0 %2194
  %2197 = vset.pattern.permute.xlu0 1
  %2198 = vperm.xlu0 %2197, %v1062
  %v2199 = vpop.permute.xlu0 %2198
  %2201 = vset.pattern.permute.xlu0 1
  %2202 = vperm.xlu0 %2201, %v1063
  %v2203 = vpop.permute.xlu0 %2202
  %2205 = vset.pattern.permute.xlu0 1
  %2206 = vperm.xlu0 %2205, %v1064
  %v2207 = vpop.permute.xlu0 %2206
  %2209 = vset.pattern.permute.xlu0 1
  %2210 = vperm.xlu0 %2209, %v1065
  %v2211 = vpop.permute.xlu0 %2210
  %2213 = vset.pattern.permute.xlu0 1
  %2214 = vperm.xlu0 %2213, %v1066
  %v2215 = vpop.permute.xlu0 %2214
  %2217 = vset.pattern.permute.xlu0 1
  %2218 = vperm.xlu0 %2217, %v1067
  %v2219 = vpop.permute.xlu0 %2218
  %2221 = vset.pattern.permute.xlu0 1
  %2222 = vperm.xlu0 %2221, %v1068
  %v2223 = vpop.permute.xlu0 %2222
  %2225 = vset.pattern.permute.xlu0 1
  %2226 = vperm.xlu0 %2225, %v1069
  %v2227 = vpop.permute.xlu0 %2226
  %2229 = vset.pattern.permute.xlu0 1
  %2230 = vperm.xlu0 %2229, %v1070
  %v2231 = vpop.permute.xlu0 %2230
  %2233 = vset.pattern.permute.xlu0 1
  %2234 = vperm.xlu0 %2233, %v1071
  %v2235 = vpop.permute.xlu0 %2234
  %2237 = vset.pattern.permute.xlu0 1
  %2238 = vperm.xlu0 %2237, %v1072
  %v2239 = vpop.permute.xlu0 %2238
  %2241 = vset.pattern.permute.xlu0 1
  %2242 = vperm.xlu0 %2241, %v1073
  %v2243 = vpop.permute.xlu0 %2242
  %2245 = vset.pattern.permute.xlu0 1
  %2246 = vperm.xlu0 %2245, %v1074
  %v2247 = vpop.permute.xlu0 %2246
  %2249 = vset.pattern.permute.xlu0 1
  %2250 = vperm.xlu0 %2249, %v1075
  %v2251 = vpop.permute.xlu0 %2250
  %2253 = vset.pattern.permute.xlu0 1
  %2254 = vperm.xlu0 %2253, %v1076
  %v2255 = vpop.permute.xlu0 %2254
  %2257 = vset.pattern.permute.xlu0 1
  %2258 = vperm.xlu0 %2257, %v1077
  %v2259 = vpop.permute.xlu0 %2258
  %2261 = vset.pattern.permute.xlu0 1
  %2262 = vperm.xlu0 %2261, %v1078
  %v2263 = vpop.permute.xlu0 %2262
  %2265 = vset.pattern.permute.xlu0 1
  %2266 = vperm.xlu0 %2265, %v1079
  %v2267 = vpop.permute.xlu0 %2266
  %2269 = vset.pattern.permute.xlu0 1
  %2270 = vperm.xlu0 %2269, %v1080
  %v2271 = vpop.permute.xlu0 %2270
  %2273 = vset.pattern.permute.xlu0 1
  %2274 = vperm.xlu0 %2273, %v1081
  %v2275 = vpop.permute.xlu0 %2274
  %2277 = vset.pattern.permute.xlu0 1
  %2278 = vperm.xlu0 %2277, %v1082
  %v2279 = vpop.permute.xlu0 %2278
  %2281 = vset.pattern.permute.xlu0 1
  %2282 = vperm.xlu0 %2281, %v1083
  %v2283 = vpop.permute.xlu0 %2282
  %2285 = vset.pattern.permute.xlu0 1
  %2286 = vperm.xlu0 %2285, %v1084
  %v2287 = vpop.permute.xlu0 %2286
  %2289 = vset.pattern.permute.xlu0 1
  %2290 = vperm.xlu0 %2289, %v1085
  %v2291 = vpop.permute.xlu0 %2290
  %2293 = vset.pattern.permute.xlu0 1
  %2294 = vperm.xlu0 %2293, %v1086
  %v2295 = vpop.permute.xlu0 %2294
  %2297 = vset.pattern.permute.xlu0 1
  %2298 = vperm.xlu0 %2297, %v1087
  %v2299 = vpop.permute.xlu0 %2298
  %2301 = vset.pattern.permute.xlu0 1
  %2302 = vperm.xlu0 %2301, %v1088
  %v2303 = vpop.permute.xlu0 %2302
  %2305 = vset.pattern.permute.xlu0 1
  %2306 = vperm.xlu0 %2305, %v1089
  %v2307 = vpop.permute.xlu0 %2306
  %2309 = vset.pattern.permute.xlu0 1
  %2310 = vperm.xlu0 %2309, %v1090
  %v2311 = vpop.permute.xlu0 %2310
  %2313 = vset.pattern.permute.xlu0 1
  %2314 = vperm.xlu0 %2313, %v1091
  %v2315 = vpop.permute.xlu0 %2314
  %2317 = vset.pattern.permute.xlu0 1
  %2318 = vperm.xlu0 %2317, %v1092
  %v2319 = vpop.permute.xlu0 %2318
  %2321 = vset.pattern.permute.xlu0 1
  %2322 = vperm.xlu0 %2321, %v1093
  %v2323 = vpop.permute.xlu0 %2322
  %2325 = vset.pattern.permute.xlu0 1
  %2326 = vperm.xlu0 %2325, %v1094
  %v2327 = vpop.permute.xlu0 %2326
  %2329 = vset.pattern.permute.xlu0 1
  %2330 = vperm.xlu0 %2329, %v1095
  %v2331 = vpop.permute.xlu0 %2330
  %2333 = vset.pattern.permute.xlu0 1
  %2334 = vperm.xlu0 %2333, %v1096
  %v2335 = vpop.permute.xlu0 %2334
  %2337 = vset.pattern.permute.xlu0 1
  %2338 = vperm.xlu0 %2337, %v1097
  %v2339 = vpop.permute.xlu0 %2338
  %2341 = vset.pattern.permute.xlu0 1
  %2342 = vperm.xlu0 %2341, %v1098
  %v2343 = vpop.permute.xlu0 %2342
  %2345 = vset.pattern.permute.xlu0 1
  %2346 = vperm.xlu0 %2345, %v1099
  %v2347 = vpop.permute.xlu0 %2346
  %2349 = vset.pattern.permute.xlu0 1
  %2350 = vperm.xlu0 %2349, %v1100
  %v2351 = vpop.permute.xlu0 %2350
  %2353 = vset.pattern.permute.xlu0 1
  %2354 = vperm.xlu0 %2353, %v1101
  %v2355 = vpop.permute.xlu0 %2354
  %2357 = vset.pattern.permute.xlu0 1
  %2358 = vperm.xlu0 %2357, %v1102
  %v2359 = vpop.permute.xlu0 %2358
  %v2361 = vmul.f32 %v2107, 0.0
  %v2362 = vmul.f32 %v2111, 0.0
  %v2363 = vmul.f32 %v1272, %v2115
  %v2364 = vmul.f32 %v1275, %v2119
  %v2365 = vmul.f32 %v1280, %v2123
  %v2366 = vmul.f32 %v1283, %v2127
  %v2367 = vmul.f32 %v1288, %v2131
  %v2368 = vmul.f32 %v1291, %v2135
  %v2369 = vmul.f32 %v1296, %v2139
  %v2370 = vmul.f32 %v1299, %v2143
  %v2371 = vmul.f32 %v1304, %v2147
  %v2372 = vmul.f32 %v1307, %v2151
  %v2373 = vmul.f32 %v1312, %v2155
  %v2374 = vmul.f32 %v1315, %v2159
  %v2375 = vmul.f32 %v1320, %v2163
  %v2376 = vmul.f32 %v1323, %v2167
  %v2377 = vmul.f32 %v1328, %v2171
  %v2378 = vmul.f32 %v1331, %v2175
  %v2379 = vmul.f32 %v1336, %v2179
  %v2380 = vmul.f32 %v1339, %v2183
  %v2381 = vmul.f32 %v1344, %v2187
  %v2382 = vmul.f32 %v1347, %v2191
  %v2383 = vmul.f32 %v1352, %v2195
  %v2384 = vmul.f32 %v1355, %v2199
  %v2385 = vmul.f32 %v1360, %v2203
  %v2386 = vmul.f32 %v1363, %v2207
  %v2387 = vmul.f32 %v1368, %v2211
  %v2388 = vmul.f32 %v1371, %v2215
  %v2389 = vmul.f32 %v1376, %v2219
  %v2390 = vmul.f32 %v1379, %v2223
  %v2391 = vmul.f32 %v1384, %v2227
  %v2392 = vmul.f32 %v1387, %v2231
  %v2393 = vmul.f32 %v1392, %v2235
  %v2394 = vmul.f32 %v1395, %v2239
  %v2395 = vmul.f32 %v1400, %v2243
  %v2396 = vmul.f32 %v1403, %v2247
  %v2397 = vmul.f32 %v1408, %v2251
  %v2398 = vmul.f32 %v1411, %v2255
  %v2399 = vmul.f32 %v1416, %v2259
  %v2400 = vmul.f32 %v1419, %v2263
  %v2401 = vmul.f32 %v1424, %v2267
  %v2402 = vmul.f32 %v1427, %v2271
  %v2403 = vmul.f32 %v1432, %v2275
  %v2404 = vmul.f32 %v1435, %v2279
  %v2405 = vmul.f32 %v1440, %v2283
  %v2406 = vmul.f32 %v1443, %v2287
  %v2407 = vmul.f32 %v1448, %v2291
  %v2408 = vmul.f32 %v1451, %v2295
  %v2409 = vmul.f32 %v1456, %v2299
  %v2410 = vmul.f32 %v1459, %v2303
  %v2411 = vmul.f32 %v1464, %v2307
  %v2412 = vmul.f32 %v1467, %v2311
  %v2413 = vmul.f32 %v1472, %v2315
  %v2414 = vmul.f32 %v1475, %v2319
  %v2415 = vmul.f32 %v1480, %v2323
  %v2416 = vmul.f32 %v1483, %v2327
  %v2417 = vmul.f32 %v1488, %v2331
  %v2418 = vmul.f32 %v1491, %v2335
  %v2419 = vmul.f32 %v1496, %v2339
  %v2420 = vmul.f32 %v1499, %v2343
  %v2421 = vmul.f32 %v1504, %v2347
  %v2422 = vmul.f32 %v1507, %v2351
  %v2423 = vmul.f32 %v1512, %v2355
  %v2424 = vmul.f32 %v1515, %v2359
  %v2489 = vrot.slane %v2361, 1
  %v2490 = vrot.slane %v2362, 1
  %v2491 = vsel %vm1782, %v2489, %v2490
  %v2492 = vrot.slane %v2363, 1
  %v2493 = vsel %vm1782, %v2490, %v2492
  %v2494 = vrot.slane %v2364, 1
  %v2495 = vsel %vm1782, %v2492, %v2494
  %v2496 = vrot.slane %v2365, 1
  %v2497 = vsel %vm1782, %v2494, %v2496
  %v2498 = vrot.slane %v2366, 1
  %v2499 = vsel %vm1782, %v2496, %v2498
  %v2500 = vrot.slane %v2367, 1
  %v2501 = vsel %vm1782, %v2498, %v2500
  %v2502 = vrot.slane %v2368, 1
  %v2503 = vsel %vm1782, %v2500, %v2502
  %v2504 = vrot.slane %v2369, 1
  %v2505 = vsel %vm1782, %v2502, %v2504
  %v2506 = vrot.slane %v2370, 1
  %v2507 = vsel %vm1782, %v2504, %v2506
  %v2508 = vrot.slane %v2371, 1
  %v2509 = vsel %vm1782, %v2506, %v2508
  %v2510 = vrot.slane %v2372, 1
  %v2511 = vsel %vm1782, %v2508, %v2510
  %v2512 = vrot.slane %v2373, 1
  %v2513 = vsel %vm1782, %v2510, %v2512
  %v2514 = vrot.slane %v2374, 1
  %v2515 = vsel %vm1782, %v2512, %v2514
  %v2516 = vrot.slane %v2375, 1
  %v2517 = vsel %vm1782, %v2514, %v2516
  %v2518 = vrot.slane %v2376, 1
  %v2519 = vsel %vm1782, %v2516, %v2518
  %v2520 = vrot.slane %v2377, 1
  %v2521 = vsel %vm1782, %v2518, %v2520
  %v2522 = vrot.slane %v2378, 1
  %v2523 = vsel %vm1782, %v2520, %v2522
  %v2524 = vrot.slane %v2379, 1
  %v2525 = vsel %vm1782, %v2522, %v2524
  %v2526 = vrot.slane %v2380, 1
  %v2527 = vsel %vm1782, %v2524, %v2526
  %v2528 = vrot.slane %v2381, 1
  %v2529 = vsel %vm1782, %v2526, %v2528
  %v2530 = vrot.slane %v2382, 1
  %v2531 = vsel %vm1782, %v2528, %v2530
  %v2532 = vrot.slane %v2383, 1
  %v2533 = vsel %vm1782, %v2530, %v2532
  %v2534 = vrot.slane %v2384, 1
  %v2535 = vsel %vm1782, %v2532, %v2534
  %v2536 = vrot.slane %v2385, 1
  %v2537 = vsel %vm1782, %v2534, %v2536
  %v2538 = vrot.slane %v2386, 1
  %v2539 = vsel %vm1782, %v2536, %v2538
  %v2540 = vrot.slane %v2387, 1
  %v2541 = vsel %vm1782, %v2538, %v2540
  %v2542 = vrot.slane %v2388, 1
  %v2543 = vsel %vm1782, %v2540, %v2542
  %v2544 = vrot.slane %v2389, 1
  %v2545 = vsel %vm1782, %v2542, %v2544
  %v2546 = vrot.slane %v2390, 1
  %v2547 = vsel %vm1782, %v2544, %v2546
  %v2548 = vrot.slane %v2391, 1
  %v2549 = vsel %vm1782, %v2546, %v2548
  %v2550 = vrot.slane %v2392, 1
  %v2551 = vsel %vm1782, %v2548, %v2550
  %v2552 = vrot.slane %v2393, 1
  %v2553 = vsel %vm1782, %v2550, %v2552
  %v2554 = vrot.slane %v2394, 1
  %v2555 = vsel %vm1782, %v2552, %v2554
  %v2556 = vrot.slane %v2395, 1
  %v2557 = vsel %vm1782, %v2554, %v2556
  %v2558 = vrot.slane %v2396, 1
  %v2559 = vsel %vm1782, %v2556, %v2558
  %v2560 = vrot.slane %v2397, 1
  %v2561 = vsel %vm1782, %v2558, %v2560
  %v2562 = vrot.slane %v2398, 1
  %v2563 = vsel %vm1782, %v2560, %v2562
  %v2564 = vrot.slane %v2399, 1
  %v2565 = vsel %vm1782, %v2562, %v2564
  %v2566 = vrot.slane %v2400, 1
  %v2567 = vsel %vm1782, %v2564, %v2566
  %v2568 = vrot.slane %v2401, 1
  %v2569 = vsel %vm1782, %v2566, %v2568
  %v2570 = vrot.slane %v2402, 1
  %v2571 = vsel %vm1782, %v2568, %v2570
  %v2572 = vrot.slane %v2403, 1
  %v2573 = vsel %vm1782, %v2570, %v2572
  %v2574 = vrot.slane %v2404, 1
  %v2575 = vsel %vm1782, %v2572, %v2574
  %v2576 = vrot.slane %v2405, 1
  %v2577 = vsel %vm1782, %v2574, %v2576
  %v2578 = vrot.slane %v2406, 1
  %v2579 = vsel %vm1782, %v2576, %v2578
  %v2580 = vrot.slane %v2407, 1
  %v2581 = vsel %vm1782, %v2578, %v2580
  %v2582 = vrot.slane %v2408, 1
  %v2583 = vsel %vm1782, %v2580, %v2582
  %v2584 = vrot.slane %v2409, 1
  %v2585 = vsel %vm1782, %v2582, %v2584
  %v2586 = vrot.slane %v2410, 1
  %v2587 = vsel %vm1782, %v2584, %v2586
  %v2588 = vrot.slane %v2411, 1
  %v2589 = vsel %vm1782, %v2586, %v2588
  %v2590 = vrot.slane %v2412, 1
  %v2591 = vsel %vm1782, %v2588, %v2590
  %v2592 = vrot.slane %v2413, 1
  %v2593 = vsel %vm1782, %v2590, %v2592
  %v2594 = vrot.slane %v2414, 1
  %v2595 = vsel %vm1782, %v2592, %v2594
  %v2596 = vrot.slane %v2415, 1
  %v2597 = vsel %vm1782, %v2594, %v2596
  %v2598 = vrot.slane %v2416, 1
  %v2599 = vsel %vm1782, %v2596, %v2598
  %v2600 = vrot.slane %v2417, 1
  %v2601 = vsel %vm1782, %v2598, %v2600
  %v2602 = vrot.slane %v2418, 1
  %v2603 = vsel %vm1782, %v2600, %v2602
  %v2604 = vrot.slane %v2419, 1
  %v2605 = vsel %vm1782, %v2602, %v2604
  %v2606 = vrot.slane %v2420, 1
  %v2607 = vsel %vm1782, %v2604, %v2606
  %v2608 = vrot.slane %v2421, 1
  %v2609 = vsel %vm1782, %v2606, %v2608
  %v2610 = vrot.slane %v2422, 1
  %v2611 = vsel %vm1782, %v2608, %v2610
  %v2612 = vrot.slane %v2423, 1
  %v2613 = vsel %vm1782, %v2610, %v2612
  %v2614 = vrot.slane %v2424, 1
  %v2615 = vsel %vm1782, %v2612, %v2614
  %2616 = vrot.lane.b32.xlu0 %v2489, 124
  %v2617 = vpop.permute.xlu0 %2616
  %2618 = vrot.lane.b32.xlu0 %v2491, 124
  %v2619 = vpop.permute.xlu0 %2618
  %2620 = vrot.lane.b32.xlu0 %v2493, 124
  %v2621 = vpop.permute.xlu0 %2620
  %2622 = vrot.lane.b32.xlu0 %v2495, 124
  %v2623 = vpop.permute.xlu0 %2622
  %2624 = vrot.lane.b32.xlu0 %v2497, 124
  %v2625 = vpop.permute.xlu0 %2624
  %2626 = vrot.lane.b32.xlu0 %v2499, 124
  %v2627 = vpop.permute.xlu0 %2626
  %2628 = vrot.lane.b32.xlu0 %v2501, 124
  %v2629 = vpop.permute.xlu0 %2628
  %2630 = vrot.lane.b32.xlu0 %v2503, 124
  %v2631 = vpop.permute.xlu0 %2630
  %2632 = vrot.lane.b32.xlu0 %v2505, 124
  %v2633 = vpop.permute.xlu0 %2632
  %2634 = vrot.lane.b32.xlu0 %v2507, 124
  %v2635 = vpop.permute.xlu0 %2634
  %2636 = vrot.lane.b32.xlu0 %v2509, 124
  %v2637 = vpop.permute.xlu0 %2636
  %2638 = vrot.lane.b32.xlu0 %v2511, 124
  %v2639 = vpop.permute.xlu0 %2638
  %2640 = vrot.lane.b32.xlu0 %v2513, 124
  %v2641 = vpop.permute.xlu0 %2640
  %2642 = vrot.lane.b32.xlu0 %v2515, 124
  %v2643 = vpop.permute.xlu0 %2642
  %2644 = vrot.lane.b32.xlu0 %v2517, 124
  %v2645 = vpop.permute.xlu0 %2644
  %2646 = vrot.lane.b32.xlu0 %v2519, 124
  %v2647 = vpop.permute.xlu0 %2646
  %2648 = vrot.lane.b32.xlu0 %v2521, 124
  %v2649 = vpop.permute.xlu0 %2648
  %2650 = vrot.lane.b32.xlu0 %v2523, 124
  %v2651 = vpop.permute.xlu0 %2650
  %2652 = vrot.lane.b32.xlu0 %v2525, 124
  %v2653 = vpop.permute.xlu0 %2652
  %2654 = vrot.lane.b32.xlu0 %v2527, 124
  %v2655 = vpop.permute.xlu0 %2654
  %2656 = vrot.lane.b32.xlu0 %v2529, 124
  %v2657 = vpop.permute.xlu0 %2656
  %2658 = vrot.lane.b32.xlu0 %v2531, 124
  %v2659 = vpop.permute.xlu0 %2658
  %2660 = vrot.lane.b32.xlu0 %v2533, 124
  %v2661 = vpop.permute.xlu0 %2660
  %2662 = vrot.lane.b32.xlu0 %v2535, 124
  %v2663 = vpop.permute.xlu0 %2662
  %2664 = vrot.lane.b32.xlu0 %v2537, 124
  %v2665 = vpop.permute.xlu0 %2664
  %2666 = vrot.lane.b32.xlu0 %v2539, 124
  %v2667 = vpop.permute.xlu0 %2666
  %2668 = vrot.lane.b32.xlu0 %v2541, 124
  %v2669 = vpop.permute.xlu0 %2668
  %2670 = vrot.lane.b32.xlu0 %v2543, 124
  %v2671 = vpop.permute.xlu0 %2670
  %2672 = vrot.lane.b32.xlu0 %v2545, 124
  %v2673 = vpop.permute.xlu0 %2672
  %2674 = vrot.lane.b32.xlu0 %v2547, 124
  %v2675 = vpop.permute.xlu0 %2674
  %2676 = vrot.lane.b32.xlu0 %v2549, 124
  %v2677 = vpop.permute.xlu0 %2676
  %2678 = vrot.lane.b32.xlu0 %v2551, 124
  %v2679 = vpop.permute.xlu0 %2678
  %2680 = vrot.lane.b32.xlu0 %v2553, 124
  %v2681 = vpop.permute.xlu0 %2680
  %2682 = vrot.lane.b32.xlu0 %v2555, 124
  %v2683 = vpop.permute.xlu0 %2682
  %2684 = vrot.lane.b32.xlu0 %v2557, 124
  %v2685 = vpop.permute.xlu0 %2684
  %2686 = vrot.lane.b32.xlu0 %v2559, 124
  %v2687 = vpop.permute.xlu0 %2686
  %2688 = vrot.lane.b32.xlu0 %v2561, 124
  %v2689 = vpop.permute.xlu0 %2688
  %2690 = vrot.lane.b32.xlu0 %v2563, 124
  %v2691 = vpop.permute.xlu0 %2690
  %2692 = vrot.lane.b32.xlu0 %v2565, 124
  %v2693 = vpop.permute.xlu0 %2692
  %2694 = vrot.lane.b32.xlu0 %v2567, 124
  %v2695 = vpop.permute.xlu0 %2694
  %2696 = vrot.lane.b32.xlu0 %v2569, 124
  %v2697 = vpop.permute.xlu0 %2696
  %2698 = vrot.lane.b32.xlu0 %v2571, 124
  %v2699 = vpop.permute.xlu0 %2698
  %2700 = vrot.lane.b32.xlu0 %v2573, 124
  %v2701 = vpop.permute.xlu0 %2700
  %2702 = vrot.lane.b32.xlu0 %v2575, 124
  %v2703 = vpop.permute.xlu0 %2702
  %2704 = vrot.lane.b32.xlu0 %v2577, 124
  %v2705 = vpop.permute.xlu0 %2704
  %2706 = vrot.lane.b32.xlu0 %v2579, 124
  %v2707 = vpop.permute.xlu0 %2706
  %2708 = vrot.lane.b32.xlu0 %v2581, 124
  %v2709 = vpop.permute.xlu0 %2708
  %2710 = vrot.lane.b32.xlu0 %v2583, 124
  %v2711 = vpop.permute.xlu0 %2710
  %2712 = vrot.lane.b32.xlu0 %v2585, 124
  %v2713 = vpop.permute.xlu0 %2712
  %2714 = vrot.lane.b32.xlu0 %v2587, 124
  %v2715 = vpop.permute.xlu0 %2714
  %2716 = vrot.lane.b32.xlu0 %v2589, 124
  %v2717 = vpop.permute.xlu0 %2716
  %2718 = vrot.lane.b32.xlu0 %v2591, 124
  %v2719 = vpop.permute.xlu0 %2718
  %2720 = vrot.lane.b32.xlu0 %v2593, 124
  %v2721 = vpop.permute.xlu0 %2720
  %2722 = vrot.lane.b32.xlu0 %v2595, 124
  %v2723 = vpop.permute.xlu0 %2722
  %2724 = vrot.lane.b32.xlu0 %v2597, 124
  %v2725 = vpop.permute.xlu0 %2724
  %2726 = vrot.lane.b32.xlu0 %v2599, 124
  %v2727 = vpop.permute.xlu0 %2726
  %2728 = vrot.lane.b32.xlu0 %v2601, 124
  %v2729 = vpop.permute.xlu0 %2728
  %2730 = vrot.lane.b32.xlu0 %v2603, 124
  %v2731 = vpop.permute.xlu0 %2730
  %2732 = vrot.lane.b32.xlu0 %v2605, 124
  %v2733 = vpop.permute.xlu0 %2732
  %2734 = vrot.lane.b32.xlu0 %v2607, 124
  %v2735 = vpop.permute.xlu0 %2734
  %2736 = vrot.lane.b32.xlu0 %v2609, 124
  %v2737 = vpop.permute.xlu0 %2736
  %2738 = vrot.lane.b32.xlu0 %v2611, 124
  %v2739 = vpop.permute.xlu0 %2738
  %2740 = vrot.lane.b32.xlu0 %v2613, 124
  %v2741 = vpop.permute.xlu0 %2740
  %2742 = vrot.lane.b32.xlu0 %v2615, 124
  %v2743 = vpop.permute.xlu0 %2742
  %2744 = vrot.lane.b32.xlu0 %v2614, 124
  %v2745 = vpop.permute.xlu0 %2744
  %v2811 = vadd.f32 %v2040, %v2617
  %v2812 = vadd.f32 %v2041, %v2619
  %v2813 = vadd.f32 %v2042, %v2621
  %v2814 = vadd.f32 %v2043, %v2623
  %v2815 = vadd.f32 %v2044, %v2625
  %v2816 = vadd.f32 %v2045, %v2627
  %v2817 = vadd.f32 %v2046, %v2629
  %v2818 = vadd.f32 %v2047, %v2631
  %v2819 = vadd.f32 %v2048, %v2633
  %v2820 = vadd.f32 %v2049, %v2635
  %v2821 = vadd.f32 %v2050, %v2637
  %v2822 = vadd.f32 %v2051, %v2639
  %v2823 = vadd.f32 %v2052, %v2641
  %v2824 = vadd.f32 %v2053, %v2643
  %v2825 = vadd.f32 %v2054, %v2645
  %v2826 = vadd.f32 %v2055, %v2647
  %v2827 = vadd.f32 %v2056, %v2649
  %v2828 = vadd.f32 %v2057, %v2651
  %v2829 = vadd.f32 %v2058, %v2653
  %v2830 = vadd.f32 %v2059, %v2655
  %v2831 = vadd.f32 %v2060, %v2657
  %v2832 = vadd.f32 %v2061, %v2659
  %v2833 = vadd.f32 %v2062, %v2661
  %v2834 = vadd.f32 %v2063, %v2663
  %v2835 = vadd.f32 %v2064, %v2665
  %v2836 = vadd.f32 %v2065, %v2667
  %v2837 = vadd.f32 %v2066, %v2669
  %v2838 = vadd.f32 %v2067, %v2671
  %v2839 = vadd.f32 %v2068, %v2673
  %v2840 = vadd.f32 %v2069, %v2675
  %v2841 = vadd.f32 %v2070, %v2677
  %v2842 = vadd.f32 %v2071, %v2679
  %v2843 = vadd.f32 %v2072, %v2681
  %v2844 = vadd.f32 %v2073, %v2683
  %v2845 = vadd.f32 %v2074, %v2685
  %v2846 = vadd.f32 %v2075, %v2687
  %v2847 = vadd.f32 %v2076, %v2689
  %v2848 = vadd.f32 %v2077, %v2691
  %v2849 = vadd.f32 %v2078, %v2693
  %v2850 = vadd.f32 %v2079, %v2695
  %v2851 = vadd.f32 %v2080, %v2697
  %v2852 = vadd.f32 %v2081, %v2699
  %v2853 = vadd.f32 %v2082, %v2701
  %v2854 = vadd.f32 %v2083, %v2703
  %v2855 = vadd.f32 %v2084, %v2705
  %v2856 = vadd.f32 %v2085, %v2707
  %v2857 = vadd.f32 %v2086, %v2709
  %v2858 = vadd.f32 %v2087, %v2711
  %v2859 = vadd.f32 %v2088, %v2713
  %v2860 = vadd.f32 %v2089, %v2715
  %v2861 = vadd.f32 %v2090, %v2717
  %v2862 = vadd.f32 %v2091, %v2719
  %v2863 = vadd.f32 %v2092, %v2721
  %v2864 = vadd.f32 %v2093, %v2723
  %v2865 = vadd.f32 %v2094, %v2725
  %v2866 = vadd.f32 %v2095, %v2727
  %v2867 = vadd.f32 %v2096, %v2729
  %v2868 = vadd.f32 %v2097, %v2731
  %v2869 = vadd.f32 %v2098, %v2733
  %v2870 = vadd.f32 %v2099, %v2735
  %v2871 = vadd.f32 %v2100, %v2737
  %v2872 = vadd.f32 %v2101, %v2739
  %v2873 = vadd.f32 %v2102, %v2741
  %v2874 = vadd.f32 %v2103, %v2743
  %v2875 = vadd.f32 %v2104, %v2745
  %2876 = vset.pattern.permute.xlu0 2
  %2877 = vperm.xlu0 %2876, %v1039
  %v2878 = vpop.permute.xlu0 %2877
  %2879 = vset.pattern.permute.xlu0 2
  %2880 = vperm.xlu0 %2879, %v1040
  %v2881 = vpop.permute.xlu0 %2880
  %2882 = vset.pattern.permute.xlu0 2
  %2883 = vperm.xlu0 %2882, %v1041
  %v2884 = vpop.permute.xlu0 %2883
  %2885 = vset.pattern.permute.xlu0 2
  %2886 = vperm.xlu0 %2885, %v1042
  %v2887 = vpop.permute.xlu0 %2886
  %2888 = vset.pattern.permute.xlu0 2
  %2889 = vperm.xlu0 %2888, %v1043
  %v2890 = vpop.permute.xlu0 %2889
  %2891 = vset.pattern.permute.xlu0 2
  %2892 = vperm.xlu0 %2891, %v1044
  %v2893 = vpop.permute.xlu0 %2892
  %2894 = vset.pattern.permute.xlu0 2
  %2895 = vperm.xlu0 %2894, %v1045
  %v2896 = vpop.permute.xlu0 %2895
  %2897 = vset.pattern.permute.xlu0 2
  %2898 = vperm.xlu0 %2897, %v1046
  %v2899 = vpop.permute.xlu0 %2898
  %2900 = vset.pattern.permute.xlu0 2
  %2901 = vperm.xlu0 %2900, %v1047
  %v2902 = vpop.permute.xlu0 %2901
  %2903 = vset.pattern.permute.xlu0 2
  %2904 = vperm.xlu0 %2903, %v1048
  %v2905 = vpop.permute.xlu0 %2904
  %2906 = vset.pattern.permute.xlu0 2
  %2907 = vperm.xlu0 %2906, %v1049
  %v2908 = vpop.permute.xlu0 %2907
  %2909 = vset.pattern.permute.xlu0 2
  %2910 = vperm.xlu0 %2909, %v1050
  %v2911 = vpop.permute.xlu0 %2910
  %2912 = vset.pattern.permute.xlu0 2
  %2913 = vperm.xlu0 %2912, %v1051
  %v2914 = vpop.permute.xlu0 %2913
  %2915 = vset.pattern.permute.xlu0 2
  %2916 = vperm.xlu0 %2915, %v1052
  %v2917 = vpop.permute.xlu0 %2916
  %2918 = vset.pattern.permute.xlu0 2
  %2919 = vperm.xlu0 %2918, %v1053
  %v2920 = vpop.permute.xlu0 %2919
  %2921 = vset.pattern.permute.xlu0 2
  %2922 = vperm.xlu0 %2921, %v1054
  %v2923 = vpop.permute.xlu0 %2922
  %2924 = vset.pattern.permute.xlu0 2
  %2925 = vperm.xlu0 %2924, %v1055
  %v2926 = vpop.permute.xlu0 %2925
  %2927 = vset.pattern.permute.xlu0 2
  %2928 = vperm.xlu0 %2927, %v1056
  %v2929 = vpop.permute.xlu0 %2928
  %2930 = vset.pattern.permute.xlu0 2
  %2931 = vperm.xlu0 %2930, %v1057
  %v2932 = vpop.permute.xlu0 %2931
  %2933 = vset.pattern.permute.xlu0 2
  %2934 = vperm.xlu0 %2933, %v1058
  %v2935 = vpop.permute.xlu0 %2934
  %2936 = vset.pattern.permute.xlu0 2
  %2937 = vperm.xlu0 %2936, %v1059
  %v2938 = vpop.permute.xlu0 %2937
  %2939 = vset.pattern.permute.xlu0 2
  %2940 = vperm.xlu0 %2939, %v1060
  %v2941 = vpop.permute.xlu0 %2940
  %2942 = vset.pattern.permute.xlu0 2
  %2943 = vperm.xlu0 %2942, %v1061
  %v2944 = vpop.permute.xlu0 %2943
  %2945 = vset.pattern.permute.xlu0 2
  %2946 = vperm.xlu0 %2945, %v1062
  %v2947 = vpop.permute.xlu0 %2946
  %2948 = vset.pattern.permute.xlu0 2
  %2949 = vperm.xlu0 %2948, %v1063
  %v2950 = vpop.permute.xlu0 %2949
  %2951 = vset.pattern.permute.xlu0 2
  %2952 = vperm.xlu0 %2951, %v1064
  %v2953 = vpop.permute.xlu0 %2952
  %2954 = vset.pattern.permute.xlu0 2
  %2955 = vperm.xlu0 %2954, %v1065
  %v2956 = vpop.permute.xlu0 %2955
  %2957 = vset.pattern.permute.xlu0 2
  %2958 = vperm.xlu0 %2957, %v1066
  %v2959 = vpop.permute.xlu0 %2958
  %2960 = vset.pattern.permute.xlu0 2
  %2961 = vperm.xlu0 %2960, %v1067
  %v2962 = vpop.permute.xlu0 %2961
  %2963 = vset.pattern.permute.xlu0 2
  %2964 = vperm.xlu0 %2963, %v1068
  %v2965 = vpop.permute.xlu0 %2964
  %2966 = vset.pattern.permute.xlu0 2
  %2967 = vperm.xlu0 %2966, %v1069
  %v2968 = vpop.permute.xlu0 %2967
  %2969 = vset.pattern.permute.xlu0 2
  %2970 = vperm.xlu0 %2969, %v1070
  %v2971 = vpop.permute.xlu0 %2970
  %2972 = vset.pattern.permute.xlu0 2
  %2973 = vperm.xlu0 %2972, %v1071
  %v2974 = vpop.permute.xlu0 %2973
  %2975 = vset.pattern.permute.xlu0 2
  %2976 = vperm.xlu0 %2975, %v1072
  %v2977 = vpop.permute.xlu0 %2976
  %2978 = vset.pattern.permute.xlu0 2
  %2979 = vperm.xlu0 %2978, %v1073
  %v2980 = vpop.permute.xlu0 %2979
  %2981 = vset.pattern.permute.xlu0 2
  %2982 = vperm.xlu0 %2981, %v1074
  %v2983 = vpop.permute.xlu0 %2982
  %2984 = vset.pattern.permute.xlu0 2
  %2985 = vperm.xlu0 %2984, %v1075
  %v2986 = vpop.permute.xlu0 %2985
  %2987 = vset.pattern.permute.xlu0 2
  %2988 = vperm.xlu0 %2987, %v1076
  %v2989 = vpop.permute.xlu0 %2988
  %2990 = vset.pattern.permute.xlu0 2
  %2991 = vperm.xlu0 %2990, %v1077
  %v2992 = vpop.permute.xlu0 %2991
  %2993 = vset.pattern.permute.xlu0 2
  %2994 = vperm.xlu0 %2993, %v1078
  %v2995 = vpop.permute.xlu0 %2994
  %2996 = vset.pattern.permute.xlu0 2
  %2997 = vperm.xlu0 %2996, %v1079
  %v2998 = vpop.permute.xlu0 %2997
  %2999 = vset.pattern.permute.xlu0 2
  %3000 = vperm.xlu0 %2999, %v1080
  %v3001 = vpop.permute.xlu0 %3000
  %3002 = vset.pattern.permute.xlu0 2
  %3003 = vperm.xlu0 %3002, %v1081
  %v3004 = vpop.permute.xlu0 %3003
  %3005 = vset.pattern.permute.xlu0 2
  %3006 = vperm.xlu0 %3005, %v1082
  %v3007 = vpop.permute.xlu0 %3006
  %3008 = vset.pattern.permute.xlu0 2
  %3009 = vperm.xlu0 %3008, %v1083
  %v3010 = vpop.permute.xlu0 %3009
  %3011 = vset.pattern.permute.xlu0 2
  %3012 = vperm.xlu0 %3011, %v1084
  %v3013 = vpop.permute.xlu0 %3012
  %3014 = vset.pattern.permute.xlu0 2
  %3015 = vperm.xlu0 %3014, %v1085
  %v3016 = vpop.permute.xlu0 %3015
  %3017 = vset.pattern.permute.xlu0 2
  %3018 = vperm.xlu0 %3017, %v1086
  %v3019 = vpop.permute.xlu0 %3018
  %3020 = vset.pattern.permute.xlu0 2
  %3021 = vperm.xlu0 %3020, %v1087
  %v3022 = vpop.permute.xlu0 %3021
  %3023 = vset.pattern.permute.xlu0 2
  %3024 = vperm.xlu0 %3023, %v1088
  %v3025 = vpop.permute.xlu0 %3024
  %3026 = vset.pattern.permute.xlu0 2
  %3027 = vperm.xlu0 %3026, %v1089
  %v3028 = vpop.permute.xlu0 %3027
  %3029 = vset.pattern.permute.xlu0 2
  %3030 = vperm.xlu0 %3029, %v1090
  %v3031 = vpop.permute.xlu0 %3030
  %3032 = vset.pattern.permute.xlu0 2
  %3033 = vperm.xlu0 %3032, %v1091
  %v3034 = vpop.permute.xlu0 %3033
  %3035 = vset.pattern.permute.xlu0 2
  %3036 = vperm.xlu0 %3035, %v1092
  %v3037 = vpop.permute.xlu0 %3036
  %3038 = vset.pattern.permute.xlu0 2
  %3039 = vperm.xlu0 %3038, %v1093
  %v3040 = vpop.permute.xlu0 %3039
  %3041 = vset.pattern.permute.xlu0 2
  %3042 = vperm.xlu0 %3041, %v1094
  %v3043 = vpop.permute.xlu0 %3042
  %3044 = vset.pattern.permute.xlu0 2
  %3045 = vperm.xlu0 %3044, %v1095
  %v3046 = vpop.permute.xlu0 %3045
  %3047 = vset.pattern.permute.xlu0 2
  %3048 = vperm.xlu0 %3047, %v1096
  %v3049 = vpop.permute.xlu0 %3048
  %3050 = vset.pattern.permute.xlu0 2
  %3051 = vperm.xlu0 %3050, %v1097
  %v3052 = vpop.permute.xlu0 %3051
  %3053 = vset.pattern.permute.xlu0 2
  %3054 = vperm.xlu0 %3053, %v1098
  %v3055 = vpop.permute.xlu0 %3054
  %3056 = vset.pattern.permute.xlu0 2
  %3057 = vperm.xlu0 %3056, %v1099
  %v3058 = vpop.permute.xlu0 %3057
  %3059 = vset.pattern.permute.xlu0 2
  %3060 = vperm.xlu0 %3059, %v1100
  %v3061 = vpop.permute.xlu0 %3060
  %3062 = vset.pattern.permute.xlu0 2
  %3063 = vperm.xlu0 %3062, %v1101
  %v3064 = vpop.permute.xlu0 %3063
  %3065 = vset.pattern.permute.xlu0 2
  %3066 = vperm.xlu0 %3065, %v1102
  %v3067 = vpop.permute.xlu0 %3066
  %vm3068 = vcmask 1040384
  %v3069 = vrot.slane %v2878, 7
  %v3070 = vrot.slane %v2881, 7
  %v3071 = vsel %vm3068, %v3069, %v3070
  %v3072 = vrot.slane %v2884, 7
  %v3073 = vsel %vm3068, %v3070, %v3072
  %v3074 = vrot.slane %v2887, 7
  %v3075 = vsel %vm3068, %v3072, %v3074
  %v3076 = vrot.slane %v2890, 7
  %v3077 = vsel %vm3068, %v3074, %v3076
  %v3078 = vrot.slane %v2893, 7
  %v3079 = vsel %vm3068, %v3076, %v3078
  %v3080 = vrot.slane %v2896, 7
  %v3081 = vsel %vm3068, %v3078, %v3080
  %v3082 = vrot.slane %v2899, 7
  %v3083 = vsel %vm3068, %v3080, %v3082
  %v3084 = vrot.slane %v2902, 7
  %v3085 = vsel %vm3068, %v3082, %v3084
  %v3086 = vrot.slane %v2905, 7
  %v3087 = vsel %vm3068, %v3084, %v3086
  %v3088 = vrot.slane %v2908, 7
  %v3089 = vsel %vm3068, %v3086, %v3088
  %v3090 = vrot.slane %v2911, 7
  %v3091 = vsel %vm3068, %v3088, %v3090
  %v3092 = vrot.slane %v2914, 7
  %v3093 = vsel %vm3068, %v3090, %v3092
  %v3094 = vrot.slane %v2917, 7
  %v3095 = vsel %vm3068, %v3092, %v3094
  %v3096 = vrot.slane %v2920, 7
  %v3097 = vsel %vm3068, %v3094, %v3096
  %v3098 = vrot.slane %v2923, 7
  %v3099 = vsel %vm3068, %v3096, %v3098
  %v3100 = vrot.slane %v2926, 7
  %v3101 = vsel %vm3068, %v3098, %v3100
  %v3102 = vrot.slane %v2929, 7
  %v3103 = vsel %vm3068, %v3100, %v3102
  %v3104 = vrot.slane %v2932, 7
  %v3105 = vsel %vm3068, %v3102, %v3104
  %v3106 = vrot.slane %v2935, 7
  %v3107 = vsel %vm3068, %v3104, %v3106
  %v3108 = vrot.slane %v2938, 7
  %v3109 = vsel %vm3068, %v3106, %v3108
  %v3110 = vrot.slane %v2941, 7
  %v3111 = vsel %vm3068, %v3108, %v3110
  %v3112 = vrot.slane %v2944, 7
  %v3113 = vsel %vm3068, %v3110, %v3112
  %v3114 = vrot.slane %v2947, 7
  %v3115 = vsel %vm3068, %v3112, %v3114
  %v3116 = vrot.slane %v2950, 7
  %v3117 = vsel %vm3068, %v3114, %v3116
  %v3118 = vrot.slane %v2953, 7
  %v3119 = vsel %vm3068, %v3116, %v3118
  %v3120 = vrot.slane %v2956, 7
  %v3121 = vsel %vm3068, %v3118, %v3120
  %v3122 = vrot.slane %v2959, 7
  %v3123 = vsel %vm3068, %v3120, %v3122
  %v3124 = vrot.slane %v2962, 7
  %v3125 = vsel %vm3068, %v3122, %v3124
  %v3126 = vrot.slane %v2965, 7
  %v3127 = vsel %vm3068, %v3124, %v3126
  %v3128 = vrot.slane %v2968, 7
  %v3129 = vsel %vm3068, %v3126, %v3128
  %v3130 = vrot.slane %v2971, 7
  %v3131 = vsel %vm3068, %v3128, %v3130
  %v3132 = vrot.slane %v2974, 7
  %v3133 = vsel %vm3068, %v3130, %v3132
  %v3134 = vrot.slane %v2977, 7
  %v3135 = vsel %vm3068, %v3132, %v3134
  %v3136 = vrot.slane %v2980, 7
  %v3137 = vsel %vm3068, %v3134, %v3136
  %v3138 = vrot.slane %v2983, 7
  %v3139 = vsel %vm3068, %v3136, %v3138
  %v3140 = vrot.slane %v2986, 7
  %v3141 = vsel %vm3068, %v3138, %v3140
  %v3142 = vrot.slane %v2989, 7
  %v3143 = vsel %vm3068, %v3140, %v3142
  %v3144 = vrot.slane %v2992, 7
  %v3145 = vsel %vm3068, %v3142, %v3144
  %v3146 = vrot.slane %v2995, 7
  %v3147 = vsel %vm3068, %v3144, %v3146
  %v3148 = vrot.slane %v2998, 7
  %v3149 = vsel %vm3068, %v3146, %v3148
  %v3150 = vrot.slane %v3001, 7
  %v3151 = vsel %vm3068, %v3148, %v3150
  %v3152 = vrot.slane %v3004, 7
  %v3153 = vsel %vm3068, %v3150, %v3152
  %v3154 = vrot.slane %v3007, 7
  %v3155 = vsel %vm3068, %v3152, %v3154
  %v3156 = vrot.slane %v3010, 7
  %v3157 = vsel %vm3068, %v3154, %v3156
  %v3158 = vrot.slane %v3013, 7
  %v3159 = vsel %vm3068, %v3156, %v3158
  %v3160 = vrot.slane %v3016, 7
  %v3161 = vsel %vm3068, %v3158, %v3160
  %v3162 = vrot.slane %v3019, 7
  %v3163 = vsel %vm3068, %v3160, %v3162
  %v3164 = vrot.slane %v3022, 7
  %v3165 = vsel %vm3068, %v3162, %v3164
  %v3166 = vrot.slane %v3025, 7
  %v3167 = vsel %vm3068, %v3164, %v3166
  %v3168 = vrot.slane %v3028, 7
  %v3169 = vsel %vm3068, %v3166, %v3168
  %v3170 = vrot.slane %v3031, 7
  %v3171 = vsel %vm3068, %v3168, %v3170
  %v3172 = vrot.slane %v3034, 7
  %v3173 = vsel %vm3068, %v3170, %v3172
  %v3174 = vrot.slane %v3037, 7
  %v3175 = vsel %vm3068, %v3172, %v3174
  %v3176 = vrot.slane %v3040, 7
  %v3177 = vsel %vm3068, %v3174, %v3176
  %v3178 = vrot.slane %v3043, 7
  %v3179 = vsel %vm3068, %v3176, %v3178
  %v3180 = vrot.slane %v3046, 7
  %v3181 = vsel %vm3068, %v3178, %v3180
  %v3182 = vrot.slane %v3049, 7
  %v3183 = vsel %vm3068, %v3180, %v3182
  %v3184 = vrot.slane %v3052, 7
  %v3185 = vsel %vm3068, %v3182, %v3184
  %v3186 = vrot.slane %v3055, 7
  %v3187 = vsel %vm3068, %v3184, %v3186
  %v3188 = vrot.slane %v3058, 7
  %v3189 = vsel %vm3068, %v3186, %v3188
  %v3190 = vrot.slane %v3061, 7
  %v3191 = vsel %vm3068, %v3188, %v3190
  %v3192 = vrot.slane %v3064, 7
  %v3193 = vsel %vm3068, %v3190, %v3192
  %v3194 = vrot.slane %v3067, 7
  %v3195 = vsel %vm3068, %v3192, %v3194
  %v3261 = vmul.f32 %v3069, 0.0
  %v3262 = vmul.f32 %v3071, 0.0
  %v3263 = vmul.f32 %v1272, %v3073
  %v3264 = vmul.f32 %v1275, %v3075
  %v3265 = vmul.f32 %v1280, %v3077
  %v3266 = vmul.f32 %v1283, %v3079
  %v3267 = vmul.f32 %v1288, %v3081
  %v3268 = vmul.f32 %v1291, %v3083
  %v3269 = vmul.f32 %v1296, %v3085
  %v3270 = vmul.f32 %v1299, %v3087
  %v3271 = vmul.f32 %v1304, %v3089
  %v3272 = vmul.f32 %v1307, %v3091
  %v3273 = vmul.f32 %v1312, %v3093
  %v3274 = vmul.f32 %v1315, %v3095
  %v3275 = vmul.f32 %v1320, %v3097
  %v3276 = vmul.f32 %v1323, %v3099
  %v3277 = vmul.f32 %v1328, %v3101
  %v3278 = vmul.f32 %v1331, %v3103
  %v3279 = vmul.f32 %v1336, %v3105
  %v3280 = vmul.f32 %v1339, %v3107
  %v3281 = vmul.f32 %v1344, %v3109
  %v3282 = vmul.f32 %v1347, %v3111
  %v3283 = vmul.f32 %v1352, %v3113
  %v3284 = vmul.f32 %v1355, %v3115
  %v3285 = vmul.f32 %v1360, %v3117
  %v3286 = vmul.f32 %v1363, %v3119
  %v3287 = vmul.f32 %v1368, %v3121
  %v3288 = vmul.f32 %v1371, %v3123
  %v3289 = vmul.f32 %v1376, %v3125
  %v3290 = vmul.f32 %v1379, %v3127
  %v3291 = vmul.f32 %v1384, %v3129
  %v3292 = vmul.f32 %v1387, %v3131
  %v3293 = vmul.f32 %v1392, %v3133
  %v3294 = vmul.f32 %v1395, %v3135
  %v3295 = vmul.f32 %v1400, %v3137
  %v3296 = vmul.f32 %v1403, %v3139
  %v3297 = vmul.f32 %v1408, %v3141
  %v3298 = vmul.f32 %v1411, %v3143
  %v3299 = vmul.f32 %v1416, %v3145
  %v3300 = vmul.f32 %v1419, %v3147
  %v3301 = vmul.f32 %v1424, %v3149
  %v3302 = vmul.f32 %v1427, %v3151
  %v3303 = vmul.f32 %v1432, %v3153
  %v3304 = vmul.f32 %v1435, %v3155
  %v3305 = vmul.f32 %v1440, %v3157
  %v3306 = vmul.f32 %v1443, %v3159
  %v3307 = vmul.f32 %v1448, %v3161
  %v3308 = vmul.f32 %v1451, %v3163
  %v3309 = vmul.f32 %v1456, %v3165
  %v3310 = vmul.f32 %v1459, %v3167
  %v3311 = vmul.f32 %v1464, %v3169
  %v3312 = vmul.f32 %v1467, %v3171
  %v3313 = vmul.f32 %v1472, %v3173
  %v3314 = vmul.f32 %v1475, %v3175
  %v3315 = vmul.f32 %v1480, %v3177
  %v3316 = vmul.f32 %v1483, %v3179
  %v3317 = vmul.f32 %v1488, %v3181
  %v3318 = vmul.f32 %v1491, %v3183
  %v3319 = vmul.f32 %v1496, %v3185
  %v3320 = vmul.f32 %v1499, %v3187
  %v3321 = vmul.f32 %v1504, %v3189
  %v3322 = vmul.f32 %v1507, %v3191
  %v3323 = vmul.f32 %v1512, %v3193
  %v3324 = vmul.f32 %v1515, %v3195
  %v3325 = vmul.f32 %v1520, %v3194
  %vm3391 = vcmask 1045504
  %v3392 = vrot.slane %v3261, 2
  %v3393 = vrot.slane %v3262, 2
  %v3394 = vsel %vm3391, %v3392, %v3393
  %v3395 = vrot.slane %v3263, 2
  %v3396 = vsel %vm3391, %v3393, %v3395
  %v3397 = vrot.slane %v3264, 2
  %v3398 = vsel %vm3391, %v3395, %v3397
  %v3399 = vrot.slane %v3265, 2
  %v3400 = vsel %vm3391, %v3397, %v3399
  %v3401 = vrot.slane %v3266, 2
  %v3402 = vsel %vm3391, %v3399, %v3401
  %v3403 = vrot.slane %v3267, 2
  %v3404 = vsel %vm3391, %v3401, %v3403
  %v3405 = vrot.slane %v3268, 2
  %v3406 = vsel %vm3391, %v3403, %v3405
  %v3407 = vrot.slane %v3269, 2
  %v3408 = vsel %vm3391, %v3405, %v3407
  %v3409 = vrot.slane %v3270, 2
  %v3410 = vsel %vm3391, %v3407, %v3409
  %v3411 = vrot.slane %v3271, 2
  %v3412 = vsel %vm3391, %v3409, %v3411
  %v3413 = vrot.slane %v3272, 2
  %v3414 = vsel %vm3391, %v3411, %v3413
  %v3415 = vrot.slane %v3273, 2
  %v3416 = vsel %vm3391, %v3413, %v3415
  %v3417 = vrot.slane %v3274, 2
  %v3418 = vsel %vm3391, %v3415, %v3417
  %v3419 = vrot.slane %v3275, 2
  %v3420 = vsel %vm3391, %v3417, %v3419
  %v3421 = vrot.slane %v3276, 2
  %v3422 = vsel %vm3391, %v3419, %v3421
  %v3423 = vrot.slane %v3277, 2
  %v3424 = vsel %vm3391, %v3421, %v3423
  %v3425 = vrot.slane %v3278, 2
  %v3426 = vsel %vm3391, %v3423, %v3425
  %v3427 = vrot.slane %v3279, 2
  %v3428 = vsel %vm3391, %v3425, %v3427
  %v3429 = vrot.slane %v3280, 2
  %v3430 = vsel %vm3391, %v3427, %v3429
  %v3431 = vrot.slane %v3281, 2
  %v3432 = vsel %vm3391, %v3429, %v3431
  %v3433 = vrot.slane %v3282, 2
  %v3434 = vsel %vm3391, %v3431, %v3433
  %v3435 = vrot.slane %v3283, 2
  %v3436 = vsel %vm3391, %v3433, %v3435
  %v3437 = vrot.slane %v3284, 2
  %v3438 = vsel %vm3391, %v3435, %v3437
  %v3439 = vrot.slane %v3285, 2
  %v3440 = vsel %vm3391, %v3437, %v3439
  %v3441 = vrot.slane %v3286, 2
  %v3442 = vsel %vm3391, %v3439, %v3441
  %v3443 = vrot.slane %v3287, 2
  %v3444 = vsel %vm3391, %v3441, %v3443
  %v3445 = vrot.slane %v3288, 2
  %v3446 = vsel %vm3391, %v3443, %v3445
  %v3447 = vrot.slane %v3289, 2
  %v3448 = vsel %vm3391, %v3445, %v3447
  %v3449 = vrot.slane %v3290, 2
  %v3450 = vsel %vm3391, %v3447, %v3449
  %v3451 = vrot.slane %v3291, 2
  %v3452 = vsel %vm3391, %v3449, %v3451
  %v3453 = vrot.slane %v3292, 2
  %v3454 = vsel %vm3391, %v3451, %v3453
  %v3455 = vrot.slane %v3293, 2
  %v3456 = vsel %vm3391, %v3453, %v3455
  %v3457 = vrot.slane %v3294, 2
  %v3458 = vsel %vm3391, %v3455, %v3457
  %v3459 = vrot.slane %v3295, 2
  %v3460 = vsel %vm3391, %v3457, %v3459
  %v3461 = vrot.slane %v3296, 2
  %v3462 = vsel %vm3391, %v3459, %v3461
  %v3463 = vrot.slane %v3297, 2
  %v3464 = vsel %vm3391, %v3461, %v3463
  %v3465 = vrot.slane %v3298, 2
  %v3466 = vsel %vm3391, %v3463, %v3465
  %v3467 = vrot.slane %v3299, 2
  %v3468 = vsel %vm3391, %v3465, %v3467
  %v3469 = vrot.slane %v3300, 2
  %v3470 = vsel %vm3391, %v3467, %v3469
  %v3471 = vrot.slane %v3301, 2
  %v3472 = vsel %vm3391, %v3469, %v3471
  %v3473 = vrot.slane %v3302, 2
  %v3474 = vsel %vm3391, %v3471, %v3473
  %v3475 = vrot.slane %v3303, 2
  %v3476 = vsel %vm3391, %v3473, %v3475
  %v3477 = vrot.slane %v3304, 2
  %v3478 = vsel %vm3391, %v3475, %v3477
  %v3479 = vrot.slane %v3305, 2
  %v3480 = vsel %vm3391, %v3477, %v3479
  %v3481 = vrot.slane %v3306, 2
  %v3482 = vsel %vm3391, %v3479, %v3481
  %v3483 = vrot.slane %v3307, 2
  %v3484 = vsel %vm3391, %v3481, %v3483
  %v3485 = vrot.slane %v3308, 2
  %v3486 = vsel %vm3391, %v3483, %v3485
  %v3487 = vrot.slane %v3309, 2
  %v3488 = vsel %vm3391, %v3485, %v3487
  %v3489 = vrot.slane %v3310, 2
  %v3490 = vsel %vm3391, %v3487, %v3489
  %v3491 = vrot.slane %v3311, 2
  %v3492 = vsel %vm3391, %v3489, %v3491
  %v3493 = vrot.slane %v3312, 2
  %v3494 = vsel %vm3391, %v3491, %v3493
  %v3495 = vrot.slane %v3313, 2
  %v3496 = vsel %vm3391, %v3493, %v3495
  %v3497 = vrot.slane %v3314, 2
  %v3498 = vsel %vm3391, %v3495, %v3497
  %v3499 = vrot.slane %v3315, 2
  %v3500 = vsel %vm3391, %v3497, %v3499
  %v3501 = vrot.slane %v3316, 2
  %v3502 = vsel %vm3391, %v3499, %v3501
  %v3503 = vrot.slane %v3317, 2
  %v3504 = vsel %vm3391, %v3501, %v3503
  %v3505 = vrot.slane %v3318, 2
  %v3506 = vsel %vm3391, %v3503, %v3505
  %v3507 = vrot.slane %v3319, 2
  %v3508 = vsel %vm3391, %v3505, %v3507
  %v3509 = vrot.slane %v3320, 2
  %v3510 = vsel %vm3391, %v3507, %v3509
  %v3511 = vrot.slane %v3321, 2
  %v3512 = vsel %vm3391, %v3509, %v3511
  %v3513 = vrot.slane %v3322, 2
  %v3514 = vsel %vm3391, %v3511, %v3513
  %v3515 = vrot.slane %v3323, 2
  %v3516 = vsel %vm3391, %v3513, %v3515
  %v3517 = vrot.slane %v3324, 2
  %v3518 = vsel %vm3391, %v3515, %v3517
  %v3519 = vrot.slane %v3325, 2
  %v3520 = vsel %vm3391, %v3517, %v3519
  %3521 = vrot.lane.b32.xlu0 %v3392, 120
  %v3522 = vpop.permute.xlu0 %3521
  %3523 = vrot.lane.b32.xlu0 %v3394, 120
  %v3524 = vpop.permute.xlu0 %3523
  %3525 = vrot.lane.b32.xlu0 %v3396, 120
  %v3526 = vpop.permute.xlu0 %3525
  %3527 = vrot.lane.b32.xlu0 %v3398, 120
  %v3528 = vpop.permute.xlu0 %3527
  %3529 = vrot.lane.b32.xlu0 %v3400, 120
  %v3530 = vpop.permute.xlu0 %3529
  %3531 = vrot.lane.b32.xlu0 %v3402, 120
  %v3532 = vpop.permute.xlu0 %3531
  %3533 = vrot.lane.b32.xlu0 %v3404, 120
  %v3534 = vpop.permute.xlu0 %3533
  %3535 = vrot.lane.b32.xlu0 %v3406, 120
  %v3536 = vpop.permute.xlu0 %3535
  %3537 = vrot.lane.b32.xlu0 %v3408, 120
  %v3538 = vpop.permute.xlu0 %3537
  %3539 = vrot.lane.b32.xlu0 %v3410, 120
  %v3540 = vpop.permute.xlu0 %3539
  %3541 = vrot.lane.b32.xlu0 %v3412, 120
  %v3542 = vpop.permute.xlu0 %3541
  %3543 = vrot.lane.b32.xlu0 %v3414, 120
  %v3544 = vpop.permute.xlu0 %3543
  %3545 = vrot.lane.b32.xlu0 %v3416, 120
  %v3546 = vpop.permute.xlu0 %3545
  %3547 = vrot.lane.b32.xlu0 %v3418, 120
  %v3548 = vpop.permute.xlu0 %3547
  %3549 = vrot.lane.b32.xlu0 %v3420, 120
  %v3550 = vpop.permute.xlu0 %3549
  %3551 = vrot.lane.b32.xlu0 %v3422, 120
  %v3552 = vpop.permute.xlu0 %3551
  %3553 = vrot.lane.b32.xlu0 %v3424, 120
  %v3554 = vpop.permute.xlu0 %3553
  %3555 = vrot.lane.b32.xlu0 %v3426, 120
  %v3556 = vpop.permute.xlu0 %3555
  %3557 = vrot.lane.b32.xlu0 %v3428, 120
  %v3558 = vpop.permute.xlu0 %3557
  %3559 = vrot.lane.b32.xlu0 %v3430, 120
  %v3560 = vpop.permute.xlu0 %3559
  %3561 = vrot.lane.b32.xlu0 %v3432, 120
  %v3562 = vpop.permute.xlu0 %3561
  %3563 = vrot.lane.b32.xlu0 %v3434, 120
  %v3564 = vpop.permute.xlu0 %3563
  %3565 = vrot.lane.b32.xlu0 %v3436, 120
  %v3566 = vpop.permute.xlu0 %3565
  %3567 = vrot.lane.b32.xlu0 %v3438, 120
  %v3568 = vpop.permute.xlu0 %3567
  %3569 = vrot.lane.b32.xlu0 %v3440, 120
  %v3570 = vpop.permute.xlu0 %3569
  %3571 = vrot.lane.b32.xlu0 %v3442, 120
  %v3572 = vpop.permute.xlu0 %3571
  %3573 = vrot.lane.b32.xlu0 %v3444, 120
  %v3574 = vpop.permute.xlu0 %3573
  %3575 = vrot.lane.b32.xlu0 %v3446, 120
  %v3576 = vpop.permute.xlu0 %3575
  %3577 = vrot.lane.b32.xlu0 %v3448, 120
  %v3578 = vpop.permute.xlu0 %3577
  %3579 = vrot.lane.b32.xlu0 %v3450, 120
  %v3580 = vpop.permute.xlu0 %3579
  %3581 = vrot.lane.b32.xlu0 %v3452, 120
  %v3582 = vpop.permute.xlu0 %3581
  %3583 = vrot.lane.b32.xlu0 %v3454, 120
  %v3584 = vpop.permute.xlu0 %3583
  %3585 = vrot.lane.b32.xlu0 %v3456, 120
  %v3586 = vpop.permute.xlu0 %3585
  %3587 = vrot.lane.b32.xlu0 %v3458, 120
  %v3588 = vpop.permute.xlu0 %3587
  %3589 = vrot.lane.b32.xlu0 %v3460, 120
  %v3590 = vpop.permute.xlu0 %3589
  %3591 = vrot.lane.b32.xlu0 %v3462, 120
  %v3592 = vpop.permute.xlu0 %3591
  %3593 = vrot.lane.b32.xlu0 %v3464, 120
  %v3594 = vpop.permute.xlu0 %3593
  %3595 = vrot.lane.b32.xlu0 %v3466, 120
  %v3596 = vpop.permute.xlu0 %3595
  %3597 = vrot.lane.b32.xlu0 %v3468, 120
  %v3598 = vpop.permute.xlu0 %3597
  %3599 = vrot.lane.b32.xlu0 %v3470, 120
  %v3600 = vpop.permute.xlu0 %3599
  %3601 = vrot.lane.b32.xlu0 %v3472, 120
  %v3602 = vpop.permute.xlu0 %3601
  %3603 = vrot.lane.b32.xlu0 %v3474, 120
  %v3604 = vpop.permute.xlu0 %3603
  %3605 = vrot.lane.b32.xlu0 %v3476, 120
  %v3606 = vpop.permute.xlu0 %3605
  %3607 = vrot.lane.b32.xlu0 %v3478, 120
  %v3608 = vpop.permute.xlu0 %3607
  %3609 = vrot.lane.b32.xlu0 %v3480, 120
  %v3610 = vpop.permute.xlu0 %3609
  %3611 = vrot.lane.b32.xlu0 %v3482, 120
  %v3612 = vpop.permute.xlu0 %3611
  %3613 = vrot.lane.b32.xlu0 %v3484, 120
  %v3614 = vpop.permute.xlu0 %3613
  %3615 = vrot.lane.b32.xlu0 %v3486, 120
  %v3616 = vpop.permute.xlu0 %3615
  %3617 = vrot.lane.b32.xlu0 %v3488, 120
  %v3618 = vpop.permute.xlu0 %3617
  %3619 = vrot.lane.b32.xlu0 %v3490, 120
  %v3620 = vpop.permute.xlu0 %3619
  %3621 = vrot.lane.b32.xlu0 %v3492, 120
  %v3622 = vpop.permute.xlu0 %3621
  %3623 = vrot.lane.b32.xlu0 %v3494, 120
  %v3624 = vpop.permute.xlu0 %3623
  %3625 = vrot.lane.b32.xlu0 %v3496, 120
  %v3626 = vpop.permute.xlu0 %3625
  %3627 = vrot.lane.b32.xlu0 %v3498, 120
  %v3628 = vpop.permute.xlu0 %3627
  %3629 = vrot.lane.b32.xlu0 %v3500, 120
  %v3630 = vpop.permute.xlu0 %3629
  %3631 = vrot.lane.b32.xlu0 %v3502, 120
  %v3632 = vpop.permute.xlu0 %3631
  %3633 = vrot.lane.b32.xlu0 %v3504, 120
  %v3634 = vpop.permute.xlu0 %3633
  %3635 = vrot.lane.b32.xlu0 %v3506, 120
  %v3636 = vpop.permute.xlu0 %3635
  %3637 = vrot.lane.b32.xlu0 %v3508, 120
  %v3638 = vpop.permute.xlu0 %3637
  %3639 = vrot.lane.b32.xlu0 %v3510, 120
  %v3640 = vpop.permute.xlu0 %3639
  %3641 = vrot.lane.b32.xlu0 %v3512, 120
  %v3642 = vpop.permute.xlu0 %3641
  %3643 = vrot.lane.b32.xlu0 %v3514, 120
  %v3644 = vpop.permute.xlu0 %3643
  %3645 = vrot.lane.b32.xlu0 %v3516, 120
  %v3646 = vpop.permute.xlu0 %3645
  %3647 = vrot.lane.b32.xlu0 %v3518, 120
  %v3648 = vpop.permute.xlu0 %3647
  %3649 = vrot.lane.b32.xlu0 %v3520, 120
  %v3650 = vpop.permute.xlu0 %3649
  %v3716 = vadd.f32 %v2811, %v3522
  %v3717 = vadd.f32 %v2812, %v3524
  %v3718 = vadd.f32 %v2813, %v3526
  %v3719 = vadd.f32 %v2814, %v3528
  %v3720 = vadd.f32 %v2815, %v3530
  %v3721 = vadd.f32 %v2816, %v3532
  %v3722 = vadd.f32 %v2817, %v3534
  %v3723 = vadd.f32 %v2818, %v3536
  %v3724 = vadd.f32 %v2819, %v3538
  %v3725 = vadd.f32 %v2820, %v3540
  %v3726 = vadd.f32 %v2821, %v3542
  %v3727 = vadd.f32 %v2822, %v3544
  %v3728 = vadd.f32 %v2823, %v3546
  %v3729 = vadd.f32 %v2824, %v3548
  %v3730 = vadd.f32 %v2825, %v3550
  %v3731 = vadd.f32 %v2826, %v3552
  %v3732 = vadd.f32 %v2827, %v3554
  %v3733 = vadd.f32 %v2828, %v3556
  %v3734 = vadd.f32 %v2829, %v3558
  %v3735 = vadd.f32 %v2830, %v3560
  %v3736 = vadd.f32 %v2831, %v3562
  %v3737 = vadd.f32 %v2832, %v3564
  %v3738 = vadd.f32 %v2833, %v3566
  %v3739 = vadd.f32 %v2834, %v3568
  %v3740 = vadd.f32 %v2835, %v3570
  %v3741 = vadd.f32 %v2836, %v3572
  %v3742 = vadd.f32 %v2837, %v3574
  %v3743 = vadd.f32 %v2838, %v3576
  %v3744 = vadd.f32 %v2839, %v3578
  %v3745 = vadd.f32 %v2840, %v3580
  %v3746 = vadd.f32 %v2841, %v3582
  %v3747 = vadd.f32 %v2842, %v3584
  %v3748 = vadd.f32 %v2843, %v3586
  %v3749 = vadd.f32 %v2844, %v3588
  %v3750 = vadd.f32 %v2845, %v3590
  %v3751 = vadd.f32 %v2846, %v3592
  %v3752 = vadd.f32 %v2847, %v3594
  %v3753 = vadd.f32 %v2848, %v3596
  %v3754 = vadd.f32 %v2849, %v3598
  %v3755 = vadd.f32 %v2850, %v3600
  %v3756 = vadd.f32 %v2851, %v3602
  %v3757 = vadd.f32 %v2852, %v3604
  %v3758 = vadd.f32 %v2853, %v3606
  %v3759 = vadd.f32 %v2854, %v3608
  %v3760 = vadd.f32 %v2855, %v3610
  %v3761 = vadd.f32 %v2856, %v3612
  %v3762 = vadd.f32 %v2857, %v3614
  %v3763 = vadd.f32 %v2858, %v3616
  %v3764 = vadd.f32 %v2859, %v3618
  %v3765 = vadd.f32 %v2860, %v3620
  %v3766 = vadd.f32 %v2861, %v3622
  %v3767 = vadd.f32 %v2862, %v3624
  %v3768 = vadd.f32 %v2863, %v3626
  %v3769 = vadd.f32 %v2864, %v3628
  %v3770 = vadd.f32 %v2865, %v3630
  %v3771 = vadd.f32 %v2866, %v3632
  %v3772 = vadd.f32 %v2867, %v3634
  %v3773 = vadd.f32 %v2868, %v3636
  %v3774 = vadd.f32 %v2869, %v3638
  %v3775 = vadd.f32 %v2870, %v3640
  %v3776 = vadd.f32 %v2871, %v3642
  %v3777 = vadd.f32 %v2872, %v3644
  %v3778 = vadd.f32 %v2873, %v3646
  %v3779 = vadd.f32 %v2874, %v3648
  %v3780 = vadd.f32 %v2875, %v3650
  %3781 = vset.pattern.permute.xlu0 3
  %3782 = vperm.xlu0 %3781, %v1039
  %v3783 = vpop.permute.xlu0 %3782
  %3784 = vset.pattern.permute.xlu0 3
  %3785 = vperm.xlu0 %3784, %v1040
  %v3786 = vpop.permute.xlu0 %3785
  %3787 = vset.pattern.permute.xlu0 3
  %3788 = vperm.xlu0 %3787, %v1041
  %v3789 = vpop.permute.xlu0 %3788
  %3790 = vset.pattern.permute.xlu0 3
  %3791 = vperm.xlu0 %3790, %v1042
  %v3792 = vpop.permute.xlu0 %3791
  %3793 = vset.pattern.permute.xlu0 3
  %3794 = vperm.xlu0 %3793, %v1043
  %v3795 = vpop.permute.xlu0 %3794
  %3796 = vset.pattern.permute.xlu0 3
  %3797 = vperm.xlu0 %3796, %v1044
  %v3798 = vpop.permute.xlu0 %3797
  %3799 = vset.pattern.permute.xlu0 3
  %3800 = vperm.xlu0 %3799, %v1045
  %v3801 = vpop.permute.xlu0 %3800
  %3802 = vset.pattern.permute.xlu0 3
  %3803 = vperm.xlu0 %3802, %v1046
  %v3804 = vpop.permute.xlu0 %3803
  %3805 = vset.pattern.permute.xlu0 3
  %3806 = vperm.xlu0 %3805, %v1047
  %v3807 = vpop.permute.xlu0 %3806
  %3808 = vset.pattern.permute.xlu0 3
  %3809 = vperm.xlu0 %3808, %v1048
  %v3810 = vpop.permute.xlu0 %3809
  %3811 = vset.pattern.permute.xlu0 3
  %3812 = vperm.xlu0 %3811, %v1049
  %v3813 = vpop.permute.xlu0 %3812
  %3814 = vset.pattern.permute.xlu0 3
  %3815 = vperm.xlu0 %3814, %v1050
  %v3816 = vpop.permute.xlu0 %3815
  %3817 = vset.pattern.permute.xlu0 3
  %3818 = vperm.xlu0 %3817, %v1051
  %v3819 = vpop.permute.xlu0 %3818
  %3820 = vset.pattern.permute.xlu0 3
  %3821 = vperm.xlu0 %3820, %v1052
  %v3822 = vpop.permute.xlu0 %3821
  %3823 = vset.pattern.permute.xlu0 3
  %3824 = vperm.xlu0 %3823, %v1053
  %v3825 = vpop.permute.xlu0 %3824
  %3826 = vset.pattern.permute.xlu0 3
  %3827 = vperm.xlu0 %3826, %v1054
  %v3828 = vpop.permute.xlu0 %3827
  %3829 = vset.pattern.permute.xlu0 3
  %3830 = vperm.xlu0 %3829, %v1055
  %v3831 = vpop.permute.xlu0 %3830
  %3832 = vset.pattern.permute.xlu0 3
  %3833 = vperm.xlu0 %3832, %v1056
  %v3834 = vpop.permute.xlu0 %3833
  %3835 = vset.pattern.permute.xlu0 3
  %3836 = vperm.xlu0 %3835, %v1057
  %v3837 = vpop.permute.xlu0 %3836
  %3838 = vset.pattern.permute.xlu0 3
  %3839 = vperm.xlu0 %3838, %v1058
  %v3840 = vpop.permute.xlu0 %3839
  %3841 = vset.pattern.permute.xlu0 3
  %3842 = vperm.xlu0 %3841, %v1059
  %v3843 = vpop.permute.xlu0 %3842
  %3844 = vset.pattern.permute.xlu0 3
  %3845 = vperm.xlu0 %3844, %v1060
  %v3846 = vpop.permute.xlu0 %3845
  %3847 = vset.pattern.permute.xlu0 3
  %3848 = vperm.xlu0 %3847, %v1061
  %v3849 = vpop.permute.xlu0 %3848
  %3850 = vset.pattern.permute.xlu0 3
  %3851 = vperm.xlu0 %3850, %v1062
  %v3852 = vpop.permute.xlu0 %3851
  %3853 = vset.pattern.permute.xlu0 3
  %3854 = vperm.xlu0 %3853, %v1063
  %v3855 = vpop.permute.xlu0 %3854
  %3856 = vset.pattern.permute.xlu0 3
  %3857 = vperm.xlu0 %3856, %v1064
  %v3858 = vpop.permute.xlu0 %3857
  %3859 = vset.pattern.permute.xlu0 3
  %3860 = vperm.xlu0 %3859, %v1065
  %v3861 = vpop.permute.xlu0 %3860
  %3862 = vset.pattern.permute.xlu0 3
  %3863 = vperm.xlu0 %3862, %v1066
  %v3864 = vpop.permute.xlu0 %3863
  %3865 = vset.pattern.permute.xlu0 3
  %3866 = vperm.xlu0 %3865, %v1067
  %v3867 = vpop.permute.xlu0 %3866
  %3868 = vset.pattern.permute.xlu0 3
  %3869 = vperm.xlu0 %3868, %v1068
  %v3870 = vpop.permute.xlu0 %3869
  %3871 = vset.pattern.permute.xlu0 3
  %3872 = vperm.xlu0 %3871, %v1069
  %v3873 = vpop.permute.xlu0 %3872
  %3874 = vset.pattern.permute.xlu0 3
  %3875 = vperm.xlu0 %3874, %v1070
  %v3876 = vpop.permute.xlu0 %3875
  %3877 = vset.pattern.permute.xlu0 3
  %3878 = vperm.xlu0 %3877, %v1071
  %v3879 = vpop.permute.xlu0 %3878
  %3880 = vset.pattern.permute.xlu0 3
  %3881 = vperm.xlu0 %3880, %v1072
  %v3882 = vpop.permute.xlu0 %3881
  %3883 = vset.pattern.permute.xlu0 3
  %3884 = vperm.xlu0 %3883, %v1073
  %v3885 = vpop.permute.xlu0 %3884
  %3886 = vset.pattern.permute.xlu0 3
  %3887 = vperm.xlu0 %3886, %v1074
  %v3888 = vpop.permute.xlu0 %3887
  %3889 = vset.pattern.permute.xlu0 3
  %3890 = vperm.xlu0 %3889, %v1075
  %v3891 = vpop.permute.xlu0 %3890
  %3892 = vset.pattern.permute.xlu0 3
  %3893 = vperm.xlu0 %3892, %v1076
  %v3894 = vpop.permute.xlu0 %3893
  %3895 = vset.pattern.permute.xlu0 3
  %3896 = vperm.xlu0 %3895, %v1077
  %v3897 = vpop.permute.xlu0 %3896
  %3898 = vset.pattern.permute.xlu0 3
  %3899 = vperm.xlu0 %3898, %v1078
  %v3900 = vpop.permute.xlu0 %3899
  %3901 = vset.pattern.permute.xlu0 3
  %3902 = vperm.xlu0 %3901, %v1079
  %v3903 = vpop.permute.xlu0 %3902
  %3904 = vset.pattern.permute.xlu0 3
  %3905 = vperm.xlu0 %3904, %v1080
  %v3906 = vpop.permute.xlu0 %3905
  %3907 = vset.pattern.permute.xlu0 3
  %3908 = vperm.xlu0 %3907, %v1081
  %v3909 = vpop.permute.xlu0 %3908
  %3910 = vset.pattern.permute.xlu0 3
  %3911 = vperm.xlu0 %3910, %v1082
  %v3912 = vpop.permute.xlu0 %3911
  %3913 = vset.pattern.permute.xlu0 3
  %3914 = vperm.xlu0 %3913, %v1083
  %v3915 = vpop.permute.xlu0 %3914
  %3916 = vset.pattern.permute.xlu0 3
  %3917 = vperm.xlu0 %3916, %v1084
  %v3918 = vpop.permute.xlu0 %3917
  %3919 = vset.pattern.permute.xlu0 3
  %3920 = vperm.xlu0 %3919, %v1085
  %v3921 = vpop.permute.xlu0 %3920
  %3922 = vset.pattern.permute.xlu0 3
  %3923 = vperm.xlu0 %3922, %v1086
  %v3924 = vpop.permute.xlu0 %3923
  %3925 = vset.pattern.permute.xlu0 3
  %3926 = vperm.xlu0 %3925, %v1087
  %v3927 = vpop.permute.xlu0 %3926
  %3928 = vset.pattern.permute.xlu0 3
  %3929 = vperm.xlu0 %3928, %v1088
  %v3930 = vpop.permute.xlu0 %3929
  %3931 = vset.pattern.permute.xlu0 3
  %3932 = vperm.xlu0 %3931, %v1089
  %v3933 = vpop.permute.xlu0 %3932
  %3934 = vset.pattern.permute.xlu0 3
  %3935 = vperm.xlu0 %3934, %v1090
  %v3936 = vpop.permute.xlu0 %3935
  %3937 = vset.pattern.permute.xlu0 3
  %3938 = vperm.xlu0 %3937, %v1091
  %v3939 = vpop.permute.xlu0 %3938
  %3940 = vset.pattern.permute.xlu0 3
  %3941 = vperm.xlu0 %3940, %v1092
  %v3942 = vpop.permute.xlu0 %3941
  %3943 = vset.pattern.permute.xlu0 3
  %3944 = vperm.xlu0 %3943, %v1093
  %v3945 = vpop.permute.xlu0 %3944
  %3946 = vset.pattern.permute.xlu0 3
  %3947 = vperm.xlu0 %3946, %v1094
  %v3948 = vpop.permute.xlu0 %3947
  %3949 = vset.pattern.permute.xlu0 3
  %3950 = vperm.xlu0 %3949, %v1095
  %v3951 = vpop.permute.xlu0 %3950
  %3952 = vset.pattern.permute.xlu0 3
  %3953 = vperm.xlu0 %3952, %v1096
  %v3954 = vpop.permute.xlu0 %3953
  %3955 = vset.pattern.permute.xlu0 3
  %3956 = vperm.xlu0 %3955, %v1097
  %v3957 = vpop.permute.xlu0 %3956
  %3958 = vset.pattern.permute.xlu0 3
  %3959 = vperm.xlu0 %3958, %v1098
  %v3960 = vpop.permute.xlu0 %3959
  %3961 = vset.pattern.permute.xlu0 3
  %3962 = vperm.xlu0 %3961, %v1099
  %v3963 = vpop.permute.xlu0 %3962
  %3964 = vset.pattern.permute.xlu0 3
  %3965 = vperm.xlu0 %3964, %v1100
  %v3966 = vpop.permute.xlu0 %3965
  %3967 = vset.pattern.permute.xlu0 3
  %3968 = vperm.xlu0 %3967, %v1101
  %v3969 = vpop.permute.xlu0 %3968
  %3970 = vset.pattern.permute.xlu0 3
  %3971 = vperm.xlu0 %3970, %v1102
  %v3972 = vpop.permute.xlu0 %3971
  %v3973 = vrot.slane %v3783, 1
  %v3974 = vrot.slane %v3786, 1
  %v3975 = vsel %vm1782, %v3973, %v3974
  %v3976 = vrot.slane %v3789, 1
  %v3977 = vsel %vm1782, %v3974, %v3976
  %v3978 = vrot.slane %v3792, 1
  %v3979 = vsel %vm1782, %v3976, %v3978
  %v3980 = vrot.slane %v3795, 1
  %v3981 = vsel %vm1782, %v3978, %v3980
  %v3982 = vrot.slane %v3798, 1
  %v3983 = vsel %vm1782, %v3980, %v3982
  %v3984 = vrot.slane %v3801, 1
  %v3985 = vsel %vm1782, %v3982, %v3984
  %v3986 = vrot.slane %v3804, 1
  %v3987 = vsel %vm1782, %v3984, %v3986
  %v3988 = vrot.slane %v3807, 1
  %v3989 = vsel %vm1782, %v3986, %v3988
  %v3990 = vrot.slane %v3810, 1
  %v3991 = vsel %vm1782, %v3988, %v3990
  %v3992 = vrot.slane %v3813, 1
  %v3993 = vsel %vm1782, %v3990, %v3992
  %v3994 = vrot.slane %v3816, 1
  %v3995 = vsel %vm1782, %v3992, %v3994
  %v3996 = vrot.slane %v3819, 1
  %v3997 = vsel %vm1782, %v3994, %v3996
  %v3998 = vrot.slane %v3822, 1
  %v3999 = vsel %vm1782, %v3996, %v3998
  %v4000 = vrot.slane %v3825, 1
  %v4001 = vsel %vm1782, %v3998, %v4000
  %v4002 = vrot.slane %v3828, 1
  %v4003 = vsel %vm1782, %v4000, %v4002
  %v4004 = vrot.slane %v3831, 1
  %v4005 = vsel %vm1782, %v4002, %v4004
  %v4006 = vrot.slane %v3834, 1
  %v4007 = vsel %vm1782, %v4004, %v4006
  %v4008 = vrot.slane %v3837, 1
  %v4009 = vsel %vm1782, %v4006, %v4008
  %v4010 = vrot.slane %v3840, 1
  %v4011 = vsel %vm1782, %v4008, %v4010
  %v4012 = vrot.slane %v3843, 1
  %v4013 = vsel %vm1782, %v4010, %v4012
  %v4014 = vrot.slane %v3846, 1
  %v4015 = vsel %vm1782, %v4012, %v4014
  %v4016 = vrot.slane %v3849, 1
  %v4017 = vsel %vm1782, %v4014, %v4016
  %v4018 = vrot.slane %v3852, 1
  %v4019 = vsel %vm1782, %v4016, %v4018
  %v4020 = vrot.slane %v3855, 1
  %v4021 = vsel %vm1782, %v4018, %v4020
  %v4022 = vrot.slane %v3858, 1
  %v4023 = vsel %vm1782, %v4020, %v4022
  %v4024 = vrot.slane %v3861, 1
  %v4025 = vsel %vm1782, %v4022, %v4024
  %v4026 = vrot.slane %v3864, 1
  %v4027 = vsel %vm1782, %v4024, %v4026
  %v4028 = vrot.slane %v3867, 1
  %v4029 = vsel %vm1782, %v4026, %v4028
  %v4030 = vrot.slane %v3870, 1
  %v4031 = vsel %vm1782, %v4028, %v4030
  %v4032 = vrot.slane %v3873, 1
  %v4033 = vsel %vm1782, %v4030, %v4032
  %v4034 = vrot.slane %v3876, 1
  %v4035 = vsel %vm1782, %v4032, %v4034
  %v4036 = vrot.slane %v3879, 1
  %v4037 = vsel %vm1782, %v4034, %v4036
  %v4038 = vrot.slane %v3882, 1
  %v4039 = vsel %vm1782, %v4036, %v4038
  %v4040 = vrot.slane %v3885, 1
  %v4041 = vsel %vm1782, %v4038, %v4040
  %v4042 = vrot.slane %v3888, 1
  %v4043 = vsel %vm1782, %v4040, %v4042
  %v4044 = vrot.slane %v3891, 1
  %v4045 = vsel %vm1782, %v4042, %v4044
  %v4046 = vrot.slane %v3894, 1
  %v4047 = vsel %vm1782, %v4044, %v4046
  %v4048 = vrot.slane %v3897, 1
  %v4049 = vsel %vm1782, %v4046, %v4048
  %v4050 = vrot.slane %v3900, 1
  %v4051 = vsel %vm1782, %v4048, %v4050
  %v4052 = vrot.slane %v3903, 1
  %v4053 = vsel %vm1782, %v4050, %v4052
  %v4054 = vrot.slane %v3906, 1
  %v4055 = vsel %vm1782, %v4052, %v4054
  %v4056 = vrot.slane %v3909, 1
  %v4057 = vsel %vm1782, %v4054, %v4056
  %v4058 = vrot.slane %v3912, 1
  %v4059 = vsel %vm1782, %v4056, %v4058
  %v4060 = vrot.slane %v3915, 1
  %v4061 = vsel %vm1782, %v4058, %v4060
  %v4062 = vrot.slane %v3918, 1
  %v4063 = vsel %vm1782, %v4060, %v4062
  %v4064 = vrot.slane %v3921, 1
  %v4065 = vsel %vm1782, %v4062, %v4064
  %v4066 = vrot.slane %v3924, 1
  %v4067 = vsel %vm1782, %v4064, %v4066
  %v4068 = vrot.slane %v3927, 1
  %v4069 = vsel %vm1782, %v4066, %v4068
  %v4070 = vrot.slane %v3930, 1
  %v4071 = vsel %vm1782, %v4068, %v4070
  %v4072 = vrot.slane %v3933, 1
  %v4073 = vsel %vm1782, %v4070, %v4072
  %v4074 = vrot.slane %v3936, 1
  %v4075 = vsel %vm1782, %v4072, %v4074
  %v4076 = vrot.slane %v3939, 1
  %v4077 = vsel %vm1782, %v4074, %v4076
  %v4078 = vrot.slane %v3942, 1
  %v4079 = vsel %vm1782, %v4076, %v4078
  %v4080 = vrot.slane %v3945, 1
  %v4081 = vsel %vm1782, %v4078, %v4080
  %v4082 = vrot.slane %v3948, 1
  %v4083 = vsel %vm1782, %v4080, %v4082
  %v4084 = vrot.slane %v3951, 1
  %v4085 = vsel %vm1782, %v4082, %v4084
  %v4086 = vrot.slane %v3954, 1
  %v4087 = vsel %vm1782, %v4084, %v4086
  %v4088 = vrot.slane %v3957, 1
  %v4089 = vsel %vm1782, %v4086, %v4088
  %v4090 = vrot.slane %v3960, 1
  %v4091 = vsel %vm1782, %v4088, %v4090
  %v4092 = vrot.slane %v3963, 1
  %v4093 = vsel %vm1782, %v4090, %v4092
  %v4094 = vrot.slane %v3966, 1
  %v4095 = vsel %vm1782, %v4092, %v4094
  %v4096 = vrot.slane %v3969, 1
  %v4097 = vsel %vm1782, %v4094, %v4096
  %v4098 = vrot.slane %v3972, 1
  %v4099 = vsel %vm1782, %v4096, %v4098
  %v4165 = vmul.f32 %v3973, 0.0
  %v4166 = vmul.f32 %v1272, %v3975
  %v4167 = vmul.f32 %v1275, %v3977
  %v4168 = vmul.f32 %v1280, %v3979
  %v4169 = vmul.f32 %v1283, %v3981
  %v4170 = vmul.f32 %v1288, %v3983
  %v4171 = vmul.f32 %v1291, %v3985
  %v4172 = vmul.f32 %v1296, %v3987
  %v4173 = vmul.f32 %v1299, %v3989
  %v4174 = vmul.f32 %v1304, %v3991
  %v4175 = vmul.f32 %v1307, %v3993
  %v4176 = vmul.f32 %v1312, %v3995
  %v4177 = vmul.f32 %v1315, %v3997
  %v4178 = vmul.f32 %v1320, %v3999
  %v4179 = vmul.f32 %v1323, %v4001
  %v4180 = vmul.f32 %v1328, %v4003
  %v4181 = vmul.f32 %v1331, %v4005
  %v4182 = vmul.f32 %v1336, %v4007
  %v4183 = vmul.f32 %v1339, %v4009
  %v4184 = vmul.f32 %v1344, %v4011
  %v4185 = vmul.f32 %v1347, %v4013
  %v4186 = vmul.f32 %v1352, %v4015
  %v4187 = vmul.f32 %v1355, %v4017
  %v4188 = vmul.f32 %v1360, %v4019
  %v4189 = vmul.f32 %v1363, %v4021
  %v4190 = vmul.f32 %v1368, %v4023
  %v4191 = vmul.f32 %v1371, %v4025
  %v4192 = vmul.f32 %v1376, %v4027
  %v4193 = vmul.f32 %v1379, %v4029
  %v4194 = vmul.f32 %v1384, %v4031
  %v4195 = vmul.f32 %v1387, %v4033
  %v4196 = vmul.f32 %v1392, %v4035
  %v4197 = vmul.f32 %v1395, %v4037
  %v4198 = vmul.f32 %v1400, %v4039
  %v4199 = vmul.f32 %v1403, %v4041
  %v4200 = vmul.f32 %v1408, %v4043
  %v4201 = vmul.f32 %v1411, %v4045
  %v4202 = vmul.f32 %v1416, %v4047
  %v4203 = vmul.f32 %v1419, %v4049
  %v4204 = vmul.f32 %v1424, %v4051
  %v4205 = vmul.f32 %v1427, %v4053
  %v4206 = vmul.f32 %v1432, %v4055
  %v4207 = vmul.f32 %v1435, %v4057
  %v4208 = vmul.f32 %v1440, %v4059
  %v4209 = vmul.f32 %v1443, %v4061
  %v4210 = vmul.f32 %v1448, %v4063
  %v4211 = vmul.f32 %v1451, %v4065
  %v4212 = vmul.f32 %v1456, %v4067
  %v4213 = vmul.f32 %v1459, %v4069
  %v4214 = vmul.f32 %v1464, %v4071
  %v4215 = vmul.f32 %v1467, %v4073
  %v4216 = vmul.f32 %v1472, %v4075
  %v4217 = vmul.f32 %v1475, %v4077
  %v4218 = vmul.f32 %v1480, %v4079
  %v4219 = vmul.f32 %v1483, %v4081
  %v4220 = vmul.f32 %v1488, %v4083
  %v4221 = vmul.f32 %v1491, %v4085
  %v4222 = vmul.f32 %v1496, %v4087
  %v4223 = vmul.f32 %v1499, %v4089
  %v4224 = vmul.f32 %v1504, %v4091
  %v4225 = vmul.f32 %v1507, %v4093
  %v4226 = vmul.f32 %v1512, %v4095
  %v4227 = vmul.f32 %v1515, %v4097
  %v4228 = vmul.f32 %v1520, %v4099
  %v4229 = vmul.f32 %v1523, %v4098
  %4295 = vrot.lane.b32.xlu0 %v4165, 116
  %v4296 = vpop.permute.xlu0 %4295
  %4297 = vrot.lane.b32.xlu0 %v4166, 116
  %v4298 = vpop.permute.xlu0 %4297
  %4299 = vrot.lane.b32.xlu0 %v4167, 116
  %v4300 = vpop.permute.xlu0 %4299
  %4301 = vrot.lane.b32.xlu0 %v4168, 116
  %v4302 = vpop.permute.xlu0 %4301
  %4303 = vrot.lane.b32.xlu0 %v4169, 116
  %v4304 = vpop.permute.xlu0 %4303
  %4305 = vrot.lane.b32.xlu0 %v4170, 116
  %v4306 = vpop.permute.xlu0 %4305
  %4307 = vrot.lane.b32.xlu0 %v4171, 116
  %v4308 = vpop.permute.xlu0 %4307
  %4309 = vrot.lane.b32.xlu0 %v4172, 116
  %v4310 = vpop.permute.xlu0 %4309
  %4311 = vrot.lane.b32.xlu0 %v4173, 116
  %v4312 = vpop.permute.xlu0 %4311
  %4313 = vrot.lane.b32.xlu0 %v4174, 116
  %v4314 = vpop.permute.xlu0 %4313
  %4315 = vrot.lane.b32.xlu0 %v4175, 116
  %v4316 = vpop.permute.xlu0 %4315
  %4317 = vrot.lane.b32.xlu0 %v4176, 116
  %v4318 = vpop.permute.xlu0 %4317
  %4319 = vrot.lane.b32.xlu0 %v4177, 116
  %v4320 = vpop.permute.xlu0 %4319
  %4321 = vrot.lane.b32.xlu0 %v4178, 116
  %v4322 = vpop.permute.xlu0 %4321
  %4323 = vrot.lane.b32.xlu0 %v4179, 116
  %v4324 = vpop.permute.xlu0 %4323
  %4325 = vrot.lane.b32.xlu0 %v4180, 116
  %v4326 = vpop.permute.xlu0 %4325
  %4327 = vrot.lane.b32.xlu0 %v4181, 116
  %v4328 = vpop.permute.xlu0 %4327
  %4329 = vrot.lane.b32.xlu0 %v4182, 116
  %v4330 = vpop.permute.xlu0 %4329
  %4331 = vrot.lane.b32.xlu0 %v4183, 116
  %v4332 = vpop.permute.xlu0 %4331
  %4333 = vrot.lane.b32.xlu0 %v4184, 116
  %v4334 = vpop.permute.xlu0 %4333
  %4335 = vrot.lane.b32.xlu0 %v4185, 116
  %v4336 = vpop.permute.xlu0 %4335
  %4337 = vrot.lane.b32.xlu0 %v4186, 116
  %v4338 = vpop.permute.xlu0 %4337
  %4339 = vrot.lane.b32.xlu0 %v4187, 116
  %v4340 = vpop.permute.xlu0 %4339
  %4341 = vrot.lane.b32.xlu0 %v4188, 116
  %v4342 = vpop.permute.xlu0 %4341
  %4343 = vrot.lane.b32.xlu0 %v4189, 116
  %v4344 = vpop.permute.xlu0 %4343
  %4345 = vrot.lane.b32.xlu0 %v4190, 116
  %v4346 = vpop.permute.xlu0 %4345
  %4347 = vrot.lane.b32.xlu0 %v4191, 116
  %v4348 = vpop.permute.xlu0 %4347
  %4349 = vrot.lane.b32.xlu0 %v4192, 116
  %v4350 = vpop.permute.xlu0 %4349
  %4351 = vrot.lane.b32.xlu0 %v4193, 116
  %v4352 = vpop.permute.xlu0 %4351
  %4353 = vrot.lane.b32.xlu0 %v4194, 116
  %v4354 = vpop.permute.xlu0 %4353
  %4355 = vrot.lane.b32.xlu0 %v4195, 116
  %v4356 = vpop.permute.xlu0 %4355
  %4357 = vrot.lane.b32.xlu0 %v4196, 116
  %v4358 = vpop.permute.xlu0 %4357
  %4359 = vrot.lane.b32.xlu0 %v4197, 116
  %v4360 = vpop.permute.xlu0 %4359
  %4361 = vrot.lane.b32.xlu0 %v4198, 116
  %v4362 = vpop.permute.xlu0 %4361
  %4363 = vrot.lane.b32.xlu0 %v4199, 116
  %v4364 = vpop.permute.xlu0 %4363
  %4365 = vrot.lane.b32.xlu0 %v4200, 116
  %v4366 = vpop.permute.xlu0 %4365
  %4367 = vrot.lane.b32.xlu0 %v4201, 116
  %v4368 = vpop.permute.xlu0 %4367
  %4369 = vrot.lane.b32.xlu0 %v4202, 116
  %v4370 = vpop.permute.xlu0 %4369
  %4371 = vrot.lane.b32.xlu0 %v4203, 116
  %v4372 = vpop.permute.xlu0 %4371
  %4373 = vrot.lane.b32.xlu0 %v4204, 116
  %v4374 = vpop.permute.xlu0 %4373
  %4375 = vrot.lane.b32.xlu0 %v4205, 116
  %v4376 = vpop.permute.xlu0 %4375
  %4377 = vrot.lane.b32.xlu0 %v4206, 116
  %v4378 = vpop.permute.xlu0 %4377
  %4379 = vrot.lane.b32.xlu0 %v4207, 116
  %v4380 = vpop.permute.xlu0 %4379
  %4381 = vrot.lane.b32.xlu0 %v4208, 116
  %v4382 = vpop.permute.xlu0 %4381
  %4383 = vrot.lane.b32.xlu0 %v4209, 116
  %v4384 = vpop.permute.xlu0 %4383
  %4385 = vrot.lane.b32.xlu0 %v4210, 116
  %v4386 = vpop.permute.xlu0 %4385
  %4387 = vrot.lane.b32.xlu0 %v4211, 116
  %v4388 = vpop.permute.xlu0 %4387
  %4389 = vrot.lane.b32.xlu0 %v4212, 116
  %v4390 = vpop.permute.xlu0 %4389
  %4391 = vrot.lane.b32.xlu0 %v4213, 116
  %v4392 = vpop.permute.xlu0 %4391
  %4393 = vrot.lane.b32.xlu0 %v4214, 116
  %v4394 = vpop.permute.xlu0 %4393
  %4395 = vrot.lane.b32.xlu0 %v4215, 116
  %v4396 = vpop.permute.xlu0 %4395
  %4397 = vrot.lane.b32.xlu0 %v4216, 116
  %v4398 = vpop.permute.xlu0 %4397
  %4399 = vrot.lane.b32.xlu0 %v4217, 116
  %v4400 = vpop.permute.xlu0 %4399
  %4401 = vrot.lane.b32.xlu0 %v4218, 116
  %v4402 = vpop.permute.xlu0 %4401
  %4403 = vrot.lane.b32.xlu0 %v4219, 116
  %v4404 = vpop.permute.xlu0 %4403
  %4405 = vrot.lane.b32.xlu0 %v4220, 116
  %v4406 = vpop.permute.xlu0 %4405
  %4407 = vrot.lane.b32.xlu0 %v4221, 116
  %v4408 = vpop.permute.xlu0 %4407
  %4409 = vrot.lane.b32.xlu0 %v4222, 116
  %v4410 = vpop.permute.xlu0 %4409
  %4411 = vrot.lane.b32.xlu0 %v4223, 116
  %v4412 = vpop.permute.xlu0 %4411
  %4413 = vrot.lane.b32.xlu0 %v4224, 116
  %v4414 = vpop.permute.xlu0 %4413
  %4415 = vrot.lane.b32.xlu0 %v4225, 116
  %v4416 = vpop.permute.xlu0 %4415
  %4417 = vrot.lane.b32.xlu0 %v4226, 116
  %v4418 = vpop.permute.xlu0 %4417
  %4419 = vrot.lane.b32.xlu0 %v4227, 116
  %v4420 = vpop.permute.xlu0 %4419
  %4421 = vrot.lane.b32.xlu0 %v4228, 116
  %v4422 = vpop.permute.xlu0 %4421
  %4423 = vrot.lane.b32.xlu0 %v4229, 116
  %v4424 = vpop.permute.xlu0 %4423
  %v4490 = vadd.f32 %v3716, %v4296
  %v4491 = vadd.f32 %v3717, %v4298
  %v4492 = vadd.f32 %v3718, %v4300
  %v4493 = vadd.f32 %v3719, %v4302
  %v4494 = vadd.f32 %v3720, %v4304
  %v4495 = vadd.f32 %v3721, %v4306
  %v4496 = vadd.f32 %v3722, %v4308
  %v4497 = vadd.f32 %v3723, %v4310
  %v4498 = vadd.f32 %v3724, %v4312
  %v4499 = vadd.f32 %v3725, %v4314
  %v4500 = vadd.f32 %v3726, %v4316
  %v4501 = vadd.f32 %v3727, %v4318
  %v4502 = vadd.f32 %v3728, %v4320
  %v4503 = vadd.f32 %v3729, %v4322
  %v4504 = vadd.f32 %v3730, %v4324
  %v4505 = vadd.f32 %v3731, %v4326
  %v4506 = vadd.f32 %v3732, %v4328
  %v4507 = vadd.f32 %v3733, %v4330
  %v4508 = vadd.f32 %v3734, %v4332
  %v4509 = vadd.f32 %v3735, %v4334
  %v4510 = vadd.f32 %v3736, %v4336
  %v4511 = vadd.f32 %v3737, %v4338
  %v4512 = vadd.f32 %v3738, %v4340
  %v4513 = vadd.f32 %v3739, %v4342
  %v4514 = vadd.f32 %v3740, %v4344
  %v4515 = vadd.f32 %v3741, %v4346
  %v4516 = vadd.f32 %v3742, %v4348
  %v4517 = vadd.f32 %v3743, %v4350
  %v4518 = vadd.f32 %v3744, %v4352
  %v4519 = vadd.f32 %v3745, %v4354
  %v4520 = vadd.f32 %v3746, %v4356
  %v4521 = vadd.f32 %v3747, %v4358
  %v4522 = vadd.f32 %v3748, %v4360
  %v4523 = vadd.f32 %v3749, %v4362
  %v4524 = vadd.f32 %v3750, %v4364
  %v4525 = vadd.f32 %v3751, %v4366
  %v4526 = vadd.f32 %v3752, %v4368
  %v4527 = vadd.f32 %v3753, %v4370
  %v4528 = vadd.f32 %v3754, %v4372
  %v4529 = vadd.f32 %v3755, %v4374
  %v4530 = vadd.f32 %v3756, %v4376
  %v4531 = vadd.f32 %v3757, %v4378
  %v4532 = vadd.f32 %v3758, %v4380
  %v4533 = vadd.f32 %v3759, %v4382
  %v4534 = vadd.f32 %v3760, %v4384
  %v4535 = vadd.f32 %v3761, %v4386
  %v4536 = vadd.f32 %v3762, %v4388
  %v4537 = vadd.f32 %v3763, %v4390
  %v4538 = vadd.f32 %v3764, %v4392
  %v4539 = vadd.f32 %v3765, %v4394
  %v4540 = vadd.f32 %v3766, %v4396
  %v4541 = vadd.f32 %v3767, %v4398
  %v4542 = vadd.f32 %v3768, %v4400
  %v4543 = vadd.f32 %v3769, %v4402
  %v4544 = vadd.f32 %v3770, %v4404
  %v4545 = vadd.f32 %v3771, %v4406
  %v4546 = vadd.f32 %v3772, %v4408
  %v4547 = vadd.f32 %v3773, %v4410
  %v4548 = vadd.f32 %v3774, %v4412
  %v4549 = vadd.f32 %v3775, %v4414
  %v4550 = vadd.f32 %v3776, %v4416
  %v4551 = vadd.f32 %v3777, %v4418
  %v4552 = vadd.f32 %v3778, %v4420
  %v4553 = vadd.f32 %v3779, %v4422
  %v4554 = vadd.f32 %v3780, %v4424
  %4555 = vset.pattern.permute.xlu0 4
  %4556 = vperm.xlu0 %4555, %v1039
  %v4557 = vpop.permute.xlu0 %4556
  %4559 = vset.pattern.permute.xlu0 4
  %4560 = vperm.xlu0 %4559, %v1040
  %v4561 = vpop.permute.xlu0 %4560
  %4563 = vset.pattern.permute.xlu0 4
  %4564 = vperm.xlu0 %4563, %v1041
  %v4565 = vpop.permute.xlu0 %4564
  %4567 = vset.pattern.permute.xlu0 4
  %4568 = vperm.xlu0 %4567, %v1042
  %v4569 = vpop.permute.xlu0 %4568
  %4571 = vset.pattern.permute.xlu0 4
  %4572 = vperm.xlu0 %4571, %v1043
  %v4573 = vpop.permute.xlu0 %4572
  %4575 = vset.pattern.permute.xlu0 4
  %4576 = vperm.xlu0 %4575, %v1044
  %v4577 = vpop.permute.xlu0 %4576
  %4579 = vset.pattern.permute.xlu0 4
  %4580 = vperm.xlu0 %4579, %v1045
  %v4581 = vpop.permute.xlu0 %4580
  %4583 = vset.pattern.permute.xlu0 4
  %4584 = vperm.xlu0 %4583, %v1046
  %v4585 = vpop.permute.xlu0 %4584
  %4587 = vset.pattern.permute.xlu0 4
  %4588 = vperm.xlu0 %4587, %v1047
  %v4589 = vpop.permute.xlu0 %4588
  %4591 = vset.pattern.permute.xlu0 4
  %4592 = vperm.xlu0 %4591, %v1048
  %v4593 = vpop.permute.xlu0 %4592
  %4595 = vset.pattern.permute.xlu0 4
  %4596 = vperm.xlu0 %4595, %v1049
  %v4597 = vpop.permute.xlu0 %4596
  %4599 = vset.pattern.permute.xlu0 4
  %4600 = vperm.xlu0 %4599, %v1050
  %v4601 = vpop.permute.xlu0 %4600
  %4603 = vset.pattern.permute.xlu0 4
  %4604 = vperm.xlu0 %4603, %v1051
  %v4605 = vpop.permute.xlu0 %4604
  %4607 = vset.pattern.permute.xlu0 4
  %4608 = vperm.xlu0 %4607, %v1052
  %v4609 = vpop.permute.xlu0 %4608
  %4611 = vset.pattern.permute.xlu0 4
  %4612 = vperm.xlu0 %4611, %v1053
  %v4613 = vpop.permute.xlu0 %4612
  %4615 = vset.pattern.permute.xlu0 4
  %4616 = vperm.xlu0 %4615, %v1054
  %v4617 = vpop.permute.xlu0 %4616
  %4619 = vset.pattern.permute.xlu0 4
  %4620 = vperm.xlu0 %4619, %v1055
  %v4621 = vpop.permute.xlu0 %4620
  %4623 = vset.pattern.permute.xlu0 4
  %4624 = vperm.xlu0 %4623, %v1056
  %v4625 = vpop.permute.xlu0 %4624
  %4627 = vset.pattern.permute.xlu0 4
  %4628 = vperm.xlu0 %4627, %v1057
  %v4629 = vpop.permute.xlu0 %4628
  %4631 = vset.pattern.permute.xlu0 4
  %4632 = vperm.xlu0 %4631, %v1058
  %v4633 = vpop.permute.xlu0 %4632
  %4635 = vset.pattern.permute.xlu0 4
  %4636 = vperm.xlu0 %4635, %v1059
  %v4637 = vpop.permute.xlu0 %4636
  %4639 = vset.pattern.permute.xlu0 4
  %4640 = vperm.xlu0 %4639, %v1060
  %v4641 = vpop.permute.xlu0 %4640
  %4643 = vset.pattern.permute.xlu0 4
  %4644 = vperm.xlu0 %4643, %v1061
  %v4645 = vpop.permute.xlu0 %4644
  %4647 = vset.pattern.permute.xlu0 4
  %4648 = vperm.xlu0 %4647, %v1062
  %v4649 = vpop.permute.xlu0 %4648
  %4651 = vset.pattern.permute.xlu0 4
  %4652 = vperm.xlu0 %4651, %v1063
  %v4653 = vpop.permute.xlu0 %4652
  %4655 = vset.pattern.permute.xlu0 4
  %4656 = vperm.xlu0 %4655, %v1064
  %v4657 = vpop.permute.xlu0 %4656
  %4659 = vset.pattern.permute.xlu0 4
  %4660 = vperm.xlu0 %4659, %v1065
  %v4661 = vpop.permute.xlu0 %4660
  %4663 = vset.pattern.permute.xlu0 4
  %4664 = vperm.xlu0 %4663, %v1066
  %v4665 = vpop.permute.xlu0 %4664
  %4667 = vset.pattern.permute.xlu0 4
  %4668 = vperm.xlu0 %4667, %v1067
  %v4669 = vpop.permute.xlu0 %4668
  %4671 = vset.pattern.permute.xlu0 4
  %4672 = vperm.xlu0 %4671, %v1068
  %v4673 = vpop.permute.xlu0 %4672
  %4675 = vset.pattern.permute.xlu0 4
  %4676 = vperm.xlu0 %4675, %v1069
  %v4677 = vpop.permute.xlu0 %4676
  %4679 = vset.pattern.permute.xlu0 4
  %4680 = vperm.xlu0 %4679, %v1070
  %v4681 = vpop.permute.xlu0 %4680
  %4683 = vset.pattern.permute.xlu0 4
  %4684 = vperm.xlu0 %4683, %v1071
  %v4685 = vpop.permute.xlu0 %4684
  %4687 = vset.pattern.permute.xlu0 4
  %4688 = vperm.xlu0 %4687, %v1072
  %v4689 = vpop.permute.xlu0 %4688
  %4691 = vset.pattern.permute.xlu0 4
  %4692 = vperm.xlu0 %4691, %v1073
  %v4693 = vpop.permute.xlu0 %4692
  %4695 = vset.pattern.permute.xlu0 4
  %4696 = vperm.xlu0 %4695, %v1074
  %v4697 = vpop.permute.xlu0 %4696
  %4699 = vset.pattern.permute.xlu0 4
  %4700 = vperm.xlu0 %4699, %v1075
  %v4701 = vpop.permute.xlu0 %4700
  %4703 = vset.pattern.permute.xlu0 4
  %4704 = vperm.xlu0 %4703, %v1076
  %v4705 = vpop.permute.xlu0 %4704
  %4707 = vset.pattern.permute.xlu0 4
  %4708 = vperm.xlu0 %4707, %v1077
  %v4709 = vpop.permute.xlu0 %4708
  %4711 = vset.pattern.permute.xlu0 4
  %4712 = vperm.xlu0 %4711, %v1078
  %v4713 = vpop.permute.xlu0 %4712
  %4715 = vset.pattern.permute.xlu0 4
  %4716 = vperm.xlu0 %4715, %v1079
  %v4717 = vpop.permute.xlu0 %4716
  %4719 = vset.pattern.permute.xlu0 4
  %4720 = vperm.xlu0 %4719, %v1080
  %v4721 = vpop.permute.xlu0 %4720
  %4723 = vset.pattern.permute.xlu0 4
  %4724 = vperm.xlu0 %4723, %v1081
  %v4725 = vpop.permute.xlu0 %4724
  %4727 = vset.pattern.permute.xlu0 4
  %4728 = vperm.xlu0 %4727, %v1082
  %v4729 = vpop.permute.xlu0 %4728
  %4731 = vset.pattern.permute.xlu0 4
  %4732 = vperm.xlu0 %4731, %v1083
  %v4733 = vpop.permute.xlu0 %4732
  %4735 = vset.pattern.permute.xlu0 4
  %4736 = vperm.xlu0 %4735, %v1084
  %v4737 = vpop.permute.xlu0 %4736
  %4739 = vset.pattern.permute.xlu0 4
  %4740 = vperm.xlu0 %4739, %v1085
  %v4741 = vpop.permute.xlu0 %4740
  %4743 = vset.pattern.permute.xlu0 4
  %4744 = vperm.xlu0 %4743, %v1086
  %v4745 = vpop.permute.xlu0 %4744
  %4747 = vset.pattern.permute.xlu0 4
  %4748 = vperm.xlu0 %4747, %v1087
  %v4749 = vpop.permute.xlu0 %4748
  %4751 = vset.pattern.permute.xlu0 4
  %4752 = vperm.xlu0 %4751, %v1088
  %v4753 = vpop.permute.xlu0 %4752
  %4755 = vset.pattern.permute.xlu0 4
  %4756 = vperm.xlu0 %4755, %v1089
  %v4757 = vpop.permute.xlu0 %4756
  %4759 = vset.pattern.permute.xlu0 4
  %4760 = vperm.xlu0 %4759, %v1090
  %v4761 = vpop.permute.xlu0 %4760
  %4763 = vset.pattern.permute.xlu0 4
  %4764 = vperm.xlu0 %4763, %v1091
  %v4765 = vpop.permute.xlu0 %4764
  %4767 = vset.pattern.permute.xlu0 4
  %4768 = vperm.xlu0 %4767, %v1092
  %v4769 = vpop.permute.xlu0 %4768
  %4771 = vset.pattern.permute.xlu0 4
  %4772 = vperm.xlu0 %4771, %v1093
  %v4773 = vpop.permute.xlu0 %4772
  %4775 = vset.pattern.permute.xlu0 4
  %4776 = vperm.xlu0 %4775, %v1094
  %v4777 = vpop.permute.xlu0 %4776
  %4779 = vset.pattern.permute.xlu0 4
  %4780 = vperm.xlu0 %4779, %v1095
  %v4781 = vpop.permute.xlu0 %4780
  %4783 = vset.pattern.permute.xlu0 4
  %4784 = vperm.xlu0 %4783, %v1096
  %v4785 = vpop.permute.xlu0 %4784
  %4787 = vset.pattern.permute.xlu0 4
  %4788 = vperm.xlu0 %4787, %v1097
  %v4789 = vpop.permute.xlu0 %4788
  %4791 = vset.pattern.permute.xlu0 4
  %4792 = vperm.xlu0 %4791, %v1098
  %v4793 = vpop.permute.xlu0 %4792
  %4795 = vset.pattern.permute.xlu0 4
  %4796 = vperm.xlu0 %4795, %v1099
  %v4797 = vpop.permute.xlu0 %4796
  %4799 = vset.pattern.permute.xlu0 4
  %4800 = vperm.xlu0 %4799, %v1100
  %v4801 = vpop.permute.xlu0 %4800
  %4803 = vset.pattern.permute.xlu0 4
  %4804 = vperm.xlu0 %4803, %v1101
  %v4805 = vpop.permute.xlu0 %4804
  %4807 = vset.pattern.permute.xlu0 4
  %4808 = vperm.xlu0 %4807, %v1102
  %v4809 = vpop.permute.xlu0 %4808
  %v4811 = vmul.f32 %v1272, %v4557
  %v4812 = vmul.f32 %v1275, %v4561
  %v4813 = vmul.f32 %v1280, %v4565
  %v4814 = vmul.f32 %v1283, %v4569
  %v4815 = vmul.f32 %v1288, %v4573
  %v4816 = vmul.f32 %v1291, %v4577
  %v4817 = vmul.f32 %v1296, %v4581
  %v4818 = vmul.f32 %v1299, %v4585
  %v4819 = vmul.f32 %v1304, %v4589
  %v4820 = vmul.f32 %v1307, %v4593
  %v4821 = vmul.f32 %v1312, %v4597
  %v4822 = vmul.f32 %v1315, %v4601
  %v4823 = vmul.f32 %v1320, %v4605
  %v4824 = vmul.f32 %v1323, %v4609
  %v4825 = vmul.f32 %v1328, %v4613
  %v4826 = vmul.f32 %v1331, %v4617
  %v4827 = vmul.f32 %v1336, %v4621
  %v4828 = vmul.f32 %v1339, %v4625
  %v4829 = vmul.f32 %v1344, %v4629
  %v4830 = vmul.f32 %v1347, %v4633
  %v4831 = vmul.f32 %v1352, %v4637
  %v4832 = vmul.f32 %v1355, %v4641
  %v4833 = vmul.f32 %v1360, %v4645
  %v4834 = vmul.f32 %v1363, %v4649
  %v4835 = vmul.f32 %v1368, %v4653
  %v4836 = vmul.f32 %v1371, %v4657
  %v4837 = vmul.f32 %v1376, %v4661
  %v4838 = vmul.f32 %v1379, %v4665
  %v4839 = vmul.f32 %v1384, %v4669
  %v4840 = vmul.f32 %v1387, %v4673
  %v4841 = vmul.f32 %v1392, %v4677
  %v4842 = vmul.f32 %v1395, %v4681
  %v4843 = vmul.f32 %v1400, %v4685
  %v4844 = vmul.f32 %v1403, %v4689
  %v4845 = vmul.f32 %v1408, %v4693
  %v4846 = vmul.f32 %v1411, %v4697
  %v4847 = vmul.f32 %v1416, %v4701
  %v4848 = vmul.f32 %v1419, %v4705
  %v4849 = vmul.f32 %v1424, %v4709
  %v4850 = vmul.f32 %v1427, %v4713
  %v4851 = vmul.f32 %v1432, %v4717
  %v4852 = vmul.f32 %v1435, %v4721
  %v4853 = vmul.f32 %v1440, %v4725
  %v4854 = vmul.f32 %v1443, %v4729
  %v4855 = vmul.f32 %v1448, %v4733
  %v4856 = vmul.f32 %v1451, %v4737
  %v4857 = vmul.f32 %v1456, %v4741
  %v4858 = vmul.f32 %v1459, %v4745
  %v4859 = vmul.f32 %v1464, %v4749
  %v4860 = vmul.f32 %v1467, %v4753
  %v4861 = vmul.f32 %v1472, %v4757
  %v4862 = vmul.f32 %v1475, %v4761
  %v4863 = vmul.f32 %v1480, %v4765
  %v4864 = vmul.f32 %v1483, %v4769
  %v4865 = vmul.f32 %v1488, %v4773
  %v4866 = vmul.f32 %v1491, %v4777
  %v4867 = vmul.f32 %v1496, %v4781
  %v4868 = vmul.f32 %v1499, %v4785
  %v4869 = vmul.f32 %v1504, %v4789
  %v4870 = vmul.f32 %v1507, %v4793
  %v4871 = vmul.f32 %v1512, %v4797
  %v4872 = vmul.f32 %v1515, %v4801
  %v4873 = vmul.f32 %v1520, %v4805
  %v4874 = vmul.f32 %v1523, %v4809
  %v4939 = vrot.slane %v4811, 1
  %v4940 = vrot.slane %v4812, 1
  %v4941 = vsel %vm1782, %v4939, %v4940
  %v4942 = vrot.slane %v4813, 1
  %v4943 = vsel %vm1782, %v4940, %v4942
  %v4944 = vrot.slane %v4814, 1
  %v4945 = vsel %vm1782, %v4942, %v4944
  %v4946 = vrot.slane %v4815, 1
  %v4947 = vsel %vm1782, %v4944, %v4946
  %v4948 = vrot.slane %v4816, 1
  %v4949 = vsel %vm1782, %v4946, %v4948
  %v4950 = vrot.slane %v4817, 1
  %v4951 = vsel %vm1782, %v4948, %v4950
  %v4952 = vrot.slane %v4818, 1
  %v4953 = vsel %vm1782, %v4950, %v4952
  %v4954 = vrot.slane %v4819, 1
  %v4955 = vsel %vm1782, %v4952, %v4954
  %v4956 = vrot.slane %v4820, 1
  %v4957 = vsel %vm1782, %v4954, %v4956
  %v4958 = vrot.slane %v4821, 1
  %v4959 = vsel %vm1782, %v4956, %v4958
  %v4960 = vrot.slane %v4822, 1
  %v4961 = vsel %vm1782, %v4958, %v4960
  %v4962 = vrot.slane %v4823, 1
  %v4963 = vsel %vm1782, %v4960, %v4962
  %v4964 = vrot.slane %v4824, 1
  %v4965 = vsel %vm1782, %v4962, %v4964
  %v4966 = vrot.slane %v4825, 1
  %v4967 = vsel %vm1782, %v4964, %v4966
  %v4968 = vrot.slane %v4826, 1
  %v4969 = vsel %vm1782, %v4966, %v4968
  %v4970 = vrot.slane %v4827, 1
  %v4971 = vsel %vm1782, %v4968, %v4970
  %v4972 = vrot.slane %v4828, 1
  %v4973 = vsel %vm1782, %v4970, %v4972
  %v4974 = vrot.slane %v4829, 1
  %v4975 = vsel %vm1782, %v4972, %v4974
  %v4976 = vrot.slane %v4830, 1
  %v4977 = vsel %vm1782, %v4974, %v4976
  %v4978 = vrot.slane %v4831, 1
  %v4979 = vsel %vm1782, %v4976, %v4978
  %v4980 = vrot.slane %v4832, 1
  %v4981 = vsel %vm1782, %v4978, %v4980
  %v4982 = vrot.slane %v4833, 1
  %v4983 = vsel %vm1782, %v4980, %v4982
  %v4984 = vrot.slane %v4834, 1
  %v4985 = vsel %vm1782, %v4982, %v4984
  %v4986 = vrot.slane %v4835, 1
  %v4987 = vsel %vm1782, %v4984, %v4986
  %v4988 = vrot.slane %v4836, 1
  %v4989 = vsel %vm1782, %v4986, %v4988
  %v4990 = vrot.slane %v4837, 1
  %v4991 = vsel %vm1782, %v4988, %v4990
  %v4992 = vrot.slane %v4838, 1
  %v4993 = vsel %vm1782, %v4990, %v4992
  %v4994 = vrot.slane %v4839, 1
  %v4995 = vsel %vm1782, %v4992, %v4994
  %v4996 = vrot.slane %v4840, 1
  %v4997 = vsel %vm1782, %v4994, %v4996
  %v4998 = vrot.slane %v4841, 1
  %v4999 = vsel %vm1782, %v4996, %v4998
  %v5000 = vrot.slane %v4842, 1
  %v5001 = vsel %vm1782, %v4998, %v5000
  %v5002 = vrot.slane %v4843, 1
  %v5003 = vsel %vm1782, %v5000, %v5002
  %v5004 = vrot.slane %v4844, 1
  %v5005 = vsel %vm1782, %v5002, %v5004
  %v5006 = vrot.slane %v4845, 1
  %v5007 = vsel %vm1782, %v5004, %v5006
  %v5008 = vrot.slane %v4846, 1
  %v5009 = vsel %vm1782, %v5006, %v5008
  %v5010 = vrot.slane %v4847, 1
  %v5011 = vsel %vm1782, %v5008, %v5010
  %v5012 = vrot.slane %v4848, 1
  %v5013 = vsel %vm1782, %v5010, %v5012
  %v5014 = vrot.slane %v4849, 1
  %v5015 = vsel %vm1782, %v5012, %v5014
  %v5016 = vrot.slane %v4850, 1
  %v5017 = vsel %vm1782, %v5014, %v5016
  %v5018 = vrot.slane %v4851, 1
  %v5019 = vsel %vm1782, %v5016, %v5018
  %v5020 = vrot.slane %v4852, 1
  %v5021 = vsel %vm1782, %v5018, %v5020
  %v5022 = vrot.slane %v4853, 1
  %v5023 = vsel %vm1782, %v5020, %v5022
  %v5024 = vrot.slane %v4854, 1
  %v5025 = vsel %vm1782, %v5022, %v5024
  %v5026 = vrot.slane %v4855, 1
  %v5027 = vsel %vm1782, %v5024, %v5026
  %v5028 = vrot.slane %v4856, 1
  %v5029 = vsel %vm1782, %v5026, %v5028
  %v5030 = vrot.slane %v4857, 1
  %v5031 = vsel %vm1782, %v5028, %v5030
  %v5032 = vrot.slane %v4858, 1
  %v5033 = vsel %vm1782, %v5030, %v5032
  %v5034 = vrot.slane %v4859, 1
  %v5035 = vsel %vm1782, %v5032, %v5034
  %v5036 = vrot.slane %v4860, 1
  %v5037 = vsel %vm1782, %v5034, %v5036
  %v5038 = vrot.slane %v4861, 1
  %v5039 = vsel %vm1782, %v5036, %v5038
  %v5040 = vrot.slane %v4862, 1
  %v5041 = vsel %vm1782, %v5038, %v5040
  %v5042 = vrot.slane %v4863, 1
  %v5043 = vsel %vm1782, %v5040, %v5042
  %v5044 = vrot.slane %v4864, 1
  %v5045 = vsel %vm1782, %v5042, %v5044
  %v5046 = vrot.slane %v4865, 1
  %v5047 = vsel %vm1782, %v5044, %v5046
  %v5048 = vrot.slane %v4866, 1
  %v5049 = vsel %vm1782, %v5046, %v5048
  %v5050 = vrot.slane %v4867, 1
  %v5051 = vsel %vm1782, %v5048, %v5050
  %v5052 = vrot.slane %v4868, 1
  %v5053 = vsel %vm1782, %v5050, %v5052
  %v5054 = vrot.slane %v4869, 1
  %v5055 = vsel %vm1782, %v5052, %v5054
  %v5056 = vrot.slane %v4870, 1
  %v5057 = vsel %vm1782, %v5054, %v5056
  %v5058 = vrot.slane %v4871, 1
  %v5059 = vsel %vm1782, %v5056, %v5058
  %v5060 = vrot.slane %v4872, 1
  %v5061 = vsel %vm1782, %v5058, %v5060
  %v5062 = vrot.slane %v4873, 1
  %v5063 = vsel %vm1782, %v5060, %v5062
  %v5064 = vrot.slane %v4874, 1
  %v5065 = vsel %vm1782, %v5062, %v5064
  %5066 = vrot.lane.b32.xlu0 %v4939, 112
  %v5067 = vpop.permute.xlu0 %5066
  %5068 = vrot.lane.b32.xlu0 %v4941, 112
  %v5069 = vpop.permute.xlu0 %5068
  %5070 = vrot.lane.b32.xlu0 %v4943, 112
  %v5071 = vpop.permute.xlu0 %5070
  %5072 = vrot.lane.b32.xlu0 %v4945, 112
  %v5073 = vpop.permute.xlu0 %5072
  %5074 = vrot.lane.b32.xlu0 %v4947, 112
  %v5075 = vpop.permute.xlu0 %5074
  %5076 = vrot.lane.b32.xlu0 %v4949, 112
  %v5077 = vpop.permute.xlu0 %5076
  %5078 = vrot.lane.b32.xlu0 %v4951, 112
  %v5079 = vpop.permute.xlu0 %5078
  %5080 = vrot.lane.b32.xlu0 %v4953, 112
  %v5081 = vpop.permute.xlu0 %5080
  %5082 = vrot.lane.b32.xlu0 %v4955, 112
  %v5083 = vpop.permute.xlu0 %5082
  %5084 = vrot.lane.b32.xlu0 %v4957, 112
  %v5085 = vpop.permute.xlu0 %5084
  %5086 = vrot.lane.b32.xlu0 %v4959, 112
  %v5087 = vpop.permute.xlu0 %5086
  %5088 = vrot.lane.b32.xlu0 %v4961, 112
  %v5089 = vpop.permute.xlu0 %5088
  %5090 = vrot.lane.b32.xlu0 %v4963, 112
  %v5091 = vpop.permute.xlu0 %5090
  %5092 = vrot.lane.b32.xlu0 %v4965, 112
  %v5093 = vpop.permute.xlu0 %5092
  %5094 = vrot.lane.b32.xlu0 %v4967, 112
  %v5095 = vpop.permute.xlu0 %5094
  %5096 = vrot.lane.b32.xlu0 %v4969, 112
  %v5097 = vpop.permute.xlu0 %5096
  %5098 = vrot.lane.b32.xlu0 %v4971, 112
  %v5099 = vpop.permute.xlu0 %5098
  %5100 = vrot.lane.b32.xlu0 %v4973, 112
  %v5101 = vpop.permute.xlu0 %5100
  %5102 = vrot.lane.b32.xlu0 %v4975, 112
  %v5103 = vpop.permute.xlu0 %5102
  %5104 = vrot.lane.b32.xlu0 %v4977, 112
  %v5105 = vpop.permute.xlu0 %5104
  %5106 = vrot.lane.b32.xlu0 %v4979, 112
  %v5107 = vpop.permute.xlu0 %5106
  %5108 = vrot.lane.b32.xlu0 %v4981, 112
  %v5109 = vpop.permute.xlu0 %5108
  %5110 = vrot.lane.b32.xlu0 %v4983, 112
  %v5111 = vpop.permute.xlu0 %5110
  %5112 = vrot.lane.b32.xlu0 %v4985, 112
  %v5113 = vpop.permute.xlu0 %5112
  %5114 = vrot.lane.b32.xlu0 %v4987, 112
  %v5115 = vpop.permute.xlu0 %5114
  %5116 = vrot.lane.b32.xlu0 %v4989, 112
  %v5117 = vpop.permute.xlu0 %5116
  %5118 = vrot.lane.b32.xlu0 %v4991, 112
  %v5119 = vpop.permute.xlu0 %5118
  %5120 = vrot.lane.b32.xlu0 %v4993, 112
  %v5121 = vpop.permute.xlu0 %5120
  %5122 = vrot.lane.b32.xlu0 %v4995, 112
  %v5123 = vpop.permute.xlu0 %5122
  %5124 = vrot.lane.b32.xlu0 %v4997, 112
  %v5125 = vpop.permute.xlu0 %5124
  %5126 = vrot.lane.b32.xlu0 %v4999, 112
  %v5127 = vpop.permute.xlu0 %5126
  %5128 = vrot.lane.b32.xlu0 %v5001, 112
  %v5129 = vpop.permute.xlu0 %5128
  %5130 = vrot.lane.b32.xlu0 %v5003, 112
  %v5131 = vpop.permute.xlu0 %5130
  %5132 = vrot.lane.b32.xlu0 %v5005, 112
  %v5133 = vpop.permute.xlu0 %5132
  %5134 = vrot.lane.b32.xlu0 %v5007, 112
  %v5135 = vpop.permute.xlu0 %5134
  %5136 = vrot.lane.b32.xlu0 %v5009, 112
  %v5137 = vpop.permute.xlu0 %5136
  %5138 = vrot.lane.b32.xlu0 %v5011, 112
  %v5139 = vpop.permute.xlu0 %5138
  %5140 = vrot.lane.b32.xlu0 %v5013, 112
  %v5141 = vpop.permute.xlu0 %5140
  %5142 = vrot.lane.b32.xlu0 %v5015, 112
  %v5143 = vpop.permute.xlu0 %5142
  %5144 = vrot.lane.b32.xlu0 %v5017, 112
  %v5145 = vpop.permute.xlu0 %5144
  %5146 = vrot.lane.b32.xlu0 %v5019, 112
  %v5147 = vpop.permute.xlu0 %5146
  %5148 = vrot.lane.b32.xlu0 %v5021, 112
  %v5149 = vpop.permute.xlu0 %5148
  %5150 = vrot.lane.b32.xlu0 %v5023, 112
  %v5151 = vpop.permute.xlu0 %5150
  %5152 = vrot.lane.b32.xlu0 %v5025, 112
  %v5153 = vpop.permute.xlu0 %5152
  %5154 = vrot.lane.b32.xlu0 %v5027, 112
  %v5155 = vpop.permute.xlu0 %5154
  %5156 = vrot.lane.b32.xlu0 %v5029, 112
  %v5157 = vpop.permute.xlu0 %5156
  %5158 = vrot.lane.b32.xlu0 %v5031, 112
  %v5159 = vpop.permute.xlu0 %5158
  %5160 = vrot.lane.b32.xlu0 %v5033, 112
  %v5161 = vpop.permute.xlu0 %5160
  %5162 = vrot.lane.b32.xlu0 %v5035, 112
  %v5163 = vpop.permute.xlu0 %5162
  %5164 = vrot.lane.b32.xlu0 %v5037, 112
  %v5165 = vpop.permute.xlu0 %5164
  %5166 = vrot.lane.b32.xlu0 %v5039, 112
  %v5167 = vpop.permute.xlu0 %5166
  %5168 = vrot.lane.b32.xlu0 %v5041, 112
  %v5169 = vpop.permute.xlu0 %5168
  %5170 = vrot.lane.b32.xlu0 %v5043, 112
  %v5171 = vpop.permute.xlu0 %5170
  %5172 = vrot.lane.b32.xlu0 %v5045, 112
  %v5173 = vpop.permute.xlu0 %5172
  %5174 = vrot.lane.b32.xlu0 %v5047, 112
  %v5175 = vpop.permute.xlu0 %5174
  %5176 = vrot.lane.b32.xlu0 %v5049, 112
  %v5177 = vpop.permute.xlu0 %5176
  %5178 = vrot.lane.b32.xlu0 %v5051, 112
  %v5179 = vpop.permute.xlu0 %5178
  %5180 = vrot.lane.b32.xlu0 %v5053, 112
  %v5181 = vpop.permute.xlu0 %5180
  %5182 = vrot.lane.b32.xlu0 %v5055, 112
  %v5183 = vpop.permute.xlu0 %5182
  %5184 = vrot.lane.b32.xlu0 %v5057, 112
  %v5185 = vpop.permute.xlu0 %5184
  %5186 = vrot.lane.b32.xlu0 %v5059, 112
  %v5187 = vpop.permute.xlu0 %5186
  %5188 = vrot.lane.b32.xlu0 %v5061, 112
  %v5189 = vpop.permute.xlu0 %5188
  %5190 = vrot.lane.b32.xlu0 %v5063, 112
  %v5191 = vpop.permute.xlu0 %5190
  %5192 = vrot.lane.b32.xlu0 %v5065, 112
  %v5193 = vpop.permute.xlu0 %5192
  %5194 = vrot.lane.b32.xlu0 %v5064, 112
  %v5195 = vpop.permute.xlu0 %5194
  %v5261 = vadd.f32 %v4490, %v5067
  %v5262 = vadd.f32 %v4491, %v5069
  %v5263 = vadd.f32 %v4492, %v5071
  %v5264 = vadd.f32 %v4493, %v5073
  %v5265 = vadd.f32 %v4494, %v5075
  %v5266 = vadd.f32 %v4495, %v5077
  %v5267 = vadd.f32 %v4496, %v5079
  %v5268 = vadd.f32 %v4497, %v5081
  %v5269 = vadd.f32 %v4498, %v5083
  %v5270 = vadd.f32 %v4499, %v5085
  %v5271 = vadd.f32 %v4500, %v5087
  %v5272 = vadd.f32 %v4501, %v5089
  %v5273 = vadd.f32 %v4502, %v5091
  %v5274 = vadd.f32 %v4503, %v5093
  %v5275 = vadd.f32 %v4504, %v5095
  %v5276 = vadd.f32 %v4505, %v5097
  %v5277 = vadd.f32 %v4506, %v5099
  %v5278 = vadd.f32 %v4507, %v5101
  %v5279 = vadd.f32 %v4508, %v5103
  %v5280 = vadd.f32 %v4509, %v5105
  %v5281 = vadd.f32 %v4510, %v5107
  %v5282 = vadd.f32 %v4511, %v5109
  %v5283 = vadd.f32 %v4512, %v5111
  %v5284 = vadd.f32 %v4513, %v5113
  %v5285 = vadd.f32 %v4514, %v5115
  %v5286 = vadd.f32 %v4515, %v5117
  %v5287 = vadd.f32 %v4516, %v5119
  %v5288 = vadd.f32 %v4517, %v5121
  %v5289 = vadd.f32 %v4518, %v5123
  %v5290 = vadd.f32 %v4519, %v5125
  %v5291 = vadd.f32 %v4520, %v5127
  %v5292 = vadd.f32 %v4521, %v5129
  %v5293 = vadd.f32 %v4522, %v5131
  %v5294 = vadd.f32 %v4523, %v5133
  %v5295 = vadd.f32 %v4524, %v5135
  %v5296 = vadd.f32 %v4525, %v5137
  %v5297 = vadd.f32 %v4526, %v5139
  %v5298 = vadd.f32 %v4527, %v5141
  %v5299 = vadd.f32 %v4528, %v5143
  %v5300 = vadd.f32 %v4529, %v5145
  %v5301 = vadd.f32 %v4530, %v5147
  %v5302 = vadd.f32 %v4531, %v5149
  %v5303 = vadd.f32 %v4532, %v5151
  %v5304 = vadd.f32 %v4533, %v5153
  %v5305 = vadd.f32 %v4534, %v5155
  %v5306 = vadd.f32 %v4535, %v5157
  %v5307 = vadd.f32 %v4536, %v5159
  %v5308 = vadd.f32 %v4537, %v5161
  %v5309 = vadd.f32 %v4538, %v5163
  %v5310 = vadd.f32 %v4539, %v5165
  %v5311 = vadd.f32 %v4540, %v5167
  %v5312 = vadd.f32 %v4541, %v5169
  %v5313 = vadd.f32 %v4542, %v5171
  %v5314 = vadd.f32 %v4543, %v5173
  %v5315 = vadd.f32 %v4544, %v5175
  %v5316 = vadd.f32 %v4545, %v5177
  %v5317 = vadd.f32 %v4546, %v5179
  %v5318 = vadd.f32 %v4547, %v5181
  %v5319 = vadd.f32 %v4548, %v5183
  %v5320 = vadd.f32 %v4549, %v5185
  %v5321 = vadd.f32 %v4550, %v5187
  %v5322 = vadd.f32 %v4551, %v5189
  %v5323 = vadd.f32 %v4552, %v5191
  %v5324 = vadd.f32 %v4553, %v5193
  %v5325 = vadd.f32 %v4554, %v5195
  %5326 = vset.pattern.permute.xlu0 5
  %5327 = vperm.xlu0 %5326, %v1039
  %v5328 = vpop.permute.xlu0 %5327
  %5329 = vset.pattern.permute.xlu0 5
  %5330 = vperm.xlu0 %5329, %v1040
  %v5331 = vpop.permute.xlu0 %5330
  %5332 = vset.pattern.permute.xlu0 5
  %5333 = vperm.xlu0 %5332, %v1041
  %v5334 = vpop.permute.xlu0 %5333
  %5335 = vset.pattern.permute.xlu0 5
  %5336 = vperm.xlu0 %5335, %v1042
  %v5337 = vpop.permute.xlu0 %5336
  %5338 = vset.pattern.permute.xlu0 5
  %5339 = vperm.xlu0 %5338, %v1043
  %v5340 = vpop.permute.xlu0 %5339
  %5341 = vset.pattern.permute.xlu0 5
  %5342 = vperm.xlu0 %5341, %v1044
  %v5343 = vpop.permute.xlu0 %5342
  %5344 = vset.pattern.permute.xlu0 5
  %5345 = vperm.xlu0 %5344, %v1045
  %v5346 = vpop.permute.xlu0 %5345
  %5347 = vset.pattern.permute.xlu0 5
  %5348 = vperm.xlu0 %5347, %v1046
  %v5349 = vpop.permute.xlu0 %5348
  %5350 = vset.pattern.permute.xlu0 5
  %5351 = vperm.xlu0 %5350, %v1047
  %v5352 = vpop.permute.xlu0 %5351
  %5353 = vset.pattern.permute.xlu0 5
  %5354 = vperm.xlu0 %5353, %v1048
  %v5355 = vpop.permute.xlu0 %5354
  %5356 = vset.pattern.permute.xlu0 5
  %5357 = vperm.xlu0 %5356, %v1049
  %v5358 = vpop.permute.xlu0 %5357
  %5359 = vset.pattern.permute.xlu0 5
  %5360 = vperm.xlu0 %5359, %v1050
  %v5361 = vpop.permute.xlu0 %5360
  %5362 = vset.pattern.permute.xlu0 5
  %5363 = vperm.xlu0 %5362, %v1051
  %v5364 = vpop.permute.xlu0 %5363
  %5365 = vset.pattern.permute.xlu0 5
  %5366 = vperm.xlu0 %5365, %v1052
  %v5367 = vpop.permute.xlu0 %5366
  %5368 = vset.pattern.permute.xlu0 5
  %5369 = vperm.xlu0 %5368, %v1053
  %v5370 = vpop.permute.xlu0 %5369
  %5371 = vset.pattern.permute.xlu0 5
  %5372 = vperm.xlu0 %5371, %v1054
  %v5373 = vpop.permute.xlu0 %5372
  %5374 = vset.pattern.permute.xlu0 5
  %5375 = vperm.xlu0 %5374, %v1055
  %v5376 = vpop.permute.xlu0 %5375
  %5377 = vset.pattern.permute.xlu0 5
  %5378 = vperm.xlu0 %5377, %v1056
  %v5379 = vpop.permute.xlu0 %5378
  %5380 = vset.pattern.permute.xlu0 5
  %5381 = vperm.xlu0 %5380, %v1057
  %v5382 = vpop.permute.xlu0 %5381
  %5383 = vset.pattern.permute.xlu0 5
  %5384 = vperm.xlu0 %5383, %v1058
  %v5385 = vpop.permute.xlu0 %5384
  %5386 = vset.pattern.permute.xlu0 5
  %5387 = vperm.xlu0 %5386, %v1059
  %v5388 = vpop.permute.xlu0 %5387
  %5389 = vset.pattern.permute.xlu0 5
  %5390 = vperm.xlu0 %5389, %v1060
  %v5391 = vpop.permute.xlu0 %5390
  %5392 = vset.pattern.permute.xlu0 5
  %5393 = vperm.xlu0 %5392, %v1061
  %v5394 = vpop.permute.xlu0 %5393
  %5395 = vset.pattern.permute.xlu0 5
  %5396 = vperm.xlu0 %5395, %v1062
  %v5397 = vpop.permute.xlu0 %5396
  %5398 = vset.pattern.permute.xlu0 5
  %5399 = vperm.xlu0 %5398, %v1063
  %v5400 = vpop.permute.xlu0 %5399
  %5401 = vset.pattern.permute.xlu0 5
  %5402 = vperm.xlu0 %5401, %v1064
  %v5403 = vpop.permute.xlu0 %5402
  %5404 = vset.pattern.permute.xlu0 5
  %5405 = vperm.xlu0 %5404, %v1065
  %v5406 = vpop.permute.xlu0 %5405
  %5407 = vset.pattern.permute.xlu0 5
  %5408 = vperm.xlu0 %5407, %v1066
  %v5409 = vpop.permute.xlu0 %5408
  %5410 = vset.pattern.permute.xlu0 5
  %5411 = vperm.xlu0 %5410, %v1067
  %v5412 = vpop.permute.xlu0 %5411
  %5413 = vset.pattern.permute.xlu0 5
  %5414 = vperm.xlu0 %5413, %v1068
  %v5415 = vpop.permute.xlu0 %5414
  %5416 = vset.pattern.permute.xlu0 5
  %5417 = vperm.xlu0 %5416, %v1069
  %v5418 = vpop.permute.xlu0 %5417
  %5419 = vset.pattern.permute.xlu0 5
  %5420 = vperm.xlu0 %5419, %v1070
  %v5421 = vpop.permute.xlu0 %5420
  %5422 = vset.pattern.permute.xlu0 5
  %5423 = vperm.xlu0 %5422, %v1071
  %v5424 = vpop.permute.xlu0 %5423
  %5425 = vset.pattern.permute.xlu0 5
  %5426 = vperm.xlu0 %5425, %v1072
  %v5427 = vpop.permute.xlu0 %5426
  %5428 = vset.pattern.permute.xlu0 5
  %5429 = vperm.xlu0 %5428, %v1073
  %v5430 = vpop.permute.xlu0 %5429
  %5431 = vset.pattern.permute.xlu0 5
  %5432 = vperm.xlu0 %5431, %v1074
  %v5433 = vpop.permute.xlu0 %5432
  %5434 = vset.pattern.permute.xlu0 5
  %5435 = vperm.xlu0 %5434, %v1075
  %v5436 = vpop.permute.xlu0 %5435
  %5437 = vset.pattern.permute.xlu0 5
  %5438 = vperm.xlu0 %5437, %v1076
  %v5439 = vpop.permute.xlu0 %5438
  %5440 = vset.pattern.permute.xlu0 5
  %5441 = vperm.xlu0 %5440, %v1077
  %v5442 = vpop.permute.xlu0 %5441
  %5443 = vset.pattern.permute.xlu0 5
  %5444 = vperm.xlu0 %5443, %v1078
  %v5445 = vpop.permute.xlu0 %5444
  %5446 = vset.pattern.permute.xlu0 5
  %5447 = vperm.xlu0 %5446, %v1079
  %v5448 = vpop.permute.xlu0 %5447
  %5449 = vset.pattern.permute.xlu0 5
  %5450 = vperm.xlu0 %5449, %v1080
  %v5451 = vpop.permute.xlu0 %5450
  %5452 = vset.pattern.permute.xlu0 5
  %5453 = vperm.xlu0 %5452, %v1081
  %v5454 = vpop.permute.xlu0 %5453
  %5455 = vset.pattern.permute.xlu0 5
  %5456 = vperm.xlu0 %5455, %v1082
  %v5457 = vpop.permute.xlu0 %5456
  %5458 = vset.pattern.permute.xlu0 5
  %5459 = vperm.xlu0 %5458, %v1083
  %v5460 = vpop.permute.xlu0 %5459
  %5461 = vset.pattern.permute.xlu0 5
  %5462 = vperm.xlu0 %5461, %v1084
  %v5463 = vpop.permute.xlu0 %5462
  %5464 = vset.pattern.permute.xlu0 5
  %5465 = vperm.xlu0 %5464, %v1085
  %v5466 = vpop.permute.xlu0 %5465
  %5467 = vset.pattern.permute.xlu0 5
  %5468 = vperm.xlu0 %5467, %v1086
  %v5469 = vpop.permute.xlu0 %5468
  %5470 = vset.pattern.permute.xlu0 5
  %5471 = vperm.xlu0 %5470, %v1087
  %v5472 = vpop.permute.xlu0 %5471
  %5473 = vset.pattern.permute.xlu0 5
  %5474 = vperm.xlu0 %5473, %v1088
  %v5475 = vpop.permute.xlu0 %5474
  %5476 = vset.pattern.permute.xlu0 5
  %5477 = vperm.xlu0 %5476, %v1089
  %v5478 = vpop.permute.xlu0 %5477
  %5479 = vset.pattern.permute.xlu0 5
  %5480 = vperm.xlu0 %5479, %v1090
  %v5481 = vpop.permute.xlu0 %5480
  %5482 = vset.pattern.permute.xlu0 5
  %5483 = vperm.xlu0 %5482, %v1091
  %v5484 = vpop.permute.xlu0 %5483
  %5485 = vset.pattern.permute.xlu0 5
  %5486 = vperm.xlu0 %5485, %v1092
  %v5487 = vpop.permute.xlu0 %5486
  %5488 = vset.pattern.permute.xlu0 5
  %5489 = vperm.xlu0 %5488, %v1093
  %v5490 = vpop.permute.xlu0 %5489
  %5491 = vset.pattern.permute.xlu0 5
  %5492 = vperm.xlu0 %5491, %v1094
  %v5493 = vpop.permute.xlu0 %5492
  %5494 = vset.pattern.permute.xlu0 5
  %5495 = vperm.xlu0 %5494, %v1095
  %v5496 = vpop.permute.xlu0 %5495
  %5497 = vset.pattern.permute.xlu0 5
  %5498 = vperm.xlu0 %5497, %v1096
  %v5499 = vpop.permute.xlu0 %5498
  %5500 = vset.pattern.permute.xlu0 5
  %5501 = vperm.xlu0 %5500, %v1097
  %v5502 = vpop.permute.xlu0 %5501
  %5503 = vset.pattern.permute.xlu0 5
  %5504 = vperm.xlu0 %5503, %v1098
  %v5505 = vpop.permute.xlu0 %5504
  %5506 = vset.pattern.permute.xlu0 5
  %5507 = vperm.xlu0 %5506, %v1099
  %v5508 = vpop.permute.xlu0 %5507
  %5509 = vset.pattern.permute.xlu0 5
  %5510 = vperm.xlu0 %5509, %v1100
  %v5511 = vpop.permute.xlu0 %5510
  %5512 = vset.pattern.permute.xlu0 5
  %5513 = vperm.xlu0 %5512, %v1101
  %v5514 = vpop.permute.xlu0 %5513
  %5515 = vset.pattern.permute.xlu0 5
  %5516 = vperm.xlu0 %5515, %v1102
  %v5517 = vpop.permute.xlu0 %5516
  %v5518 = vrot.slane %v5328, 7
  %v5519 = vrot.slane %v5331, 7
  %v5520 = vsel %vm3068, %v5518, %v5519
  %v5521 = vrot.slane %v5334, 7
  %v5522 = vsel %vm3068, %v5519, %v5521
  %v5523 = vrot.slane %v5337, 7
  %v5524 = vsel %vm3068, %v5521, %v5523
  %v5525 = vrot.slane %v5340, 7
  %v5526 = vsel %vm3068, %v5523, %v5525
  %v5527 = vrot.slane %v5343, 7
  %v5528 = vsel %vm3068, %v5525, %v5527
  %v5529 = vrot.slane %v5346, 7
  %v5530 = vsel %vm3068, %v5527, %v5529
  %v5531 = vrot.slane %v5349, 7
  %v5532 = vsel %vm3068, %v5529, %v5531
  %v5533 = vrot.slane %v5352, 7
  %v5534 = vsel %vm3068, %v5531, %v5533
  %v5535 = vrot.slane %v5355, 7
  %v5536 = vsel %vm3068, %v5533, %v5535
  %v5537 = vrot.slane %v5358, 7
  %v5538 = vsel %vm3068, %v5535, %v5537
  %v5539 = vrot.slane %v5361, 7
  %v5540 = vsel %vm3068, %v5537, %v5539
  %v5541 = vrot.slane %v5364, 7
  %v5542 = vsel %vm3068, %v5539, %v5541
  %v5543 = vrot.slane %v5367, 7
  %v5544 = vsel %vm3068, %v5541, %v5543
  %v5545 = vrot.slane %v5370, 7
  %v5546 = vsel %vm3068, %v5543, %v5545
  %v5547 = vrot.slane %v5373, 7
  %v5548 = vsel %vm3068, %v5545, %v5547
  %v5549 = vrot.slane %v5376, 7
  %v5550 = vsel %vm3068, %v5547, %v5549
  %v5551 = vrot.slane %v5379, 7
  %v5552 = vsel %vm3068, %v5549, %v5551
  %v5553 = vrot.slane %v5382, 7
  %v5554 = vsel %vm3068, %v5551, %v5553
  %v5555 = vrot.slane %v5385, 7
  %v5556 = vsel %vm3068, %v5553, %v5555
  %v5557 = vrot.slane %v5388, 7
  %v5558 = vsel %vm3068, %v5555, %v5557
  %v5559 = vrot.slane %v5391, 7
  %v5560 = vsel %vm3068, %v5557, %v5559
  %v5561 = vrot.slane %v5394, 7
  %v5562 = vsel %vm3068, %v5559, %v5561
  %v5563 = vrot.slane %v5397, 7
  %v5564 = vsel %vm3068, %v5561, %v5563
  %v5565 = vrot.slane %v5400, 7
  %v5566 = vsel %vm3068, %v5563, %v5565
  %v5567 = vrot.slane %v5403, 7
  %v5568 = vsel %vm3068, %v5565, %v5567
  %v5569 = vrot.slane %v5406, 7
  %v5570 = vsel %vm3068, %v5567, %v5569
  %v5571 = vrot.slane %v5409, 7
  %v5572 = vsel %vm3068, %v5569, %v5571
  %v5573 = vrot.slane %v5412, 7
  %v5574 = vsel %vm3068, %v5571, %v5573
  %v5575 = vrot.slane %v5415, 7
  %v5576 = vsel %vm3068, %v5573, %v5575
  %v5577 = vrot.slane %v5418, 7
  %v5578 = vsel %vm3068, %v5575, %v5577
  %v5579 = vrot.slane %v5421, 7
  %v5580 = vsel %vm3068, %v5577, %v5579
  %v5581 = vrot.slane %v5424, 7
  %v5582 = vsel %vm3068, %v5579, %v5581
  %v5583 = vrot.slane %v5427, 7
  %v5584 = vsel %vm3068, %v5581, %v5583
  %v5585 = vrot.slane %v5430, 7
  %v5586 = vsel %vm3068, %v5583, %v5585
  %v5587 = vrot.slane %v5433, 7
  %v5588 = vsel %vm3068, %v5585, %v5587
  %v5589 = vrot.slane %v5436, 7
  %v5590 = vsel %vm3068, %v5587, %v5589
  %v5591 = vrot.slane %v5439, 7
  %v5592 = vsel %vm3068, %v5589, %v5591
  %v5593 = vrot.slane %v5442, 7
  %v5594 = vsel %vm3068, %v5591, %v5593
  %v5595 = vrot.slane %v5445, 7
  %v5596 = vsel %vm3068, %v5593, %v5595
  %v5597 = vrot.slane %v5448, 7
  %v5598 = vsel %vm3068, %v5595, %v5597
  %v5599 = vrot.slane %v5451, 7
  %v5600 = vsel %vm3068, %v5597, %v5599
  %v5601 = vrot.slane %v5454, 7
  %v5602 = vsel %vm3068, %v5599, %v5601
  %v5603 = vrot.slane %v5457, 7
  %v5604 = vsel %vm3068, %v5601, %v5603
  %v5605 = vrot.slane %v5460, 7
  %v5606 = vsel %vm3068, %v5603, %v5605
  %v5607 = vrot.slane %v5463, 7
  %v5608 = vsel %vm3068, %v5605, %v5607
  %v5609 = vrot.slane %v5466, 7
  %v5610 = vsel %vm3068, %v5607, %v5609
  %v5611 = vrot.slane %v5469, 7
  %v5612 = vsel %vm3068, %v5609, %v5611
  %v5613 = vrot.slane %v5472, 7
  %v5614 = vsel %vm3068, %v5611, %v5613
  %v5615 = vrot.slane %v5475, 7
  %v5616 = vsel %vm3068, %v5613, %v5615
  %v5617 = vrot.slane %v5478, 7
  %v5618 = vsel %vm3068, %v5615, %v5617
  %v5619 = vrot.slane %v5481, 7
  %v5620 = vsel %vm3068, %v5617, %v5619
  %v5621 = vrot.slane %v5484, 7
  %v5622 = vsel %vm3068, %v5619, %v5621
  %v5623 = vrot.slane %v5487, 7
  %v5624 = vsel %vm3068, %v5621, %v5623
  %v5625 = vrot.slane %v5490, 7
  %v5626 = vsel %vm3068, %v5623, %v5625
  %v5627 = vrot.slane %v5493, 7
  %v5628 = vsel %vm3068, %v5625, %v5627
  %v5629 = vrot.slane %v5496, 7
  %v5630 = vsel %vm3068, %v5627, %v5629
  %v5631 = vrot.slane %v5499, 7
  %v5632 = vsel %vm3068, %v5629, %v5631
  %v5633 = vrot.slane %v5502, 7
  %v5634 = vsel %vm3068, %v5631, %v5633
  %v5635 = vrot.slane %v5505, 7
  %v5636 = vsel %vm3068, %v5633, %v5635
  %v5637 = vrot.slane %v5508, 7
  %v5638 = vsel %vm3068, %v5635, %v5637
  %v5639 = vrot.slane %v5511, 7
  %v5640 = vsel %vm3068, %v5637, %v5639
  %v5641 = vrot.slane %v5514, 7
  %v5642 = vsel %vm3068, %v5639, %v5641
  %v5643 = vrot.slane %v5517, 7
  %v5644 = vsel %vm3068, %v5641, %v5643
  %v5710 = vmul.f32 %v1272, %v5518
  %v5711 = vmul.f32 %v1275, %v5520
  %v5712 = vmul.f32 %v1280, %v5522
  %v5713 = vmul.f32 %v1283, %v5524
  %v5714 = vmul.f32 %v1288, %v5526
  %v5715 = vmul.f32 %v1291, %v5528
  %v5716 = vmul.f32 %v1296, %v5530
  %v5717 = vmul.f32 %v1299, %v5532
  %v5718 = vmul.f32 %v1304, %v5534
  %v5719 = vmul.f32 %v1307, %v5536
  %v5720 = vmul.f32 %v1312, %v5538
  %v5721 = vmul.f32 %v1315, %v5540
  %v5722 = vmul.f32 %v1320, %v5542
  %v5723 = vmul.f32 %v1323, %v5544
  %v5724 = vmul.f32 %v1328, %v5546
  %v5725 = vmul.f32 %v1331, %v5548
  %v5726 = vmul.f32 %v1336, %v5550
  %v5727 = vmul.f32 %v1339, %v5552
  %v5728 = vmul.f32 %v1344, %v5554
  %v5729 = vmul.f32 %v1347, %v5556
  %v5730 = vmul.f32 %v1352, %v5558
  %v5731 = vmul.f32 %v1355, %v5560
  %v5732 = vmul.f32 %v1360, %v5562
  %v5733 = vmul.f32 %v1363, %v5564
  %v5734 = vmul.f32 %v1368, %v5566
  %v5735 = vmul.f32 %v1371, %v5568
  %v5736 = vmul.f32 %v1376, %v5570
  %v5737 = vmul.f32 %v1379, %v5572
  %v5738 = vmul.f32 %v1384, %v5574
  %v5739 = vmul.f32 %v1387, %v5576
  %v5740 = vmul.f32 %v1392, %v5578
  %v5741 = vmul.f32 %v1395, %v5580
  %v5742 = vmul.f32 %v1400, %v5582
  %v5743 = vmul.f32 %v1403, %v5584
  %v5744 = vmul.f32 %v1408, %v5586
  %v5745 = vmul.f32 %v1411, %v5588
  %v5746 = vmul.f32 %v1416, %v5590
  %v5747 = vmul.f32 %v1419, %v5592
  %v5748 = vmul.f32 %v1424, %v5594
  %v5749 = vmul.f32 %v1427, %v5596
  %v5750 = vmul.f32 %v1432, %v5598
  %v5751 = vmul.f32 %v1435, %v5600
  %v5752 = vmul.f32 %v1440, %v5602
  %v5753 = vmul.f32 %v1443, %v5604
  %v5754 = vmul.f32 %v1448, %v5606
  %v5755 = vmul.f32 %v1451, %v5608
  %v5756 = vmul.f32 %v1456, %v5610
  %v5757 = vmul.f32 %v1459, %v5612
  %v5758 = vmul.f32 %v1464, %v5614
  %v5759 = vmul.f32 %v1467, %v5616
  %v5760 = vmul.f32 %v1472, %v5618
  %v5761 = vmul.f32 %v1475, %v5620
  %v5762 = vmul.f32 %v1480, %v5622
  %v5763 = vmul.f32 %v1483, %v5624
  %v5764 = vmul.f32 %v1488, %v5626
  %v5765 = vmul.f32 %v1491, %v5628
  %v5766 = vmul.f32 %v1496, %v5630
  %v5767 = vmul.f32 %v1499, %v5632
  %v5768 = vmul.f32 %v1504, %v5634
  %v5769 = vmul.f32 %v1507, %v5636
  %v5770 = vmul.f32 %v1512, %v5638
  %v5771 = vmul.f32 %v1515, %v5640
  %v5772 = vmul.f32 %v1520, %v5642
  %v5773 = vmul.f32 %v1523, %v5644
  %v5774 = vmul.f32 %v5643, 0.0
  %v5840 = vrot.slane %v5710, 2
  %v5841 = vrot.slane %v5711, 2
  %v5842 = vsel %vm3391, %v5840, %v5841
  %v5843 = vrot.slane %v5712, 2
  %v5844 = vsel %vm3391, %v5841, %v5843
  %v5845 = vrot.slane %v5713, 2
  %v5846 = vsel %vm3391, %v5843, %v5845
  %v5847 = vrot.slane %v5714, 2
  %v5848 = vsel %vm3391, %v5845, %v5847
  %v5849 = vrot.slane %v5715, 2
  %v5850 = vsel %vm3391, %v5847, %v5849
  %v5851 = vrot.slane %v5716, 2
  %v5852 = vsel %vm3391, %v5849, %v5851
  %v5853 = vrot.slane %v5717, 2
  %v5854 = vsel %vm3391, %v5851, %v5853
  %v5855 = vrot.slane %v5718, 2
  %v5856 = vsel %vm3391, %v5853, %v5855
  %v5857 = vrot.slane %v5719, 2
  %v5858 = vsel %vm3391, %v5855, %v5857
  %v5859 = vrot.slane %v5720, 2
  %v5860 = vsel %vm3391, %v5857, %v5859
  %v5861 = vrot.slane %v5721, 2
  %v5862 = vsel %vm3391, %v5859, %v5861
  %v5863 = vrot.slane %v5722, 2
  %v5864 = vsel %vm3391, %v5861, %v5863
  %v5865 = vrot.slane %v5723, 2
  %v5866 = vsel %vm3391, %v5863, %v5865
  %v5867 = vrot.slane %v5724, 2
  %v5868 = vsel %vm3391, %v5865, %v5867
  %v5869 = vrot.slane %v5725, 2
  %v5870 = vsel %vm3391, %v5867, %v5869
  %v5871 = vrot.slane %v5726, 2
  %v5872 = vsel %vm3391, %v5869, %v5871
  %v5873 = vrot.slane %v5727, 2
  %v5874 = vsel %vm3391, %v5871, %v5873
  %v5875 = vrot.slane %v5728, 2
  %v5876 = vsel %vm3391, %v5873, %v5875
  %v5877 = vrot.slane %v5729, 2
  %v5878 = vsel %vm3391, %v5875, %v5877
  %v5879 = vrot.slane %v5730, 2
  %v5880 = vsel %vm3391, %v5877, %v5879
  %v5881 = vrot.slane %v5731, 2
  %v5882 = vsel %vm3391, %v5879, %v5881
  %v5883 = vrot.slane %v5732, 2
  %v5884 = vsel %vm3391, %v5881, %v5883
  %v5885 = vrot.slane %v5733, 2
  %v5886 = vsel %vm3391, %v5883, %v5885
  %v5887 = vrot.slane %v5734, 2
  %v5888 = vsel %vm3391, %v5885, %v5887
  %v5889 = vrot.slane %v5735, 2
  %v5890 = vsel %vm3391, %v5887, %v5889
  %v5891 = vrot.slane %v5736, 2
  %v5892 = vsel %vm3391, %v5889, %v5891
  %v5893 = vrot.slane %v5737, 2
  %v5894 = vsel %vm3391, %v5891, %v5893
  %v5895 = vrot.slane %v5738, 2
  %v5896 = vsel %vm3391, %v5893, %v5895
  %v5897 = vrot.slane %v5739, 2
  %v5898 = vsel %vm3391, %v5895, %v5897
  %v5899 = vrot.slane %v5740, 2
  %v5900 = vsel %vm3391, %v5897, %v5899
  %v5901 = vrot.slane %v5741, 2
  %v5902 = vsel %vm3391, %v5899, %v5901
  %v5903 = vrot.slane %v5742, 2
  %v5904 = vsel %vm3391, %v5901, %v5903
  %v5905 = vrot.slane %v5743, 2
  %v5906 = vsel %vm3391, %v5903, %v5905
  %v5907 = vrot.slane %v5744, 2
  %v5908 = vsel %vm3391, %v5905, %v5907
  %v5909 = vrot.slane %v5745, 2
  %v5910 = vsel %vm3391, %v5907, %v5909
  %v5911 = vrot.slane %v5746, 2
  %v5912 = vsel %vm3391, %v5909, %v5911
  %v5913 = vrot.slane %v5747, 2
  %v5914 = vsel %vm3391, %v5911, %v5913
  %v5915 = vrot.slane %v5748, 2
  %v5916 = vsel %vm3391, %v5913, %v5915
  %v5917 = vrot.slane %v5749, 2
  %v5918 = vsel %vm3391, %v5915, %v5917
  %v5919 = vrot.slane %v5750, 2
  %v5920 = vsel %vm3391, %v5917, %v5919
  %v5921 = vrot.slane %v5751, 2
  %v5922 = vsel %vm3391, %v5919, %v5921
  %v5923 = vrot.slane %v5752, 2
  %v5924 = vsel %vm3391, %v5921, %v5923
  %v5925 = vrot.slane %v5753, 2
  %v5926 = vsel %vm3391, %v5923, %v5925
  %v5927 = vrot.slane %v5754, 2
  %v5928 = vsel %vm3391, %v5925, %v5927
  %v5929 = vrot.slane %v5755, 2
  %v5930 = vsel %vm3391, %v5927, %v5929
  %v5931 = vrot.slane %v5756, 2
  %v5932 = vsel %vm3391, %v5929, %v5931
  %v5933 = vrot.slane %v5757, 2
  %v5934 = vsel %vm3391, %v5931, %v5933
  %v5935 = vrot.slane %v5758, 2
  %v5936 = vsel %vm3391, %v5933, %v5935
  %v5937 = vrot.slane %v5759, 2
  %v5938 = vsel %vm3391, %v5935, %v5937
  %v5939 = vrot.slane %v5760, 2
  %v5940 = vsel %vm3391, %v5937, %v5939
  %v5941 = vrot.slane %v5761, 2
  %v5942 = vsel %vm3391, %v5939, %v5941
  %v5943 = vrot.slane %v5762, 2
  %v5944 = vsel %vm3391, %v5941, %v5943
  %v5945 = vrot.slane %v5763, 2
  %v5946 = vsel %vm3391, %v5943, %v5945
  %v5947 = vrot.slane %v5764, 2
  %v5948 = vsel %vm3391, %v5945, %v5947
  %v5949 = vrot.slane %v5765, 2
  %v5950 = vsel %vm3391, %v5947, %v5949
  %v5951 = vrot.slane %v5766, 2
  %v5952 = vsel %vm3391, %v5949, %v5951
  %v5953 = vrot.slane %v5767, 2
  %v5954 = vsel %vm3391, %v5951, %v5953
  %v5955 = vrot.slane %v5768, 2
  %v5956 = vsel %vm3391, %v5953, %v5955
  %v5957 = vrot.slane %v5769, 2
  %v5958 = vsel %vm3391, %v5955, %v5957
  %v5959 = vrot.slane %v5770, 2
  %v5960 = vsel %vm3391, %v5957, %v5959
  %v5961 = vrot.slane %v5771, 2
  %v5962 = vsel %vm3391, %v5959, %v5961
  %v5963 = vrot.slane %v5772, 2
  %v5964 = vsel %vm3391, %v5961, %v5963
  %v5965 = vrot.slane %v5773, 2
  %v5966 = vsel %vm3391, %v5963, %v5965
  %v5967 = vrot.slane %v5774, 2
  %v5968 = vsel %vm3391, %v5965, %v5967
  %5969 = vrot.lane.b32.xlu0 %v5840, 108
  %v5970 = vpop.permute.xlu0 %5969
  %5971 = vrot.lane.b32.xlu0 %v5842, 108
  %v5972 = vpop.permute.xlu0 %5971
  %5973 = vrot.lane.b32.xlu0 %v5844, 108
  %v5974 = vpop.permute.xlu0 %5973
  %5975 = vrot.lane.b32.xlu0 %v5846, 108
  %v5976 = vpop.permute.xlu0 %5975
  %5977 = vrot.lane.b32.xlu0 %v5848, 108
  %v5978 = vpop.permute.xlu0 %5977
  %5979 = vrot.lane.b32.xlu0 %v5850, 108
  %v5980 = vpop.permute.xlu0 %5979
  %5981 = vrot.lane.b32.xlu0 %v5852, 108
  %v5982 = vpop.permute.xlu0 %5981
  %5983 = vrot.lane.b32.xlu0 %v5854, 108
  %v5984 = vpop.permute.xlu0 %5983
  %5985 = vrot.lane.b32.xlu0 %v5856, 108
  %v5986 = vpop.permute.xlu0 %5985
  %5987 = vrot.lane.b32.xlu0 %v5858, 108
  %v5988 = vpop.permute.xlu0 %5987
  %5989 = vrot.lane.b32.xlu0 %v5860, 108
  %v5990 = vpop.permute.xlu0 %5989
  %5991 = vrot.lane.b32.xlu0 %v5862, 108
  %v5992 = vpop.permute.xlu0 %5991
  %5993 = vrot.lane.b32.xlu0 %v5864, 108
  %v5994 = vpop.permute.xlu0 %5993
  %5995 = vrot.lane.b32.xlu0 %v5866, 108
  %v5996 = vpop.permute.xlu0 %5995
  %5997 = vrot.lane.b32.xlu0 %v5868, 108
  %v5998 = vpop.permute.xlu0 %5997
  %5999 = vrot.lane.b32.xlu0 %v5870, 108
  %v6000 = vpop.permute.xlu0 %5999
  %6001 = vrot.lane.b32.xlu0 %v5872, 108
  %v6002 = vpop.permute.xlu0 %6001
  %6003 = vrot.lane.b32.xlu0 %v5874, 108
  %v6004 = vpop.permute.xlu0 %6003
  %6005 = vrot.lane.b32.xlu0 %v5876, 108
  %v6006 = vpop.permute.xlu0 %6005
  %6007 = vrot.lane.b32.xlu0 %v5878, 108
  %v6008 = vpop.permute.xlu0 %6007
  %6009 = vrot.lane.b32.xlu0 %v5880, 108
  %v6010 = vpop.permute.xlu0 %6009
  %6011 = vrot.lane.b32.xlu0 %v5882, 108
  %v6012 = vpop.permute.xlu0 %6011
  %6013 = vrot.lane.b32.xlu0 %v5884, 108
  %v6014 = vpop.permute.xlu0 %6013
  %6015 = vrot.lane.b32.xlu0 %v5886, 108
  %v6016 = vpop.permute.xlu0 %6015
  %6017 = vrot.lane.b32.xlu0 %v5888, 108
  %v6018 = vpop.permute.xlu0 %6017
  %6019 = vrot.lane.b32.xlu0 %v5890, 108
  %v6020 = vpop.permute.xlu0 %6019
  %6021 = vrot.lane.b32.xlu0 %v5892, 108
  %v6022 = vpop.permute.xlu0 %6021
  %6023 = vrot.lane.b32.xlu0 %v5894, 108
  %v6024 = vpop.permute.xlu0 %6023
  %6025 = vrot.lane.b32.xlu0 %v5896, 108
  %v6026 = vpop.permute.xlu0 %6025
  %6027 = vrot.lane.b32.xlu0 %v5898, 108
  %v6028 = vpop.permute.xlu0 %6027
  %6029 = vrot.lane.b32.xlu0 %v5900, 108
  %v6030 = vpop.permute.xlu0 %6029
  %6031 = vrot.lane.b32.xlu0 %v5902, 108
  %v6032 = vpop.permute.xlu0 %6031
  %6033 = vrot.lane.b32.xlu0 %v5904, 108
  %v6034 = vpop.permute.xlu0 %6033
  %6035 = vrot.lane.b32.xlu0 %v5906, 108
  %v6036 = vpop.permute.xlu0 %6035
  %6037 = vrot.lane.b32.xlu0 %v5908, 108
  %v6038 = vpop.permute.xlu0 %6037
  %6039 = vrot.lane.b32.xlu0 %v5910, 108
  %v6040 = vpop.permute.xlu0 %6039
  %6041 = vrot.lane.b32.xlu0 %v5912, 108
  %v6042 = vpop.permute.xlu0 %6041
  %6043 = vrot.lane.b32.xlu0 %v5914, 108
  %v6044 = vpop.permute.xlu0 %6043
  %6045 = vrot.lane.b32.xlu0 %v5916, 108
  %v6046 = vpop.permute.xlu0 %6045
  %6047 = vrot.lane.b32.xlu0 %v5918, 108
  %v6048 = vpop.permute.xlu0 %6047
  %6049 = vrot.lane.b32.xlu0 %v5920, 108
  %v6050 = vpop.permute.xlu0 %6049
  %6051 = vrot.lane.b32.xlu0 %v5922, 108
  %v6052 = vpop.permute.xlu0 %6051
  %6053 = vrot.lane.b32.xlu0 %v5924, 108
  %v6054 = vpop.permute.xlu0 %6053
  %6055 = vrot.lane.b32.xlu0 %v5926, 108
  %v6056 = vpop.permute.xlu0 %6055
  %6057 = vrot.lane.b32.xlu0 %v5928, 108
  %v6058 = vpop.permute.xlu0 %6057
  %6059 = vrot.lane.b32.xlu0 %v5930, 108
  %v6060 = vpop.permute.xlu0 %6059
  %6061 = vrot.lane.b32.xlu0 %v5932, 108
  %v6062 = vpop.permute.xlu0 %6061
  %6063 = vrot.lane.b32.xlu0 %v5934, 108
  %v6064 = vpop.permute.xlu0 %6063
  %6065 = vrot.lane.b32.xlu0 %v5936, 108
  %v6066 = vpop.permute.xlu0 %6065
  %6067 = vrot.lane.b32.xlu0 %v5938, 108
  %v6068 = vpop.permute.xlu0 %6067
  %6069 = vrot.lane.b32.xlu0 %v5940, 108
  %v6070 = vpop.permute.xlu0 %6069
  %6071 = vrot.lane.b32.xlu0 %v5942, 108
  %v6072 = vpop.permute.xlu0 %6071
  %6073 = vrot.lane.b32.xlu0 %v5944, 108
  %v6074 = vpop.permute.xlu0 %6073
  %6075 = vrot.lane.b32.xlu0 %v5946, 108
  %v6076 = vpop.permute.xlu0 %6075
  %6077 = vrot.lane.b32.xlu0 %v5948, 108
  %v6078 = vpop.permute.xlu0 %6077
  %6079 = vrot.lane.b32.xlu0 %v5950, 108
  %v6080 = vpop.permute.xlu0 %6079
  %6081 = vrot.lane.b32.xlu0 %v5952, 108
  %v6082 = vpop.permute.xlu0 %6081
  %6083 = vrot.lane.b32.xlu0 %v5954, 108
  %v6084 = vpop.permute.xlu0 %6083
  %6085 = vrot.lane.b32.xlu0 %v5956, 108
  %v6086 = vpop.permute.xlu0 %6085
  %6087 = vrot.lane.b32.xlu0 %v5958, 108
  %v6088 = vpop.permute.xlu0 %6087
  %6089 = vrot.lane.b32.xlu0 %v5960, 108
  %v6090 = vpop.permute.xlu0 %6089
  %6091 = vrot.lane.b32.xlu0 %v5962, 108
  %v6092 = vpop.permute.xlu0 %6091
  %6093 = vrot.lane.b32.xlu0 %v5964, 108
  %v6094 = vpop.permute.xlu0 %6093
  %6095 = vrot.lane.b32.xlu0 %v5966, 108
  %v6096 = vpop.permute.xlu0 %6095
  %6097 = vrot.lane.b32.xlu0 %v5968, 108
  %v6098 = vpop.permute.xlu0 %6097
  %v6164 = vadd.f32 %v5261, %v5970
  %v6165 = vadd.f32 %v5262, %v5972
  %v6166 = vadd.f32 %v5263, %v5974
  %v6167 = vadd.f32 %v5264, %v5976
  %v6168 = vadd.f32 %v5265, %v5978
  %v6169 = vadd.f32 %v5266, %v5980
  %v6170 = vadd.f32 %v5267, %v5982
  %v6171 = vadd.f32 %v5268, %v5984
  %v6172 = vadd.f32 %v5269, %v5986
  %v6173 = vadd.f32 %v5270, %v5988
  %v6174 = vadd.f32 %v5271, %v5990
  %v6175 = vadd.f32 %v5272, %v5992
  %v6176 = vadd.f32 %v5273, %v5994
  %v6177 = vadd.f32 %v5274, %v5996
  %v6178 = vadd.f32 %v5275, %v5998
  %v6179 = vadd.f32 %v5276, %v6000
  %v6180 = vadd.f32 %v5277, %v6002
  %v6181 = vadd.f32 %v5278, %v6004
  %v6182 = vadd.f32 %v5279, %v6006
  %v6183 = vadd.f32 %v5280, %v6008
  %v6184 = vadd.f32 %v5281, %v6010
  %v6185 = vadd.f32 %v5282, %v6012
  %v6186 = vadd.f32 %v5283, %v6014
  %v6187 = vadd.f32 %v5284, %v6016
  %v6188 = vadd.f32 %v5285, %v6018
  %v6189 = vadd.f32 %v5286, %v6020
  %v6190 = vadd.f32 %v5287, %v6022
  %v6191 = vadd.f32 %v5288, %v6024
  %v6192 = vadd.f32 %v5289, %v6026
  %v6193 = vadd.f32 %v5290, %v6028
  %v6194 = vadd.f32 %v5291, %v6030
  %v6195 = vadd.f32 %v5292, %v6032
  %v6196 = vadd.f32 %v5293, %v6034
  %v6197 = vadd.f32 %v5294, %v6036
  %v6198 = vadd.f32 %v5295, %v6038
  %v6199 = vadd.f32 %v5296, %v6040
  %v6200 = vadd.f32 %v5297, %v6042
  %v6201 = vadd.f32 %v5298, %v6044
  %v6202 = vadd.f32 %v5299, %v6046
  %v6203 = vadd.f32 %v5300, %v6048
  %v6204 = vadd.f32 %v5301, %v6050
  %v6205 = vadd.f32 %v5302, %v6052
  %v6206 = vadd.f32 %v5303, %v6054
  %v6207 = vadd.f32 %v5304, %v6056
  %v6208 = vadd.f32 %v5305, %v6058
  %v6209 = vadd.f32 %v5306, %v6060
  %v6210 = vadd.f32 %v5307, %v6062
  %v6211 = vadd.f32 %v5308, %v6064
  %v6212 = vadd.f32 %v5309, %v6066
  %v6213 = vadd.f32 %v5310, %v6068
  %v6214 = vadd.f32 %v5311, %v6070
  %v6215 = vadd.f32 %v5312, %v6072
  %v6216 = vadd.f32 %v5313, %v6074
  %v6217 = vadd.f32 %v5314, %v6076
  %v6218 = vadd.f32 %v5315, %v6078
  %v6219 = vadd.f32 %v5316, %v6080
  %v6220 = vadd.f32 %v5317, %v6082
  %v6221 = vadd.f32 %v5318, %v6084
  %v6222 = vadd.f32 %v5319, %v6086
  %v6223 = vadd.f32 %v5320, %v6088
  %v6224 = vadd.f32 %v5321, %v6090
  %v6225 = vadd.f32 %v5322, %v6092
  %v6226 = vadd.f32 %v5323, %v6094
  %v6227 = vadd.f32 %v5324, %v6096
  %v6228 = vadd.f32 %v5325, %v6098
  %6229 = vset.pattern.permute.xlu0 6
  %6230 = vperm.xlu0 %6229, %v1039
  %v6231 = vpop.permute.xlu0 %6230
  %6232 = vset.pattern.permute.xlu0 6
  %6233 = vperm.xlu0 %6232, %v1040
  %v6234 = vpop.permute.xlu0 %6233
  %6235 = vset.pattern.permute.xlu0 6
  %6236 = vperm.xlu0 %6235, %v1041
  %v6237 = vpop.permute.xlu0 %6236
  %6238 = vset.pattern.permute.xlu0 6
  %6239 = vperm.xlu0 %6238, %v1042
  %v6240 = vpop.permute.xlu0 %6239
  %6241 = vset.pattern.permute.xlu0 6
  %6242 = vperm.xlu0 %6241, %v1043
  %v6243 = vpop.permute.xlu0 %6242
  %6244 = vset.pattern.permute.xlu0 6
  %6245 = vperm.xlu0 %6244, %v1044
  %v6246 = vpop.permute.xlu0 %6245
  %6247 = vset.pattern.permute.xlu0 6
  %6248 = vperm.xlu0 %6247, %v1045
  %v6249 = vpop.permute.xlu0 %6248
  %6250 = vset.pattern.permute.xlu0 6
  %6251 = vperm.xlu0 %6250, %v1046
  %v6252 = vpop.permute.xlu0 %6251
  %6253 = vset.pattern.permute.xlu0 6
  %6254 = vperm.xlu0 %6253, %v1047
  %v6255 = vpop.permute.xlu0 %6254
  %6256 = vset.pattern.permute.xlu0 6
  %6257 = vperm.xlu0 %6256, %v1048
  %v6258 = vpop.permute.xlu0 %6257
  %6259 = vset.pattern.permute.xlu0 6
  %6260 = vperm.xlu0 %6259, %v1049
  %v6261 = vpop.permute.xlu0 %6260
  %6262 = vset.pattern.permute.xlu0 6
  %6263 = vperm.xlu0 %6262, %v1050
  %v6264 = vpop.permute.xlu0 %6263
  %6265 = vset.pattern.permute.xlu0 6
  %6266 = vperm.xlu0 %6265, %v1051
  %v6267 = vpop.permute.xlu0 %6266
  %6268 = vset.pattern.permute.xlu0 6
  %6269 = vperm.xlu0 %6268, %v1052
  %v6270 = vpop.permute.xlu0 %6269
  %6271 = vset.pattern.permute.xlu0 6
  %6272 = vperm.xlu0 %6271, %v1053
  %v6273 = vpop.permute.xlu0 %6272
  %6274 = vset.pattern.permute.xlu0 6
  %6275 = vperm.xlu0 %6274, %v1054
  %v6276 = vpop.permute.xlu0 %6275
  %6277 = vset.pattern.permute.xlu0 6
  %6278 = vperm.xlu0 %6277, %v1055
  %v6279 = vpop.permute.xlu0 %6278
  %6280 = vset.pattern.permute.xlu0 6
  %6281 = vperm.xlu0 %6280, %v1056
  %v6282 = vpop.permute.xlu0 %6281
  %6283 = vset.pattern.permute.xlu0 6
  %6284 = vperm.xlu0 %6283, %v1057
  %v6285 = vpop.permute.xlu0 %6284
  %6286 = vset.pattern.permute.xlu0 6
  %6287 = vperm.xlu0 %6286, %v1058
  %v6288 = vpop.permute.xlu0 %6287
  %6289 = vset.pattern.permute.xlu0 6
  %6290 = vperm.xlu0 %6289, %v1059
  %v6291 = vpop.permute.xlu0 %6290
  %6292 = vset.pattern.permute.xlu0 6
  %6293 = vperm.xlu0 %6292, %v1060
  %v6294 = vpop.permute.xlu0 %6293
  %6295 = vset.pattern.permute.xlu0 6
  %6296 = vperm.xlu0 %6295, %v1061
  %v6297 = vpop.permute.xlu0 %6296
  %6298 = vset.pattern.permute.xlu0 6
  %6299 = vperm.xlu0 %6298, %v1062
  %v6300 = vpop.permute.xlu0 %6299
  %6301 = vset.pattern.permute.xlu0 6
  %6302 = vperm.xlu0 %6301, %v1063
  %v6303 = vpop.permute.xlu0 %6302
  %6304 = vset.pattern.permute.xlu0 6
  %6305 = vperm.xlu0 %6304, %v1064
  %v6306 = vpop.permute.xlu0 %6305
  %6307 = vset.pattern.permute.xlu0 6
  %6308 = vperm.xlu0 %6307, %v1065
  %v6309 = vpop.permute.xlu0 %6308
  %6310 = vset.pattern.permute.xlu0 6
  %6311 = vperm.xlu0 %6310, %v1066
  %v6312 = vpop.permute.xlu0 %6311
  %6313 = vset.pattern.permute.xlu0 6
  %6314 = vperm.xlu0 %6313, %v1067
  %v6315 = vpop.permute.xlu0 %6314
  %6316 = vset.pattern.permute.xlu0 6
  %6317 = vperm.xlu0 %6316, %v1068
  %v6318 = vpop.permute.xlu0 %6317
  %6319 = vset.pattern.permute.xlu0 6
  %6320 = vperm.xlu0 %6319, %v1069
  %v6321 = vpop.permute.xlu0 %6320
  %6322 = vset.pattern.permute.xlu0 6
  %6323 = vperm.xlu0 %6322, %v1070
  %v6324 = vpop.permute.xlu0 %6323
  %6325 = vset.pattern.permute.xlu0 6
  %6326 = vperm.xlu0 %6325, %v1071
  %v6327 = vpop.permute.xlu0 %6326
  %6328 = vset.pattern.permute.xlu0 6
  %6329 = vperm.xlu0 %6328, %v1072
  %v6330 = vpop.permute.xlu0 %6329
  %6331 = vset.pattern.permute.xlu0 6
  %6332 = vperm.xlu0 %6331, %v1073
  %v6333 = vpop.permute.xlu0 %6332
  %6334 = vset.pattern.permute.xlu0 6
  %6335 = vperm.xlu0 %6334, %v1074
  %v6336 = vpop.permute.xlu0 %6335
  %6337 = vset.pattern.permute.xlu0 6
  %6338 = vperm.xlu0 %6337, %v1075
  %v6339 = vpop.permute.xlu0 %6338
  %6340 = vset.pattern.permute.xlu0 6
  %6341 = vperm.xlu0 %6340, %v1076
  %v6342 = vpop.permute.xlu0 %6341
  %6343 = vset.pattern.permute.xlu0 6
  %6344 = vperm.xlu0 %6343, %v1077
  %v6345 = vpop.permute.xlu0 %6344
  %6346 = vset.pattern.permute.xlu0 6
  %6347 = vperm.xlu0 %6346, %v1078
  %v6348 = vpop.permute.xlu0 %6347
  %6349 = vset.pattern.permute.xlu0 6
  %6350 = vperm.xlu0 %6349, %v1079
  %v6351 = vpop.permute.xlu0 %6350
  %6352 = vset.pattern.permute.xlu0 6
  %6353 = vperm.xlu0 %6352, %v1080
  %v6354 = vpop.permute.xlu0 %6353
  %6355 = vset.pattern.permute.xlu0 6
  %6356 = vperm.xlu0 %6355, %v1081
  %v6357 = vpop.permute.xlu0 %6356
  %6358 = vset.pattern.permute.xlu0 6
  %6359 = vperm.xlu0 %6358, %v1082
  %v6360 = vpop.permute.xlu0 %6359
  %6361 = vset.pattern.permute.xlu0 6
  %6362 = vperm.xlu0 %6361, %v1083
  %v6363 = vpop.permute.xlu0 %6362
  %6364 = vset.pattern.permute.xlu0 6
  %6365 = vperm.xlu0 %6364, %v1084
  %v6366 = vpop.permute.xlu0 %6365
  %6367 = vset.pattern.permute.xlu0 6
  %6368 = vperm.xlu0 %6367, %v1085
  %v6369 = vpop.permute.xlu0 %6368
  %6370 = vset.pattern.permute.xlu0 6
  %6371 = vperm.xlu0 %6370, %v1086
  %v6372 = vpop.permute.xlu0 %6371
  %6373 = vset.pattern.permute.xlu0 6
  %6374 = vperm.xlu0 %6373, %v1087
  %v6375 = vpop.permute.xlu0 %6374
  %6376 = vset.pattern.permute.xlu0 6
  %6377 = vperm.xlu0 %6376, %v1088
  %v6378 = vpop.permute.xlu0 %6377
  %6379 = vset.pattern.permute.xlu0 6
  %6380 = vperm.xlu0 %6379, %v1089
  %v6381 = vpop.permute.xlu0 %6380
  %6382 = vset.pattern.permute.xlu0 6
  %6383 = vperm.xlu0 %6382, %v1090
  %v6384 = vpop.permute.xlu0 %6383
  %6385 = vset.pattern.permute.xlu0 6
  %6386 = vperm.xlu0 %6385, %v1091
  %v6387 = vpop.permute.xlu0 %6386
  %6388 = vset.pattern.permute.xlu0 6
  %6389 = vperm.xlu0 %6388, %v1092
  %v6390 = vpop.permute.xlu0 %6389
  %6391 = vset.pattern.permute.xlu0 6
  %6392 = vperm.xlu0 %6391, %v1093
  %v6393 = vpop.permute.xlu0 %6392
  %6394 = vset.pattern.permute.xlu0 6
  %6395 = vperm.xlu0 %6394, %v1094
  %v6396 = vpop.permute.xlu0 %6395
  %6397 = vset.pattern.permute.xlu0 6
  %6398 = vperm.xlu0 %6397, %v1095
  %v6399 = vpop.permute.xlu0 %6398
  %6400 = vset.pattern.permute.xlu0 6
  %6401 = vperm.xlu0 %6400, %v1096
  %v6402 = vpop.permute.xlu0 %6401
  %6403 = vset.pattern.permute.xlu0 6
  %6404 = vperm.xlu0 %6403, %v1097
  %v6405 = vpop.permute.xlu0 %6404
  %6406 = vset.pattern.permute.xlu0 6
  %6407 = vperm.xlu0 %6406, %v1098
  %v6408 = vpop.permute.xlu0 %6407
  %6409 = vset.pattern.permute.xlu0 6
  %6410 = vperm.xlu0 %6409, %v1099
  %v6411 = vpop.permute.xlu0 %6410
  %6412 = vset.pattern.permute.xlu0 6
  %6413 = vperm.xlu0 %6412, %v1100
  %v6414 = vpop.permute.xlu0 %6413
  %6415 = vset.pattern.permute.xlu0 6
  %6416 = vperm.xlu0 %6415, %v1101
  %v6417 = vpop.permute.xlu0 %6416
  %6418 = vset.pattern.permute.xlu0 6
  %6419 = vperm.xlu0 %6418, %v1102
  %v6420 = vpop.permute.xlu0 %6419
  %v6421 = vrot.slane %v6231, 1
  %v6422 = vrot.slane %v6234, 1
  %v6423 = vsel %vm1782, %v6421, %v6422
  %v6424 = vrot.slane %v6237, 1
  %v6425 = vsel %vm1782, %v6422, %v6424
  %v6426 = vrot.slane %v6240, 1
  %v6427 = vsel %vm1782, %v6424, %v6426
  %v6428 = vrot.slane %v6243, 1
  %v6429 = vsel %vm1782, %v6426, %v6428
  %v6430 = vrot.slane %v6246, 1
  %v6431 = vsel %vm1782, %v6428, %v6430
  %v6432 = vrot.slane %v6249, 1
  %v6433 = vsel %vm1782, %v6430, %v6432
  %v6434 = vrot.slane %v6252, 1
  %v6435 = vsel %vm1782, %v6432, %v6434
  %v6436 = vrot.slane %v6255, 1
  %v6437 = vsel %vm1782, %v6434, %v6436
  %v6438 = vrot.slane %v6258, 1
  %v6439 = vsel %vm1782, %v6436, %v6438
  %v6440 = vrot.slane %v6261, 1
  %v6441 = vsel %vm1782, %v6438, %v6440
  %v6442 = vrot.slane %v6264, 1
  %v6443 = vsel %vm1782, %v6440, %v6442
  %v6444 = vrot.slane %v6267, 1
  %v6445 = vsel %vm1782, %v6442, %v6444
  %v6446 = vrot.slane %v6270, 1
  %v6447 = vsel %vm1782, %v6444, %v6446
  %v6448 = vrot.slane %v6273, 1
  %v6449 = vsel %vm1782, %v6446, %v6448
  %v6450 = vrot.slane %v6276, 1
  %v6451 = vsel %vm1782, %v6448, %v6450
  %v6452 = vrot.slane %v6279, 1
  %v6453 = vsel %vm1782, %v6450, %v6452
  %v6454 = vrot.slane %v6282, 1
  %v6455 = vsel %vm1782, %v6452, %v6454
  %v6456 = vrot.slane %v6285, 1
  %v6457 = vsel %vm1782, %v6454, %v6456
  %v6458 = vrot.slane %v6288, 1
  %v6459 = vsel %vm1782, %v6456, %v6458
  %v6460 = vrot.slane %v6291, 1
  %v6461 = vsel %vm1782, %v6458, %v6460
  %v6462 = vrot.slane %v6294, 1
  %v6463 = vsel %vm1782, %v6460, %v6462
  %v6464 = vrot.slane %v6297, 1
  %v6465 = vsel %vm1782, %v6462, %v6464
  %v6466 = vrot.slane %v6300, 1
  %v6467 = vsel %vm1782, %v6464, %v6466
  %v6468 = vrot.slane %v6303, 1
  %v6469 = vsel %vm1782, %v6466, %v6468
  %v6470 = vrot.slane %v6306, 1
  %v6471 = vsel %vm1782, %v6468, %v6470
  %v6472 = vrot.slane %v6309, 1
  %v6473 = vsel %vm1782, %v6470, %v6472
  %v6474 = vrot.slane %v6312, 1
  %v6475 = vsel %vm1782, %v6472, %v6474
  %v6476 = vrot.slane %v6315, 1
  %v6477 = vsel %vm1782, %v6474, %v6476
  %v6478 = vrot.slane %v6318, 1
  %v6479 = vsel %vm1782, %v6476, %v6478
  %v6480 = vrot.slane %v6321, 1
  %v6481 = vsel %vm1782, %v6478, %v6480
  %v6482 = vrot.slane %v6324, 1
  %v6483 = vsel %vm1782, %v6480, %v6482
  %v6484 = vrot.slane %v6327, 1
  %v6485 = vsel %vm1782, %v6482, %v6484
  %v6486 = vrot.slane %v6330, 1
  %v6487 = vsel %vm1782, %v6484, %v6486
  %v6488 = vrot.slane %v6333, 1
  %v6489 = vsel %vm1782, %v6486, %v6488
  %v6490 = vrot.slane %v6336, 1
  %v6491 = vsel %vm1782, %v6488, %v6490
  %v6492 = vrot.slane %v6339, 1
  %v6493 = vsel %vm1782, %v6490, %v6492
  %v6494 = vrot.slane %v6342, 1
  %v6495 = vsel %vm1782, %v6492, %v6494
  %v6496 = vrot.slane %v6345, 1
  %v6497 = vsel %vm1782, %v6494, %v6496
  %v6498 = vrot.slane %v6348, 1
  %v6499 = vsel %vm1782, %v6496, %v6498
  %v6500 = vrot.slane %v6351, 1
  %v6501 = vsel %vm1782, %v6498, %v6500
  %v6502 = vrot.slane %v6354, 1
  %v6503 = vsel %vm1782, %v6500, %v6502
  %v6504 = vrot.slane %v6357, 1
  %v6505 = vsel %vm1782, %v6502, %v6504
  %v6506 = vrot.slane %v6360, 1
  %v6507 = vsel %vm1782, %v6504, %v6506
  %v6508 = vrot.slane %v6363, 1
  %v6509 = vsel %vm1782, %v6506, %v6508
  %v6510 = vrot.slane %v6366, 1
  %v6511 = vsel %vm1782, %v6508, %v6510
  %v6512 = vrot.slane %v6369, 1
  %v6513 = vsel %vm1782, %v6510, %v6512
  %v6514 = vrot.slane %v6372, 1
  %v6515 = vsel %vm1782, %v6512, %v6514
  %v6516 = vrot.slane %v6375, 1
  %v6517 = vsel %vm1782, %v6514, %v6516
  %v6518 = vrot.slane %v6378, 1
  %v6519 = vsel %vm1782, %v6516, %v6518
  %v6520 = vrot.slane %v6381, 1
  %v6521 = vsel %vm1782, %v6518, %v6520
  %v6522 = vrot.slane %v6384, 1
  %v6523 = vsel %vm1782, %v6520, %v6522
  %v6524 = vrot.slane %v6387, 1
  %v6525 = vsel %vm1782, %v6522, %v6524
  %v6526 = vrot.slane %v6390, 1
  %v6527 = vsel %vm1782, %v6524, %v6526
  %v6528 = vrot.slane %v6393, 1
  %v6529 = vsel %vm1782, %v6526, %v6528
  %v6530 = vrot.slane %v6396, 1
  %v6531 = vsel %vm1782, %v6528, %v6530
  %v6532 = vrot.slane %v6399, 1
  %v6533 = vsel %vm1782, %v6530, %v6532
  %v6534 = vrot.slane %v6402, 1
  %v6535 = vsel %vm1782, %v6532, %v6534
  %v6536 = vrot.slane %v6405, 1
  %v6537 = vsel %vm1782, %v6534, %v6536
  %v6538 = vrot.slane %v6408, 1
  %v6539 = vsel %vm1782, %v6536, %v6538
  %v6540 = vrot.slane %v6411, 1
  %v6541 = vsel %vm1782, %v6538, %v6540
  %v6542 = vrot.slane %v6414, 1
  %v6543 = vsel %vm1782, %v6540, %v6542
  %v6544 = vrot.slane %v6417, 1
  %v6545 = vsel %vm1782, %v6542, %v6544
  %v6546 = vrot.slane %v6420, 1
  %v6547 = vsel %vm1782, %v6544, %v6546
  %v6613 = vmul.f32 %v1275, %v6421
  %v6614 = vmul.f32 %v1280, %v6423
  %v6615 = vmul.f32 %v1283, %v6425
  %v6616 = vmul.f32 %v1288, %v6427
  %v6617 = vmul.f32 %v1291, %v6429
  %v6618 = vmul.f32 %v1296, %v6431
  %v6619 = vmul.f32 %v1299, %v6433
  %v6620 = vmul.f32 %v1304, %v6435
  %v6621 = vmul.f32 %v1307, %v6437
  %v6622 = vmul.f32 %v1312, %v6439
  %v6623 = vmul.f32 %v1315, %v6441
  %v6624 = vmul.f32 %v1320, %v6443
  %v6625 = vmul.f32 %v1323, %v6445
  %v6626 = vmul.f32 %v1328, %v6447
  %v6627 = vmul.f32 %v1331, %v6449
  %v6628 = vmul.f32 %v1336, %v6451
  %v6629 = vmul.f32 %v1339, %v6453
  %v6630 = vmul.f32 %v1344, %v6455
  %v6631 = vmul.f32 %v1347, %v6457
  %v6632 = vmul.f32 %v1352, %v6459
  %v6633 = vmul.f32 %v1355, %v6461
  %v6634 = vmul.f32 %v1360, %v6463
  %v6635 = vmul.f32 %v1363, %v6465
  %v6636 = vmul.f32 %v1368, %v6467
  %v6637 = vmul.f32 %v1371, %v6469
  %v6638 = vmul.f32 %v1376, %v6471
  %v6639 = vmul.f32 %v1379, %v6473
  %v6640 = vmul.f32 %v1384, %v6475
  %v6641 = vmul.f32 %v1387, %v6477
  %v6642 = vmul.f32 %v1392, %v6479
  %v6643 = vmul.f32 %v1395, %v6481
  %v6644 = vmul.f32 %v1400, %v6483
  %v6645 = vmul.f32 %v1403, %v6485
  %v6646 = vmul.f32 %v1408, %v6487
  %v6647 = vmul.f32 %v1411, %v6489
  %v6648 = vmul.f32 %v1416, %v6491
  %v6649 = vmul.f32 %v1419, %v6493
  %v6650 = vmul.f32 %v1424, %v6495
  %v6651 = vmul.f32 %v1427, %v6497
  %v6652 = vmul.f32 %v1432, %v6499
  %v6653 = vmul.f32 %v1435, %v6501
  %v6654 = vmul.f32 %v1440, %v6503
  %v6655 = vmul.f32 %v1443, %v6505
  %v6656 = vmul.f32 %v1448, %v6507
  %v6657 = vmul.f32 %v1451, %v6509
  %v6658 = vmul.f32 %v1456, %v6511
  %v6659 = vmul.f32 %v1459, %v6513
  %v6660 = vmul.f32 %v1464, %v6515
  %v6661 = vmul.f32 %v1467, %v6517
  %v6662 = vmul.f32 %v1472, %v6519
  %v6663 = vmul.f32 %v1475, %v6521
  %v6664 = vmul.f32 %v1480, %v6523
  %v6665 = vmul.f32 %v1483, %v6525
  %v6666 = vmul.f32 %v1488, %v6527
  %v6667 = vmul.f32 %v1491, %v6529
  %v6668 = vmul.f32 %v1496, %v6531
  %v6669 = vmul.f32 %v1499, %v6533
  %v6670 = vmul.f32 %v1504, %v6535
  %v6671 = vmul.f32 %v1507, %v6537
  %v6672 = vmul.f32 %v1512, %v6539
  %v6673 = vmul.f32 %v1515, %v6541
  %v6674 = vmul.f32 %v1520, %v6543
  %v6675 = vmul.f32 %v1523, %v6545
  %v6676 = vmul.f32 %v6547, 0.0
  %v6677 = vmul.f32 %v6546, 0.0
  %6743 = vrot.lane.b32.xlu0 %v6613, 104
  %v6744 = vpop.permute.xlu0 %6743
  %6745 = vrot.lane.b32.xlu0 %v6614, 104
  %v6746 = vpop.permute.xlu0 %6745
  %6747 = vrot.lane.b32.xlu0 %v6615, 104
  %v6748 = vpop.permute.xlu0 %6747
  %6749 = vrot.lane.b32.xlu0 %v6616, 104
  %v6750 = vpop.permute.xlu0 %6749
  %6751 = vrot.lane.b32.xlu0 %v6617, 104
  %v6752 = vpop.permute.xlu0 %6751
  %6753 = vrot.lane.b32.xlu0 %v6618, 104
  %v6754 = vpop.permute.xlu0 %6753
  %6755 = vrot.lane.b32.xlu0 %v6619, 104
  %v6756 = vpop.permute.xlu0 %6755
  %6757 = vrot.lane.b32.xlu0 %v6620, 104
  %v6758 = vpop.permute.xlu0 %6757
  %6759 = vrot.lane.b32.xlu0 %v6621, 104
  %v6760 = vpop.permute.xlu0 %6759
  %6761 = vrot.lane.b32.xlu0 %v6622, 104
  %v6762 = vpop.permute.xlu0 %6761
  %6763 = vrot.lane.b32.xlu0 %v6623, 104
  %v6764 = vpop.permute.xlu0 %6763
  %6765 = vrot.lane.b32.xlu0 %v6624, 104
  %v6766 = vpop.permute.xlu0 %6765
  %6767 = vrot.lane.b32.xlu0 %v6625, 104
  %v6768 = vpop.permute.xlu0 %6767
  %6769 = vrot.lane.b32.xlu0 %v6626, 104
  %v6770 = vpop.permute.xlu0 %6769
  %6771 = vrot.lane.b32.xlu0 %v6627, 104
  %v6772 = vpop.permute.xlu0 %6771
  %6773 = vrot.lane.b32.xlu0 %v6628, 104
  %v6774 = vpop.permute.xlu0 %6773
  %6775 = vrot.lane.b32.xlu0 %v6629, 104
  %v6776 = vpop.permute.xlu0 %6775
  %6777 = vrot.lane.b32.xlu0 %v6630, 104
  %v6778 = vpop.permute.xlu0 %6777
  %6779 = vrot.lane.b32.xlu0 %v6631, 104
  %v6780 = vpop.permute.xlu0 %6779
  %6781 = vrot.lane.b32.xlu0 %v6632, 104
  %v6782 = vpop.permute.xlu0 %6781
  %6783 = vrot.lane.b32.xlu0 %v6633, 104
  %v6784 = vpop.permute.xlu0 %6783
  %6785 = vrot.lane.b32.xlu0 %v6634, 104
  %v6786 = vpop.permute.xlu0 %6785
  %6787 = vrot.lane.b32.xlu0 %v6635, 104
  %v6788 = vpop.permute.xlu0 %6787
  %6789 = vrot.lane.b32.xlu0 %v6636, 104
  %v6790 = vpop.permute.xlu0 %6789
  %6791 = vrot.lane.b32.xlu0 %v6637, 104
  %v6792 = vpop.permute.xlu0 %6791
  %6793 = vrot.lane.b32.xlu0 %v6638, 104
  %v6794 = vpop.permute.xlu0 %6793
  %6795 = vrot.lane.b32.xlu0 %v6639, 104
  %v6796 = vpop.permute.xlu0 %6795
  %6797 = vrot.lane.b32.xlu0 %v6640, 104
  %v6798 = vpop.permute.xlu0 %6797
  %6799 = vrot.lane.b32.xlu0 %v6641, 104
  %v6800 = vpop.permute.xlu0 %6799
  %6801 = vrot.lane.b32.xlu0 %v6642, 104
  %v6802 = vpop.permute.xlu0 %6801
  %6803 = vrot.lane.b32.xlu0 %v6643, 104
  %v6804 = vpop.permute.xlu0 %6803
  %6805 = vrot.lane.b32.xlu0 %v6644, 104
  %v6806 = vpop.permute.xlu0 %6805
  %6807 = vrot.lane.b32.xlu0 %v6645, 104
  %v6808 = vpop.permute.xlu0 %6807
  %6809 = vrot.lane.b32.xlu0 %v6646, 104
  %v6810 = vpop.permute.xlu0 %6809
  %6811 = vrot.lane.b32.xlu0 %v6647, 104
  %v6812 = vpop.permute.xlu0 %6811
  %6813 = vrot.lane.b32.xlu0 %v6648, 104
  %v6814 = vpop.permute.xlu0 %6813
  %6815 = vrot.lane.b32.xlu0 %v6649, 104
  %v6816 = vpop.permute.xlu0 %6815
  %6817 = vrot.lane.b32.xlu0 %v6650, 104
  %v6818 = vpop.permute.xlu0 %6817
  %6819 = vrot.lane.b32.xlu0 %v6651, 104
  %v6820 = vpop.permute.xlu0 %6819
  %6821 = vrot.lane.b32.xlu0 %v6652, 104
  %v6822 = vpop.permute.xlu0 %6821
  %6823 = vrot.lane.b32.xlu0 %v6653, 104
  %v6824 = vpop.permute.xlu0 %6823
  %6825 = vrot.lane.b32.xlu0 %v6654, 104
  %v6826 = vpop.permute.xlu0 %6825
  %6827 = vrot.lane.b32.xlu0 %v6655, 104
  %v6828 = vpop.permute.xlu0 %6827
  %6829 = vrot.lane.b32.xlu0 %v6656, 104
  %v6830 = vpop.permute.xlu0 %6829
  %6831 = vrot.lane.b32.xlu0 %v6657, 104
  %v6832 = vpop.permute.xlu0 %6831
  %6833 = vrot.lane.b32.xlu0 %v6658, 104
  %v6834 = vpop.permute.xlu0 %6833
  %6835 = vrot.lane.b32.xlu0 %v6659, 104
  %v6836 = vpop.permute.xlu0 %6835
  %6837 = vrot.lane.b32.xlu0 %v6660, 104
  %v6838 = vpop.permute.xlu0 %6837
  %6839 = vrot.lane.b32.xlu0 %v6661, 104
  %v6840 = vpop.permute.xlu0 %6839
  %6841 = vrot.lane.b32.xlu0 %v6662, 104
  %v6842 = vpop.permute.xlu0 %6841
  %6843 = vrot.lane.b32.xlu0 %v6663, 104
  %v6844 = vpop.permute.xlu0 %6843
  %6845 = vrot.lane.b32.xlu0 %v6664, 104
  %v6846 = vpop.permute.xlu0 %6845
  %6847 = vrot.lane.b32.xlu0 %v6665, 104
  %v6848 = vpop.permute.xlu0 %6847
  %6849 = vrot.lane.b32.xlu0 %v6666, 104
  %v6850 = vpop.permute.xlu0 %6849
  %6851 = vrot.lane.b32.xlu0 %v6667, 104
  %v6852 = vpop.permute.xlu0 %6851
  %6853 = vrot.lane.b32.xlu0 %v6668, 104
  %v6854 = vpop.permute.xlu0 %6853
  %6855 = vrot.lane.b32.xlu0 %v6669, 104
  %v6856 = vpop.permute.xlu0 %6855
  %6857 = vrot.lane.b32.xlu0 %v6670, 104
  %v6858 = vpop.permute.xlu0 %6857
  %6859 = vrot.lane.b32.xlu0 %v6671, 104
  %v6860 = vpop.permute.xlu0 %6859
  %6861 = vrot.lane.b32.xlu0 %v6672, 104
  %v6862 = vpop.permute.xlu0 %6861
  %6863 = vrot.lane.b32.xlu0 %v6673, 104
  %v6864 = vpop.permute.xlu0 %6863
  %6865 = vrot.lane.b32.xlu0 %v6674, 104
  %v6866 = vpop.permute.xlu0 %6865
  %6867 = vrot.lane.b32.xlu0 %v6675, 104
  %v6868 = vpop.permute.xlu0 %6867
  %6869 = vrot.lane.b32.xlu0 %v6676, 104
  %v6870 = vpop.permute.xlu0 %6869
  %6871 = vrot.lane.b32.xlu0 %v6677, 104
  %v6872 = vpop.permute.xlu0 %6871
  %v6938 = vadd.f32 %v6164, %v6744
  %v6939 = vadd.f32 %v6165, %v6746
  %v6940 = vadd.f32 %v6166, %v6748
  %v6941 = vadd.f32 %v6167, %v6750
  %v6942 = vadd.f32 %v6168, %v6752
  %v6943 = vadd.f32 %v6169, %v6754
  %v6944 = vadd.f32 %v6170, %v6756
  %v6945 = vadd.f32 %v6171, %v6758
  %v6946 = vadd.f32 %v6172, %v6760
  %v6947 = vadd.f32 %v6173, %v6762
  %v6948 = vadd.f32 %v6174, %v6764
  %v6949 = vadd.f32 %v6175, %v6766
  %v6950 = vadd.f32 %v6176, %v6768
  %v6951 = vadd.f32 %v6177, %v6770
  %v6952 = vadd.f32 %v6178, %v6772
  %v6953 = vadd.f32 %v6179, %v6774
  %v6954 = vadd.f32 %v6180, %v6776
  %v6955 = vadd.f32 %v6181, %v6778
  %v6956 = vadd.f32 %v6182, %v6780
  %v6957 = vadd.f32 %v6183, %v6782
  %v6958 = vadd.f32 %v6184, %v6784
  %v6959 = vadd.f32 %v6185, %v6786
  %v6960 = vadd.f32 %v6186, %v6788
  %v6961 = vadd.f32 %v6187, %v6790
  %v6962 = vadd.f32 %v6188, %v6792
  %v6963 = vadd.f32 %v6189, %v6794
  %v6964 = vadd.f32 %v6190, %v6796
  %v6965 = vadd.f32 %v6191, %v6798
  %v6966 = vadd.f32 %v6192, %v6800
  %v6967 = vadd.f32 %v6193, %v6802
  %v6968 = vadd.f32 %v6194, %v6804
  %v6969 = vadd.f32 %v6195, %v6806
  %v6970 = vadd.f32 %v6196, %v6808
  %v6971 = vadd.f32 %v6197, %v6810
  %v6972 = vadd.f32 %v6198, %v6812
  %v6973 = vadd.f32 %v6199, %v6814
  %v6974 = vadd.f32 %v6200, %v6816
  %v6975 = vadd.f32 %v6201, %v6818
  %v6976 = vadd.f32 %v6202, %v6820
  %v6977 = vadd.f32 %v6203, %v6822
  %v6978 = vadd.f32 %v6204, %v6824
  %v6979 = vadd.f32 %v6205, %v6826
  %v6980 = vadd.f32 %v6206, %v6828
  %v6981 = vadd.f32 %v6207, %v6830
  %v6982 = vadd.f32 %v6208, %v6832
  %v6983 = vadd.f32 %v6209, %v6834
  %v6984 = vadd.f32 %v6210, %v6836
  %v6985 = vadd.f32 %v6211, %v6838
  %v6986 = vadd.f32 %v6212, %v6840
  %v6987 = vadd.f32 %v6213, %v6842
  %v6988 = vadd.f32 %v6214, %v6844
  %v6989 = vadd.f32 %v6215, %v6846
  %v6990 = vadd.f32 %v6216, %v6848
  %v6991 = vadd.f32 %v6217, %v6850
  %v6992 = vadd.f32 %v6218, %v6852
  %v6993 = vadd.f32 %v6219, %v6854
  %v6994 = vadd.f32 %v6220, %v6856
  %v6995 = vadd.f32 %v6221, %v6858
  %v6996 = vadd.f32 %v6222, %v6860
  %v6997 = vadd.f32 %v6223, %v6862
  %v6998 = vadd.f32 %v6224, %v6864
  %v6999 = vadd.f32 %v6225, %v6866
  %v7000 = vadd.f32 %v6226, %v6868
  %v7001 = vadd.f32 %v6227, %v6870
  %v7002 = vadd.f32 %v6228, %v6872
  %7003 = vset.pattern.permute.xlu0 7
  %7004 = vperm.xlu0 %7003, %v1039
  %v7005 = vpop.permute.xlu0 %7004
  %7007 = vset.pattern.permute.xlu0 7
  %7008 = vperm.xlu0 %7007, %v1040
  %v7009 = vpop.permute.xlu0 %7008
  %7011 = vset.pattern.permute.xlu0 7
  %7012 = vperm.xlu0 %7011, %v1041
  %v7013 = vpop.permute.xlu0 %7012
  %7015 = vset.pattern.permute.xlu0 7
  %7016 = vperm.xlu0 %7015, %v1042
  %v7017 = vpop.permute.xlu0 %7016
  %7019 = vset.pattern.permute.xlu0 7
  %7020 = vperm.xlu0 %7019, %v1043
  %v7021 = vpop.permute.xlu0 %7020
  %7023 = vset.pattern.permute.xlu0 7
  %7024 = vperm.xlu0 %7023, %v1044
  %v7025 = vpop.permute.xlu0 %7024
  %7027 = vset.pattern.permute.xlu0 7
  %7028 = vperm.xlu0 %7027, %v1045
  %v7029 = vpop.permute.xlu0 %7028
  %7031 = vset.pattern.permute.xlu0 7
  %7032 = vperm.xlu0 %7031, %v1046
  %v7033 = vpop.permute.xlu0 %7032
  %7035 = vset.pattern.permute.xlu0 7
  %7036 = vperm.xlu0 %7035, %v1047
  %v7037 = vpop.permute.xlu0 %7036
  %7039 = vset.pattern.permute.xlu0 7
  %7040 = vperm.xlu0 %7039, %v1048
  %v7041 = vpop.permute.xlu0 %7040
  %7043 = vset.pattern.permute.xlu0 7
  %7044 = vperm.xlu0 %7043, %v1049
  %v7045 = vpop.permute.xlu0 %7044
  %7047 = vset.pattern.permute.xlu0 7
  %7048 = vperm.xlu0 %7047, %v1050
  %v7049 = vpop.permute.xlu0 %7048
  %7051 = vset.pattern.permute.xlu0 7
  %7052 = vperm.xlu0 %7051, %v1051
  %v7053 = vpop.permute.xlu0 %7052
  %7055 = vset.pattern.permute.xlu0 7
  %7056 = vperm.xlu0 %7055, %v1052
  %v7057 = vpop.permute.xlu0 %7056
  %7059 = vset.pattern.permute.xlu0 7
  %7060 = vperm.xlu0 %7059, %v1053
  %v7061 = vpop.permute.xlu0 %7060
  %7063 = vset.pattern.permute.xlu0 7
  %7064 = vperm.xlu0 %7063, %v1054
  %v7065 = vpop.permute.xlu0 %7064
  %7067 = vset.pattern.permute.xlu0 7
  %7068 = vperm.xlu0 %7067, %v1055
  %v7069 = vpop.permute.xlu0 %7068
  %7071 = vset.pattern.permute.xlu0 7
  %7072 = vperm.xlu0 %7071, %v1056
  %v7073 = vpop.permute.xlu0 %7072
  %7075 = vset.pattern.permute.xlu0 7
  %7076 = vperm.xlu0 %7075, %v1057
  %v7077 = vpop.permute.xlu0 %7076
  %7079 = vset.pattern.permute.xlu0 7
  %7080 = vperm.xlu0 %7079, %v1058
  %v7081 = vpop.permute.xlu0 %7080
  %7083 = vset.pattern.permute.xlu0 7
  %7084 = vperm.xlu0 %7083, %v1059
  %v7085 = vpop.permute.xlu0 %7084
  %7087 = vset.pattern.permute.xlu0 7
  %7088 = vperm.xlu0 %7087, %v1060
  %v7089 = vpop.permute.xlu0 %7088
  %7091 = vset.pattern.permute.xlu0 7
  %7092 = vperm.xlu0 %7091, %v1061
  %v7093 = vpop.permute.xlu0 %7092
  %7095 = vset.pattern.permute.xlu0 7
  %7096 = vperm.xlu0 %7095, %v1062
  %v7097 = vpop.permute.xlu0 %7096
  %7099 = vset.pattern.permute.xlu0 7
  %7100 = vperm.xlu0 %7099, %v1063
  %v7101 = vpop.permute.xlu0 %7100
  %7103 = vset.pattern.permute.xlu0 7
  %7104 = vperm.xlu0 %7103, %v1064
  %v7105 = vpop.permute.xlu0 %7104
  %7107 = vset.pattern.permute.xlu0 7
  %7108 = vperm.xlu0 %7107, %v1065
  %v7109 = vpop.permute.xlu0 %7108
  %7111 = vset.pattern.permute.xlu0 7
  %7112 = vperm.xlu0 %7111, %v1066
  %v7113 = vpop.permute.xlu0 %7112
  %7115 = vset.pattern.permute.xlu0 7
  %7116 = vperm.xlu0 %7115, %v1067
  %v7117 = vpop.permute.xlu0 %7116
  %7119 = vset.pattern.permute.xlu0 7
  %7120 = vperm.xlu0 %7119, %v1068
  %v7121 = vpop.permute.xlu0 %7120
  %7123 = vset.pattern.permute.xlu0 7
  %7124 = vperm.xlu0 %7123, %v1069
  %v7125 = vpop.permute.xlu0 %7124
  %7127 = vset.pattern.permute.xlu0 7
  %7128 = vperm.xlu0 %7127, %v1070
  %v7129 = vpop.permute.xlu0 %7128
  %7131 = vset.pattern.permute.xlu0 7
  %7132 = vperm.xlu0 %7131, %v1071
  %v7133 = vpop.permute.xlu0 %7132
  %7135 = vset.pattern.permute.xlu0 7
  %7136 = vperm.xlu0 %7135, %v1072
  %v7137 = vpop.permute.xlu0 %7136
  %7139 = vset.pattern.permute.xlu0 7
  %7140 = vperm.xlu0 %7139, %v1073
  %v7141 = vpop.permute.xlu0 %7140
  %7143 = vset.pattern.permute.xlu0 7
  %7144 = vperm.xlu0 %7143, %v1074
  %v7145 = vpop.permute.xlu0 %7144
  %7147 = vset.pattern.permute.xlu0 7
  %7148 = vperm.xlu0 %7147, %v1075
  %v7149 = vpop.permute.xlu0 %7148
  %7151 = vset.pattern.permute.xlu0 7
  %7152 = vperm.xlu0 %7151, %v1076
  %v7153 = vpop.permute.xlu0 %7152
  %7155 = vset.pattern.permute.xlu0 7
  %7156 = vperm.xlu0 %7155, %v1077
  %v7157 = vpop.permute.xlu0 %7156
  %7159 = vset.pattern.permute.xlu0 7
  %7160 = vperm.xlu0 %7159, %v1078
  %v7161 = vpop.permute.xlu0 %7160
  %7163 = vset.pattern.permute.xlu0 7
  %7164 = vperm.xlu0 %7163, %v1079
  %v7165 = vpop.permute.xlu0 %7164
  %7167 = vset.pattern.permute.xlu0 7
  %7168 = vperm.xlu0 %7167, %v1080
  %v7169 = vpop.permute.xlu0 %7168
  %7171 = vset.pattern.permute.xlu0 7
  %7172 = vperm.xlu0 %7171, %v1081
  %v7173 = vpop.permute.xlu0 %7172
  %7175 = vset.pattern.permute.xlu0 7
  %7176 = vperm.xlu0 %7175, %v1082
  %v7177 = vpop.permute.xlu0 %7176
  %7179 = vset.pattern.permute.xlu0 7
  %7180 = vperm.xlu0 %7179, %v1083
  %v7181 = vpop.permute.xlu0 %7180
  %7183 = vset.pattern.permute.xlu0 7
  %7184 = vperm.xlu0 %7183, %v1084
  %v7185 = vpop.permute.xlu0 %7184
  %7187 = vset.pattern.permute.xlu0 7
  %7188 = vperm.xlu0 %7187, %v1085
  %v7189 = vpop.permute.xlu0 %7188
  %7191 = vset.pattern.permute.xlu0 7
  %7192 = vperm.xlu0 %7191, %v1086
  %v7193 = vpop.permute.xlu0 %7192
  %7195 = vset.pattern.permute.xlu0 7
  %7196 = vperm.xlu0 %7195, %v1087
  %v7197 = vpop.permute.xlu0 %7196
  %7199 = vset.pattern.permute.xlu0 7
  %7200 = vperm.xlu0 %7199, %v1088
  %v7201 = vpop.permute.xlu0 %7200
  %7203 = vset.pattern.permute.xlu0 7
  %7204 = vperm.xlu0 %7203, %v1089
  %v7205 = vpop.permute.xlu0 %7204
  %7207 = vset.pattern.permute.xlu0 7
  %7208 = vperm.xlu0 %7207, %v1090
  %v7209 = vpop.permute.xlu0 %7208
  %7211 = vset.pattern.permute.xlu0 7
  %7212 = vperm.xlu0 %7211, %v1091
  %v7213 = vpop.permute.xlu0 %7212
  %7215 = vset.pattern.permute.xlu0 7
  %7216 = vperm.xlu0 %7215, %v1092
  %v7217 = vpop.permute.xlu0 %7216
  %7219 = vset.pattern.permute.xlu0 7
  %7220 = vperm.xlu0 %7219, %v1093
  %v7221 = vpop.permute.xlu0 %7220
  %7223 = vset.pattern.permute.xlu0 7
  %7224 = vperm.xlu0 %7223, %v1094
  %v7225 = vpop.permute.xlu0 %7224
  %7227 = vset.pattern.permute.xlu0 7
  %7228 = vperm.xlu0 %7227, %v1095
  %v7229 = vpop.permute.xlu0 %7228
  %7231 = vset.pattern.permute.xlu0 7
  %7232 = vperm.xlu0 %7231, %v1096
  %v7233 = vpop.permute.xlu0 %7232
  %7235 = vset.pattern.permute.xlu0 7
  %7236 = vperm.xlu0 %7235, %v1097
  %v7237 = vpop.permute.xlu0 %7236
  %7239 = vset.pattern.permute.xlu0 7
  %7240 = vperm.xlu0 %7239, %v1098
  %v7241 = vpop.permute.xlu0 %7240
  %7243 = vset.pattern.permute.xlu0 7
  %7244 = vperm.xlu0 %7243, %v1099
  %v7245 = vpop.permute.xlu0 %7244
  %7247 = vset.pattern.permute.xlu0 7
  %7248 = vperm.xlu0 %7247, %v1100
  %v7249 = vpop.permute.xlu0 %7248
  %7251 = vset.pattern.permute.xlu0 7
  %7252 = vperm.xlu0 %7251, %v1101
  %v7253 = vpop.permute.xlu0 %7252
  %7255 = vset.pattern.permute.xlu0 7
  %7256 = vperm.xlu0 %7255, %v1102
  %v7257 = vpop.permute.xlu0 %7256
  %v7259 = vmul.f32 %v1280, %v7005
  %v7260 = vmul.f32 %v1283, %v7009
  %v7261 = vmul.f32 %v1288, %v7013
  %v7262 = vmul.f32 %v1291, %v7017
  %v7263 = vmul.f32 %v1296, %v7021
  %v7264 = vmul.f32 %v1299, %v7025
  %v7265 = vmul.f32 %v1304, %v7029
  %v7266 = vmul.f32 %v1307, %v7033
  %v7267 = vmul.f32 %v1312, %v7037
  %v7268 = vmul.f32 %v1315, %v7041
  %v7269 = vmul.f32 %v1320, %v7045
  %v7270 = vmul.f32 %v1323, %v7049
  %v7271 = vmul.f32 %v1328, %v7053
  %v7272 = vmul.f32 %v1331, %v7057
  %v7273 = vmul.f32 %v1336, %v7061
  %v7274 = vmul.f32 %v1339, %v7065
  %v7275 = vmul.f32 %v1344, %v7069
  %v7276 = vmul.f32 %v1347, %v7073
  %v7277 = vmul.f32 %v1352, %v7077
  %v7278 = vmul.f32 %v1355, %v7081
  %v7279 = vmul.f32 %v1360, %v7085
  %v7280 = vmul.f32 %v1363, %v7089
  %v7281 = vmul.f32 %v1368, %v7093
  %v7282 = vmul.f32 %v1371, %v7097
  %v7283 = vmul.f32 %v1376, %v7101
  %v7284 = vmul.f32 %v1379, %v7105
  %v7285 = vmul.f32 %v1384, %v7109
  %v7286 = vmul.f32 %v1387, %v7113
  %v7287 = vmul.f32 %v1392, %v7117
  %v7288 = vmul.f32 %v1395, %v7121
  %v7289 = vmul.f32 %v1400, %v7125
  %v7290 = vmul.f32 %v1403, %v7129
  %v7291 = vmul.f32 %v1408, %v7133
  %v7292 = vmul.f32 %v1411, %v7137
  %v7293 = vmul.f32 %v1416, %v7141
  %v7294 = vmul.f32 %v1419, %v7145
  %v7295 = vmul.f32 %v1424, %v7149
  %v7296 = vmul.f32 %v1427, %v7153
  %v7297 = vmul.f32 %v1432, %v7157
  %v7298 = vmul.f32 %v1435, %v7161
  %v7299 = vmul.f32 %v1440, %v7165
  %v7300 = vmul.f32 %v1443, %v7169
  %v7301 = vmul.f32 %v1448, %v7173
  %v7302 = vmul.f32 %v1451, %v7177
  %v7303 = vmul.f32 %v1456, %v7181
  %v7304 = vmul.f32 %v1459, %v7185
  %v7305 = vmul.f32 %v1464, %v7189
  %v7306 = vmul.f32 %v1467, %v7193
  %v7307 = vmul.f32 %v1472, %v7197
  %v7308 = vmul.f32 %v1475, %v7201
  %v7309 = vmul.f32 %v1480, %v7205
  %v7310 = vmul.f32 %v1483, %v7209
  %v7311 = vmul.f32 %v1488, %v7213
  %v7312 = vmul.f32 %v1491, %v7217
  %v7313 = vmul.f32 %v1496, %v7221
  %v7314 = vmul.f32 %v1499, %v7225
  %v7315 = vmul.f32 %v1504, %v7229
  %v7316 = vmul.f32 %v1507, %v7233
  %v7317 = vmul.f32 %v1512, %v7237
  %v7318 = vmul.f32 %v1515, %v7241
  %v7319 = vmul.f32 %v1520, %v7245
  %v7320 = vmul.f32 %v1523, %v7249
  %v7321 = vmul.f32 %v7253, 0.0
  %v7322 = vmul.f32 %v7257, 0.0
  %v7387 = vrot.slane %v7259, 1
  %v7388 = vrot.slane %v7260, 1
  %v7389 = vsel %vm1782, %v7387, %v7388
  %v7390 = vrot.slane %v7261, 1
  %v7391 = vsel %vm1782, %v7388, %v7390
  %v7392 = vrot.slane %v7262, 1
  %v7393 = vsel %vm1782, %v7390, %v7392
  %v7394 = vrot.slane %v7263, 1
  %v7395 = vsel %vm1782, %v7392, %v7394
  %v7396 = vrot.slane %v7264, 1
  %v7397 = vsel %vm1782, %v7394, %v7396
  %v7398 = vrot.slane %v7265, 1
  %v7399 = vsel %vm1782, %v7396, %v7398
  %v7400 = vrot.slane %v7266, 1
  %v7401 = vsel %vm1782, %v7398, %v7400
  %v7402 = vrot.slane %v7267, 1
  %v7403 = vsel %vm1782, %v7400, %v7402
  %v7404 = vrot.slane %v7268, 1
  %v7405 = vsel %vm1782, %v7402, %v7404
  %v7406 = vrot.slane %v7269, 1
  %v7407 = vsel %vm1782, %v7404, %v7406
  %v7408 = vrot.slane %v7270, 1
  %v7409 = vsel %vm1782, %v7406, %v7408
  %v7410 = vrot.slane %v7271, 1
  %v7411 = vsel %vm1782, %v7408, %v7410
  %v7412 = vrot.slane %v7272, 1
  %v7413 = vsel %vm1782, %v7410, %v7412
  %v7414 = vrot.slane %v7273, 1
  %v7415 = vsel %vm1782, %v7412, %v7414
  %v7416 = vrot.slane %v7274, 1
  %v7417 = vsel %vm1782, %v7414, %v7416
  %v7418 = vrot.slane %v7275, 1
  %v7419 = vsel %vm1782, %v7416, %v7418
  %v7420 = vrot.slane %v7276, 1
  %v7421 = vsel %vm1782, %v7418, %v7420
  %v7422 = vrot.slane %v7277, 1
  %v7423 = vsel %vm1782, %v7420, %v7422
  %v7424 = vrot.slane %v7278, 1
  %v7425 = vsel %vm1782, %v7422, %v7424
  %v7426 = vrot.slane %v7279, 1
  %v7427 = vsel %vm1782, %v7424, %v7426
  %v7428 = vrot.slane %v7280, 1
  %v7429 = vsel %vm1782, %v7426, %v7428
  %v7430 = vrot.slane %v7281, 1
  %v7431 = vsel %vm1782, %v7428, %v7430
  %v7432 = vrot.slane %v7282, 1
  %v7433 = vsel %vm1782, %v7430, %v7432
  %v7434 = vrot.slane %v7283, 1
  %v7435 = vsel %vm1782, %v7432, %v7434
  %v7436 = vrot.slane %v7284, 1
  %v7437 = vsel %vm1782, %v7434, %v7436
  %v7438 = vrot.slane %v7285, 1
  %v7439 = vsel %vm1782, %v7436, %v7438
  %v7440 = vrot.slane %v7286, 1
  %v7441 = vsel %vm1782, %v7438, %v7440
  %v7442 = vrot.slane %v7287, 1
  %v7443 = vsel %vm1782, %v7440, %v7442
  %v7444 = vrot.slane %v7288, 1
  %v7445 = vsel %vm1782, %v7442, %v7444
  %v7446 = vrot.slane %v7289, 1
  %v7447 = vsel %vm1782, %v7444, %v7446
  %v7448 = vrot.slane %v7290, 1
  %v7449 = vsel %vm1782, %v7446, %v7448
  %v7450 = vrot.slane %v7291, 1
  %v7451 = vsel %vm1782, %v7448, %v7450
  %v7452 = vrot.slane %v7292, 1
  %v7453 = vsel %vm1782, %v7450, %v7452
  %v7454 = vrot.slane %v7293, 1
  %v7455 = vsel %vm1782, %v7452, %v7454
  %v7456 = vrot.slane %v7294, 1
  %v7457 = vsel %vm1782, %v7454, %v7456
  %v7458 = vrot.slane %v7295, 1
  %v7459 = vsel %vm1782, %v7456, %v7458
  %v7460 = vrot.slane %v7296, 1
  %v7461 = vsel %vm1782, %v7458, %v7460
  %v7462 = vrot.slane %v7297, 1
  %v7463 = vsel %vm1782, %v7460, %v7462
  %v7464 = vrot.slane %v7298, 1
  %v7465 = vsel %vm1782, %v7462, %v7464
  %v7466 = vrot.slane %v7299, 1
  %v7467 = vsel %vm1782, %v7464, %v7466
  %v7468 = vrot.slane %v7300, 1
  %v7469 = vsel %vm1782, %v7466, %v7468
  %v7470 = vrot.slane %v7301, 1
  %v7471 = vsel %vm1782, %v7468, %v7470
  %v7472 = vrot.slane %v7302, 1
  %v7473 = vsel %vm1782, %v7470, %v7472
  %v7474 = vrot.slane %v7303, 1
  %v7475 = vsel %vm1782, %v7472, %v7474
  %v7476 = vrot.slane %v7304, 1
  %v7477 = vsel %vm1782, %v7474, %v7476
  %v7478 = vrot.slane %v7305, 1
  %v7479 = vsel %vm1782, %v7476, %v7478
  %v7480 = vrot.slane %v7306, 1
  %v7481 = vsel %vm1782, %v7478, %v7480
  %v7482 = vrot.slane %v7307, 1
  %v7483 = vsel %vm1782, %v7480, %v7482
  %v7484 = vrot.slane %v7308, 1
  %v7485 = vsel %vm1782, %v7482, %v7484
  %v7486 = vrot.slane %v7309, 1
  %v7487 = vsel %vm1782, %v7484, %v7486
  %v7488 = vrot.slane %v7310, 1
  %v7489 = vsel %vm1782, %v7486, %v7488
  %v7490 = vrot.slane %v7311, 1
  %v7491 = vsel %vm1782, %v7488, %v7490
  %v7492 = vrot.slane %v7312, 1
  %v7493 = vsel %vm1782, %v7490, %v7492
  %v7494 = vrot.slane %v7313, 1
  %v7495 = vsel %vm1782, %v7492, %v7494
  %v7496 = vrot.slane %v7314, 1
  %v7497 = vsel %vm1782, %v7494, %v7496
  %v7498 = vrot.slane %v7315, 1
  %v7499 = vsel %vm1782, %v7496, %v7498
  %v7500 = vrot.slane %v7316, 1
  %v7501 = vsel %vm1782, %v7498, %v7500
  %v7502 = vrot.slane %v7317, 1
  %v7503 = vsel %vm1782, %v7500, %v7502
  %v7504 = vrot.slane %v7318, 1
  %v7505 = vsel %vm1782, %v7502, %v7504
  %v7506 = vrot.slane %v7319, 1
  %v7507 = vsel %vm1782, %v7504, %v7506
  %v7508 = vrot.slane %v7320, 1
  %v7509 = vsel %vm1782, %v7506, %v7508
  %v7510 = vrot.slane %v7321, 1
  %v7511 = vsel %vm1782, %v7508, %v7510
  %v7512 = vrot.slane %v7322, 1
  %v7513 = vsel %vm1782, %v7510, %v7512
  %7514 = vrot.lane.b32.xlu0 %v7387, 100
  %v7515 = vpop.permute.xlu0 %7514
  %7516 = vrot.lane.b32.xlu0 %v7389, 100
  %v7517 = vpop.permute.xlu0 %7516
  %7518 = vrot.lane.b32.xlu0 %v7391, 100
  %v7519 = vpop.permute.xlu0 %7518
  %7520 = vrot.lane.b32.xlu0 %v7393, 100
  %v7521 = vpop.permute.xlu0 %7520
  %7522 = vrot.lane.b32.xlu0 %v7395, 100
  %v7523 = vpop.permute.xlu0 %7522
  %7524 = vrot.lane.b32.xlu0 %v7397, 100
  %v7525 = vpop.permute.xlu0 %7524
  %7526 = vrot.lane.b32.xlu0 %v7399, 100
  %v7527 = vpop.permute.xlu0 %7526
  %7528 = vrot.lane.b32.xlu0 %v7401, 100
  %v7529 = vpop.permute.xlu0 %7528
  %7530 = vrot.lane.b32.xlu0 %v7403, 100
  %v7531 = vpop.permute.xlu0 %7530
  %7532 = vrot.lane.b32.xlu0 %v7405, 100
  %v7533 = vpop.permute.xlu0 %7532
  %7534 = vrot.lane.b32.xlu0 %v7407, 100
  %v7535 = vpop.permute.xlu0 %7534
  %7536 = vrot.lane.b32.xlu0 %v7409, 100
  %v7537 = vpop.permute.xlu0 %7536
  %7538 = vrot.lane.b32.xlu0 %v7411, 100
  %v7539 = vpop.permute.xlu0 %7538
  %7540 = vrot.lane.b32.xlu0 %v7413, 100
  %v7541 = vpop.permute.xlu0 %7540
  %7542 = vrot.lane.b32.xlu0 %v7415, 100
  %v7543 = vpop.permute.xlu0 %7542
  %7544 = vrot.lane.b32.xlu0 %v7417, 100
  %v7545 = vpop.permute.xlu0 %7544
  %7546 = vrot.lane.b32.xlu0 %v7419, 100
  %v7547 = vpop.permute.xlu0 %7546
  %7548 = vrot.lane.b32.xlu0 %v7421, 100
  %v7549 = vpop.permute.xlu0 %7548
  %7550 = vrot.lane.b32.xlu0 %v7423, 100
  %v7551 = vpop.permute.xlu0 %7550
  %7552 = vrot.lane.b32.xlu0 %v7425, 100
  %v7553 = vpop.permute.xlu0 %7552
  %7554 = vrot.lane.b32.xlu0 %v7427, 100
  %v7555 = vpop.permute.xlu0 %7554
  %7556 = vrot.lane.b32.xlu0 %v7429, 100
  %v7557 = vpop.permute.xlu0 %7556
  %7558 = vrot.lane.b32.xlu0 %v7431, 100
  %v7559 = vpop.permute.xlu0 %7558
  %7560 = vrot.lane.b32.xlu0 %v7433, 100
  %v7561 = vpop.permute.xlu0 %7560
  %7562 = vrot.lane.b32.xlu0 %v7435, 100
  %v7563 = vpop.permute.xlu0 %7562
  %7564 = vrot.lane.b32.xlu0 %v7437, 100
  %v7565 = vpop.permute.xlu0 %7564
  %7566 = vrot.lane.b32.xlu0 %v7439, 100
  %v7567 = vpop.permute.xlu0 %7566
  %7568 = vrot.lane.b32.xlu0 %v7441, 100
  %v7569 = vpop.permute.xlu0 %7568
  %7570 = vrot.lane.b32.xlu0 %v7443, 100
  %v7571 = vpop.permute.xlu0 %7570
  %7572 = vrot.lane.b32.xlu0 %v7445, 100
  %v7573 = vpop.permute.xlu0 %7572
  %7574 = vrot.lane.b32.xlu0 %v7447, 100
  %v7575 = vpop.permute.xlu0 %7574
  %7576 = vrot.lane.b32.xlu0 %v7449, 100
  %v7577 = vpop.permute.xlu0 %7576
  %7578 = vrot.lane.b32.xlu0 %v7451, 100
  %v7579 = vpop.permute.xlu0 %7578
  %7580 = vrot.lane.b32.xlu0 %v7453, 100
  %v7581 = vpop.permute.xlu0 %7580
  %7582 = vrot.lane.b32.xlu0 %v7455, 100
  %v7583 = vpop.permute.xlu0 %7582
  %7584 = vrot.lane.b32.xlu0 %v7457, 100
  %v7585 = vpop.permute.xlu0 %7584
  %7586 = vrot.lane.b32.xlu0 %v7459, 100
  %v7587 = vpop.permute.xlu0 %7586
  %7588 = vrot.lane.b32.xlu0 %v7461, 100
  %v7589 = vpop.permute.xlu0 %7588
  %7590 = vrot.lane.b32.xlu0 %v7463, 100
  %v7591 = vpop.permute.xlu0 %7590
  %7592 = vrot.lane.b32.xlu0 %v7465, 100
  %v7593 = vpop.permute.xlu0 %7592
  %7594 = vrot.lane.b32.xlu0 %v7467, 100
  %v7595 = vpop.permute.xlu0 %7594
  %7596 = vrot.lane.b32.xlu0 %v7469, 100
  %v7597 = vpop.permute.xlu0 %7596
  %7598 = vrot.lane.b32.xlu0 %v7471, 100
  %v7599 = vpop.permute.xlu0 %7598
  %7600 = vrot.lane.b32.xlu0 %v7473, 100
  %v7601 = vpop.permute.xlu0 %7600
  %7602 = vrot.lane.b32.xlu0 %v7475, 100
  %v7603 = vpop.permute.xlu0 %7602
  %7604 = vrot.lane.b32.xlu0 %v7477, 100
  %v7605 = vpop.permute.xlu0 %7604
  %7606 = vrot.lane.b32.xlu0 %v7479, 100
  %v7607 = vpop.permute.xlu0 %7606
  %7608 = vrot.lane.b32.xlu0 %v7481, 100
  %v7609 = vpop.permute.xlu0 %7608
  %7610 = vrot.lane.b32.xlu0 %v7483, 100
  %v7611 = vpop.permute.xlu0 %7610
  %7612 = vrot.lane.b32.xlu0 %v7485, 100
  %v7613 = vpop.permute.xlu0 %7612
  %7614 = vrot.lane.b32.xlu0 %v7487, 100
  %v7615 = vpop.permute.xlu0 %7614
  %7616 = vrot.lane.b32.xlu0 %v7489, 100
  %v7617 = vpop.permute.xlu0 %7616
  %7618 = vrot.lane.b32.xlu0 %v7491, 100
  %v7619 = vpop.permute.xlu0 %7618
  %7620 = vrot.lane.b32.xlu0 %v7493, 100
  %v7621 = vpop.permute.xlu0 %7620
  %7622 = vrot.lane.b32.xlu0 %v7495, 100
  %v7623 = vpop.permute.xlu0 %7622
  %7624 = vrot.lane.b32.xlu0 %v7497, 100
  %v7625 = vpop.permute.xlu0 %7624
  %7626 = vrot.lane.b32.xlu0 %v7499, 100
  %v7627 = vpop.permute.xlu0 %7626
  %7628 = vrot.lane.b32.xlu0 %v7501, 100
  %v7629 = vpop.permute.xlu0 %7628
  %7630 = vrot.lane.b32.xlu0 %v7503, 100
  %v7631 = vpop.permute.xlu0 %7630
  %7632 = vrot.lane.b32.xlu0 %v7505, 100
  %v7633 = vpop.permute.xlu0 %7632
  %7634 = vrot.lane.b32.xlu0 %v7507, 100
  %v7635 = vpop.permute.xlu0 %7634
  %7636 = vrot.lane.b32.xlu0 %v7509, 100
  %v7637 = vpop.permute.xlu0 %7636
  %7638 = vrot.lane.b32.xlu0 %v7511, 100
  %v7639 = vpop.permute.xlu0 %7638
  %7640 = vrot.lane.b32.xlu0 %v7513, 100
  %v7641 = vpop.permute.xlu0 %7640
  %7642 = vrot.lane.b32.xlu0 %v7512, 100
  %v7643 = vpop.permute.xlu0 %7642
  %v7709 = vadd.f32 %v6938, %v7515
  %v7710 = vadd.f32 %v6939, %v7517
  %v7711 = vadd.f32 %v6940, %v7519
  %v7712 = vadd.f32 %v6941, %v7521
  %v7713 = vadd.f32 %v6942, %v7523
  %v7714 = vadd.f32 %v6943, %v7525
  %v7715 = vadd.f32 %v6944, %v7527
  %v7716 = vadd.f32 %v6945, %v7529
  %v7717 = vadd.f32 %v6946, %v7531
  %v7718 = vadd.f32 %v6947, %v7533
  %v7719 = vadd.f32 %v6948, %v7535
  %v7720 = vadd.f32 %v6949, %v7537
  %v7721 = vadd.f32 %v6950, %v7539
  %v7722 = vadd.f32 %v6951, %v7541
  %v7723 = vadd.f32 %v6952, %v7543
  %v7724 = vadd.f32 %v6953, %v7545
  %v7725 = vadd.f32 %v6954, %v7547
  %v7726 = vadd.f32 %v6955, %v7549
  %v7727 = vadd.f32 %v6956, %v7551
  %v7728 = vadd.f32 %v6957, %v7553
  %v7729 = vadd.f32 %v6958, %v7555
  %v7730 = vadd.f32 %v6959, %v7557
  %v7731 = vadd.f32 %v6960, %v7559
  %v7732 = vadd.f32 %v6961, %v7561
  %v7733 = vadd.f32 %v6962, %v7563
  %v7734 = vadd.f32 %v6963, %v7565
  %v7735 = vadd.f32 %v6964, %v7567
  %v7736 = vadd.f32 %v6965, %v7569
  %v7737 = vadd.f32 %v6966, %v7571
  %v7738 = vadd.f32 %v6967, %v7573
  %v7739 = vadd.f32 %v6968, %v7575
  %v7740 = vadd.f32 %v6969, %v7577
  %v7741 = vadd.f32 %v6970, %v7579
  %v7742 = vadd.f32 %v6971, %v7581
  %v7743 = vadd.f32 %v6972, %v7583
  %v7744 = vadd.f32 %v6973, %v7585
  %v7745 = vadd.f32 %v6974, %v7587
  %v7746 = vadd.f32 %v6975, %v7589
  %v7747 = vadd.f32 %v6976, %v7591
  %v7748 = vadd.f32 %v6977, %v7593
  %v7749 = vadd.f32 %v6978, %v7595
  %v7750 = vadd.f32 %v6979, %v7597
  %v7751 = vadd.f32 %v6980, %v7599
  %v7752 = vadd.f32 %v6981, %v7601
  %v7753 = vadd.f32 %v6982, %v7603
  %v7754 = vadd.f32 %v6983, %v7605
  %v7755 = vadd.f32 %v6984, %v7607
  %v7756 = vadd.f32 %v6985, %v7609
  %v7757 = vadd.f32 %v6986, %v7611
  %v7758 = vadd.f32 %v6987, %v7613
  %v7759 = vadd.f32 %v6988, %v7615
  %v7760 = vadd.f32 %v6989, %v7617
  %v7761 = vadd.f32 %v6990, %v7619
  %v7762 = vadd.f32 %v6991, %v7621
  %v7763 = vadd.f32 %v6992, %v7623
  %v7764 = vadd.f32 %v6993, %v7625
  %v7765 = vadd.f32 %v6994, %v7627
  %v7766 = vadd.f32 %v6995, %v7629
  %v7767 = vadd.f32 %v6996, %v7631
  %v7768 = vadd.f32 %v6997, %v7633
  %v7769 = vadd.f32 %v6998, %v7635
  %v7770 = vadd.f32 %v6999, %v7637
  %v7771 = vadd.f32 %v7000, %v7639
  %v7772 = vadd.f32 %v7001, %v7641
  %v7773 = vadd.f32 %v7002, %v7643
  %7774 = vset.pattern.permute.xlu0 8
  %7775 = vperm.xlu0 %7774, %v1039
  %v7776 = vpop.permute.xlu0 %7775
  %7777 = vset.pattern.permute.xlu0 8
  %7778 = vperm.xlu0 %7777, %v1040
  %v7779 = vpop.permute.xlu0 %7778
  %7780 = vset.pattern.permute.xlu0 8
  %7781 = vperm.xlu0 %7780, %v1041
  %v7782 = vpop.permute.xlu0 %7781
  %7783 = vset.pattern.permute.xlu0 8
  %7784 = vperm.xlu0 %7783, %v1042
  %v7785 = vpop.permute.xlu0 %7784
  %7786 = vset.pattern.permute.xlu0 8
  %7787 = vperm.xlu0 %7786, %v1043
  %v7788 = vpop.permute.xlu0 %7787
  %7789 = vset.pattern.permute.xlu0 8
  %7790 = vperm.xlu0 %7789, %v1044
  %v7791 = vpop.permute.xlu0 %7790
  %7792 = vset.pattern.permute.xlu0 8
  %7793 = vperm.xlu0 %7792, %v1045
  %v7794 = vpop.permute.xlu0 %7793
  %7795 = vset.pattern.permute.xlu0 8
  %7796 = vperm.xlu0 %7795, %v1046
  %v7797 = vpop.permute.xlu0 %7796
  %7798 = vset.pattern.permute.xlu0 8
  %7799 = vperm.xlu0 %7798, %v1047
  %v7800 = vpop.permute.xlu0 %7799
  %7801 = vset.pattern.permute.xlu0 8
  %7802 = vperm.xlu0 %7801, %v1048
  %v7803 = vpop.permute.xlu0 %7802
  %7804 = vset.pattern.permute.xlu0 8
  %7805 = vperm.xlu0 %7804, %v1049
  %v7806 = vpop.permute.xlu0 %7805
  %7807 = vset.pattern.permute.xlu0 8
  %7808 = vperm.xlu0 %7807, %v1050
  %v7809 = vpop.permute.xlu0 %7808
  %7810 = vset.pattern.permute.xlu0 8
  %7811 = vperm.xlu0 %7810, %v1051
  %v7812 = vpop.permute.xlu0 %7811
  %7813 = vset.pattern.permute.xlu0 8
  %7814 = vperm.xlu0 %7813, %v1052
  %v7815 = vpop.permute.xlu0 %7814
  %7816 = vset.pattern.permute.xlu0 8
  %7817 = vperm.xlu0 %7816, %v1053
  %v7818 = vpop.permute.xlu0 %7817
  %7819 = vset.pattern.permute.xlu0 8
  %7820 = vperm.xlu0 %7819, %v1054
  %v7821 = vpop.permute.xlu0 %7820
  %7822 = vset.pattern.permute.xlu0 8
  %7823 = vperm.xlu0 %7822, %v1055
  %v7824 = vpop.permute.xlu0 %7823
  %7825 = vset.pattern.permute.xlu0 8
  %7826 = vperm.xlu0 %7825, %v1056
  %v7827 = vpop.permute.xlu0 %7826
  %7828 = vset.pattern.permute.xlu0 8
  %7829 = vperm.xlu0 %7828, %v1057
  %v7830 = vpop.permute.xlu0 %7829
  %7831 = vset.pattern.permute.xlu0 8
  %7832 = vperm.xlu0 %7831, %v1058
  %v7833 = vpop.permute.xlu0 %7832
  %7834 = vset.pattern.permute.xlu0 8
  %7835 = vperm.xlu0 %7834, %v1059
  %v7836 = vpop.permute.xlu0 %7835
  %7837 = vset.pattern.permute.xlu0 8
  %7838 = vperm.xlu0 %7837, %v1060
  %v7839 = vpop.permute.xlu0 %7838
  %7840 = vset.pattern.permute.xlu0 8
  %7841 = vperm.xlu0 %7840, %v1061
  %v7842 = vpop.permute.xlu0 %7841
  %7843 = vset.pattern.permute.xlu0 8
  %7844 = vperm.xlu0 %7843, %v1062
  %v7845 = vpop.permute.xlu0 %7844
  %7846 = vset.pattern.permute.xlu0 8
  %7847 = vperm.xlu0 %7846, %v1063
  %v7848 = vpop.permute.xlu0 %7847
  %7849 = vset.pattern.permute.xlu0 8
  %7850 = vperm.xlu0 %7849, %v1064
  %v7851 = vpop.permute.xlu0 %7850
  %7852 = vset.pattern.permute.xlu0 8
  %7853 = vperm.xlu0 %7852, %v1065
  %v7854 = vpop.permute.xlu0 %7853
  %7855 = vset.pattern.permute.xlu0 8
  %7856 = vperm.xlu0 %7855, %v1066
  %v7857 = vpop.permute.xlu0 %7856
  %7858 = vset.pattern.permute.xlu0 8
  %7859 = vperm.xlu0 %7858, %v1067
  %v7860 = vpop.permute.xlu0 %7859
  %7861 = vset.pattern.permute.xlu0 8
  %7862 = vperm.xlu0 %7861, %v1068
  %v7863 = vpop.permute.xlu0 %7862
  %7864 = vset.pattern.permute.xlu0 8
  %7865 = vperm.xlu0 %7864, %v1069
  %v7866 = vpop.permute.xlu0 %7865
  %7867 = vset.pattern.permute.xlu0 8
  %7868 = vperm.xlu0 %7867, %v1070
  %v7869 = vpop.permute.xlu0 %7868
  %7870 = vset.pattern.permute.xlu0 8
  %7871 = vperm.xlu0 %7870, %v1071
  %v7872 = vpop.permute.xlu0 %7871
  %7873 = vset.pattern.permute.xlu0 8
  %7874 = vperm.xlu0 %7873, %v1072
  %v7875 = vpop.permute.xlu0 %7874
  %7876 = vset.pattern.permute.xlu0 8
  %7877 = vperm.xlu0 %7876, %v1073
  %v7878 = vpop.permute.xlu0 %7877
  %7879 = vset.pattern.permute.xlu0 8
  %7880 = vperm.xlu0 %7879, %v1074
  %v7881 = vpop.permute.xlu0 %7880
  %7882 = vset.pattern.permute.xlu0 8
  %7883 = vperm.xlu0 %7882, %v1075
  %v7884 = vpop.permute.xlu0 %7883
  %7885 = vset.pattern.permute.xlu0 8
  %7886 = vperm.xlu0 %7885, %v1076
  %v7887 = vpop.permute.xlu0 %7886
  %7888 = vset.pattern.permute.xlu0 8
  %7889 = vperm.xlu0 %7888, %v1077
  %v7890 = vpop.permute.xlu0 %7889
  %7891 = vset.pattern.permute.xlu0 8
  %7892 = vperm.xlu0 %7891, %v1078
  %v7893 = vpop.permute.xlu0 %7892
  %7894 = vset.pattern.permute.xlu0 8
  %7895 = vperm.xlu0 %7894, %v1079
  %v7896 = vpop.permute.xlu0 %7895
  %7897 = vset.pattern.permute.xlu0 8
  %7898 = vperm.xlu0 %7897, %v1080
  %v7899 = vpop.permute.xlu0 %7898
  %7900 = vset.pattern.permute.xlu0 8
  %7901 = vperm.xlu0 %7900, %v1081
  %v7902 = vpop.permute.xlu0 %7901
  %7903 = vset.pattern.permute.xlu0 8
  %7904 = vperm.xlu0 %7903, %v1082
  %v7905 = vpop.permute.xlu0 %7904
  %7906 = vset.pattern.permute.xlu0 8
  %7907 = vperm.xlu0 %7906, %v1083
  %v7908 = vpop.permute.xlu0 %7907
  %7909 = vset.pattern.permute.xlu0 8
  %7910 = vperm.xlu0 %7909, %v1084
  %v7911 = vpop.permute.xlu0 %7910
  %7912 = vset.pattern.permute.xlu0 8
  %7913 = vperm.xlu0 %7912, %v1085
  %v7914 = vpop.permute.xlu0 %7913
  %7915 = vset.pattern.permute.xlu0 8
  %7916 = vperm.xlu0 %7915, %v1086
  %v7917 = vpop.permute.xlu0 %7916
  %7918 = vset.pattern.permute.xlu0 8
  %7919 = vperm.xlu0 %7918, %v1087
  %v7920 = vpop.permute.xlu0 %7919
  %7921 = vset.pattern.permute.xlu0 8
  %7922 = vperm.xlu0 %7921, %v1088
  %v7923 = vpop.permute.xlu0 %7922
  %7924 = vset.pattern.permute.xlu0 8
  %7925 = vperm.xlu0 %7924, %v1089
  %v7926 = vpop.permute.xlu0 %7925
  %7927 = vset.pattern.permute.xlu0 8
  %7928 = vperm.xlu0 %7927, %v1090
  %v7929 = vpop.permute.xlu0 %7928
  %7930 = vset.pattern.permute.xlu0 8
  %7931 = vperm.xlu0 %7930, %v1091
  %v7932 = vpop.permute.xlu0 %7931
  %7933 = vset.pattern.permute.xlu0 8
  %7934 = vperm.xlu0 %7933, %v1092
  %v7935 = vpop.permute.xlu0 %7934
  %7936 = vset.pattern.permute.xlu0 8
  %7937 = vperm.xlu0 %7936, %v1093
  %v7938 = vpop.permute.xlu0 %7937
  %7939 = vset.pattern.permute.xlu0 8
  %7940 = vperm.xlu0 %7939, %v1094
  %v7941 = vpop.permute.xlu0 %7940
  %7942 = vset.pattern.permute.xlu0 8
  %7943 = vperm.xlu0 %7942, %v1095
  %v7944 = vpop.permute.xlu0 %7943
  %7945 = vset.pattern.permute.xlu0 8
  %7946 = vperm.xlu0 %7945, %v1096
  %v7947 = vpop.permute.xlu0 %7946
  %7948 = vset.pattern.permute.xlu0 8
  %7949 = vperm.xlu0 %7948, %v1097
  %v7950 = vpop.permute.xlu0 %7949
  %7951 = vset.pattern.permute.xlu0 8
  %7952 = vperm.xlu0 %7951, %v1098
  %v7953 = vpop.permute.xlu0 %7952
  %7954 = vset.pattern.permute.xlu0 8
  %7955 = vperm.xlu0 %7954, %v1099
  %v7956 = vpop.permute.xlu0 %7955
  %7957 = vset.pattern.permute.xlu0 8
  %7958 = vperm.xlu0 %7957, %v1100
  %v7959 = vpop.permute.xlu0 %7958
  %7960 = vset.pattern.permute.xlu0 8
  %7961 = vperm.xlu0 %7960, %v1101
  %v7962 = vpop.permute.xlu0 %7961
  %7963 = vset.pattern.permute.xlu0 8
  %7964 = vperm.xlu0 %7963, %v1102
  %v7965 = vpop.permute.xlu0 %7964
  %v7966 = vrot.slane %v7776, 7
  %v7967 = vrot.slane %v7779, 7
  %v7968 = vsel %vm3068, %v7966, %v7967
  %v7969 = vrot.slane %v7782, 7
  %v7970 = vsel %vm3068, %v7967, %v7969
  %v7971 = vrot.slane %v7785, 7
  %v7972 = vsel %vm3068, %v7969, %v7971
  %v7973 = vrot.slane %v7788, 7
  %v7974 = vsel %vm3068, %v7971, %v7973
  %v7975 = vrot.slane %v7791, 7
  %v7976 = vsel %vm3068, %v7973, %v7975
  %v7977 = vrot.slane %v7794, 7
  %v7978 = vsel %vm3068, %v7975, %v7977
  %v7979 = vrot.slane %v7797, 7
  %v7980 = vsel %vm3068, %v7977, %v7979
  %v7981 = vrot.slane %v7800, 7
  %v7982 = vsel %vm3068, %v7979, %v7981
  %v7983 = vrot.slane %v7803, 7
  %v7984 = vsel %vm3068, %v7981, %v7983
  %v7985 = vrot.slane %v7806, 7
  %v7986 = vsel %vm3068, %v7983, %v7985
  %v7987 = vrot.slane %v7809, 7
  %v7988 = vsel %vm3068, %v7985, %v7987
  %v7989 = vrot.slane %v7812, 7
  %v7990 = vsel %vm3068, %v7987, %v7989
  %v7991 = vrot.slane %v7815, 7
  %v7992 = vsel %vm3068, %v7989, %v7991
  %v7993 = vrot.slane %v7818, 7
  %v7994 = vsel %vm3068, %v7991, %v7993
  %v7995 = vrot.slane %v7821, 7
  %v7996 = vsel %vm3068, %v7993, %v7995
  %v7997 = vrot.slane %v7824, 7
  %v7998 = vsel %vm3068, %v7995, %v7997
  %v7999 = vrot.slane %v7827, 7
  %v8000 = vsel %vm3068, %v7997, %v7999
  %v8001 = vrot.slane %v7830, 7
  %v8002 = vsel %vm3068, %v7999, %v8001
  %v8003 = vrot.slane %v7833, 7
  %v8004 = vsel %vm3068, %v8001, %v8003
  %v8005 = vrot.slane %v7836, 7
  %v8006 = vsel %vm3068, %v8003, %v8005
  %v8007 = vrot.slane %v7839, 7
  %v8008 = vsel %vm3068, %v8005, %v8007
  %v8009 = vrot.slane %v7842, 7
  %v8010 = vsel %vm3068, %v8007, %v8009
  %v8011 = vrot.slane %v7845, 7
  %v8012 = vsel %vm3068, %v8009, %v8011
  %v8013 = vrot.slane %v7848, 7
  %v8014 = vsel %vm3068, %v8011, %v8013
  %v8015 = vrot.slane %v7851, 7
  %v8016 = vsel %vm3068, %v8013, %v8015
  %v8017 = vrot.slane %v7854, 7
  %v8018 = vsel %vm3068, %v8015, %v8017
  %v8019 = vrot.slane %v7857, 7
  %v8020 = vsel %vm3068, %v8017, %v8019
  %v8021 = vrot.slane %v7860, 7
  %v8022 = vsel %vm3068, %v8019, %v8021
  %v8023 = vrot.slane %v7863, 7
  %v8024 = vsel %vm3068, %v8021, %v8023
  %v8025 = vrot.slane %v7866, 7
  %v8026 = vsel %vm3068, %v8023, %v8025
  %v8027 = vrot.slane %v7869, 7
  %v8028 = vsel %vm3068, %v8025, %v8027
  %v8029 = vrot.slane %v7872, 7
  %v8030 = vsel %vm3068, %v8027, %v8029
  %v8031 = vrot.slane %v7875, 7
  %v8032 = vsel %vm3068, %v8029, %v8031
  %v8033 = vrot.slane %v7878, 7
  %v8034 = vsel %vm3068, %v8031, %v8033
  %v8035 = vrot.slane %v7881, 7
  %v8036 = vsel %vm3068, %v8033, %v8035
  %v8037 = vrot.slane %v7884, 7
  %v8038 = vsel %vm3068, %v8035, %v8037
  %v8039 = vrot.slane %v7887, 7
  %v8040 = vsel %vm3068, %v8037, %v8039
  %v8041 = vrot.slane %v7890, 7
  %v8042 = vsel %vm3068, %v8039, %v8041
  %v8043 = vrot.slane %v7893, 7
  %v8044 = vsel %vm3068, %v8041, %v8043
  %v8045 = vrot.slane %v7896, 7
  %v8046 = vsel %vm3068, %v8043, %v8045
  %v8047 = vrot.slane %v7899, 7
  %v8048 = vsel %vm3068, %v8045, %v8047
  %v8049 = vrot.slane %v7902, 7
  %v8050 = vsel %vm3068, %v8047, %v8049
  %v8051 = vrot.slane %v7905, 7
  %v8052 = vsel %vm3068, %v8049, %v8051
  %v8053 = vrot.slane %v7908, 7
  %v8054 = vsel %vm3068, %v8051, %v8053
  %v8055 = vrot.slane %v7911, 7
  %v8056 = vsel %vm3068, %v8053, %v8055
  %v8057 = vrot.slane %v7914, 7
  %v8058 = vsel %vm3068, %v8055, %v8057
  %v8059 = vrot.slane %v7917, 7
  %v8060 = vsel %vm3068, %v8057, %v8059
  %v8061 = vrot.slane %v7920, 7
  %v8062 = vsel %vm3068, %v8059, %v8061
  %v8063 = vrot.slane %v7923, 7
  %v8064 = vsel %vm3068, %v8061, %v8063
  %v8065 = vrot.slane %v7926, 7
  %v8066 = vsel %vm3068, %v8063, %v8065
  %v8067 = vrot.slane %v7929, 7
  %v8068 = vsel %vm3068, %v8065, %v8067
  %v8069 = vrot.slane %v7932, 7
  %v8070 = vsel %vm3068, %v8067, %v8069
  %v8071 = vrot.slane %v7935, 7
  %v8072 = vsel %vm3068, %v8069, %v8071
  %v8073 = vrot.slane %v7938, 7
  %v8074 = vsel %vm3068, %v8071, %v8073
  %v8075 = vrot.slane %v7941, 7
  %v8076 = vsel %vm3068, %v8073, %v8075
  %v8077 = vrot.slane %v7944, 7
  %v8078 = vsel %vm3068, %v8075, %v8077
  %v8079 = vrot.slane %v7947, 7
  %v8080 = vsel %vm3068, %v8077, %v8079
  %v8081 = vrot.slane %v7950, 7
  %v8082 = vsel %vm3068, %v8079, %v8081
  %v8083 = vrot.slane %v7953, 7
  %v8084 = vsel %vm3068, %v8081, %v8083
  %v8085 = vrot.slane %v7956, 7
  %v8086 = vsel %vm3068, %v8083, %v8085
  %v8087 = vrot.slane %v7959, 7
  %v8088 = vsel %vm3068, %v8085, %v8087
  %v8089 = vrot.slane %v7962, 7
  %v8090 = vsel %vm3068, %v8087, %v8089
  %v8091 = vrot.slane %v7965, 7
  %v8092 = vsel %vm3068, %v8089, %v8091
  %v8158 = vmul.f32 %v1280, %v7966
  %v8159 = vmul.f32 %v1283, %v7968
  %v8160 = vmul.f32 %v1288, %v7970
  %v8161 = vmul.f32 %v1291, %v7972
  %v8162 = vmul.f32 %v1296, %v7974
  %v8163 = vmul.f32 %v1299, %v7976
  %v8164 = vmul.f32 %v1304, %v7978
  %v8165 = vmul.f32 %v1307, %v7980
  %v8166 = vmul.f32 %v1312, %v7982
  %v8167 = vmul.f32 %v1315, %v7984
  %v8168 = vmul.f32 %v1320, %v7986
  %v8169 = vmul.f32 %v1323, %v7988
  %v8170 = vmul.f32 %v1328, %v7990
  %v8171 = vmul.f32 %v1331, %v7992
  %v8172 = vmul.f32 %v1336, %v7994
  %v8173 = vmul.f32 %v1339, %v7996
  %v8174 = vmul.f32 %v1344, %v7998
  %v8175 = vmul.f32 %v1347, %v8000
  %v8176 = vmul.f32 %v1352, %v8002
  %v8177 = vmul.f32 %v1355, %v8004
  %v8178 = vmul.f32 %v1360, %v8006
  %v8179 = vmul.f32 %v1363, %v8008
  %v8180 = vmul.f32 %v1368, %v8010
  %v8181 = vmul.f32 %v1371, %v8012
  %v8182 = vmul.f32 %v1376, %v8014
  %v8183 = vmul.f32 %v1379, %v8016
  %v8184 = vmul.f32 %v1384, %v8018
  %v8185 = vmul.f32 %v1387, %v8020
  %v8186 = vmul.f32 %v1392, %v8022
  %v8187 = vmul.f32 %v1395, %v8024
  %v8188 = vmul.f32 %v1400, %v8026
  %v8189 = vmul.f32 %v1403, %v8028
  %v8190 = vmul.f32 %v1408, %v8030
  %v8191 = vmul.f32 %v1411, %v8032
  %v8192 = vmul.f32 %v1416, %v8034
  %v8193 = vmul.f32 %v1419, %v8036
  %v8194 = vmul.f32 %v1424, %v8038
  %v8195 = vmul.f32 %v1427, %v8040
  %v8196 = vmul.f32 %v1432, %v8042
  %v8197 = vmul.f32 %v1435, %v8044
  %v8198 = vmul.f32 %v1440, %v8046
  %v8199 = vmul.f32 %v1443, %v8048
  %v8200 = vmul.f32 %v1448, %v8050
  %v8201 = vmul.f32 %v1451, %v8052
  %v8202 = vmul.f32 %v1456, %v8054
  %v8203 = vmul.f32 %v1459, %v8056
  %v8204 = vmul.f32 %v1464, %v8058
  %v8205 = vmul.f32 %v1467, %v8060
  %v8206 = vmul.f32 %v1472, %v8062
  %v8207 = vmul.f32 %v1475, %v8064
  %v8208 = vmul.f32 %v1480, %v8066
  %v8209 = vmul.f32 %v1483, %v8068
  %v8210 = vmul.f32 %v1488, %v8070
  %v8211 = vmul.f32 %v1491, %v8072
  %v8212 = vmul.f32 %v1496, %v8074
  %v8213 = vmul.f32 %v1499, %v8076
  %v8214 = vmul.f32 %v1504, %v8078
  %v8215 = vmul.f32 %v1507, %v8080
  %v8216 = vmul.f32 %v1512, %v8082
  %v8217 = vmul.f32 %v1515, %v8084
  %v8218 = vmul.f32 %v1520, %v8086
  %v8219 = vmul.f32 %v1523, %v8088
  %v8220 = vmul.f32 %v8090, 0.0
  %v8221 = vmul.f32 %v8092, 0.0
  %v8222 = vmul.f32 %v8091, 0.0
  %v8288 = vrot.slane %v8158, 2
  %v8289 = vrot.slane %v8159, 2
  %v8290 = vsel %vm3391, %v8288, %v8289
  %v8291 = vrot.slane %v8160, 2
  %v8292 = vsel %vm3391, %v8289, %v8291
  %v8293 = vrot.slane %v8161, 2
  %v8294 = vsel %vm3391, %v8291, %v8293
  %v8295 = vrot.slane %v8162, 2
  %v8296 = vsel %vm3391, %v8293, %v8295
  %v8297 = vrot.slane %v8163, 2
  %v8298 = vsel %vm3391, %v8295, %v8297
  %v8299 = vrot.slane %v8164, 2
  %v8300 = vsel %vm3391, %v8297, %v8299
  %v8301 = vrot.slane %v8165, 2
  %v8302 = vsel %vm3391, %v8299, %v8301
  %v8303 = vrot.slane %v8166, 2
  %v8304 = vsel %vm3391, %v8301, %v8303
  %v8305 = vrot.slane %v8167, 2
  %v8306 = vsel %vm3391, %v8303, %v8305
  %v8307 = vrot.slane %v8168, 2
  %v8308 = vsel %vm3391, %v8305, %v8307
  %v8309 = vrot.slane %v8169, 2
  %v8310 = vsel %vm3391, %v8307, %v8309
  %v8311 = vrot.slane %v8170, 2
  %v8312 = vsel %vm3391, %v8309, %v8311
  %v8313 = vrot.slane %v8171, 2
  %v8314 = vsel %vm3391, %v8311, %v8313
  %v8315 = vrot.slane %v8172, 2
  %v8316 = vsel %vm3391, %v8313, %v8315
  %v8317 = vrot.slane %v8173, 2
  %v8318 = vsel %vm3391, %v8315, %v8317
  %v8319 = vrot.slane %v8174, 2
  %v8320 = vsel %vm3391, %v8317, %v8319
  %v8321 = vrot.slane %v8175, 2
  %v8322 = vsel %vm3391, %v8319, %v8321
  %v8323 = vrot.slane %v8176, 2
  %v8324 = vsel %vm3391, %v8321, %v8323
  %v8325 = vrot.slane %v8177, 2
  %v8326 = vsel %vm3391, %v8323, %v8325
  %v8327 = vrot.slane %v8178, 2
  %v8328 = vsel %vm3391, %v8325, %v8327
  %v8329 = vrot.slane %v8179, 2
  %v8330 = vsel %vm3391, %v8327, %v8329
  %v8331 = vrot.slane %v8180, 2
  %v8332 = vsel %vm3391, %v8329, %v8331
  %v8333 = vrot.slane %v8181, 2
  %v8334 = vsel %vm3391, %v8331, %v8333
  %v8335 = vrot.slane %v8182, 2
  %v8336 = vsel %vm3391, %v8333, %v8335
  %v8337 = vrot.slane %v8183, 2
  %v8338 = vsel %vm3391, %v8335, %v8337
  %v8339 = vrot.slane %v8184, 2
  %v8340 = vsel %vm3391, %v8337, %v8339
  %v8341 = vrot.slane %v8185, 2
  %v8342 = vsel %vm3391, %v8339, %v8341
  %v8343 = vrot.slane %v8186, 2
  %v8344 = vsel %vm3391, %v8341, %v8343
  %v8345 = vrot.slane %v8187, 2
  %v8346 = vsel %vm3391, %v8343, %v8345
  %v8347 = vrot.slane %v8188, 2
  %v8348 = vsel %vm3391, %v8345, %v8347
  %v8349 = vrot.slane %v8189, 2
  %v8350 = vsel %vm3391, %v8347, %v8349
  %v8351 = vrot.slane %v8190, 2
  %v8352 = vsel %vm3391, %v8349, %v8351
  %v8353 = vrot.slane %v8191, 2
  %v8354 = vsel %vm3391, %v8351, %v8353
  %v8355 = vrot.slane %v8192, 2
  %v8356 = vsel %vm3391, %v8353, %v8355
  %v8357 = vrot.slane %v8193, 2
  %v8358 = vsel %vm3391, %v8355, %v8357
  %v8359 = vrot.slane %v8194, 2
  %v8360 = vsel %vm3391, %v8357, %v8359
  %v8361 = vrot.slane %v8195, 2
  %v8362 = vsel %vm3391, %v8359, %v8361
  %v8363 = vrot.slane %v8196, 2
  %v8364 = vsel %vm3391, %v8361, %v8363
  %v8365 = vrot.slane %v8197, 2
  %v8366 = vsel %vm3391, %v8363, %v8365
  %v8367 = vrot.slane %v8198, 2
  %v8368 = vsel %vm3391, %v8365, %v8367
  %v8369 = vrot.slane %v8199, 2
  %v8370 = vsel %vm3391, %v8367, %v8369
  %v8371 = vrot.slane %v8200, 2
  %v8372 = vsel %vm3391, %v8369, %v8371
  %v8373 = vrot.slane %v8201, 2
  %v8374 = vsel %vm3391, %v8371, %v8373
  %v8375 = vrot.slane %v8202, 2
  %v8376 = vsel %vm3391, %v8373, %v8375
  %v8377 = vrot.slane %v8203, 2
  %v8378 = vsel %vm3391, %v8375, %v8377
  %v8379 = vrot.slane %v8204, 2
  %v8380 = vsel %vm3391, %v8377, %v8379
  %v8381 = vrot.slane %v8205, 2
  %v8382 = vsel %vm3391, %v8379, %v8381
  %v8383 = vrot.slane %v8206, 2
  %v8384 = vsel %vm3391, %v8381, %v8383
  %v8385 = vrot.slane %v8207, 2
  %v8386 = vsel %vm3391, %v8383, %v8385
  %v8387 = vrot.slane %v8208, 2
  %v8388 = vsel %vm3391, %v8385, %v8387
  %v8389 = vrot.slane %v8209, 2
  %v8390 = vsel %vm3391, %v8387, %v8389
  %v8391 = vrot.slane %v8210, 2
  %v8392 = vsel %vm3391, %v8389, %v8391
  %v8393 = vrot.slane %v8211, 2
  %v8394 = vsel %vm3391, %v8391, %v8393
  %v8395 = vrot.slane %v8212, 2
  %v8396 = vsel %vm3391, %v8393, %v8395
  %v8397 = vrot.slane %v8213, 2
  %v8398 = vsel %vm3391, %v8395, %v8397
  %v8399 = vrot.slane %v8214, 2
  %v8400 = vsel %vm3391, %v8397, %v8399
  %v8401 = vrot.slane %v8215, 2
  %v8402 = vsel %vm3391, %v8399, %v8401
  %v8403 = vrot.slane %v8216, 2
  %v8404 = vsel %vm3391, %v8401, %v8403
  %v8405 = vrot.slane %v8217, 2
  %v8406 = vsel %vm3391, %v8403, %v8405
  %v8407 = vrot.slane %v8218, 2
  %v8408 = vsel %vm3391, %v8405, %v8407
  %v8409 = vrot.slane %v8219, 2
  %v8410 = vsel %vm3391, %v8407, %v8409
  %v8411 = vrot.slane %v8220, 2
  %v8412 = vsel %vm3391, %v8409, %v8411
  %v8413 = vrot.slane %v8221, 2
  %v8414 = vsel %vm3391, %v8411, %v8413
  %v8415 = vrot.slane %v8222, 2
  %v8416 = vsel %vm3391, %v8413, %v8415
  %8417 = vrot.lane.b32.xlu0 %v8288, 96
  %v8418 = vpop.permute.xlu0 %8417
  %8419 = vrot.lane.b32.xlu0 %v8290, 96
  %v8420 = vpop.permute.xlu0 %8419
  %8421 = vrot.lane.b32.xlu0 %v8292, 96
  %v8422 = vpop.permute.xlu0 %8421
  %8423 = vrot.lane.b32.xlu0 %v8294, 96
  %v8424 = vpop.permute.xlu0 %8423
  %8425 = vrot.lane.b32.xlu0 %v8296, 96
  %v8426 = vpop.permute.xlu0 %8425
  %8427 = vrot.lane.b32.xlu0 %v8298, 96
  %v8428 = vpop.permute.xlu0 %8427
  %8429 = vrot.lane.b32.xlu0 %v8300, 96
  %v8430 = vpop.permute.xlu0 %8429
  %8431 = vrot.lane.b32.xlu0 %v8302, 96
  %v8432 = vpop.permute.xlu0 %8431
  %8433 = vrot.lane.b32.xlu0 %v8304, 96
  %v8434 = vpop.permute.xlu0 %8433
  %8435 = vrot.lane.b32.xlu0 %v8306, 96
  %v8436 = vpop.permute.xlu0 %8435
  %8437 = vrot.lane.b32.xlu0 %v8308, 96
  %v8438 = vpop.permute.xlu0 %8437
  %8439 = vrot.lane.b32.xlu0 %v8310, 96
  %v8440 = vpop.permute.xlu0 %8439
  %8441 = vrot.lane.b32.xlu0 %v8312, 96
  %v8442 = vpop.permute.xlu0 %8441
  %8443 = vrot.lane.b32.xlu0 %v8314, 96
  %v8444 = vpop.permute.xlu0 %8443
  %8445 = vrot.lane.b32.xlu0 %v8316, 96
  %v8446 = vpop.permute.xlu0 %8445
  %8447 = vrot.lane.b32.xlu0 %v8318, 96
  %v8448 = vpop.permute.xlu0 %8447
  %8449 = vrot.lane.b32.xlu0 %v8320, 96
  %v8450 = vpop.permute.xlu0 %8449
  %8451 = vrot.lane.b32.xlu0 %v8322, 96
  %v8452 = vpop.permute.xlu0 %8451
  %8453 = vrot.lane.b32.xlu0 %v8324, 96
  %v8454 = vpop.permute.xlu0 %8453
  %8455 = vrot.lane.b32.xlu0 %v8326, 96
  %v8456 = vpop.permute.xlu0 %8455
  %8457 = vrot.lane.b32.xlu0 %v8328, 96
  %v8458 = vpop.permute.xlu0 %8457
  %8459 = vrot.lane.b32.xlu0 %v8330, 96
  %v8460 = vpop.permute.xlu0 %8459
  %8461 = vrot.lane.b32.xlu0 %v8332, 96
  %v8462 = vpop.permute.xlu0 %8461
  %8463 = vrot.lane.b32.xlu0 %v8334, 96
  %v8464 = vpop.permute.xlu0 %8463
  %8465 = vrot.lane.b32.xlu0 %v8336, 96
  %v8466 = vpop.permute.xlu0 %8465
  %8467 = vrot.lane.b32.xlu0 %v8338, 96
  %v8468 = vpop.permute.xlu0 %8467
  %8469 = vrot.lane.b32.xlu0 %v8340, 96
  %v8470 = vpop.permute.xlu0 %8469
  %8471 = vrot.lane.b32.xlu0 %v8342, 96
  %v8472 = vpop.permute.xlu0 %8471
  %8473 = vrot.lane.b32.xlu0 %v8344, 96
  %v8474 = vpop.permute.xlu0 %8473
  %8475 = vrot.lane.b32.xlu0 %v8346, 96
  %v8476 = vpop.permute.xlu0 %8475
  %8477 = vrot.lane.b32.xlu0 %v8348, 96
  %v8478 = vpop.permute.xlu0 %8477
  %8479 = vrot.lane.b32.xlu0 %v8350, 96
  %v8480 = vpop.permute.xlu0 %8479
  %8481 = vrot.lane.b32.xlu0 %v8352, 96
  %v8482 = vpop.permute.xlu0 %8481
  %8483 = vrot.lane.b32.xlu0 %v8354, 96
  %v8484 = vpop.permute.xlu0 %8483
  %8485 = vrot.lane.b32.xlu0 %v8356, 96
  %v8486 = vpop.permute.xlu0 %8485
  %8487 = vrot.lane.b32.xlu0 %v8358, 96
  %v8488 = vpop.permute.xlu0 %8487
  %8489 = vrot.lane.b32.xlu0 %v8360, 96
  %v8490 = vpop.permute.xlu0 %8489
  %8491 = vrot.lane.b32.xlu0 %v8362, 96
  %v8492 = vpop.permute.xlu0 %8491
  %8493 = vrot.lane.b32.xlu0 %v8364, 96
  %v8494 = vpop.permute.xlu0 %8493
  %8495 = vrot.lane.b32.xlu0 %v8366, 96
  %v8496 = vpop.permute.xlu0 %8495
  %8497 = vrot.lane.b32.xlu0 %v8368, 96
  %v8498 = vpop.permute.xlu0 %8497
  %8499 = vrot.lane.b32.xlu0 %v8370, 96
  %v8500 = vpop.permute.xlu0 %8499
  %8501 = vrot.lane.b32.xlu0 %v8372, 96
  %v8502 = vpop.permute.xlu0 %8501
  %8503 = vrot.lane.b32.xlu0 %v8374, 96
  %v8504 = vpop.permute.xlu0 %8503
  %8505 = vrot.lane.b32.xlu0 %v8376, 96
  %v8506 = vpop.permute.xlu0 %8505
  %8507 = vrot.lane.b32.xlu0 %v8378, 96
  %v8508 = vpop.permute.xlu0 %8507
  %8509 = vrot.lane.b32.xlu0 %v8380, 96
  %v8510 = vpop.permute.xlu0 %8509
  %8511 = vrot.lane.b32.xlu0 %v8382, 96
  %v8512 = vpop.permute.xlu0 %8511
  %8513 = vrot.lane.b32.xlu0 %v8384, 96
  %v8514 = vpop.permute.xlu0 %8513
  %8515 = vrot.lane.b32.xlu0 %v8386, 96
  %v8516 = vpop.permute.xlu0 %8515
  %8517 = vrot.lane.b32.xlu0 %v8388, 96
  %v8518 = vpop.permute.xlu0 %8517
  %8519 = vrot.lane.b32.xlu0 %v8390, 96
  %v8520 = vpop.permute.xlu0 %8519
  %8521 = vrot.lane.b32.xlu0 %v8392, 96
  %v8522 = vpop.permute.xlu0 %8521
  %8523 = vrot.lane.b32.xlu0 %v8394, 96
  %v8524 = vpop.permute.xlu0 %8523
  %8525 = vrot.lane.b32.xlu0 %v8396, 96
  %v8526 = vpop.permute.xlu0 %8525
  %8527 = vrot.lane.b32.xlu0 %v8398, 96
  %v8528 = vpop.permute.xlu0 %8527
  %8529 = vrot.lane.b32.xlu0 %v8400, 96
  %v8530 = vpop.permute.xlu0 %8529
  %8531 = vrot.lane.b32.xlu0 %v8402, 96
  %v8532 = vpop.permute.xlu0 %8531
  %8533 = vrot.lane.b32.xlu0 %v8404, 96
  %v8534 = vpop.permute.xlu0 %8533
  %8535 = vrot.lane.b32.xlu0 %v8406, 96
  %v8536 = vpop.permute.xlu0 %8535
  %8537 = vrot.lane.b32.xlu0 %v8408, 96
  %v8538 = vpop.permute.xlu0 %8537
  %8539 = vrot.lane.b32.xlu0 %v8410, 96
  %v8540 = vpop.permute.xlu0 %8539
  %8541 = vrot.lane.b32.xlu0 %v8412, 96
  %v8542 = vpop.permute.xlu0 %8541
  %8543 = vrot.lane.b32.xlu0 %v8414, 96
  %v8544 = vpop.permute.xlu0 %8543
  %8545 = vrot.lane.b32.xlu0 %v8416, 96
  %v8546 = vpop.permute.xlu0 %8545
  %v8612 = vadd.f32 %v7709, %v8418
  %v8613 = vadd.f32 %v7710, %v8420
  %v8614 = vadd.f32 %v7711, %v8422
  %v8615 = vadd.f32 %v7712, %v8424
  %v8616 = vadd.f32 %v7713, %v8426
  %v8617 = vadd.f32 %v7714, %v8428
  %v8618 = vadd.f32 %v7715, %v8430
  %v8619 = vadd.f32 %v7716, %v8432
  %v8620 = vadd.f32 %v7717, %v8434
  %v8621 = vadd.f32 %v7718, %v8436
  %v8622 = vadd.f32 %v7719, %v8438
  %v8623 = vadd.f32 %v7720, %v8440
  %v8624 = vadd.f32 %v7721, %v8442
  %v8625 = vadd.f32 %v7722, %v8444
  %v8626 = vadd.f32 %v7723, %v8446
  %v8627 = vadd.f32 %v7724, %v8448
  %v8628 = vadd.f32 %v7725, %v8450
  %v8629 = vadd.f32 %v7726, %v8452
  %v8630 = vadd.f32 %v7727, %v8454
  %v8631 = vadd.f32 %v7728, %v8456
  %v8632 = vadd.f32 %v7729, %v8458
  %v8633 = vadd.f32 %v7730, %v8460
  %v8634 = vadd.f32 %v7731, %v8462
  %v8635 = vadd.f32 %v7732, %v8464
  %v8636 = vadd.f32 %v7733, %v8466
  %v8637 = vadd.f32 %v7734, %v8468
  %v8638 = vadd.f32 %v7735, %v8470
  %v8639 = vadd.f32 %v7736, %v8472
  %v8640 = vadd.f32 %v7737, %v8474
  %v8641 = vadd.f32 %v7738, %v8476
  %v8642 = vadd.f32 %v7739, %v8478
  %v8643 = vadd.f32 %v7740, %v8480
  %v8644 = vadd.f32 %v7741, %v8482
  %v8645 = vadd.f32 %v7742, %v8484
  %v8646 = vadd.f32 %v7743, %v8486
  %v8647 = vadd.f32 %v7744, %v8488
  %v8648 = vadd.f32 %v7745, %v8490
  %v8649 = vadd.f32 %v7746, %v8492
  %v8650 = vadd.f32 %v7747, %v8494
  %v8651 = vadd.f32 %v7748, %v8496
  %v8652 = vadd.f32 %v7749, %v8498
  %v8653 = vadd.f32 %v7750, %v8500
  %v8654 = vadd.f32 %v7751, %v8502
  %v8655 = vadd.f32 %v7752, %v8504
  %v8656 = vadd.f32 %v7753, %v8506
  %v8657 = vadd.f32 %v7754, %v8508
  %v8658 = vadd.f32 %v7755, %v8510
  %v8659 = vadd.f32 %v7756, %v8512
  %v8660 = vadd.f32 %v7757, %v8514
  %v8661 = vadd.f32 %v7758, %v8516
  %v8662 = vadd.f32 %v7759, %v8518
  %v8663 = vadd.f32 %v7760, %v8520
  %v8664 = vadd.f32 %v7761, %v8522
  %v8665 = vadd.f32 %v7762, %v8524
  %v8666 = vadd.f32 %v7763, %v8526
  %v8667 = vadd.f32 %v7764, %v8528
  %v8668 = vadd.f32 %v7765, %v8530
  %v8669 = vadd.f32 %v7766, %v8532
  %v8670 = vadd.f32 %v7767, %v8534
  %v8671 = vadd.f32 %v7768, %v8536
  %v8672 = vadd.f32 %v7769, %v8538
  %v8673 = vadd.f32 %v7770, %v8540
  %v8674 = vadd.f32 %v7771, %v8542
  %v8675 = vadd.f32 %v7772, %v8544
  %v8676 = vadd.f32 %v7773, %v8546
  %v8677 = vld [vmem:[%s5] sm:$0x1]
  %v8679 = vlaneseq
  %v8680 = vshrl.u32 %v8679, 7
  %v8681 = vsub.s32 0, %v8680
  %v8682 = vrot.slane %v8677, %v8681
  %v8684 = vadd.f32 %v8612, %v8682
  %v8685 = vadd.f32 %v8613, %v8682
  %v8686 = vadd.f32 %v8614, %v8682
  %v8687 = vadd.f32 %v8615, %v8682
  %v8688 = vadd.f32 %v8616, %v8682
  %v8689 = vadd.f32 %v8617, %v8682
  %v8690 = vadd.f32 %v8618, %v8682
  %v8691 = vadd.f32 %v8619, %v8682
  %v8692 = vadd.f32 %v8620, %v8682
  %v8693 = vadd.f32 %v8621, %v8682
  %v8694 = vadd.f32 %v8622, %v8682
  %v8695 = vadd.f32 %v8623, %v8682
  %v8696 = vadd.f32 %v8624, %v8682
  %v8697 = vadd.f32 %v8625, %v8682
  %v8698 = vadd.f32 %v8626, %v8682
  %v8699 = vadd.f32 %v8627, %v8682
  %v8700 = vadd.f32 %v8628, %v8682
  %v8701 = vadd.f32 %v8629, %v8682
  %v8702 = vadd.f32 %v8630, %v8682
  %v8703 = vadd.f32 %v8631, %v8682
  %v8704 = vadd.f32 %v8632, %v8682
  %v8705 = vadd.f32 %v8633, %v8682
  %v8706 = vadd.f32 %v8634, %v8682
  %v8707 = vadd.f32 %v8635, %v8682
  %v8708 = vadd.f32 %v8636, %v8682
  %v8709 = vadd.f32 %v8637, %v8682
  %v8710 = vadd.f32 %v8638, %v8682
  %v8711 = vadd.f32 %v8639, %v8682
  %v8712 = vadd.f32 %v8640, %v8682
  %v8713 = vadd.f32 %v8641, %v8682
  %v8714 = vadd.f32 %v8642, %v8682
  %v8715 = vadd.f32 %v8643, %v8682
  %v8716 = vadd.f32 %v8644, %v8682
  %v8717 = vadd.f32 %v8645, %v8682
  %v8718 = vadd.f32 %v8646, %v8682
  %v8719 = vadd.f32 %v8647, %v8682
  %v8720 = vadd.f32 %v8648, %v8682
  %v8721 = vadd.f32 %v8649, %v8682
  %v8722 = vadd.f32 %v8650, %v8682
  %v8723 = vadd.f32 %v8651, %v8682
  %v8724 = vadd.f32 %v8652, %v8682
  %v8725 = vadd.f32 %v8653, %v8682
  %v8726 = vadd.f32 %v8654, %v8682
  %v8727 = vadd.f32 %v8655, %v8682
  %v8728 = vadd.f32 %v8656, %v8682
  %v8729 = vadd.f32 %v8657, %v8682
  %v8730 = vadd.f32 %v8658, %v8682
  %v8731 = vadd.f32 %v8659, %v8682
  %v8732 = vadd.f32 %v8660, %v8682
  %v8733 = vadd.f32 %v8661, %v8682
  %v8734 = vadd.f32 %v8662, %v8682
  %v8735 = vadd.f32 %v8663, %v8682
  %v8736 = vadd.f32 %v8664, %v8682
  %v8737 = vadd.f32 %v8665, %v8682
  %v8738 = vadd.f32 %v8666, %v8682
  %v8739 = vadd.f32 %v8667, %v8682
  %v8740 = vadd.f32 %v8668, %v8682
  %v8741 = vadd.f32 %v8669, %v8682
  %v8742 = vadd.f32 %v8670, %v8682
  %v8743 = vadd.f32 %v8671, %v8682
  %v8744 = vadd.f32 %v8672, %v8682
  %v8745 = vadd.f32 %v8673, %v8682
  %v8746 = vadd.f32 %v8674, %v8682
  %v8747 = vadd.f32 %v8675, %v8682
  %v8748 = vadd.f32 %v8676, %v8682
  %v8749 = vld [vmem:[%s6] sm:$0x1]
  %v8750 = vld [vmem:[%s7] sm:$0x1]
  %v8816 = vrot.slane %v8684, 7
  %v8817 = vrot.slane %v8685, 7
  %v8818 = vsel %vm3068, %v8816, %v8817
  %v8819 = vrot.slane %v8686, 7
  %v8820 = vsel %vm3068, %v8817, %v8819
  %v8821 = vrot.slane %v8687, 7
  %v8822 = vsel %vm3068, %v8819, %v8821
  %v8823 = vrot.slane %v8688, 7
  %v8824 = vsel %vm3068, %v8821, %v8823
  %v8825 = vrot.slane %v8689, 7
  %v8826 = vsel %vm3068, %v8823, %v8825
  %v8827 = vrot.slane %v8690, 7
  %v8828 = vsel %vm3068, %v8825, %v8827
  %v8829 = vrot.slane %v8691, 7
  %v8830 = vsel %vm3068, %v8827, %v8829
  %v8831 = vrot.slane %v8692, 7
  %v8832 = vsel %vm3068, %v8829, %v8831
  %v8833 = vrot.slane %v8693, 7
  %v8834 = vsel %vm3068, %v8831, %v8833
  %v8835 = vrot.slane %v8694, 7
  %v8836 = vsel %vm3068, %v8833, %v8835
  %v8837 = vrot.slane %v8695, 7
  %v8838 = vsel %vm3068, %v8835, %v8837
  %v8839 = vrot.slane %v8696, 7
  %v8840 = vsel %vm3068, %v8837, %v8839
  %v8841 = vrot.slane %v8697, 7
  %v8842 = vsel %vm3068, %v8839, %v8841
  %v8843 = vrot.slane %v8698, 7
  %v8844 = vsel %vm3068, %v8841, %v8843
  %v8845 = vrot.slane %v8699, 7
  %v8846 = vsel %vm3068, %v8843, %v8845
  %v8847 = vrot.slane %v8700, 7
  %v8848 = vsel %vm3068, %v8845, %v8847
  %v8849 = vrot.slane %v8701, 7
  %v8850 = vsel %vm3068, %v8847, %v8849
  %v8851 = vrot.slane %v8702, 7
  %v8852 = vsel %vm3068, %v8849, %v8851
  %v8853 = vrot.slane %v8703, 7
  %v8854 = vsel %vm3068, %v8851, %v8853
  %v8855 = vrot.slane %v8704, 7
  %v8856 = vsel %vm3068, %v8853, %v8855
  %v8857 = vrot.slane %v8705, 7
  %v8858 = vsel %vm3068, %v8855, %v8857
  %v8859 = vrot.slane %v8706, 7
  %v8860 = vsel %vm3068, %v8857, %v8859
  %v8861 = vrot.slane %v8707, 7
  %v8862 = vsel %vm3068, %v8859, %v8861
  %v8863 = vrot.slane %v8708, 7
  %v8864 = vsel %vm3068, %v8861, %v8863
  %v8865 = vrot.slane %v8709, 7
  %v8866 = vsel %vm3068, %v8863, %v8865
  %v8867 = vrot.slane %v8710, 7
  %v8868 = vsel %vm3068, %v8865, %v8867
  %v8869 = vrot.slane %v8711, 7
  %v8870 = vsel %vm3068, %v8867, %v8869
  %v8871 = vrot.slane %v8712, 7
  %v8872 = vsel %vm3068, %v8869, %v8871
  %v8873 = vrot.slane %v8713, 7
  %v8874 = vsel %vm3068, %v8871, %v8873
  %v8875 = vrot.slane %v8714, 7
  %v8876 = vsel %vm3068, %v8873, %v8875
  %v8877 = vrot.slane %v8715, 7
  %v8878 = vsel %vm3068, %v8875, %v8877
  %v8879 = vrot.slane %v8716, 7
  %v8880 = vsel %vm3068, %v8877, %v8879
  %v8881 = vrot.slane %v8717, 7
  %v8882 = vsel %vm3068, %v8879, %v8881
  %v8883 = vrot.slane %v8718, 7
  %v8884 = vsel %vm3068, %v8881, %v8883
  %v8885 = vrot.slane %v8719, 7
  %v8886 = vsel %vm3068, %v8883, %v8885
  %v8887 = vrot.slane %v8720, 7
  %v8888 = vsel %vm3068, %v8885, %v8887
  %v8889 = vrot.slane %v8721, 7
  %v8890 = vsel %vm3068, %v8887, %v8889
  %v8891 = vrot.slane %v8722, 7
  %v8892 = vsel %vm3068, %v8889, %v8891
  %v8893 = vrot.slane %v8723, 7
  %v8894 = vsel %vm3068, %v8891, %v8893
  %v8895 = vrot.slane %v8724, 7
  %v8896 = vsel %vm3068, %v8893, %v8895
  %v8897 = vrot.slane %v8725, 7
  %v8898 = vsel %vm3068, %v8895, %v8897
  %v8899 = vrot.slane %v8726, 7
  %v8900 = vsel %vm3068, %v8897, %v8899
  %v8901 = vrot.slane %v8727, 7
  %v8902 = vsel %vm3068, %v8899, %v8901
  %v8903 = vrot.slane %v8728, 7
  %v8904 = vsel %vm3068, %v8901, %v8903
  %v8905 = vrot.slane %v8729, 7
  %v8906 = vsel %vm3068, %v8903, %v8905
  %v8907 = vrot.slane %v8730, 7
  %v8908 = vsel %vm3068, %v8905, %v8907
  %v8909 = vrot.slane %v8731, 7
  %v8910 = vsel %vm3068, %v8907, %v8909
  %v8911 = vrot.slane %v8732, 7
  %v8912 = vsel %vm3068, %v8909, %v8911
  %v8913 = vrot.slane %v8733, 7
  %v8914 = vsel %vm3068, %v8911, %v8913
  %v8915 = vrot.slane %v8734, 7
  %v8916 = vsel %vm3068, %v8913, %v8915
  %v8917 = vrot.slane %v8735, 7
  %v8918 = vsel %vm3068, %v8915, %v8917
  %v8919 = vrot.slane %v8736, 7
  %v8920 = vsel %vm3068, %v8917, %v8919
  %v8921 = vrot.slane %v8737, 7
  %v8922 = vsel %vm3068, %v8919, %v8921
  %v8923 = vrot.slane %v8738, 7
  %v8924 = vsel %vm3068, %v8921, %v8923
  %v8925 = vrot.slane %v8739, 7
  %v8926 = vsel %vm3068, %v8923, %v8925
  %v8927 = vrot.slane %v8740, 7
  %v8928 = vsel %vm3068, %v8925, %v8927
  %v8929 = vrot.slane %v8741, 7
  %v8930 = vsel %vm3068, %v8927, %v8929
  %v8931 = vrot.slane %v8742, 7
  %v8932 = vsel %vm3068, %v8929, %v8931
  %v8933 = vrot.slane %v8743, 7
  %v8934 = vsel %vm3068, %v8931, %v8933
  %v8935 = vrot.slane %v8744, 7
  %v8936 = vsel %vm3068, %v8933, %v8935
  %v8937 = vrot.slane %v8745, 7
  %v8938 = vsel %vm3068, %v8935, %v8937
  %v8939 = vrot.slane %v8746, 7
  %v8940 = vsel %vm3068, %v8937, %v8939
  %v8941 = vrot.slane %v8747, 7
  %v8942 = vsel %vm3068, %v8939, %v8941
  %v8943 = vrot.slane %v8748, 7
  %v8944 = vsel %vm3068, %v8941, %v8943
  %v9009 = vsel %vm974, %v8818, 0.0
  %v9010 = vsel %vm974, %v8820, 0.0
  %v9011 = vadd.f32 %v9009, %v9010
  %v9012 = vsel %vm974, %v8822, 0.0
  %v9013 = vadd.f32 %v9011, %v9012
  %v9014 = vsel %vm974, %v8824, 0.0
  %v9015 = vadd.f32 %v9013, %v9014
  %v9016 = vsel %vm974, %v8826, 0.0
  %v9017 = vadd.f32 %v9015, %v9016
  %v9018 = vsel %vm974, %v8828, 0.0
  %v9019 = vadd.f32 %v9017, %v9018
  %v9020 = vsel %vm974, %v8830, 0.0
  %v9021 = vadd.f32 %v9019, %v9020
  %v9022 = vsel %vm974, %v8832, 0.0
  %v9023 = vadd.f32 %v9021, %v9022
  %v9024 = vsel %vm974, %v8834, 0.0
  %v9025 = vadd.f32 %v9023, %v9024
  %v9026 = vsel %vm974, %v8836, 0.0
  %v9027 = vadd.f32 %v9025, %v9026
  %v9028 = vsel %vm974, %v8838, 0.0
  %v9029 = vadd.f32 %v9027, %v9028
  %v9030 = vsel %vm974, %v8840, 0.0
  %v9031 = vadd.f32 %v9029, %v9030
  %v9032 = vsel %vm974, %v8842, 0.0
  %v9033 = vadd.f32 %v9031, %v9032
  %v9034 = vsel %vm974, %v8844, 0.0
  %v9035 = vadd.f32 %v9033, %v9034
  %v9036 = vsel %vm974, %v8846, 0.0
  %v9037 = vadd.f32 %v9035, %v9036
  %v9038 = vsel %vm974, %v8848, 0.0
  %v9039 = vadd.f32 %v9037, %v9038
  %v9040 = vsel %vm974, %v8850, 0.0
  %v9041 = vadd.f32 %v9039, %v9040
  %v9042 = vsel %vm974, %v8852, 0.0
  %v9043 = vadd.f32 %v9041, %v9042
  %v9044 = vsel %vm974, %v8854, 0.0
  %v9045 = vadd.f32 %v9043, %v9044
  %v9046 = vsel %vm974, %v8856, 0.0
  %v9047 = vadd.f32 %v9045, %v9046
  %v9048 = vsel %vm974, %v8858, 0.0
  %v9049 = vadd.f32 %v9047, %v9048
  %v9050 = vsel %vm974, %v8860, 0.0
  %v9051 = vadd.f32 %v9049, %v9050
  %v9052 = vsel %vm974, %v8862, 0.0
  %v9053 = vadd.f32 %v9051, %v9052
  %v9054 = vsel %vm974, %v8864, 0.0
  %v9055 = vadd.f32 %v9053, %v9054
  %v9056 = vsel %vm974, %v8866, 0.0
  %v9057 = vadd.f32 %v9055, %v9056
  %v9058 = vsel %vm974, %v8868, 0.0
  %v9059 = vadd.f32 %v9057, %v9058
  %v9060 = vsel %vm974, %v8870, 0.0
  %v9061 = vadd.f32 %v9059, %v9060
  %v9062 = vsel %vm974, %v8872, 0.0
  %v9063 = vadd.f32 %v9061, %v9062
  %v9064 = vsel %vm974, %v8874, 0.0
  %v9065 = vadd.f32 %v9063, %v9064
  %v9066 = vsel %vm974, %v8876, 0.0
  %v9067 = vadd.f32 %v9065, %v9066
  %v9068 = vsel %vm974, %v8878, 0.0
  %v9069 = vadd.f32 %v9067, %v9068
  %v9070 = vsel %vm974, %v8880, 0.0
  %v9071 = vadd.f32 %v9069, %v9070
  %v9072 = vsel %vm974, %v8882, 0.0
  %v9073 = vadd.f32 %v9071, %v9072
  %v9074 = vsel %vm974, %v8884, 0.0
  %v9075 = vadd.f32 %v9073, %v9074
  %v9076 = vsel %vm974, %v8886, 0.0
  %v9077 = vadd.f32 %v9075, %v9076
  %v9078 = vsel %vm974, %v8888, 0.0
  %v9079 = vadd.f32 %v9077, %v9078
  %v9080 = vsel %vm974, %v8890, 0.0
  %v9081 = vadd.f32 %v9079, %v9080
  %v9082 = vsel %vm974, %v8892, 0.0
  %v9083 = vadd.f32 %v9081, %v9082
  %v9084 = vsel %vm974, %v8894, 0.0
  %v9085 = vadd.f32 %v9083, %v9084
  %v9086 = vsel %vm974, %v8896, 0.0
  %v9087 = vadd.f32 %v9085, %v9086
  %v9088 = vsel %vm974, %v8898, 0.0
  %v9089 = vadd.f32 %v9087, %v9088
  %v9090 = vsel %vm974, %v8900, 0.0
  %v9091 = vadd.f32 %v9089, %v9090
  %v9092 = vsel %vm974, %v8902, 0.0
  %v9093 = vadd.f32 %v9091, %v9092
  %v9094 = vsel %vm974, %v8904, 0.0
  %v9095 = vadd.f32 %v9093, %v9094
  %v9096 = vsel %vm974, %v8906, 0.0
  %v9097 = vadd.f32 %v9095, %v9096
  %v9098 = vsel %vm974, %v8908, 0.0
  %v9099 = vadd.f32 %v9097, %v9098
  %v9100 = vsel %vm974, %v8910, 0.0
  %v9101 = vadd.f32 %v9099, %v9100
  %v9102 = vsel %vm974, %v8912, 0.0
  %v9103 = vadd.f32 %v9101, %v9102
  %v9104 = vsel %vm974, %v8914, 0.0
  %v9105 = vadd.f32 %v9103, %v9104
  %v9106 = vsel %vm974, %v8916, 0.0
  %v9107 = vadd.f32 %v9105, %v9106
  %v9108 = vsel %vm974, %v8918, 0.0
  %v9109 = vadd.f32 %v9107, %v9108
  %v9110 = vsel %vm974, %v8920, 0.0
  %v9111 = vadd.f32 %v9109, %v9110
  %v9112 = vsel %vm974, %v8922, 0.0
  %v9113 = vadd.f32 %v9111, %v9112
  %v9114 = vsel %vm974, %v8924, 0.0
  %v9115 = vadd.f32 %v9113, %v9114
  %v9116 = vsel %vm974, %v8926, 0.0
  %v9117 = vadd.f32 %v9115, %v9116
  %v9118 = vsel %vm974, %v8928, 0.0
  %v9119 = vadd.f32 %v9117, %v9118
  %v9120 = vsel %vm974, %v8930, 0.0
  %v9121 = vadd.f32 %v9119, %v9120
  %v9122 = vsel %vm974, %v8932, 0.0
  %v9123 = vadd.f32 %v9121, %v9122
  %v9124 = vsel %vm974, %v8934, 0.0
  %v9125 = vadd.f32 %v9123, %v9124
  %v9126 = vsel %vm974, %v8936, 0.0
  %v9127 = vadd.f32 %v9125, %v9126
  %v9128 = vsel %vm974, %v8938, 0.0
  %v9129 = vadd.f32 %v9127, %v9128
  %v9130 = vsel %vm974, %v8940, 0.0
  %v9131 = vadd.f32 %v9129, %v9130
  %v9132 = vsel %vm974, %v8942, 0.0
  %v9133 = vadd.f32 %v9131, %v9132
  %v9134 = vsel %vm974, %v8944, 0.0
  %v9135 = vadd.f32 %v9133, %v9134
  %v9136 = vrot.slane %v9135, 4
  %v9137 = vadd.f32 %v9135, %v9136
  %v9138 = vrot.slane %v9137, 2
  %v9139 = vadd.f32 %v9137, %v9138
  %v9140 = vrot.slane %v9139, 1
  %v9141 = vadd.f32 %v9139, %v9140
  %v9142 = vrcp.pop 512.0
  %v9143 = vmul.f32 %v9141, %v9142
  %v9144 = vsub.f32 %v8684, %v9143
  %v9145 = vsub.f32 %v8685, %v9143
  %v9146 = vsub.f32 %v8686, %v9143
  %v9147 = vsub.f32 %v8687, %v9143
  %v9148 = vsub.f32 %v8688, %v9143
  %v9149 = vsub.f32 %v8689, %v9143
  %v9150 = vsub.f32 %v8690, %v9143
  %v9151 = vsub.f32 %v8691, %v9143
  %v9152 = vsub.f32 %v8692, %v9143
  %v9153 = vsub.f32 %v8693, %v9143
  %v9154 = vsub.f32 %v8694, %v9143
  %v9155 = vsub.f32 %v8695, %v9143
  %v9156 = vsub.f32 %v8696, %v9143
  %v9157 = vsub.f32 %v8697, %v9143
  %v9158 = vsub.f32 %v8698, %v9143
  %v9159 = vsub.f32 %v8699, %v9143
  %v9160 = vsub.f32 %v8700, %v9143
  %v9161 = vsub.f32 %v8701, %v9143
  %v9162 = vsub.f32 %v8702, %v9143
  %v9163 = vsub.f32 %v8703, %v9143
  %v9164 = vsub.f32 %v8704, %v9143
  %v9165 = vsub.f32 %v8705, %v9143
  %v9166 = vsub.f32 %v8706, %v9143
  %v9167 = vsub.f32 %v8707, %v9143
  %v9168 = vsub.f32 %v8708, %v9143
  %v9169 = vsub.f32 %v8709, %v9143
  %v9170 = vsub.f32 %v8710, %v9143
  %v9171 = vsub.f32 %v8711, %v9143
  %v9172 = vsub.f32 %v8712, %v9143
  %v9173 = vsub.f32 %v8713, %v9143
  %v9174 = vsub.f32 %v8714, %v9143
  %v9175 = vsub.f32 %v8715, %v9143
  %v9176 = vsub.f32 %v8716, %v9143
  %v9177 = vsub.f32 %v8717, %v9143
  %v9178 = vsub.f32 %v8718, %v9143
  %v9179 = vsub.f32 %v8719, %v9143
  %v9180 = vsub.f32 %v8720, %v9143
  %v9181 = vsub.f32 %v8721, %v9143
  %v9182 = vsub.f32 %v8722, %v9143
  %v9183 = vsub.f32 %v8723, %v9143
  %v9184 = vsub.f32 %v8724, %v9143
  %v9185 = vsub.f32 %v8725, %v9143
  %v9186 = vsub.f32 %v8726, %v9143
  %v9187 = vsub.f32 %v8727, %v9143
  %v9188 = vsub.f32 %v8728, %v9143
  %v9189 = vsub.f32 %v8729, %v9143
  %v9190 = vsub.f32 %v8730, %v9143
  %v9191 = vsub.f32 %v8731, %v9143
  %v9192 = vsub.f32 %v8732, %v9143
  %v9193 = vsub.f32 %v8733, %v9143
  %v9194 = vsub.f32 %v8734, %v9143
  %v9195 = vsub.f32 %v8735, %v9143
  %v9196 = vsub.f32 %v8736, %v9143
  %v9197 = vsub.f32 %v8737, %v9143
  %v9198 = vsub.f32 %v8738, %v9143
  %v9199 = vsub.f32 %v8739, %v9143
  %v9200 = vsub.f32 %v8740, %v9143
  %v9201 = vsub.f32 %v8741, %v9143
  %v9202 = vsub.f32 %v8742, %v9143
  %v9203 = vsub.f32 %v8743, %v9143
  %v9204 = vsub.f32 %v8744, %v9143
  %v9205 = vsub.f32 %v8745, %v9143
  %v9206 = vsub.f32 %v8746, %v9143
  %v9207 = vsub.f32 %v8747, %v9143
  %v9208 = vsub.f32 %v8748, %v9143
  %v9209 = vmul.f32 %v9144, %v9144
  %v9210 = vmul.f32 %v9145, %v9145
  %v9211 = vmul.f32 %v9146, %v9146
  %v9212 = vmul.f32 %v9147, %v9147
  %v9213 = vmul.f32 %v9148, %v9148
  %v9214 = vmul.f32 %v9149, %v9149
  %v9215 = vmul.f32 %v9150, %v9150
  %v9216 = vmul.f32 %v9151, %v9151
  %v9217 = vmul.f32 %v9152, %v9152
  %v9218 = vmul.f32 %v9153, %v9153
  %v9219 = vmul.f32 %v9154, %v9154
  %v9220 = vmul.f32 %v9155, %v9155
  %v9221 = vmul.f32 %v9156, %v9156
  %v9222 = vmul.f32 %v9157, %v9157
  %v9223 = vmul.f32 %v9158, %v9158
  %v9224 = vmul.f32 %v9159, %v9159
  %v9225 = vmul.f32 %v9160, %v9160
  %v9226 = vmul.f32 %v9161, %v9161
  %v9227 = vmul.f32 %v9162, %v9162
  %v9228 = vmul.f32 %v9163, %v9163
  %v9229 = vmul.f32 %v9164, %v9164
  %v9230 = vmul.f32 %v9165, %v9165
  %v9231 = vmul.f32 %v9166, %v9166
  %v9232 = vmul.f32 %v9167, %v9167
  %v9233 = vmul.f32 %v9168, %v9168
  %v9234 = vmul.f32 %v9169, %v9169
  %v9235 = vmul.f32 %v9170, %v9170
  %v9236 = vmul.f32 %v9171, %v9171
  %v9237 = vmul.f32 %v9172, %v9172
  %v9238 = vmul.f32 %v9173, %v9173
  %v9239 = vmul.f32 %v9174, %v9174
  %v9240 = vmul.f32 %v9175, %v9175
  %v9241 = vmul.f32 %v9176, %v9176
  %v9242 = vmul.f32 %v9177, %v9177
  %v9243 = vmul.f32 %v9178, %v9178
  %v9244 = vmul.f32 %v9179, %v9179
  %v9245 = vmul.f32 %v9180, %v9180
  %v9246 = vmul.f32 %v9181, %v9181
  %v9247 = vmul.f32 %v9182, %v9182
  %v9248 = vmul.f32 %v9183, %v9183
  %v9249 = vmul.f32 %v9184, %v9184
  %v9250 = vmul.f32 %v9185, %v9185
  %v9251 = vmul.f32 %v9186, %v9186
  %v9252 = vmul.f32 %v9187, %v9187
  %v9253 = vmul.f32 %v9188, %v9188
  %v9254 = vmul.f32 %v9189, %v9189
  %v9255 = vmul.f32 %v9190, %v9190
  %v9256 = vmul.f32 %v9191, %v9191
  %v9257 = vmul.f32 %v9192, %v9192
  %v9258 = vmul.f32 %v9193, %v9193
  %v9259 = vmul.f32 %v9194, %v9194
  %v9260 = vmul.f32 %v9195, %v9195
  %v9261 = vmul.f32 %v9196, %v9196
  %v9262 = vmul.f32 %v9197, %v9197
  %v9263 = vmul.f32 %v9198, %v9198
  %v9264 = vmul.f32 %v9199, %v9199
  %v9265 = vmul.f32 %v9200, %v9200
  %v9266 = vmul.f32 %v9201, %v9201
  %v9267 = vmul.f32 %v9202, %v9202
  %v9268 = vmul.f32 %v9203, %v9203
  %v9269 = vmul.f32 %v9204, %v9204
  %v9270 = vmul.f32 %v9205, %v9205
  %v9271 = vmul.f32 %v9206, %v9206
  %v9272 = vmul.f32 %v9207, %v9207
  %v9273 = vmul.f32 %v9208, %v9208
  %v9339 = vrot.slane %v9209, 7
  %v9340 = vrot.slane %v9210, 7
  %v9341 = vsel %vm3068, %v9339, %v9340
  %v9342 = vrot.slane %v9211, 7
  %v9343 = vsel %vm3068, %v9340, %v9342
  %v9344 = vrot.slane %v9212, 7
  %v9345 = vsel %vm3068, %v9342, %v9344
  %v9346 = vrot.slane %v9213, 7
  %v9347 = vsel %vm3068, %v9344, %v9346
  %v9348 = vrot.slane %v9214, 7
  %v9349 = vsel %vm3068, %v9346, %v9348
  %v9350 = vrot.slane %v9215, 7
  %v9351 = vsel %vm3068, %v9348, %v9350
  %v9352 = vrot.slane %v9216, 7
  %v9353 = vsel %vm3068, %v9350, %v9352
  %v9354 = vrot.slane %v9217, 7
  %v9355 = vsel %vm3068, %v9352, %v9354
  %v9356 = vrot.slane %v9218, 7
  %v9357 = vsel %vm3068, %v9354, %v9356
  %v9358 = vrot.slane %v9219, 7
  %v9359 = vsel %vm3068, %v9356, %v9358
  %v9360 = vrot.slane %v9220, 7
  %v9361 = vsel %vm3068, %v9358, %v9360
  %v9362 = vrot.slane %v9221, 7
  %v9363 = vsel %vm3068, %v9360, %v9362
  %v9364 = vrot.slane %v9222, 7
  %v9365 = vsel %vm3068, %v9362, %v9364
  %v9366 = vrot.slane %v9223, 7
  %v9367 = vsel %vm3068, %v9364, %v9366
  %v9368 = vrot.slane %v9224, 7
  %v9369 = vsel %vm3068, %v9366, %v9368
  %v9370 = vrot.slane %v9225, 7
  %v9371 = vsel %vm3068, %v9368, %v9370
  %v9372 = vrot.slane %v9226, 7
  %v9373 = vsel %vm3068, %v9370, %v9372
  %v9374 = vrot.slane %v9227, 7
  %v9375 = vsel %vm3068, %v9372, %v9374
  %v9376 = vrot.slane %v9228, 7
  %v9377 = vsel %vm3068, %v9374, %v9376
  %v9378 = vrot.slane %v9229, 7
  %v9379 = vsel %vm3068, %v9376, %v9378
  %v9380 = vrot.slane %v9230, 7
  %v9381 = vsel %vm3068, %v9378, %v9380
  %v9382 = vrot.slane %v9231, 7
  %v9383 = vsel %vm3068, %v9380, %v9382
  %v9384 = vrot.slane %v9232, 7
  %v9385 = vsel %vm3068, %v9382, %v9384
  %v9386 = vrot.slane %v9233, 7
  %v9387 = vsel %vm3068, %v9384, %v9386
  %v9388 = vrot.slane %v9234, 7
  %v9389 = vsel %vm3068, %v9386, %v9388
  %v9390 = vrot.slane %v9235, 7
  %v9391 = vsel %vm3068, %v9388, %v9390
  %v9392 = vrot.slane %v9236, 7
  %v9393 = vsel %vm3068, %v9390, %v9392
  %v9394 = vrot.slane %v9237, 7
  %v9395 = vsel %vm3068, %v9392, %v9394
  %v9396 = vrot.slane %v9238, 7
  %v9397 = vsel %vm3068, %v9394, %v9396
  %v9398 = vrot.slane %v9239, 7
  %v9399 = vsel %vm3068, %v9396, %v9398
  %v9400 = vrot.slane %v9240, 7
  %v9401 = vsel %vm3068, %v9398, %v9400
  %v9402 = vrot.slane %v9241, 7
  %v9403 = vsel %vm3068, %v9400, %v9402
  %v9404 = vrot.slane %v9242, 7
  %v9405 = vsel %vm3068, %v9402, %v9404
  %v9406 = vrot.slane %v9243, 7
  %v9407 = vsel %vm3068, %v9404, %v9406
  %v9408 = vrot.slane %v9244, 7
  %v9409 = vsel %vm3068, %v9406, %v9408
  %v9410 = vrot.slane %v9245, 7
  %v9411 = vsel %vm3068, %v9408, %v9410
  %v9412 = vrot.slane %v9246, 7
  %v9413 = vsel %vm3068, %v9410, %v9412
  %v9414 = vrot.slane %v9247, 7
  %v9415 = vsel %vm3068, %v9412, %v9414
  %v9416 = vrot.slane %v9248, 7
  %v9417 = vsel %vm3068, %v9414, %v9416
  %v9418 = vrot.slane %v9249, 7
  %v9419 = vsel %vm3068, %v9416, %v9418
  %v9420 = vrot.slane %v9250, 7
  %v9421 = vsel %vm3068, %v9418, %v9420
  %v9422 = vrot.slane %v9251, 7
  %v9423 = vsel %vm3068, %v9420, %v9422
  %v9424 = vrot.slane %v9252, 7
  %v9425 = vsel %vm3068, %v9422, %v9424
  %v9426 = vrot.slane %v9253, 7
  %v9427 = vsel %vm3068, %v9424, %v9426
  %v9428 = vrot.slane %v9254, 7
  %v9429 = vsel %vm3068, %v9426, %v9428
  %v9430 = vrot.slane %v9255, 7
  %v9431 = vsel %vm3068, %v9428, %v9430
  %v9432 = vrot.slane %v9256, 7
  %v9433 = vsel %vm3068, %v9430, %v9432
  %v9434 = vrot.slane %v9257, 7
  %v9435 = vsel %vm3068, %v9432, %v9434
  %v9436 = vrot.slane %v9258, 7
  %v9437 = vsel %vm3068, %v9434, %v9436
  %v9438 = vrot.slane %v9259, 7
  %v9439 = vsel %vm3068, %v9436, %v9438
  %v9440 = vrot.slane %v9260, 7
  %v9441 = vsel %vm3068, %v9438, %v9440
  %v9442 = vrot.slane %v9261, 7
  %v9443 = vsel %vm3068, %v9440, %v9442
  %v9444 = vrot.slane %v9262, 7
  %v9445 = vsel %vm3068, %v9442, %v9444
  %v9446 = vrot.slane %v9263, 7
  %v9447 = vsel %vm3068, %v9444, %v9446
  %v9448 = vrot.slane %v9264, 7
  %v9449 = vsel %vm3068, %v9446, %v9448
  %v9450 = vrot.slane %v9265, 7
  %v9451 = vsel %vm3068, %v9448, %v9450
  %v9452 = vrot.slane %v9266, 7
  %v9453 = vsel %vm3068, %v9450, %v9452
  %v9454 = vrot.slane %v9267, 7
  %v9455 = vsel %vm3068, %v9452, %v9454
  %v9456 = vrot.slane %v9268, 7
  %v9457 = vsel %vm3068, %v9454, %v9456
  %v9458 = vrot.slane %v9269, 7
  %v9459 = vsel %vm3068, %v9456, %v9458
  %v9460 = vrot.slane %v9270, 7
  %v9461 = vsel %vm3068, %v9458, %v9460
  %v9462 = vrot.slane %v9271, 7
  %v9463 = vsel %vm3068, %v9460, %v9462
  %v9464 = vrot.slane %v9272, 7
  %v9465 = vsel %vm3068, %v9462, %v9464
  %v9466 = vrot.slane %v9273, 7
  %v9467 = vsel %vm3068, %v9464, %v9466
  %v9532 = vsel %vm974, %v9341, 0.0
  %v9533 = vsel %vm974, %v9343, 0.0
  %v9534 = vadd.f32 %v9532, %v9533
  %v9535 = vsel %vm974, %v9345, 0.0
  %v9536 = vadd.f32 %v9534, %v9535
  %v9537 = vsel %vm974, %v9347, 0.0
  %v9538 = vadd.f32 %v9536, %v9537
  %v9539 = vsel %vm974, %v9349, 0.0
  %v9540 = vadd.f32 %v9538, %v9539
  %v9541 = vsel %vm974, %v9351, 0.0
  %v9542 = vadd.f32 %v9540, %v9541
  %v9543 = vsel %vm974, %v9353, 0.0
  %v9544 = vadd.f32 %v9542, %v9543
  %v9545 = vsel %vm974, %v9355, 0.0
  %v9546 = vadd.f32 %v9544, %v9545
  %v9547 = vsel %vm974, %v9357, 0.0
  %v9548 = vadd.f32 %v9546, %v9547
  %v9549 = vsel %vm974, %v9359, 0.0
  %v9550 = vadd.f32 %v9548, %v9549
  %v9551 = vsel %vm974, %v9361, 0.0
  %v9552 = vadd.f32 %v9550, %v9551
  %v9553 = vsel %vm974, %v9363, 0.0
  %v9554 = vadd.f32 %v9552, %v9553
  %v9555 = vsel %vm974, %v9365, 0.0
  %v9556 = vadd.f32 %v9554, %v9555
  %v9557 = vsel %vm974, %v9367, 0.0
  %v9558 = vadd.f32 %v9556, %v9557
  %v9559 = vsel %vm974, %v9369, 0.0
  %v9560 = vadd.f32 %v9558, %v9559
  %v9561 = vsel %vm974, %v9371, 0.0
  %v9562 = vadd.f32 %v9560, %v9561
  %v9563 = vsel %vm974, %v9373, 0.0
  %v9564 = vadd.f32 %v9562, %v9563
  %v9565 = vsel %vm974, %v9375, 0.0
  %v9566 = vadd.f32 %v9564, %v9565
  %v9567 = vsel %vm974, %v9377, 0.0
  %v9568 = vadd.f32 %v9566, %v9567
  %v9569 = vsel %vm974, %v9379, 0.0
  %v9570 = vadd.f32 %v9568, %v9569
  %v9571 = vsel %vm974, %v9381, 0.0
  %v9572 = vadd.f32 %v9570, %v9571
  %v9573 = vsel %vm974, %v9383, 0.0
  %v9574 = vadd.f32 %v9572, %v9573
  %v9575 = vsel %vm974, %v9385, 0.0
  %v9576 = vadd.f32 %v9574, %v9575
  %v9577 = vsel %vm974, %v9387, 0.0
  %v9578 = vadd.f32 %v9576, %v9577
  %v9579 = vsel %vm974, %v9389, 0.0
  %v9580 = vadd.f32 %v9578, %v9579
  %v9581 = vsel %vm974, %v9391, 0.0
  %v9582 = vadd.f32 %v9580, %v9581
  %v9583 = vsel %vm974, %v9393, 0.0
  %v9584 = vadd.f32 %v9582, %v9583
  %v9585 = vsel %vm974, %v9395, 0.0
  %v9586 = vadd.f32 %v9584, %v9585
  %v9587 = vsel %vm974, %v9397, 0.0
  %v9588 = vadd.f32 %v9586, %v9587
  %v9589 = vsel %vm974, %v9399, 0.0
  %v9590 = vadd.f32 %v9588, %v9589
  %v9591 = vsel %vm974, %v9401, 0.0
  %v9592 = vadd.f32 %v9590, %v9591
  %v9593 = vsel %vm974, %v9403, 0.0
  %v9594 = vadd.f32 %v9592, %v9593
  %v9595 = vsel %vm974, %v9405, 0.0
  %v9596 = vadd.f32 %v9594, %v9595
  %v9597 = vsel %vm974, %v9407, 0.0
  %v9598 = vadd.f32 %v9596, %v9597
  %v9599 = vsel %vm974, %v9409, 0.0
  %v9600 = vadd.f32 %v9598, %v9599
  %v9601 = vsel %vm974, %v9411, 0.0
  %v9602 = vadd.f32 %v9600, %v9601
  %v9603 = vsel %vm974, %v9413, 0.0
  %v9604 = vadd.f32 %v9602, %v9603
  %v9605 = vsel %vm974, %v9415, 0.0
  %v9606 = vadd.f32 %v9604, %v9605
  %v9607 = vsel %vm974, %v9417, 0.0
  %v9608 = vadd.f32 %v9606, %v9607
  %v9609 = vsel %vm974, %v9419, 0.0
  %v9610 = vadd.f32 %v9608, %v9609
  %v9611 = vsel %vm974, %v9421, 0.0
  %v9612 = vadd.f32 %v9610, %v9611
  %v9613 = vsel %vm974, %v9423, 0.0
  %v9614 = vadd.f32 %v9612, %v9613
  %v9615 = vsel %vm974, %v9425, 0.0
  %v9616 = vadd.f32 %v9614, %v9615
  %v9617 = vsel %vm974, %v9427, 0.0
  %v9618 = vadd.f32 %v9616, %v9617
  %v9619 = vsel %vm974, %v9429, 0.0
  %v9620 = vadd.f32 %v9618, %v9619
  %v9621 = vsel %vm974, %v9431, 0.0
  %v9622 = vadd.f32 %v9620, %v9621
  %v9623 = vsel %vm974, %v9433, 0.0
  %v9624 = vadd.f32 %v9622, %v9623
  %v9625 = vsel %vm974, %v9435, 0.0
  %v9626 = vadd.f32 %v9624, %v9625
  %v9627 = vsel %vm974, %v9437, 0.0
  %v9628 = vadd.f32 %v9626, %v9627
  %v9629 = vsel %vm974, %v9439, 0.0
  %v9630 = vadd.f32 %v9628, %v9629
  %v9631 = vsel %vm974, %v9441, 0.0
  %v9632 = vadd.f32 %v9630, %v9631
  %v9633 = vsel %vm974, %v9443, 0.0
  %v9634 = vadd.f32 %v9632, %v9633
  %v9635 = vsel %vm974, %v9445, 0.0
  %v9636 = vadd.f32 %v9634, %v9635
  %v9637 = vsel %vm974, %v9447, 0.0
  %v9638 = vadd.f32 %v9636, %v9637
  %v9639 = vsel %vm974, %v9449, 0.0
  %v9640 = vadd.f32 %v9638, %v9639
  %v9641 = vsel %vm974, %v9451, 0.0
  %v9642 = vadd.f32 %v9640, %v9641
  %v9643 = vsel %vm974, %v9453, 0.0
  %v9644 = vadd.f32 %v9642, %v9643
  %v9645 = vsel %vm974, %v9455, 0.0
  %v9646 = vadd.f32 %v9644, %v9645
  %v9647 = vsel %vm974, %v9457, 0.0
  %v9648 = vadd.f32 %v9646, %v9647
  %v9649 = vsel %vm974, %v9459, 0.0
  %v9650 = vadd.f32 %v9648, %v9649
  %v9651 = vsel %vm974, %v9461, 0.0
  %v9652 = vadd.f32 %v9650, %v9651
  %v9653 = vsel %vm974, %v9463, 0.0
  %v9654 = vadd.f32 %v9652, %v9653
  %v9655 = vsel %vm974, %v9465, 0.0
  %v9656 = vadd.f32 %v9654, %v9655
  %v9657 = vsel %vm974, %v9467, 0.0
  %v9658 = vadd.f32 %v9656, %v9657
  %v9659 = vrot.slane %v9658, 4
  %v9660 = vadd.f32 %v9658, %v9659
  %v9661 = vrot.slane %v9660, 2
  %v9662 = vadd.f32 %v9660, %v9661
  %v9663 = vrot.slane %v9662, 1
  %v9664 = vadd.f32 %v9662, %v9663
  %v9665 = vmul.f32 %v9664, %v9142
  %v9666 = vadd.f32 %v9665, 1e-05
  %v9667 = vrsqrt.pop %v9666
  %v9668 = vmul.f32 %v9144, %v9667
  %v9669 = vmul.f32 %v9145, %v9667
  %v9670 = vmul.f32 %v9146, %v9667
  %v9671 = vmul.f32 %v9147, %v9667
  %v9672 = vmul.f32 %v9148, %v9667
  %v9673 = vmul.f32 %v9149, %v9667
  %v9674 = vmul.f32 %v9150, %v9667
  %v9675 = vmul.f32 %v9151, %v9667
  %v9676 = vmul.f32 %v9152, %v9667
  %v9677 = vmul.f32 %v9153, %v9667
  %v9678 = vmul.f32 %v9154, %v9667
  %v9679 = vmul.f32 %v9155, %v9667
  %v9680 = vmul.f32 %v9156, %v9667
  %v9681 = vmul.f32 %v9157, %v9667
  %v9682 = vmul.f32 %v9158, %v9667
  %v9683 = vmul.f32 %v9159, %v9667
  %v9684 = vmul.f32 %v9160, %v9667
  %v9685 = vmul.f32 %v9161, %v9667
  %v9686 = vmul.f32 %v9162, %v9667
  %v9687 = vmul.f32 %v9163, %v9667
  %v9688 = vmul.f32 %v9164, %v9667
  %v9689 = vmul.f32 %v9165, %v9667
  %v9690 = vmul.f32 %v9166, %v9667
  %v9691 = vmul.f32 %v9167, %v9667
  %v9692 = vmul.f32 %v9168, %v9667
  %v9693 = vmul.f32 %v9169, %v9667
  %v9694 = vmul.f32 %v9170, %v9667
  %v9695 = vmul.f32 %v9171, %v9667
  %v9696 = vmul.f32 %v9172, %v9667
  %v9697 = vmul.f32 %v9173, %v9667
  %v9698 = vmul.f32 %v9174, %v9667
  %v9699 = vmul.f32 %v9175, %v9667
  %v9700 = vmul.f32 %v9176, %v9667
  %v9701 = vmul.f32 %v9177, %v9667
  %v9702 = vmul.f32 %v9178, %v9667
  %v9703 = vmul.f32 %v9179, %v9667
  %v9704 = vmul.f32 %v9180, %v9667
  %v9705 = vmul.f32 %v9181, %v9667
  %v9706 = vmul.f32 %v9182, %v9667
  %v9707 = vmul.f32 %v9183, %v9667
  %v9708 = vmul.f32 %v9184, %v9667
  %v9709 = vmul.f32 %v9185, %v9667
  %v9710 = vmul.f32 %v9186, %v9667
  %v9711 = vmul.f32 %v9187, %v9667
  %v9712 = vmul.f32 %v9188, %v9667
  %v9713 = vmul.f32 %v9189, %v9667
  %v9714 = vmul.f32 %v9190, %v9667
  %v9715 = vmul.f32 %v9191, %v9667
  %v9716 = vmul.f32 %v9192, %v9667
  %v9717 = vmul.f32 %v9193, %v9667
  %v9718 = vmul.f32 %v9194, %v9667
  %v9719 = vmul.f32 %v9195, %v9667
  %v9720 = vmul.f32 %v9196, %v9667
  %v9721 = vmul.f32 %v9197, %v9667
  %v9722 = vmul.f32 %v9198, %v9667
  %v9723 = vmul.f32 %v9199, %v9667
  %v9724 = vmul.f32 %v9200, %v9667
  %v9725 = vmul.f32 %v9201, %v9667
  %v9726 = vmul.f32 %v9202, %v9667
  %v9727 = vmul.f32 %v9203, %v9667
  %v9728 = vmul.f32 %v9204, %v9667
  %v9729 = vmul.f32 %v9205, %v9667
  %v9730 = vmul.f32 %v9206, %v9667
  %v9731 = vmul.f32 %v9207, %v9667
  %v9732 = vmul.f32 %v9208, %v9667
  %v9734 = vlaneseq
  %v9735 = vshrl.u32 %v9734, 7
  %v9736 = vsub.s32 0, %v9735
  %v9737 = vrot.slane %v8749, %v9736
  %v9739 = vmul.f32 %v9668, %v9737
  %v9740 = vmul.f32 %v9669, %v9737
  %v9741 = vmul.f32 %v9670, %v9737
  %v9742 = vmul.f32 %v9671, %v9737
  %v9743 = vmul.f32 %v9672, %v9737
  %v9744 = vmul.f32 %v9673, %v9737
  %v9745 = vmul.f32 %v9674, %v9737
  %v9746 = vmul.f32 %v9675, %v9737
  %v9747 = vmul.f32 %v9676, %v9737
  %v9748 = vmul.f32 %v9677, %v9737
  %v9749 = vmul.f32 %v9678, %v9737
  %v9750 = vmul.f32 %v9679, %v9737
  %v9751 = vmul.f32 %v9680, %v9737
  %v9752 = vmul.f32 %v9681, %v9737
  %v9753 = vmul.f32 %v9682, %v9737
  %v9754 = vmul.f32 %v9683, %v9737
  %v9755 = vmul.f32 %v9684, %v9737
  %v9756 = vmul.f32 %v9685, %v9737
  %v9757 = vmul.f32 %v9686, %v9737
  %v9758 = vmul.f32 %v9687, %v9737
  %v9759 = vmul.f32 %v9688, %v9737
  %v9760 = vmul.f32 %v9689, %v9737
  %v9761 = vmul.f32 %v9690, %v9737
  %v9762 = vmul.f32 %v9691, %v9737
  %v9763 = vmul.f32 %v9692, %v9737
  %v9764 = vmul.f32 %v9693, %v9737
  %v9765 = vmul.f32 %v9694, %v9737
  %v9766 = vmul.f32 %v9695, %v9737
  %v9767 = vmul.f32 %v9696, %v9737
  %v9768 = vmul.f32 %v9697, %v9737
  %v9769 = vmul.f32 %v9698, %v9737
  %v9770 = vmul.f32 %v9699, %v9737
  %v9771 = vmul.f32 %v9700, %v9737
  %v9772 = vmul.f32 %v9701, %v9737
  %v9773 = vmul.f32 %v9702, %v9737
  %v9774 = vmul.f32 %v9703, %v9737
  %v9775 = vmul.f32 %v9704, %v9737
  %v9776 = vmul.f32 %v9705, %v9737
  %v9777 = vmul.f32 %v9706, %v9737
  %v9778 = vmul.f32 %v9707, %v9737
  %v9779 = vmul.f32 %v9708, %v9737
  %v9780 = vmul.f32 %v9709, %v9737
  %v9781 = vmul.f32 %v9710, %v9737
  %v9782 = vmul.f32 %v9711, %v9737
  %v9783 = vmul.f32 %v9712, %v9737
  %v9784 = vmul.f32 %v9713, %v9737
  %v9785 = vmul.f32 %v9714, %v9737
  %v9786 = vmul.f32 %v9715, %v9737
  %v9787 = vmul.f32 %v9716, %v9737
  %v9788 = vmul.f32 %v9717, %v9737
  %v9789 = vmul.f32 %v9718, %v9737
  %v9790 = vmul.f32 %v9719, %v9737
  %v9791 = vmul.f32 %v9720, %v9737
  %v9792 = vmul.f32 %v9721, %v9737
  %v9793 = vmul.f32 %v9722, %v9737
  %v9794 = vmul.f32 %v9723, %v9737
  %v9795 = vmul.f32 %v9724, %v9737
  %v9796 = vmul.f32 %v9725, %v9737
  %v9797 = vmul.f32 %v9726, %v9737
  %v9798 = vmul.f32 %v9727, %v9737
  %v9799 = vmul.f32 %v9728, %v9737
  %v9800 = vmul.f32 %v9729, %v9737
  %v9801 = vmul.f32 %v9730, %v9737
  %v9802 = vmul.f32 %v9731, %v9737
  %v9803 = vmul.f32 %v9732, %v9737
  %v9805 = vlaneseq
  %v9806 = vshrl.u32 %v9805, 7
  %v9807 = vsub.s32 0, %v9806
  %v9808 = vrot.slane %v8750, %v9807
  %v9810 = vadd.f32 %v9739, %v9808
  %v9811 = vadd.f32 %v9740, %v9808
  %v9812 = vadd.f32 %v9741, %v9808
  %v9813 = vadd.f32 %v9742, %v9808
  %v9814 = vadd.f32 %v9743, %v9808
  %v9815 = vadd.f32 %v9744, %v9808
  %v9816 = vadd.f32 %v9745, %v9808
  %v9817 = vadd.f32 %v9746, %v9808
  %v9818 = vadd.f32 %v9747, %v9808
  %v9819 = vadd.f32 %v9748, %v9808
  %v9820 = vadd.f32 %v9749, %v9808
  %v9821 = vadd.f32 %v9750, %v9808
  %v9822 = vadd.f32 %v9751, %v9808
  %v9823 = vadd.f32 %v9752, %v9808
  %v9824 = vadd.f32 %v9753, %v9808
  %v9825 = vadd.f32 %v9754, %v9808
  %v9826 = vadd.f32 %v9755, %v9808
  %v9827 = vadd.f32 %v9756, %v9808
  %v9828 = vadd.f32 %v9757, %v9808
  %v9829 = vadd.f32 %v9758, %v9808
  %v9830 = vadd.f32 %v9759, %v9808
  %v9831 = vadd.f32 %v9760, %v9808
  %v9832 = vadd.f32 %v9761, %v9808
  %v9833 = vadd.f32 %v9762, %v9808
  %v9834 = vadd.f32 %v9763, %v9808
  %v9835 = vadd.f32 %v9764, %v9808
  %v9836 = vadd.f32 %v9765, %v9808
  %v9837 = vadd.f32 %v9766, %v9808
  %v9838 = vadd.f32 %v9767, %v9808
  %v9839 = vadd.f32 %v9768, %v9808
  %v9840 = vadd.f32 %v9769, %v9808
  %v9841 = vadd.f32 %v9770, %v9808
  %v9842 = vadd.f32 %v9771, %v9808
  %v9843 = vadd.f32 %v9772, %v9808
  %v9844 = vadd.f32 %v9773, %v9808
  %v9845 = vadd.f32 %v9774, %v9808
  %v9846 = vadd.f32 %v9775, %v9808
  %v9847 = vadd.f32 %v9776, %v9808
  %v9848 = vadd.f32 %v9777, %v9808
  %v9849 = vadd.f32 %v9778, %v9808
  %v9850 = vadd.f32 %v9779, %v9808
  %v9851 = vadd.f32 %v9780, %v9808
  %v9852 = vadd.f32 %v9781, %v9808
  %v9853 = vadd.f32 %v9782, %v9808
  %v9854 = vadd.f32 %v9783, %v9808
  %v9855 = vadd.f32 %v9784, %v9808
  %v9856 = vadd.f32 %v9785, %v9808
  %v9857 = vadd.f32 %v9786, %v9808
  %v9858 = vadd.f32 %v9787, %v9808
  %v9859 = vadd.f32 %v9788, %v9808
  %v9860 = vadd.f32 %v9789, %v9808
  %v9861 = vadd.f32 %v9790, %v9808
  %v9862 = vadd.f32 %v9791, %v9808
  %v9863 = vadd.f32 %v9792, %v9808
  %v9864 = vadd.f32 %v9793, %v9808
  %v9865 = vadd.f32 %v9794, %v9808
  %v9866 = vadd.f32 %v9795, %v9808
  %v9867 = vadd.f32 %v9796, %v9808
  %v9868 = vadd.f32 %v9797, %v9808
  %v9869 = vadd.f32 %v9798, %v9808
  %v9870 = vadd.f32 %v9799, %v9808
  %v9871 = vadd.f32 %v9800, %v9808
  %v9872 = vadd.f32 %v9801, %v9808
  %v9873 = vadd.f32 %v9802, %v9808
  %v9874 = vadd.f32 %v9803, %v9808
  %v9875 = vmax.f32 %v9810, 0.0
  %v9876 = vmax.f32 %v9811, 0.0
  %v9877 = vmax.f32 %v9812, 0.0
  %v9878 = vmax.f32 %v9813, 0.0
  %v9879 = vmax.f32 %v9814, 0.0
  %v9880 = vmax.f32 %v9815, 0.0
  %v9881 = vmax.f32 %v9816, 0.0
  %v9882 = vmax.f32 %v9817, 0.0
  %v9883 = vmax.f32 %v9818, 0.0
  %v9884 = vmax.f32 %v9819, 0.0
  %v9885 = vmax.f32 %v9820, 0.0
  %v9886 = vmax.f32 %v9821, 0.0
  %v9887 = vmax.f32 %v9822, 0.0
  %v9888 = vmax.f32 %v9823, 0.0
  %v9889 = vmax.f32 %v9824, 0.0
  %v9890 = vmax.f32 %v9825, 0.0
  %v9891 = vmax.f32 %v9826, 0.0
  %v9892 = vmax.f32 %v9827, 0.0
  %v9893 = vmax.f32 %v9828, 0.0
  %v9894 = vmax.f32 %v9829, 0.0
  %v9895 = vmax.f32 %v9830, 0.0
  %v9896 = vmax.f32 %v9831, 0.0
  %v9897 = vmax.f32 %v9832, 0.0
  %v9898 = vmax.f32 %v9833, 0.0
  %v9899 = vmax.f32 %v9834, 0.0
  %v9900 = vmax.f32 %v9835, 0.0
  %v9901 = vmax.f32 %v9836, 0.0
  %v9902 = vmax.f32 %v9837, 0.0
  %v9903 = vmax.f32 %v9838, 0.0
  %v9904 = vmax.f32 %v9839, 0.0
  %v9905 = vmax.f32 %v9840, 0.0
  %v9906 = vmax.f32 %v9841, 0.0
  %v9907 = vmax.f32 %v9842, 0.0
  %v9908 = vmax.f32 %v9843, 0.0
  %v9909 = vmax.f32 %v9844, 0.0
  %v9910 = vmax.f32 %v9845, 0.0
  %v9911 = vmax.f32 %v9846, 0.0
  %v9912 = vmax.f32 %v9847, 0.0
  %v9913 = vmax.f32 %v9848, 0.0
  %v9914 = vmax.f32 %v9849, 0.0
  %v9915 = vmax.f32 %v9850, 0.0
  %v9916 = vmax.f32 %v9851, 0.0
  %v9917 = vmax.f32 %v9852, 0.0
  %v9918 = vmax.f32 %v9853, 0.0
  %v9919 = vmax.f32 %v9854, 0.0
  %v9920 = vmax.f32 %v9855, 0.0
  %v9921 = vmax.f32 %v9856, 0.0
  %v9922 = vmax.f32 %v9857, 0.0
  %v9923 = vmax.f32 %v9858, 0.0
  %v9924 = vmax.f32 %v9859, 0.0
  %v9925 = vmax.f32 %v9860, 0.0
  %v9926 = vmax.f32 %v9861, 0.0
  %v9927 = vmax.f32 %v9862, 0.0
  %v9928 = vmax.f32 %v9863, 0.0
  %v9929 = vmax.f32 %v9864, 0.0
  %v9930 = vmax.f32 %v9865, 0.0
  %v9931 = vmax.f32 %v9866, 0.0
  %v9932 = vmax.f32 %v9867, 0.0
  %v9933 = vmax.f32 %v9868, 0.0
  %v9934 = vmax.f32 %v9869, 0.0
  %v9935 = vmax.f32 %v9870, 0.0
  %v9936 = vmax.f32 %v9871, 0.0
  %v9937 = vmax.f32 %v9872, 0.0
  %v9938 = vmax.f32 %v9873, 0.0
  %v9939 = vmax.f32 %v9874, 0.0
  %v9940 = vpack.c.bf16 %v9876, %v9875
  %v9941 = vpack.c.bf16 %v9878, %v9877
  %v9942 = vpack.c.bf16 %v9880, %v9879
  %v9943 = vpack.c.bf16 %v9882, %v9881
  %v9944 = vpack.c.bf16 %v9884, %v9883
  %v9945 = vpack.c.bf16 %v9886, %v9885
  %v9946 = vpack.c.bf16 %v9888, %v9887
  %v9947 = vpack.c.bf16 %v9890, %v9889
  %v9948 = vpack.c.bf16 %v9892, %v9891
  %v9949 = vpack.c.bf16 %v9894, %v9893
  %v9950 = vpack.c.bf16 %v9896, %v9895
  %v9951 = vpack.c.bf16 %v9898, %v9897
  %v9952 = vpack.c.bf16 %v9900, %v9899
  %v9953 = vpack.c.bf16 %v9902, %v9901
  %v9954 = vpack.c.bf16 %v9904, %v9903
  %v9955 = vpack.c.bf16 %v9906, %v9905
  %v9956 = vpack.c.bf16 %v9908, %v9907
  %v9957 = vpack.c.bf16 %v9910, %v9909
  %v9958 = vpack.c.bf16 %v9912, %v9911
  %v9959 = vpack.c.bf16 %v9914, %v9913
  %v9960 = vpack.c.bf16 %v9916, %v9915
  %v9961 = vpack.c.bf16 %v9918, %v9917
  %v9962 = vpack.c.bf16 %v9920, %v9919
  %v9963 = vpack.c.bf16 %v9922, %v9921
  %v9964 = vpack.c.bf16 %v9924, %v9923
  %v9965 = vpack.c.bf16 %v9926, %v9925
  %v9966 = vpack.c.bf16 %v9928, %v9927
  %v9967 = vpack.c.bf16 %v9930, %v9929
  %v9968 = vpack.c.bf16 %v9932, %v9931
  %v9969 = vpack.c.bf16 %v9934, %v9933
  %v9970 = vpack.c.bf16 %v9936, %v9935
  %v9971 = vpack.c.bf16 %v9938, %v9937
  %v9972 = vpack.c.bf16 %v9939, %v9939
  %v9973 = vld [vmem:[%s8] sm:$0x3]
  %vm9974 = vsmask.f32 4352
  %v9976 = vshrl.u32 %v9940, 16
  %v9978 = vrot.slane %v9976, 3
  %v9979 = vshll.u32 %v9940, 16
  %v9981 = vrot.slane %v9979, 4
  %v9982 = vor.u32 %v9978, %v9981
  %v9984 = vshrl.u32 %v9941, 16
  %v9986 = vrot.slane %v9984, 3
  %v9987 = vshll.u32 %v9941, 16
  %v9989 = vrot.slane %v9987, 4
  %v9990 = vor.u32 %v9986, %v9989
  %v9991 = vsel %vm9974, %v9982, %v9990
  %v9993 = vshrl.u32 %v9942, 16
  %v9995 = vrot.slane %v9993, 3
  %v9996 = vshll.u32 %v9942, 16
  %v9998 = vrot.slane %v9996, 4
  %v9999 = vor.u32 %v9995, %v9998
  %v10000 = vsel %vm9974, %v9990, %v9999
  %v10002 = vshrl.u32 %v9943, 16
  %v10004 = vrot.slane %v10002, 3
  %v10005 = vshll.u32 %v9943, 16
  %v10007 = vrot.slane %v10005, 4
  %v10008 = vor.u32 %v10004, %v10007
  %v10009 = vsel %vm9974, %v9999, %v10008
  %v10011 = vshrl.u32 %v9944, 16
  %v10013 = vrot.slane %v10011, 3
  %v10014 = vshll.u32 %v9944, 16
  %v10016 = vrot.slane %v10014, 4
  %v10017 = vor.u32 %v10013, %v10016
  %v10018 = vsel %vm9974, %v10008, %v10017
  %v10020 = vshrl.u32 %v9945, 16
  %v10022 = vrot.slane %v10020, 3
  %v10023 = vshll.u32 %v9945, 16
  %v10025 = vrot.slane %v10023, 4
  %v10026 = vor.u32 %v10022, %v10025
  %v10027 = vsel %vm9974, %v10017, %v10026
  %v10029 = vshrl.u32 %v9946, 16
  %v10031 = vrot.slane %v10029, 3
  %v10032 = vshll.u32 %v9946, 16
  %v10034 = vrot.slane %v10032, 4
  %v10035 = vor.u32 %v10031, %v10034
  %v10036 = vsel %vm9974, %v10026, %v10035
  %v10038 = vshrl.u32 %v9947, 16
  %v10040 = vrot.slane %v10038, 3
  %v10041 = vshll.u32 %v9947, 16
  %v10043 = vrot.slane %v10041, 4
  %v10044 = vor.u32 %v10040, %v10043
  %v10045 = vsel %vm9974, %v10035, %v10044
  %v10047 = vshrl.u32 %v9948, 16
  %v10049 = vrot.slane %v10047, 3
  %v10050 = vshll.u32 %v9948, 16
  %v10052 = vrot.slane %v10050, 4
  %v10053 = vor.u32 %v10049, %v10052
  %v10054 = vsel %vm9974, %v10044, %v10053
  %v10056 = vshrl.u32 %v9949, 16
  %v10058 = vrot.slane %v10056, 3
  %v10059 = vshll.u32 %v9949, 16
  %v10061 = vrot.slane %v10059, 4
  %v10062 = vor.u32 %v10058, %v10061
  %v10063 = vsel %vm9974, %v10053, %v10062
  %v10065 = vshrl.u32 %v9950, 16
  %v10067 = vrot.slane %v10065, 3
  %v10068 = vshll.u32 %v9950, 16
  %v10070 = vrot.slane %v10068, 4
  %v10071 = vor.u32 %v10067, %v10070
  %v10072 = vsel %vm9974, %v10062, %v10071
  %v10074 = vshrl.u32 %v9951, 16
  %v10076 = vrot.slane %v10074, 3
  %v10077 = vshll.u32 %v9951, 16
  %v10079 = vrot.slane %v10077, 4
  %v10080 = vor.u32 %v10076, %v10079
  %v10081 = vsel %vm9974, %v10071, %v10080
  %v10083 = vshrl.u32 %v9952, 16
  %v10085 = vrot.slane %v10083, 3
  %v10086 = vshll.u32 %v9952, 16
  %v10088 = vrot.slane %v10086, 4
  %v10089 = vor.u32 %v10085, %v10088
  %v10090 = vsel %vm9974, %v10080, %v10089
  %v10092 = vshrl.u32 %v9953, 16
  %v10094 = vrot.slane %v10092, 3
  %v10095 = vshll.u32 %v9953, 16
  %v10097 = vrot.slane %v10095, 4
  %v10098 = vor.u32 %v10094, %v10097
  %v10099 = vsel %vm9974, %v10089, %v10098
  %v10101 = vshrl.u32 %v9954, 16
  %v10103 = vrot.slane %v10101, 3
  %v10104 = vshll.u32 %v9954, 16
  %v10106 = vrot.slane %v10104, 4
  %v10107 = vor.u32 %v10103, %v10106
  %v10108 = vsel %vm9974, %v10098, %v10107
  %v10110 = vshrl.u32 %v9955, 16
  %v10112 = vrot.slane %v10110, 3
  %v10113 = vshll.u32 %v9955, 16
  %v10115 = vrot.slane %v10113, 4
  %v10116 = vor.u32 %v10112, %v10115
  %v10117 = vsel %vm9974, %v10107, %v10116
  %v10119 = vshrl.u32 %v9956, 16
  %v10121 = vrot.slane %v10119, 3
  %v10122 = vshll.u32 %v9956, 16
  %v10124 = vrot.slane %v10122, 4
  %v10125 = vor.u32 %v10121, %v10124
  %v10126 = vsel %vm9974, %v10116, %v10125
  %v10128 = vshrl.u32 %v9957, 16
  %v10130 = vrot.slane %v10128, 3
  %v10131 = vshll.u32 %v9957, 16
  %v10133 = vrot.slane %v10131, 4
  %v10134 = vor.u32 %v10130, %v10133
  %v10135 = vsel %vm9974, %v10125, %v10134
  %v10137 = vshrl.u32 %v9958, 16
  %v10139 = vrot.slane %v10137, 3
  %v10140 = vshll.u32 %v9958, 16
  %v10142 = vrot.slane %v10140, 4
  %v10143 = vor.u32 %v10139, %v10142
  %v10144 = vsel %vm9974, %v10134, %v10143
  %v10146 = vshrl.u32 %v9959, 16
  %v10148 = vrot.slane %v10146, 3
  %v10149 = vshll.u32 %v9959, 16
  %v10151 = vrot.slane %v10149, 4
  %v10152 = vor.u32 %v10148, %v10151
  %v10153 = vsel %vm9974, %v10143, %v10152
  %v10155 = vshrl.u32 %v9960, 16
  %v10157 = vrot.slane %v10155, 3
  %v10158 = vshll.u32 %v9960, 16
  %v10160 = vrot.slane %v10158, 4
  %v10161 = vor.u32 %v10157, %v10160
  %v10162 = vsel %vm9974, %v10152, %v10161
  %v10164 = vshrl.u32 %v9961, 16
  %v10166 = vrot.slane %v10164, 3
  %v10167 = vshll.u32 %v9961, 16
  %v10169 = vrot.slane %v10167, 4
  %v10170 = vor.u32 %v10166, %v10169
  %v10171 = vsel %vm9974, %v10161, %v10170
  %v10173 = vshrl.u32 %v9962, 16
  %v10175 = vrot.slane %v10173, 3
  %v10176 = vshll.u32 %v9962, 16
  %v10178 = vrot.slane %v10176, 4
  %v10179 = vor.u32 %v10175, %v10178
  %v10180 = vsel %vm9974, %v10170, %v10179
  %v10182 = vshrl.u32 %v9963, 16
  %v10184 = vrot.slane %v10182, 3
  %v10185 = vshll.u32 %v9963, 16
  %v10187 = vrot.slane %v10185, 4
  %v10188 = vor.u32 %v10184, %v10187
  %v10189 = vsel %vm9974, %v10179, %v10188
  %v10191 = vshrl.u32 %v9964, 16
  %v10193 = vrot.slane %v10191, 3
  %v10194 = vshll.u32 %v9964, 16
  %v10196 = vrot.slane %v10194, 4
  %v10197 = vor.u32 %v10193, %v10196
  %v10198 = vsel %vm9974, %v10188, %v10197
  %v10200 = vshrl.u32 %v9965, 16
  %v10202 = vrot.slane %v10200, 3
  %v10203 = vshll.u32 %v9965, 16
  %v10205 = vrot.slane %v10203, 4
  %v10206 = vor.u32 %v10202, %v10205
  %v10207 = vsel %vm9974, %v10197, %v10206
  %v10209 = vshrl.u32 %v9966, 16
  %v10211 = vrot.slane %v10209, 3
  %v10212 = vshll.u32 %v9966, 16
  %v10214 = vrot.slane %v10212, 4
  %v10215 = vor.u32 %v10211, %v10214
  %v10216 = vsel %vm9974, %v10206, %v10215
  %v10218 = vshrl.u32 %v9967, 16
  %v10220 = vrot.slane %v10218, 3
  %v10221 = vshll.u32 %v9967, 16
  %v10223 = vrot.slane %v10221, 4
  %v10224 = vor.u32 %v10220, %v10223
  %v10225 = vsel %vm9974, %v10215, %v10224
  %v10227 = vshrl.u32 %v9968, 16
  %v10229 = vrot.slane %v10227, 3
  %v10230 = vshll.u32 %v9968, 16
  %v10232 = vrot.slane %v10230, 4
  %v10233 = vor.u32 %v10229, %v10232
  %v10234 = vsel %vm9974, %v10224, %v10233
  %v10236 = vshrl.u32 %v9969, 16
  %v10238 = vrot.slane %v10236, 3
  %v10239 = vshll.u32 %v9969, 16
  %v10241 = vrot.slane %v10239, 4
  %v10242 = vor.u32 %v10238, %v10241
  %v10243 = vsel %vm9974, %v10233, %v10242
  %v10245 = vshrl.u32 %v9970, 16
  %v10247 = vrot.slane %v10245, 3
  %v10248 = vshll.u32 %v9970, 16
  %v10250 = vrot.slane %v10248, 4
  %v10251 = vor.u32 %v10247, %v10250
  %v10252 = vsel %vm9974, %v10242, %v10251
  %v10254 = vshrl.u32 %v9971, 16
  %v10256 = vrot.slane %v10254, 3
  %v10257 = vshll.u32 %v9971, 16
  %v10259 = vrot.slane %v10257, 4
  %v10260 = vor.u32 %v10256, %v10259
  %v10261 = vsel %vm9974, %v10251, %v10260
  %v10263 = vshrl.u32 %v9972, 16
  %v10265 = vrot.slane %v10263, 3
  %v10266 = vshll.u32 %v9972, 16
  %v10268 = vrot.slane %v10266, 4
  %v10269 = vor.u32 %v10265, %v10268
  %v10270 = vsel %vm9974, %v10260, %v10269
  %v10272 = vsel %vm974, %v9991, 0
  %v10275 = vsel %vm974, %v10000, 0
  %v10278 = vsel %vm974, %v10009, 0
  %v10281 = vsel %vm974, %v10018, 0
  %v10284 = vsel %vm974, %v10027, 0
  %v10287 = vsel %vm974, %v10036, 0
  %v10290 = vsel %vm974, %v10045, 0
  %v10293 = vsel %vm974, %v10054, 0
  %v10296 = vsel %vm974, %v10063, 0
  %v10299 = vsel %vm974, %v10072, 0
  %v10302 = vsel %vm974, %v10081, 0
  %v10305 = vsel %vm974, %v10090, 0
  %v10308 = vsel %vm974, %v10099, 0
  %v10311 = vsel %vm974, %v10108, 0
  %v10314 = vsel %vm974, %v10117, 0
  %v10317 = vsel %vm974, %v10126, 0
  %v10320 = vsel %vm974, %v10135, 0
  %v10323 = vsel %vm974, %v10144, 0
  %v10326 = vsel %vm974, %v10153, 0
  %v10329 = vsel %vm974, %v10162, 0
  %v10332 = vsel %vm974, %v10171, 0
  %v10335 = vsel %vm974, %v10180, 0
  %v10338 = vsel %vm974, %v10189, 0
  %v10341 = vsel %vm974, %v10198, 0
  %v10344 = vsel %vm974, %v10207, 0
  %v10347 = vsel %vm974, %v10216, 0
  %v10350 = vsel %vm974, %v10225, 0
  %v10353 = vsel %vm974, %v10234, 0
  %v10356 = vsel %vm974, %v10243, 0
  %v10359 = vsel %vm974, %v10252, 0
  %v10362 = vsel %vm974, %v10261, 0
  %v10365 = vsel %vm974, %v10270, 0
  %vm10367 = vcmask 1041408
  %v10369 = vsel %vm10367, %v9973, 0
  %10371 = vmatprep.subr.bf16.mxu0 0
  %10372 = vmatpush1.bf16.msra.mxu0 0
  %10373 = vmatprep.subr.bf16.mxu0 0
  %10374 = vmatpush1.bf16.msra.mxu0 0
  %10375 = vmatprep.subr.bf16.mxu0 0
  %10376 = vmatpush1.bf16.msra.mxu0 0
  %10377 = vmatprep.subr.bf16.mxu0 0
  %10378 = vmatpush1.bf16.msra.mxu0 0
  %10379 = vmatprep.subr.bf16.mxu0 0
  %10380 = vmatpush1.bf16.msra.mxu0 0
  %10381 = vmatprep.subr.bf16.mxu0 0
  %10382 = vmatpush1.bf16.msra.mxu0 0
  %10383 = vmatprep.subr.bf16.mxu0 0
  %10384 = vmatpush1.bf16.msra.mxu0 0
  %10385 = vmatprep.subr.bf16.mxu0 0
  %10386 = vmatpush1.bf16.msra.mxu0 %v10369
  %10387 = vmatprep.subr.bf16.mxu0 0
  %10388 = vmatpush2.bf16.msra.mxu0 0
  %10389 = vmatprep.subr.bf16.mxu0 0
  %10390 = vmatpush2.bf16.msra.mxu0 0
  %10391 = vmatprep.subr.bf16.mxu0 0
  %10392 = vmatpush2.bf16.msra.mxu0 0
  %10393 = vmatprep.subr.bf16.mxu0 0
  %10394 = vmatpush2.bf16.msra.mxu0 0
  %10395 = vmatprep.subr.bf16.mxu0 0
  %10396 = vmatpush2.bf16.msra.mxu0 0
  %10397 = vmatprep.subr.bf16.mxu0 0
  %10398 = vmatpush2.bf16.msra.mxu0 0
  %10399 = vmatprep.subr.bf16.mxu0 0
  %10400 = vmatpush2.bf16.msra.mxu0 0
  %10401 = vmatprep.subr.bf16.mxu0 0
  %10402 = vmatpush2.bf16.msra.mxu0 0
  %10403 = vmatprep.mubr.bf16.mxu0 0
  %10404 = vmatmul.mubr.bf16.gmra.mxu0 %v10272
  %v10405 = vpop.f32.mrf.mxu0
  %v10406 = vadd.f32 0.0, %v10405
  %v10407 = vpop.f32.mrf.mxu0
  %v10408 = vpop.f32.mrf.mxu0
  %v10409 = vadd.f32 0.0, %v10408
  %v10410 = vpop.f32.mrf.mxu0
  %10411 = vmatprep.mubr.bf16.mxu0 0
  %10412 = vmatmul.mubr.bf16.gmra.mxu0 %v10275
  %v10413 = vpop.f32.mrf.mxu0
  %v10414 = vadd.f32 0.0, %v10413
  %v10415 = vpop.f32.mrf.mxu0
  %v10416 = vpop.f32.mrf.mxu0
  %v10417 = vadd.f32 0.0, %v10416
  %v10418 = vpop.f32.mrf.mxu0
  %10419 = vmatprep.mubr.bf16.mxu0 0
  %10420 = vmatmul.mubr.bf16.gmra.mxu0 %v10278
  %v10421 = vpop.f32.mrf.mxu0
  %v10422 = vadd.f32 0.0, %v10421
  %v10423 = vpop.f32.mrf.mxu0
  %v10424 = vpop.f32.mrf.mxu0
  %v10425 = vadd.f32 0.0, %v10424
  %v10426 = vpop.f32.mrf.mxu0
  %10427 = vmatprep.mubr.bf16.mxu0 0
  %10428 = vmatmul.mubr.bf16.gmra.mxu0 %v10281
  %v10429 = vpop.f32.mrf.mxu0
  %v10430 = vadd.f32 0.0, %v10429
  %v10431 = vpop.f32.mrf.mxu0
  %v10432 = vpop.f32.mrf.mxu0
  %v10433 = vadd.f32 0.0, %v10432
  %v10434 = vpop.f32.mrf.mxu0
  %10435 = vmatprep.mubr.bf16.mxu0 0
  %10436 = vmatmul.mubr.bf16.gmra.mxu0 %v10284
  %v10437 = vpop.f32.mrf.mxu0
  %v10438 = vadd.f32 0.0, %v10437
  %v10439 = vpop.f32.mrf.mxu0
  %v10440 = vpop.f32.mrf.mxu0
  %v10441 = vadd.f32 0.0, %v10440
  %v10442 = vpop.f32.mrf.mxu0
  %10443 = vmatprep.mubr.bf16.mxu0 0
  %10444 = vmatmul.mubr.bf16.gmra.mxu0 %v10287
  %v10445 = vpop.f32.mrf.mxu0
  %v10446 = vadd.f32 0.0, %v10445
  %v10447 = vpop.f32.mrf.mxu0
  %v10448 = vpop.f32.mrf.mxu0
  %v10449 = vadd.f32 0.0, %v10448
  %v10450 = vpop.f32.mrf.mxu0
  %10451 = vmatprep.mubr.bf16.mxu0 0
  %10452 = vmatmul.mubr.bf16.gmra.mxu0 %v10290
  %v10453 = vpop.f32.mrf.mxu0
  %v10454 = vadd.f32 0.0, %v10453
  %v10455 = vpop.f32.mrf.mxu0
  %v10456 = vpop.f32.mrf.mxu0
  %v10457 = vadd.f32 0.0, %v10456
  %v10458 = vpop.f32.mrf.mxu0
  %10459 = vmatprep.mubr.bf16.mxu0 0
  %10460 = vmatmul.mubr.bf16.gmra.mxu0 %v10293
  %v10461 = vpop.f32.mrf.mxu0
  %v10462 = vadd.f32 0.0, %v10461
  %v10463 = vpop.f32.mrf.mxu0
  %v10464 = vpop.f32.mrf.mxu0
  %v10465 = vadd.f32 0.0, %v10464
  %v10466 = vpop.f32.mrf.mxu0
  %10467 = vmatprep.mubr.bf16.mxu0 0
  %10468 = vmatmul.mubr.bf16.gmra.mxu0 %v10296
  %v10469 = vpop.f32.mrf.mxu0
  %v10470 = vadd.f32 0.0, %v10469
  %v10471 = vpop.f32.mrf.mxu0
  %v10472 = vpop.f32.mrf.mxu0
  %v10473 = vadd.f32 0.0, %v10472
  %v10474 = vpop.f32.mrf.mxu0
  %10475 = vmatprep.mubr.bf16.mxu0 0
  %10476 = vmatmul.mubr.bf16.gmra.mxu0 %v10299
  %v10477 = vpop.f32.mrf.mxu0
  %v10478 = vadd.f32 0.0, %v10477
  %v10479 = vpop.f32.mrf.mxu0
  %v10480 = vpop.f32.mrf.mxu0
  %v10481 = vadd.f32 0.0, %v10480
  %v10482 = vpop.f32.mrf.mxu0
  %10483 = vmatprep.mubr.bf16.mxu0 0
  %10484 = vmatmul.mubr.bf16.gmra.mxu0 %v10302
  %v10485 = vpop.f32.mrf.mxu0
  %v10486 = vadd.f32 0.0, %v10485
  %v10487 = vpop.f32.mrf.mxu0
  %v10488 = vpop.f32.mrf.mxu0
  %v10489 = vadd.f32 0.0, %v10488
  %v10490 = vpop.f32.mrf.mxu0
  %10491 = vmatprep.mubr.bf16.mxu0 0
  %10492 = vmatmul.mubr.bf16.gmra.mxu0 %v10305
  %v10493 = vpop.f32.mrf.mxu0
  %v10494 = vadd.f32 0.0, %v10493
  %v10495 = vpop.f32.mrf.mxu0
  %v10496 = vpop.f32.mrf.mxu0
  %v10497 = vadd.f32 0.0, %v10496
  %v10498 = vpop.f32.mrf.mxu0
  %10499 = vmatprep.mubr.bf16.mxu0 0
  %10500 = vmatmul.mubr.bf16.gmra.mxu0 %v10308
  %v10501 = vpop.f32.mrf.mxu0
  %v10502 = vadd.f32 0.0, %v10501
  %v10503 = vpop.f32.mrf.mxu0
  %v10504 = vpop.f32.mrf.mxu0
  %v10505 = vadd.f32 0.0, %v10504
  %v10506 = vpop.f32.mrf.mxu0
  %10507 = vmatprep.mubr.bf16.mxu0 0
  %10508 = vmatmul.mubr.bf16.gmra.mxu0 %v10311
  %v10509 = vpop.f32.mrf.mxu0
  %v10510 = vadd.f32 0.0, %v10509
  %v10511 = vpop.f32.mrf.mxu0
  %v10512 = vpop.f32.mrf.mxu0
  %v10513 = vadd.f32 0.0, %v10512
  %v10514 = vpop.f32.mrf.mxu0
  %10515 = vmatprep.mubr.bf16.mxu0 0
  %10516 = vmatmul.mubr.bf16.gmra.mxu0 %v10314
  %v10517 = vpop.f32.mrf.mxu0
  %v10518 = vadd.f32 0.0, %v10517
  %v10519 = vpop.f32.mrf.mxu0
  %v10520 = vpop.f32.mrf.mxu0
  %v10521 = vadd.f32 0.0, %v10520
  %v10522 = vpop.f32.mrf.mxu0
  %10523 = vmatprep.mubr.bf16.mxu0 0
  %10524 = vmatmul.mubr.bf16.gmra.mxu0 %v10317
  %v10525 = vpop.f32.mrf.mxu0
  %v10526 = vadd.f32 0.0, %v10525
  %v10527 = vpop.f32.mrf.mxu0
  %v10528 = vpop.f32.mrf.mxu0
  %v10529 = vadd.f32 0.0, %v10528
  %v10530 = vpop.f32.mrf.mxu0
  %10531 = vmatprep.mubr.bf16.mxu0 0
  %10532 = vmatmul.mubr.bf16.gmra.mxu0 %v10320
  %v10533 = vpop.f32.mrf.mxu0
  %v10534 = vadd.f32 0.0, %v10533
  %v10535 = vpop.f32.mrf.mxu0
  %v10536 = vpop.f32.mrf.mxu0
  %v10537 = vadd.f32 0.0, %v10536
  %v10538 = vpop.f32.mrf.mxu0
  %10539 = vmatprep.mubr.bf16.mxu0 0
  %10540 = vmatmul.mubr.bf16.gmra.mxu0 %v10323
  %v10541 = vpop.f32.mrf.mxu0
  %v10542 = vadd.f32 0.0, %v10541
  %v10543 = vpop.f32.mrf.mxu0
  %v10544 = vpop.f32.mrf.mxu0
  %v10545 = vadd.f32 0.0, %v10544
  %v10546 = vpop.f32.mrf.mxu0
  %10547 = vmatprep.mubr.bf16.mxu0 0
  %10548 = vmatmul.mubr.bf16.gmra.mxu0 %v10326
  %v10549 = vpop.f32.mrf.mxu0
  %v10550 = vadd.f32 0.0, %v10549
  %v10551 = vpop.f32.mrf.mxu0
  %v10552 = vpop.f32.mrf.mxu0
  %v10553 = vadd.f32 0.0, %v10552
  %v10554 = vpop.f32.mrf.mxu0
  %10555 = vmatprep.mubr.bf16.mxu0 0
  %10556 = vmatmul.mubr.bf16.gmra.mxu0 %v10329
  %v10557 = vpop.f32.mrf.mxu0
  %v10558 = vadd.f32 0.0, %v10557
  %v10559 = vpop.f32.mrf.mxu0
  %v10560 = vpop.f32.mrf.mxu0
  %v10561 = vadd.f32 0.0, %v10560
  %v10562 = vpop.f32.mrf.mxu0
  %10563 = vmatprep.mubr.bf16.mxu0 0
  %10564 = vmatmul.mubr.bf16.gmra.mxu0 %v10332
  %v10565 = vpop.f32.mrf.mxu0
  %v10566 = vadd.f32 0.0, %v10565
  %v10567 = vpop.f32.mrf.mxu0
  %v10568 = vpop.f32.mrf.mxu0
  %v10569 = vadd.f32 0.0, %v10568
  %v10570 = vpop.f32.mrf.mxu0
  %10571 = vmatprep.mubr.bf16.mxu0 0
  %10572 = vmatmul.mubr.bf16.gmra.mxu0 %v10335
  %v10573 = vpop.f32.mrf.mxu0
  %v10574 = vadd.f32 0.0, %v10573
  %v10575 = vpop.f32.mrf.mxu0
  %v10576 = vpop.f32.mrf.mxu0
  %v10577 = vadd.f32 0.0, %v10576
  %v10578 = vpop.f32.mrf.mxu0
  %10579 = vmatprep.mubr.bf16.mxu0 0
  %10580 = vmatmul.mubr.bf16.gmra.mxu0 %v10338
  %v10581 = vpop.f32.mrf.mxu0
  %v10582 = vadd.f32 0.0, %v10581
  %v10583 = vpop.f32.mrf.mxu0
  %v10584 = vpop.f32.mrf.mxu0
  %v10585 = vadd.f32 0.0, %v10584
  %v10586 = vpop.f32.mrf.mxu0
  %10587 = vmatprep.mubr.bf16.mxu0 0
  %10588 = vmatmul.mubr.bf16.gmra.mxu0 %v10341
  %v10589 = vpop.f32.mrf.mxu0
  %v10590 = vadd.f32 0.0, %v10589
  %v10591 = vpop.f32.mrf.mxu0
  %v10592 = vpop.f32.mrf.mxu0
  %v10593 = vadd.f32 0.0, %v10592
  %v10594 = vpop.f32.mrf.mxu0
  %10595 = vmatprep.mubr.bf16.mxu0 0
  %10596 = vmatmul.mubr.bf16.gmra.mxu0 %v10344
  %v10597 = vpop.f32.mrf.mxu0
  %v10598 = vadd.f32 0.0, %v10597
  %v10599 = vpop.f32.mrf.mxu0
  %v10600 = vpop.f32.mrf.mxu0
  %v10601 = vadd.f32 0.0, %v10600
  %v10602 = vpop.f32.mrf.mxu0
  %10603 = vmatprep.mubr.bf16.mxu0 0
  %10604 = vmatmul.mubr.bf16.gmra.mxu0 %v10347
  %v10605 = vpop.f32.mrf.mxu0
  %v10606 = vadd.f32 0.0, %v10605
  %v10607 = vpop.f32.mrf.mxu0
  %v10608 = vpop.f32.mrf.mxu0
  %v10609 = vadd.f32 0.0, %v10608
  %v10610 = vpop.f32.mrf.mxu0
  %10611 = vmatprep.mubr.bf16.mxu0 0
  %10612 = vmatmul.mubr.bf16.gmra.mxu0 %v10350
  %v10613 = vpop.f32.mrf.mxu0
  %v10614 = vadd.f32 0.0, %v10613
  %v10615 = vpop.f32.mrf.mxu0
  %v10616 = vpop.f32.mrf.mxu0
  %v10617 = vadd.f32 0.0, %v10616
  %v10618 = vpop.f32.mrf.mxu0
  %10619 = vmatprep.mubr.bf16.mxu0 0
  %10620 = vmatmul.mubr.bf16.gmra.mxu0 %v10353
  %v10621 = vpop.f32.mrf.mxu0
  %v10622 = vadd.f32 0.0, %v10621
  %v10623 = vpop.f32.mrf.mxu0
  %v10624 = vpop.f32.mrf.mxu0
  %v10625 = vadd.f32 0.0, %v10624
  %v10626 = vpop.f32.mrf.mxu0
  %10627 = vmatprep.mubr.bf16.mxu0 0
  %10628 = vmatmul.mubr.bf16.gmra.mxu0 %v10356
  %v10629 = vpop.f32.mrf.mxu0
  %v10630 = vadd.f32 0.0, %v10629
  %v10631 = vpop.f32.mrf.mxu0
  %v10632 = vpop.f32.mrf.mxu0
  %v10633 = vadd.f32 0.0, %v10632
  %v10634 = vpop.f32.mrf.mxu0
  %10635 = vmatprep.mubr.bf16.mxu0 0
  %10636 = vmatmul.mubr.bf16.gmra.mxu0 %v10359
  %v10637 = vpop.f32.mrf.mxu0
  %v10638 = vadd.f32 0.0, %v10637
  %v10639 = vpop.f32.mrf.mxu0
  %v10640 = vpop.f32.mrf.mxu0
  %v10641 = vadd.f32 0.0, %v10640
  %v10642 = vpop.f32.mrf.mxu0
  %10643 = vmatprep.mubr.bf16.mxu0 0
  %10644 = vmatmul.mubr.bf16.gmra.mxu0 %v10362
  %v10645 = vpop.f32.mrf.mxu0
  %v10646 = vadd.f32 0.0, %v10645
  %v10647 = vpop.f32.mrf.mxu0
  %v10648 = vpop.f32.mrf.mxu0
  %v10649 = vadd.f32 0.0, %v10648
  %v10650 = vpop.f32.mrf.mxu0
  %10651 = vmatprep.mubr.bf16.mxu0 0
  %10652 = vmatmul.mubr.bf16.gmra.mxu0 %v10365
  %v10653 = vpop.f32.mrf.mxu0
  %v10654 = vadd.f32 0.0, %v10653
  %v10655 = vpop.f32.mrf.mxu0
  %v10656 = vpop.f32.mrf.mxu0
  %v10657 = vadd.f32 0.0, %v10656
  %v10658 = vpop.f32.mrf.mxu0
  %10659 = vdwg.mxu0
  %v10660 = vmul.f32 %v10406, %v1789
  %v10661 = vmul.f32 %v10409, %v1791
  %v10662 = vmul.f32 %v10414, %v1793
  %v10663 = vmul.f32 %v10417, %v1795
  %v10664 = vmul.f32 %v10422, %v1797
  %v10665 = vmul.f32 %v10425, %v1799
  %v10666 = vmul.f32 %v10430, %v1801
  %v10667 = vmul.f32 %v10433, %v1803
  %v10668 = vmul.f32 %v10438, %v1805
  %v10669 = vmul.f32 %v10441, %v1807
  %v10670 = vmul.f32 %v10446, %v1809
  %v10671 = vmul.f32 %v10449, %v1811
  %v10672 = vmul.f32 %v10454, %v1813
  %v10673 = vmul.f32 %v10457, %v1815
  %v10674 = vmul.f32 %v10462, %v1817
  %v10675 = vmul.f32 %v10465, %v1819
  %v10676 = vmul.f32 %v10470, %v1821
  %v10677 = vmul.f32 %v10473, %v1823
  %v10678 = vmul.f32 %v10478, %v1825
  %v10679 = vmul.f32 %v10481, %v1827
  %v10680 = vmul.f32 %v10486, %v1829
  %v10681 = vmul.f32 %v10489, %v1831
  %v10682 = vmul.f32 %v10494, %v1833
  %v10683 = vmul.f32 %v10497, %v1835
  %v10684 = vmul.f32 %v10502, %v1837
  %v10685 = vmul.f32 %v10505, %v1839
  %v10686 = vmul.f32 %v10510, %v1841
  %v10687 = vmul.f32 %v10513, %v1843
  %v10688 = vmul.f32 %v10518, %v1845
  %v10689 = vmul.f32 %v10521, %v1847
  %v10690 = vmul.f32 %v10526, %v1849
  %v10691 = vmul.f32 %v10529, %v1851
  %v10692 = vmul.f32 %v10534, %v1853
  %v10693 = vmul.f32 %v10537, %v1855
  %v10694 = vmul.f32 %v10542, %v1857
  %v10695 = vmul.f32 %v10545, %v1859
  %v10696 = vmul.f32 %v10550, %v1861
  %v10697 = vmul.f32 %v10553, %v1863
  %v10698 = vmul.f32 %v10558, %v1865
  %v10699 = vmul.f32 %v10561, %v1867
  %v10700 = vmul.f32 %v10566, %v1869
  %v10701 = vmul.f32 %v10569, %v1871
  %v10702 = vmul.f32 %v10574, %v1873
  %v10703 = vmul.f32 %v10577, %v1875
  %v10704 = vmul.f32 %v10582, %v1877
  %v10705 = vmul.f32 %v10585, %v1879
  %v10706 = vmul.f32 %v10590, %v1881
  %v10707 = vmul.f32 %v10593, %v1883
  %v10708 = vmul.f32 %v10598, %v1885
  %v10709 = vmul.f32 %v10601, %v1887
  %v10710 = vmul.f32 %v10606, %v1889
  %v10711 = vmul.f32 %v10609, %v1891
  %v10712 = vmul.f32 %v10614, %v1893
  %v10713 = vmul.f32 %v10617, %v1895
  %v10714 = vmul.f32 %v10622, %v1897
  %v10715 = vmul.f32 %v10625, %v1899
  %v10716 = vmul.f32 %v10630, %v1901
  %v10717 = vmul.f32 %v10633, %v1903
  %v10718 = vmul.f32 %v10638, %v1905
  %v10719 = vmul.f32 %v10641, %v1907
  %v10720 = vmul.f32 %v10646, %v1909
  %v10721 = vmul.f32 %v10649, %v1908
  %v10722 = vadd.f32 %v10660, 0.0
  %v10723 = vadd.f32 %v10661, 0.0
  %v10724 = vadd.f32 %v10662, 0.0
  %v10725 = vadd.f32 %v10663, 0.0
  %v10726 = vadd.f32 %v10664, 0.0
  %v10727 = vadd.f32 %v10665, 0.0
  %v10728 = vadd.f32 %v10666, 0.0
  %v10729 = vadd.f32 %v10667, 0.0
  %v10730 = vadd.f32 %v10668, 0.0
  %v10731 = vadd.f32 %v10669, 0.0
  %v10732 = vadd.f32 %v10670, 0.0
  %v10733 = vadd.f32 %v10671, 0.0
  %v10734 = vadd.f32 %v10672, 0.0
  %v10735 = vadd.f32 %v10673, 0.0
  %v10736 = vadd.f32 %v10674, 0.0
  %v10737 = vadd.f32 %v10675, 0.0
  %v10738 = vadd.f32 %v10676, 0.0
  %v10739 = vadd.f32 %v10677, 0.0
  %v10740 = vadd.f32 %v10678, 0.0
  %v10741 = vadd.f32 %v10679, 0.0
  %v10742 = vadd.f32 %v10680, 0.0
  %v10743 = vadd.f32 %v10681, 0.0
  %v10744 = vadd.f32 %v10682, 0.0
  %v10745 = vadd.f32 %v10683, 0.0
  %v10746 = vadd.f32 %v10684, 0.0
  %v10747 = vadd.f32 %v10685, 0.0
  %v10748 = vadd.f32 %v10686, 0.0
  %v10749 = vadd.f32 %v10687, 0.0
  %v10750 = vadd.f32 %v10688, 0.0
  %v10751 = vadd.f32 %v10689, 0.0
  %v10752 = vadd.f32 %v10690, 0.0
  %v10753 = vadd.f32 %v10691, 0.0
  %v10754 = vadd.f32 %v10692, 0.0
  %v10755 = vadd.f32 %v10693, 0.0
  %v10756 = vadd.f32 %v10694, 0.0
  %v10757 = vadd.f32 %v10695, 0.0
  %v10758 = vadd.f32 %v10696, 0.0
  %v10759 = vadd.f32 %v10697, 0.0
  %v10760 = vadd.f32 %v10698, 0.0
  %v10761 = vadd.f32 %v10699, 0.0
  %v10762 = vadd.f32 %v10700, 0.0
  %v10763 = vadd.f32 %v10701, 0.0
  %v10764 = vadd.f32 %v10702, 0.0
  %v10765 = vadd.f32 %v10703, 0.0
  %v10766 = vadd.f32 %v10704, 0.0
  %v10767 = vadd.f32 %v10705, 0.0
  %v10768 = vadd.f32 %v10706, 0.0
  %v10769 = vadd.f32 %v10707, 0.0
  %v10770 = vadd.f32 %v10708, 0.0
  %v10771 = vadd.f32 %v10709, 0.0
  %v10772 = vadd.f32 %v10710, 0.0
  %v10773 = vadd.f32 %v10711, 0.0
  %v10774 = vadd.f32 %v10712, 0.0
  %v10775 = vadd.f32 %v10713, 0.0
  %v10776 = vadd.f32 %v10714, 0.0
  %v10777 = vadd.f32 %v10715, 0.0
  %v10778 = vadd.f32 %v10716, 0.0
  %v10779 = vadd.f32 %v10717, 0.0
  %v10780 = vadd.f32 %v10718, 0.0
  %v10781 = vadd.f32 %v10719, 0.0
  %v10782 = vadd.f32 %v10720, 0.0
  %v10783 = vadd.f32 %v10721, 0.0
  %v10784 = vmul.f32 %v10406, %v2115
  %v10785 = vmul.f32 %v10409, %v2119
  %v10786 = vmul.f32 %v10414, %v2123
  %v10787 = vmul.f32 %v10417, %v2127
  %v10788 = vmul.f32 %v10422, %v2131
  %v10789 = vmul.f32 %v10425, %v2135
  %v10790 = vmul.f32 %v10430, %v2139
  %v10791 = vmul.f32 %v10433, %v2143
  %v10792 = vmul.f32 %v10438, %v2147
  %v10793 = vmul.f32 %v10441, %v2151
  %v10794 = vmul.f32 %v10446, %v2155
  %v10795 = vmul.f32 %v10449, %v2159
  %v10796 = vmul.f32 %v10454, %v2163
  %v10797 = vmul.f32 %v10457, %v2167
  %v10798 = vmul.f32 %v10462, %v2171
  %v10799 = vmul.f32 %v10465, %v2175
  %v10800 = vmul.f32 %v10470, %v2179
  %v10801 = vmul.f32 %v10473, %v2183
  %v10802 = vmul.f32 %v10478, %v2187
  %v10803 = vmul.f32 %v10481, %v2191
  %v10804 = vmul.f32 %v10486, %v2195
  %v10805 = vmul.f32 %v10489, %v2199
  %v10806 = vmul.f32 %v10494, %v2203
  %v10807 = vmul.f32 %v10497, %v2207
  %v10808 = vmul.f32 %v10502, %v2211
  %v10809 = vmul.f32 %v10505, %v2215
  %v10810 = vmul.f32 %v10510, %v2219
  %v10811 = vmul.f32 %v10513, %v2223
  %v10812 = vmul.f32 %v10518, %v2227
  %v10813 = vmul.f32 %v10521, %v2231
  %v10814 = vmul.f32 %v10526, %v2235
  %v10815 = vmul.f32 %v10529, %v2239
  %v10816 = vmul.f32 %v10534, %v2243
  %v10817 = vmul.f32 %v10537, %v2247
  %v10818 = vmul.f32 %v10542, %v2251
  %v10819 = vmul.f32 %v10545, %v2255
  %v10820 = vmul.f32 %v10550, %v2259
  %v10821 = vmul.f32 %v10553, %v2263
  %v10822 = vmul.f32 %v10558, %v2267
  %v10823 = vmul.f32 %v10561, %v2271
  %v10824 = vmul.f32 %v10566, %v2275
  %v10825 = vmul.f32 %v10569, %v2279
  %v10826 = vmul.f32 %v10574, %v2283
  %v10827 = vmul.f32 %v10577, %v2287
  %v10828 = vmul.f32 %v10582, %v2291
  %v10829 = vmul.f32 %v10585, %v2295
  %v10830 = vmul.f32 %v10590, %v2299
  %v10831 = vmul.f32 %v10593, %v2303
  %v10832 = vmul.f32 %v10598, %v2307
  %v10833 = vmul.f32 %v10601, %v2311
  %v10834 = vmul.f32 %v10606, %v2315
  %v10835 = vmul.f32 %v10609, %v2319
  %v10836 = vmul.f32 %v10614, %v2323
  %v10837 = vmul.f32 %v10617, %v2327
  %v10838 = vmul.f32 %v10622, %v2331
  %v10839 = vmul.f32 %v10625, %v2335
  %v10840 = vmul.f32 %v10630, %v2339
  %v10841 = vmul.f32 %v10633, %v2343
  %v10842 = vmul.f32 %v10638, %v2347
  %v10843 = vmul.f32 %v10641, %v2351
  %v10844 = vmul.f32 %v10646, %v2355
  %v10845 = vmul.f32 %v10649, %v2359
  %v10908 = vrot.slane %v10784, 1
  %v10909 = vsel %vm1782, %v2490, %v10908
  %v10910 = vrot.slane %v10785, 1
  %v10911 = vsel %vm1782, %v10908, %v10910
  %v10912 = vrot.slane %v10786, 1
  %v10913 = vsel %vm1782, %v10910, %v10912
  %v10914 = vrot.slane %v10787, 1
  %v10915 = vsel %vm1782, %v10912, %v10914
  %v10916 = vrot.slane %v10788, 1
  %v10917 = vsel %vm1782, %v10914, %v10916
  %v10918 = vrot.slane %v10789, 1
  %v10919 = vsel %vm1782, %v10916, %v10918
  %v10920 = vrot.slane %v10790, 1
  %v10921 = vsel %vm1782, %v10918, %v10920
  %v10922 = vrot.slane %v10791, 1
  %v10923 = vsel %vm1782, %v10920, %v10922
  %v10924 = vrot.slane %v10792, 1
  %v10925 = vsel %vm1782, %v10922, %v10924
  %v10926 = vrot.slane %v10793, 1
  %v10927 = vsel %vm1782, %v10924, %v10926
  %v10928 = vrot.slane %v10794, 1
  %v10929 = vsel %vm1782, %v10926, %v10928
  %v10930 = vrot.slane %v10795, 1
  %v10931 = vsel %vm1782, %v10928, %v10930
  %v10932 = vrot.slane %v10796, 1
  %v10933 = vsel %vm1782, %v10930, %v10932
  %v10934 = vrot.slane %v10797, 1
  %v10935 = vsel %vm1782, %v10932, %v10934
  %v10936 = vrot.slane %v10798, 1
  %v10937 = vsel %vm1782, %v10934, %v10936
  %v10938 = vrot.slane %v10799, 1
  %v10939 = vsel %vm1782, %v10936, %v10938
  %v10940 = vrot.slane %v10800, 1
  %v10941 = vsel %vm1782, %v10938, %v10940
  %v10942 = vrot.slane %v10801, 1
  %v10943 = vsel %vm1782, %v10940, %v10942
  %v10944 = vrot.slane %v10802, 1
  %v10945 = vsel %vm1782, %v10942, %v10944
  %v10946 = vrot.slane %v10803, 1
  %v10947 = vsel %vm1782, %v10944, %v10946
  %v10948 = vrot.slane %v10804, 1
  %v10949 = vsel %vm1782, %v10946, %v10948
  %v10950 = vrot.slane %v10805, 1
  %v10951 = vsel %vm1782, %v10948, %v10950
  %v10952 = vrot.slane %v10806, 1
  %v10953 = vsel %vm1782, %v10950, %v10952
  %v10954 = vrot.slane %v10807, 1
  %v10955 = vsel %vm1782, %v10952, %v10954
  %v10956 = vrot.slane %v10808, 1
  %v10957 = vsel %vm1782, %v10954, %v10956
  %v10958 = vrot.slane %v10809, 1
  %v10959 = vsel %vm1782, %v10956, %v10958
  %v10960 = vrot.slane %v10810, 1
  %v10961 = vsel %vm1782, %v10958, %v10960
  %v10962 = vrot.slane %v10811, 1
  %v10963 = vsel %vm1782, %v10960, %v10962
  %v10964 = vrot.slane %v10812, 1
  %v10965 = vsel %vm1782, %v10962, %v10964
  %v10966 = vrot.slane %v10813, 1
  %v10967 = vsel %vm1782, %v10964, %v10966
  %v10968 = vrot.slane %v10814, 1
  %v10969 = vsel %vm1782, %v10966, %v10968
  %v10970 = vrot.slane %v10815, 1
  %v10971 = vsel %vm1782, %v10968, %v10970
  %v10972 = vrot.slane %v10816, 1
  %v10973 = vsel %vm1782, %v10970, %v10972
  %v10974 = vrot.slane %v10817, 1
  %v10975 = vsel %vm1782, %v10972, %v10974
  %v10976 = vrot.slane %v10818, 1
  %v10977 = vsel %vm1782, %v10974, %v10976
  %v10978 = vrot.slane %v10819, 1
  %v10979 = vsel %vm1782, %v10976, %v10978
  %v10980 = vrot.slane %v10820, 1
  %v10981 = vsel %vm1782, %v10978, %v10980
  %v10982 = vrot.slane %v10821, 1
  %v10983 = vsel %vm1782, %v10980, %v10982
  %v10984 = vrot.slane %v10822, 1
  %v10985 = vsel %vm1782, %v10982, %v10984
  %v10986 = vrot.slane %v10823, 1
  %v10987 = vsel %vm1782, %v10984, %v10986
  %v10988 = vrot.slane %v10824, 1
  %v10989 = vsel %vm1782, %v10986, %v10988
  %v10990 = vrot.slane %v10825, 1
  %v10991 = vsel %vm1782, %v10988, %v10990
  %v10992 = vrot.slane %v10826, 1
  %v10993 = vsel %vm1782, %v10990, %v10992
  %v10994 = vrot.slane %v10827, 1
  %v10995 = vsel %vm1782, %v10992, %v10994
  %v10996 = vrot.slane %v10828, 1
  %v10997 = vsel %vm1782, %v10994, %v10996
  %v10998 = vrot.slane %v10829, 1
  %v10999 = vsel %vm1782, %v10996, %v10998
  %v11000 = vrot.slane %v10830, 1
  %v11001 = vsel %vm1782, %v10998, %v11000
  %v11002 = vrot.slane %v10831, 1
  %v11003 = vsel %vm1782, %v11000, %v11002
  %v11004 = vrot.slane %v10832, 1
  %v11005 = vsel %vm1782, %v11002, %v11004
  %v11006 = vrot.slane %v10833, 1
  %v11007 = vsel %vm1782, %v11004, %v11006
  %v11008 = vrot.slane %v10834, 1
  %v11009 = vsel %vm1782, %v11006, %v11008
  %v11010 = vrot.slane %v10835, 1
  %v11011 = vsel %vm1782, %v11008, %v11010
  %v11012 = vrot.slane %v10836, 1
  %v11013 = vsel %vm1782, %v11010, %v11012
  %v11014 = vrot.slane %v10837, 1
  %v11015 = vsel %vm1782, %v11012, %v11014
  %v11016 = vrot.slane %v10838, 1
  %v11017 = vsel %vm1782, %v11014, %v11016
  %v11018 = vrot.slane %v10839, 1
  %v11019 = vsel %vm1782, %v11016, %v11018
  %v11020 = vrot.slane %v10840, 1
  %v11021 = vsel %vm1782, %v11018, %v11020
  %v11022 = vrot.slane %v10841, 1
  %v11023 = vsel %vm1782, %v11020, %v11022
  %v11024 = vrot.slane %v10842, 1
  %v11025 = vsel %vm1782, %v11022, %v11024
  %v11026 = vrot.slane %v10843, 1
  %v11027 = vsel %vm1782, %v11024, %v11026
  %v11028 = vrot.slane %v10844, 1
  %v11029 = vsel %vm1782, %v11026, %v11028
  %v11030 = vrot.slane %v10845, 1
  %v11031 = vsel %vm1782, %v11028, %v11030
  %11032 = vrot.lane.b32.xlu0 %v10909, 124
  %v11033 = vpop.permute.xlu0 %11032
  %11034 = vrot.lane.b32.xlu0 %v10911, 124
  %v11035 = vpop.permute.xlu0 %11034
  %11036 = vrot.lane.b32.xlu0 %v10913, 124
  %v11037 = vpop.permute.xlu0 %11036
  %11038 = vrot.lane.b32.xlu0 %v10915, 124
  %v11039 = vpop.permute.xlu0 %11038
  %11040 = vrot.lane.b32.xlu0 %v10917, 124
  %v11041 = vpop.permute.xlu0 %11040
  %11042 = vrot.lane.b32.xlu0 %v10919, 124
  %v11043 = vpop.permute.xlu0 %11042
  %11044 = vrot.lane.b32.xlu0 %v10921, 124
  %v11045 = vpop.permute.xlu0 %11044
  %11046 = vrot.lane.b32.xlu0 %v10923, 124
  %v11047 = vpop.permute.xlu0 %11046
  %11048 = vrot.lane.b32.xlu0 %v10925, 124
  %v11049 = vpop.permute.xlu0 %11048
  %11050 = vrot.lane.b32.xlu0 %v10927, 124
  %v11051 = vpop.permute.xlu0 %11050
  %11052 = vrot.lane.b32.xlu0 %v10929, 124
  %v11053 = vpop.permute.xlu0 %11052
  %11054 = vrot.lane.b32.xlu0 %v10931, 124
  %v11055 = vpop.permute.xlu0 %11054
  %11056 = vrot.lane.b32.xlu0 %v10933, 124
  %v11057 = vpop.permute.xlu0 %11056
  %11058 = vrot.lane.b32.xlu0 %v10935, 124
  %v11059 = vpop.permute.xlu0 %11058
  %11060 = vrot.lane.b32.xlu0 %v10937, 124
  %v11061 = vpop.permute.xlu0 %11060
  %11062 = vrot.lane.b32.xlu0 %v10939, 124
  %v11063 = vpop.permute.xlu0 %11062
  %11064 = vrot.lane.b32.xlu0 %v10941, 124
  %v11065 = vpop.permute.xlu0 %11064
  %11066 = vrot.lane.b32.xlu0 %v10943, 124
  %v11067 = vpop.permute.xlu0 %11066
  %11068 = vrot.lane.b32.xlu0 %v10945, 124
  %v11069 = vpop.permute.xlu0 %11068
  %11070 = vrot.lane.b32.xlu0 %v10947, 124
  %v11071 = vpop.permute.xlu0 %11070
  %11072 = vrot.lane.b32.xlu0 %v10949, 124
  %v11073 = vpop.permute.xlu0 %11072
  %11074 = vrot.lane.b32.xlu0 %v10951, 124
  %v11075 = vpop.permute.xlu0 %11074
  %11076 = vrot.lane.b32.xlu0 %v10953, 124
  %v11077 = vpop.permute.xlu0 %11076
  %11078 = vrot.lane.b32.xlu0 %v10955, 124
  %v11079 = vpop.permute.xlu0 %11078
  %11080 = vrot.lane.b32.xlu0 %v10957, 124
  %v11081 = vpop.permute.xlu0 %11080
  %11082 = vrot.lane.b32.xlu0 %v10959, 124
  %v11083 = vpop.permute.xlu0 %11082
  %11084 = vrot.lane.b32.xlu0 %v10961, 124
  %v11085 = vpop.permute.xlu0 %11084
  %11086 = vrot.lane.b32.xlu0 %v10963, 124
  %v11087 = vpop.permute.xlu0 %11086
  %11088 = vrot.lane.b32.xlu0 %v10965, 124
  %v11089 = vpop.permute.xlu0 %11088
  %11090 = vrot.lane.b32.xlu0 %v10967, 124
  %v11091 = vpop.permute.xlu0 %11090
  %11092 = vrot.lane.b32.xlu0 %v10969, 124
  %v11093 = vpop.permute.xlu0 %11092
  %11094 = vrot.lane.b32.xlu0 %v10971, 124
  %v11095 = vpop.permute.xlu0 %11094
  %11096 = vrot.lane.b32.xlu0 %v10973, 124
  %v11097 = vpop.permute.xlu0 %11096
  %11098 = vrot.lane.b32.xlu0 %v10975, 124
  %v11099 = vpop.permute.xlu0 %11098
  %11100 = vrot.lane.b32.xlu0 %v10977, 124
  %v11101 = vpop.permute.xlu0 %11100
  %11102 = vrot.lane.b32.xlu0 %v10979, 124
  %v11103 = vpop.permute.xlu0 %11102
  %11104 = vrot.lane.b32.xlu0 %v10981, 124
  %v11105 = vpop.permute.xlu0 %11104
  %11106 = vrot.lane.b32.xlu0 %v10983, 124
  %v11107 = vpop.permute.xlu0 %11106
  %11108 = vrot.lane.b32.xlu0 %v10985, 124
  %v11109 = vpop.permute.xlu0 %11108
  %11110 = vrot.lane.b32.xlu0 %v10987, 124
  %v11111 = vpop.permute.xlu0 %11110
  %11112 = vrot.lane.b32.xlu0 %v10989, 124
  %v11113 = vpop.permute.xlu0 %11112
  %11114 = vrot.lane.b32.xlu0 %v10991, 124
  %v11115 = vpop.permute.xlu0 %11114
  %11116 = vrot.lane.b32.xlu0 %v10993, 124
  %v11117 = vpop.permute.xlu0 %11116
  %11118 = vrot.lane.b32.xlu0 %v10995, 124
  %v11119 = vpop.permute.xlu0 %11118
  %11120 = vrot.lane.b32.xlu0 %v10997, 124
  %v11121 = vpop.permute.xlu0 %11120
  %11122 = vrot.lane.b32.xlu0 %v10999, 124
  %v11123 = vpop.permute.xlu0 %11122
  %11124 = vrot.lane.b32.xlu0 %v11001, 124
  %v11125 = vpop.permute.xlu0 %11124
  %11126 = vrot.lane.b32.xlu0 %v11003, 124
  %v11127 = vpop.permute.xlu0 %11126
  %11128 = vrot.lane.b32.xlu0 %v11005, 124
  %v11129 = vpop.permute.xlu0 %11128
  %11130 = vrot.lane.b32.xlu0 %v11007, 124
  %v11131 = vpop.permute.xlu0 %11130
  %11132 = vrot.lane.b32.xlu0 %v11009, 124
  %v11133 = vpop.permute.xlu0 %11132
  %11134 = vrot.lane.b32.xlu0 %v11011, 124
  %v11135 = vpop.permute.xlu0 %11134
  %11136 = vrot.lane.b32.xlu0 %v11013, 124
  %v11137 = vpop.permute.xlu0 %11136
  %11138 = vrot.lane.b32.xlu0 %v11015, 124
  %v11139 = vpop.permute.xlu0 %11138
  %11140 = vrot.lane.b32.xlu0 %v11017, 124
  %v11141 = vpop.permute.xlu0 %11140
  %11142 = vrot.lane.b32.xlu0 %v11019, 124
  %v11143 = vpop.permute.xlu0 %11142
  %11144 = vrot.lane.b32.xlu0 %v11021, 124
  %v11145 = vpop.permute.xlu0 %11144
  %11146 = vrot.lane.b32.xlu0 %v11023, 124
  %v11147 = vpop.permute.xlu0 %11146
  %11148 = vrot.lane.b32.xlu0 %v11025, 124
  %v11149 = vpop.permute.xlu0 %11148
  %11150 = vrot.lane.b32.xlu0 %v11027, 124
  %v11151 = vpop.permute.xlu0 %11150
  %11152 = vrot.lane.b32.xlu0 %v11029, 124
  %v11153 = vpop.permute.xlu0 %11152
  %11154 = vrot.lane.b32.xlu0 %v11031, 124
  %v11155 = vpop.permute.xlu0 %11154
  %11156 = vrot.lane.b32.xlu0 %v11030, 124
  %v11157 = vpop.permute.xlu0 %11156
  %v11221 = vadd.f32 %v2042, %v11033
  %v11222 = vadd.f32 %v10722, %v11035
  %v11223 = vadd.f32 %v10723, %v11037
  %v11224 = vadd.f32 %v10724, %v11039
  %v11225 = vadd.f32 %v10725, %v11041
  %v11226 = vadd.f32 %v10726, %v11043
  %v11227 = vadd.f32 %v10727, %v11045
  %v11228 = vadd.f32 %v10728, %v11047
  %v11229 = vadd.f32 %v10729, %v11049
  %v11230 = vadd.f32 %v10730, %v11051
  %v11231 = vadd.f32 %v10731, %v11053
  %v11232 = vadd.f32 %v10732, %v11055
  %v11233 = vadd.f32 %v10733, %v11057
  %v11234 = vadd.f32 %v10734, %v11059
  %v11235 = vadd.f32 %v10735, %v11061
  %v11236 = vadd.f32 %v10736, %v11063
  %v11237 = vadd.f32 %v10737, %v11065
  %v11238 = vadd.f32 %v10738, %v11067
  %v11239 = vadd.f32 %v10739, %v11069
  %v11240 = vadd.f32 %v10740, %v11071
  %v11241 = vadd.f32 %v10741, %v11073
  %v11242 = vadd.f32 %v10742, %v11075
  %v11243 = vadd.f32 %v10743, %v11077
  %v11244 = vadd.f32 %v10744, %v11079
  %v11245 = vadd.f32 %v10745, %v11081
  %v11246 = vadd.f32 %v10746, %v11083
  %v11247 = vadd.f32 %v10747, %v11085
  %v11248 = vadd.f32 %v10748, %v11087
  %v11249 = vadd.f32 %v10749, %v11089
  %v11250 = vadd.f32 %v10750, %v11091
  %v11251 = vadd.f32 %v10751, %v11093
  %v11252 = vadd.f32 %v10752, %v11095
  %v11253 = vadd.f32 %v10753, %v11097
  %v11254 = vadd.f32 %v10754, %v11099
  %v11255 = vadd.f32 %v10755, %v11101
  %v11256 = vadd.f32 %v10756, %v11103
  %v11257 = vadd.f32 %v10757, %v11105
  %v11258 = vadd.f32 %v10758, %v11107
  %v11259 = vadd.f32 %v10759, %v11109
  %v11260 = vadd.f32 %v10760, %v11111
  %v11261 = vadd.f32 %v10761, %v11113
  %v11262 = vadd.f32 %v10762, %v11115
  %v11263 = vadd.f32 %v10763, %v11117
  %v11264 = vadd.f32 %v10764, %v11119
  %v11265 = vadd.f32 %v10765, %v11121
  %v11266 = vadd.f32 %v10766, %v11123
  %v11267 = vadd.f32 %v10767, %v11125
  %v11268 = vadd.f32 %v10768, %v11127
  %v11269 = vadd.f32 %v10769, %v11129
  %v11270 = vadd.f32 %v10770, %v11131
  %v11271 = vadd.f32 %v10771, %v11133
  %v11272 = vadd.f32 %v10772, %v11135
  %v11273 = vadd.f32 %v10773, %v11137
  %v11274 = vadd.f32 %v10774, %v11139
  %v11275 = vadd.f32 %v10775, %v11141
  %v11276 = vadd.f32 %v10776, %v11143
  %v11277 = vadd.f32 %v10777, %v11145
  %v11278 = vadd.f32 %v10778, %v11147
  %v11279 = vadd.f32 %v10779, %v11149
  %v11280 = vadd.f32 %v10780, %v11151
  %v11281 = vadd.f32 %v10781, %v11153
  %v11282 = vadd.f32 %v10782, %v11155
  %v11283 = vadd.f32 %v10783, %v11157
  %v11284 = vmul.f32 %v10406, %v3073
  %v11285 = vmul.f32 %v10409, %v3075
  %v11286 = vmul.f32 %v10414, %v3077
  %v11287 = vmul.f32 %v10417, %v3079
  %v11288 = vmul.f32 %v10422, %v3081
  %v11289 = vmul.f32 %v10425, %v3083
  %v11290 = vmul.f32 %v10430, %v3085
  %v11291 = vmul.f32 %v10433, %v3087
  %v11292 = vmul.f32 %v10438, %v3089
  %v11293 = vmul.f32 %v10441, %v3091
  %v11294 = vmul.f32 %v10446, %v3093
  %v11295 = vmul.f32 %v10449, %v3095
  %v11296 = vmul.f32 %v10454, %v3097
  %v11297 = vmul.f32 %v10457, %v3099
  %v11298 = vmul.f32 %v10462, %v3101
  %v11299 = vmul.f32 %v10465, %v3103
  %v11300 = vmul.f32 %v10470, %v3105
  %v11301 = vmul.f32 %v10473, %v3107
  %v11302 = vmul.f32 %v10478, %v3109
  %v11303 = vmul.f32 %v10481, %v3111
  %v11304 = vmul.f32 %v10486, %v3113
  %v11305 = vmul.f32 %v10489, %v3115
  %v11306 = vmul.f32 %v10494, %v3117
  %v11307 = vmul.f32 %v10497, %v3119
  %v11308 = vmul.f32 %v10502, %v3121
  %v11309 = vmul.f32 %v10505, %v3123
  %v11310 = vmul.f32 %v10510, %v3125
  %v11311 = vmul.f32 %v10513, %v3127
  %v11312 = vmul.f32 %v10518, %v3129
  %v11313 = vmul.f32 %v10521, %v3131
  %v11314 = vmul.f32 %v10526, %v3133
  %v11315 = vmul.f32 %v10529, %v3135
  %v11316 = vmul.f32 %v10534, %v3137
  %v11317 = vmul.f32 %v10537, %v3139
  %v11318 = vmul.f32 %v10542, %v3141
  %v11319 = vmul.f32 %v10545, %v3143
  %v11320 = vmul.f32 %v10550, %v3145
  %v11321 = vmul.f32 %v10553, %v3147
  %v11322 = vmul.f32 %v10558, %v3149
  %v11323 = vmul.f32 %v10561, %v3151
  %v11324 = vmul.f32 %v10566, %v3153
  %v11325 = vmul.f32 %v10569, %v3155
  %v11326 = vmul.f32 %v10574, %v3157
  %v11327 = vmul.f32 %v10577, %v3159
  %v11328 = vmul.f32 %v10582, %v3161
  %v11329 = vmul.f32 %v10585, %v3163
  %v11330 = vmul.f32 %v10590, %v3165
  %v11331 = vmul.f32 %v10593, %v3167
  %v11332 = vmul.f32 %v10598, %v3169
  %v11333 = vmul.f32 %v10601, %v3171
  %v11334 = vmul.f32 %v10606, %v3173
  %v11335 = vmul.f32 %v10609, %v3175
  %v11336 = vmul.f32 %v10614, %v3177
  %v11337 = vmul.f32 %v10617, %v3179
  %v11338 = vmul.f32 %v10622, %v3181
  %v11339 = vmul.f32 %v10625, %v3183
  %v11340 = vmul.f32 %v10630, %v3185
  %v11341 = vmul.f32 %v10633, %v3187
  %v11342 = vmul.f32 %v10638, %v3189
  %v11343 = vmul.f32 %v10641, %v3191
  %v11344 = vmul.f32 %v10646, %v3193
  %v11345 = vmul.f32 %v10649, %v3195
  %v11346 = vmul.f32 %v10654, %v3194
  %v11410 = vrot.slane %v11284, 2
  %v11411 = vsel %vm3391, %v3393, %v11410
  %v11412 = vrot.slane %v11285, 2
  %v11413 = vsel %vm3391, %v11410, %v11412
  %v11414 = vrot.slane %v11286, 2
  %v11415 = vsel %vm3391, %v11412, %v11414
  %v11416 = vrot.slane %v11287, 2
  %v11417 = vsel %vm3391, %v11414, %v11416
  %v11418 = vrot.slane %v11288, 2
  %v11419 = vsel %vm3391, %v11416, %v11418
  %v11420 = vrot.slane %v11289, 2
  %v11421 = vsel %vm3391, %v11418, %v11420
  %v11422 = vrot.slane %v11290, 2
  %v11423 = vsel %vm3391, %v11420, %v11422
  %v11424 = vrot.slane %v11291, 2
  %v11425 = vsel %vm3391, %v11422, %v11424
  %v11426 = vrot.slane %v11292, 2
  %v11427 = vsel %vm3391, %v11424, %v11426
  %v11428 = vrot.slane %v11293, 2
  %v11429 = vsel %vm3391, %v11426, %v11428
  %v11430 = vrot.slane %v11294, 2
  %v11431 = vsel %vm3391, %v11428, %v11430
  %v11432 = vrot.slane %v11295, 2
  %v11433 = vsel %vm3391, %v11430, %v11432
  %v11434 = vrot.slane %v11296, 2
  %v11435 = vsel %vm3391, %v11432, %v11434
  %v11436 = vrot.slane %v11297, 2
  %v11437 = vsel %vm3391, %v11434, %v11436
  %v11438 = vrot.slane %v11298, 2
  %v11439 = vsel %vm3391, %v11436, %v11438
  %v11440 = vrot.slane %v11299, 2
  %v11441 = vsel %vm3391, %v11438, %v11440
  %v11442 = vrot.slane %v11300, 2
  %v11443 = vsel %vm3391, %v11440, %v11442
  %v11444 = vrot.slane %v11301, 2
  %v11445 = vsel %vm3391, %v11442, %v11444
  %v11446 = vrot.slane %v11302, 2
  %v11447 = vsel %vm3391, %v11444, %v11446
  %v11448 = vrot.slane %v11303, 2
  %v11449 = vsel %vm3391, %v11446, %v11448
  %v11450 = vrot.slane %v11304, 2
  %v11451 = vsel %vm3391, %v11448, %v11450
  %v11452 = vrot.slane %v11305, 2
  %v11453 = vsel %vm3391, %v11450, %v11452
  %v11454 = vrot.slane %v11306, 2
  %v11455 = vsel %vm3391, %v11452, %v11454
  %v11456 = vrot.slane %v11307, 2
  %v11457 = vsel %vm3391, %v11454, %v11456
  %v11458 = vrot.slane %v11308, 2
  %v11459 = vsel %vm3391, %v11456, %v11458
  %v11460 = vrot.slane %v11309, 2
  %v11461 = vsel %vm3391, %v11458, %v11460
  %v11462 = vrot.slane %v11310, 2
  %v11463 = vsel %vm3391, %v11460, %v11462
  %v11464 = vrot.slane %v11311, 2
  %v11465 = vsel %vm3391, %v11462, %v11464
  %v11466 = vrot.slane %v11312, 2
  %v11467 = vsel %vm3391, %v11464, %v11466
  %v11468 = vrot.slane %v11313, 2
  %v11469 = vsel %vm3391, %v11466, %v11468
  %v11470 = vrot.slane %v11314, 2
  %v11471 = vsel %vm3391, %v11468, %v11470
  %v11472 = vrot.slane %v11315, 2
  %v11473 = vsel %vm3391, %v11470, %v11472
  %v11474 = vrot.slane %v11316, 2
  %v11475 = vsel %vm3391, %v11472, %v11474
  %v11476 = vrot.slane %v11317, 2
  %v11477 = vsel %vm3391, %v11474, %v11476
  %v11478 = vrot.slane %v11318, 2
  %v11479 = vsel %vm3391, %v11476, %v11478
  %v11480 = vrot.slane %v11319, 2
  %v11481 = vsel %vm3391, %v11478, %v11480
  %v11482 = vrot.slane %v11320, 2
  %v11483 = vsel %vm3391, %v11480, %v11482
  %v11484 = vrot.slane %v11321, 2
  %v11485 = vsel %vm3391, %v11482, %v11484
  %v11486 = vrot.slane %v11322, 2
  %v11487 = vsel %vm3391, %v11484, %v11486
  %v11488 = vrot.slane %v11323, 2
  %v11489 = vsel %vm3391, %v11486, %v11488
  %v11490 = vrot.slane %v11324, 2
  %v11491 = vsel %vm3391, %v11488, %v11490
  %v11492 = vrot.slane %v11325, 2
  %v11493 = vsel %vm3391, %v11490, %v11492
  %v11494 = vrot.slane %v11326, 2
  %v11495 = vsel %vm3391, %v11492, %v11494
  %v11496 = vrot.slane %v11327, 2
  %v11497 = vsel %vm3391, %v11494, %v11496
  %v11498 = vrot.slane %v11328, 2
  %v11499 = vsel %vm3391, %v11496, %v11498
  %v11500 = vrot.slane %v11329, 2
  %v11501 = vsel %vm3391, %v11498, %v11500
  %v11502 = vrot.slane %v11330, 2
  %v11503 = vsel %vm3391, %v11500, %v11502
  %v11504 = vrot.slane %v11331, 2
  %v11505 = vsel %vm3391, %v11502, %v11504
  %v11506 = vrot.slane %v11332, 2
  %v11507 = vsel %vm3391, %v11504, %v11506
  %v11508 = vrot.slane %v11333, 2
  %v11509 = vsel %vm3391, %v11506, %v11508
  %v11510 = vrot.slane %v11334, 2
  %v11511 = vsel %vm3391, %v11508, %v11510
  %v11512 = vrot.slane %v11335, 2
  %v11513 = vsel %vm3391, %v11510, %v11512
  %v11514 = vrot.slane %v11336, 2
  %v11515 = vsel %vm3391, %v11512, %v11514
  %v11516 = vrot.slane %v11337, 2
  %v11517 = vsel %vm3391, %v11514, %v11516
  %v11518 = vrot.slane %v11338, 2
  %v11519 = vsel %vm3391, %v11516, %v11518
  %v11520 = vrot.slane %v11339, 2
  %v11521 = vsel %vm3391, %v11518, %v11520
  %v11522 = vrot.slane %v11340, 2
  %v11523 = vsel %vm3391, %v11520, %v11522
  %v11524 = vrot.slane %v11341, 2
  %v11525 = vsel %vm3391, %v11522, %v11524
  %v11526 = vrot.slane %v11342, 2
  %v11527 = vsel %vm3391, %v11524, %v11526
  %v11528 = vrot.slane %v11343, 2
  %v11529 = vsel %vm3391, %v11526, %v11528
  %v11530 = vrot.slane %v11344, 2
  %v11531 = vsel %vm3391, %v11528, %v11530
  %v11532 = vrot.slane %v11345, 2
  %v11533 = vsel %vm3391, %v11530, %v11532
  %v11534 = vrot.slane %v11346, 2
  %v11535 = vsel %vm3391, %v11532, %v11534
  %11536 = vrot.lane.b32.xlu0 %v11411, 120
  %v11537 = vpop.permute.xlu0 %11536
  %11538 = vrot.lane.b32.xlu0 %v11413, 120
  %v11539 = vpop.permute.xlu0 %11538
  %11540 = vrot.lane.b32.xlu0 %v11415, 120
  %v11541 = vpop.permute.xlu0 %11540
  %11542 = vrot.lane.b32.xlu0 %v11417, 120
  %v11543 = vpop.permute.xlu0 %11542
  %11544 = vrot.lane.b32.xlu0 %v11419, 120
  %v11545 = vpop.permute.xlu0 %11544
  %11546 = vrot.lane.b32.xlu0 %v11421, 120
  %v11547 = vpop.permute.xlu0 %11546
  %11548 = vrot.lane.b32.xlu0 %v11423, 120
  %v11549 = vpop.permute.xlu0 %11548
  %11550 = vrot.lane.b32.xlu0 %v11425, 120
  %v11551 = vpop.permute.xlu0 %11550
  %11552 = vrot.lane.b32.xlu0 %v11427, 120
  %v11553 = vpop.permute.xlu0 %11552
  %11554 = vrot.lane.b32.xlu0 %v11429, 120
  %v11555 = vpop.permute.xlu0 %11554
  %11556 = vrot.lane.b32.xlu0 %v11431, 120
  %v11557 = vpop.permute.xlu0 %11556
  %11558 = vrot.lane.b32.xlu0 %v11433, 120
  %v11559 = vpop.permute.xlu0 %11558
  %11560 = vrot.lane.b32.xlu0 %v11435, 120
  %v11561 = vpop.permute.xlu0 %11560
  %11562 = vrot.lane.b32.xlu0 %v11437, 120
  %v11563 = vpop.permute.xlu0 %11562
  %11564 = vrot.lane.b32.xlu0 %v11439, 120
  %v11565 = vpop.permute.xlu0 %11564
  %11566 = vrot.lane.b32.xlu0 %v11441, 120
  %v11567 = vpop.permute.xlu0 %11566
  %11568 = vrot.lane.b32.xlu0 %v11443, 120
  %v11569 = vpop.permute.xlu0 %11568
  %11570 = vrot.lane.b32.xlu0 %v11445, 120
  %v11571 = vpop.permute.xlu0 %11570
  %11572 = vrot.lane.b32.xlu0 %v11447, 120
  %v11573 = vpop.permute.xlu0 %11572
  %11574 = vrot.lane.b32.xlu0 %v11449, 120
  %v11575 = vpop.permute.xlu0 %11574
  %11576 = vrot.lane.b32.xlu0 %v11451, 120
  %v11577 = vpop.permute.xlu0 %11576
  %11578 = vrot.lane.b32.xlu0 %v11453, 120
  %v11579 = vpop.permute.xlu0 %11578
  %11580 = vrot.lane.b32.xlu0 %v11455, 120
  %v11581 = vpop.permute.xlu0 %11580
  %11582 = vrot.lane.b32.xlu0 %v11457, 120
  %v11583 = vpop.permute.xlu0 %11582
  %11584 = vrot.lane.b32.xlu0 %v11459, 120
  %v11585 = vpop.permute.xlu0 %11584
  %11586 = vrot.lane.b32.xlu0 %v11461, 120
  %v11587 = vpop.permute.xlu0 %11586
  %11588 = vrot.lane.b32.xlu0 %v11463, 120
  %v11589 = vpop.permute.xlu0 %11588
  %11590 = vrot.lane.b32.xlu0 %v11465, 120
  %v11591 = vpop.permute.xlu0 %11590
  %11592 = vrot.lane.b32.xlu0 %v11467, 120
  %v11593 = vpop.permute.xlu0 %11592
  %11594 = vrot.lane.b32.xlu0 %v11469, 120
  %v11595 = vpop.permute.xlu0 %11594
  %11596 = vrot.lane.b32.xlu0 %v11471, 120
  %v11597 = vpop.permute.xlu0 %11596
  %11598 = vrot.lane.b32.xlu0 %v11473, 120
  %v11599 = vpop.permute.xlu0 %11598
  %11600 = vrot.lane.b32.xlu0 %v11475, 120
  %v11601 = vpop.permute.xlu0 %11600
  %11602 = vrot.lane.b32.xlu0 %v11477, 120
  %v11603 = vpop.permute.xlu0 %11602
  %11604 = vrot.lane.b32.xlu0 %v11479, 120
  %v11605 = vpop.permute.xlu0 %11604
  %11606 = vrot.lane.b32.xlu0 %v11481, 120
  %v11607 = vpop.permute.xlu0 %11606
  %11608 = vrot.lane.b32.xlu0 %v11483, 120
  %v11609 = vpop.permute.xlu0 %11608
  %11610 = vrot.lane.b32.xlu0 %v11485, 120
  %v11611 = vpop.permute.xlu0 %11610
  %11612 = vrot.lane.b32.xlu0 %v11487, 120
  %v11613 = vpop.permute.xlu0 %11612
  %11614 = vrot.lane.b32.xlu0 %v11489, 120
  %v11615 = vpop.permute.xlu0 %11614
  %11616 = vrot.lane.b32.xlu0 %v11491, 120
  %v11617 = vpop.permute.xlu0 %11616
  %11618 = vrot.lane.b32.xlu0 %v11493, 120
  %v11619 = vpop.permute.xlu0 %11618
  %11620 = vrot.lane.b32.xlu0 %v11495, 120
  %v11621 = vpop.permute.xlu0 %11620
  %11622 = vrot.lane.b32.xlu0 %v11497, 120
  %v11623 = vpop.permute.xlu0 %11622
  %11624 = vrot.lane.b32.xlu0 %v11499, 120
  %v11625 = vpop.permute.xlu0 %11624
  %11626 = vrot.lane.b32.xlu0 %v11501, 120
  %v11627 = vpop.permute.xlu0 %11626
  %11628 = vrot.lane.b32.xlu0 %v11503, 120
  %v11629 = vpop.permute.xlu0 %11628
  %11630 = vrot.lane.b32.xlu0 %v11505, 120
  %v11631 = vpop.permute.xlu0 %11630
  %11632 = vrot.lane.b32.xlu0 %v11507, 120
  %v11633 = vpop.permute.xlu0 %11632
  %11634 = vrot.lane.b32.xlu0 %v11509, 120
  %v11635 = vpop.permute.xlu0 %11634
  %11636 = vrot.lane.b32.xlu0 %v11511, 120
  %v11637 = vpop.permute.xlu0 %11636
  %11638 = vrot.lane.b32.xlu0 %v11513, 120
  %v11639 = vpop.permute.xlu0 %11638
  %11640 = vrot.lane.b32.xlu0 %v11515, 120
  %v11641 = vpop.permute.xlu0 %11640
  %11642 = vrot.lane.b32.xlu0 %v11517, 120
  %v11643 = vpop.permute.xlu0 %11642
  %11644 = vrot.lane.b32.xlu0 %v11519, 120
  %v11645 = vpop.permute.xlu0 %11644
  %11646 = vrot.lane.b32.xlu0 %v11521, 120
  %v11647 = vpop.permute.xlu0 %11646
  %11648 = vrot.lane.b32.xlu0 %v11523, 120
  %v11649 = vpop.permute.xlu0 %11648
  %11650 = vrot.lane.b32.xlu0 %v11525, 120
  %v11651 = vpop.permute.xlu0 %11650
  %11652 = vrot.lane.b32.xlu0 %v11527, 120
  %v11653 = vpop.permute.xlu0 %11652
  %11654 = vrot.lane.b32.xlu0 %v11529, 120
  %v11655 = vpop.permute.xlu0 %11654
  %11656 = vrot.lane.b32.xlu0 %v11531, 120
  %v11657 = vpop.permute.xlu0 %11656
  %11658 = vrot.lane.b32.xlu0 %v11533, 120
  %v11659 = vpop.permute.xlu0 %11658
  %11660 = vrot.lane.b32.xlu0 %v11535, 120
  %v11661 = vpop.permute.xlu0 %11660
  %v11725 = vadd.f32 %v11221, %v11537
  %v11726 = vadd.f32 %v11222, %v11539
  %v11727 = vadd.f32 %v11223, %v11541
  %v11728 = vadd.f32 %v11224, %v11543
  %v11729 = vadd.f32 %v11225, %v11545
  %v11730 = vadd.f32 %v11226, %v11547
  %v11731 = vadd.f32 %v11227, %v11549
  %v11732 = vadd.f32 %v11228, %v11551
  %v11733 = vadd.f32 %v11229, %v11553
  %v11734 = vadd.f32 %v11230, %v11555
  %v11735 = vadd.f32 %v11231, %v11557
  %v11736 = vadd.f32 %v11232, %v11559
  %v11737 = vadd.f32 %v11233, %v11561
  %v11738 = vadd.f32 %v11234, %v11563
  %v11739 = vadd.f32 %v11235, %v11565
  %v11740 = vadd.f32 %v11236, %v11567
  %v11741 = vadd.f32 %v11237, %v11569
  %v11742 = vadd.f32 %v11238, %v11571
  %v11743 = vadd.f32 %v11239, %v11573
  %v11744 = vadd.f32 %v11240, %v11575
  %v11745 = vadd.f32 %v11241, %v11577
  %v11746 = vadd.f32 %v11242, %v11579
  %v11747 = vadd.f32 %v11243, %v11581
  %v11748 = vadd.f32 %v11244, %v11583
  %v11749 = vadd.f32 %v11245, %v11585
  %v11750 = vadd.f32 %v11246, %v11587
  %v11751 = vadd.f32 %v11247, %v11589
  %v11752 = vadd.f32 %v11248, %v11591
  %v11753 = vadd.f32 %v11249, %v11593
  %v11754 = vadd.f32 %v11250, %v11595
  %v11755 = vadd.f32 %v11251, %v11597
  %v11756 = vadd.f32 %v11252, %v11599
  %v11757 = vadd.f32 %v11253, %v11601
  %v11758 = vadd.f32 %v11254, %v11603
  %v11759 = vadd.f32 %v11255, %v11605
  %v11760 = vadd.f32 %v11256, %v11607
  %v11761 = vadd.f32 %v11257, %v11609
  %v11762 = vadd.f32 %v11258, %v11611
  %v11763 = vadd.f32 %v11259, %v11613
  %v11764 = vadd.f32 %v11260, %v11615
  %v11765 = vadd.f32 %v11261, %v11617
  %v11766 = vadd.f32 %v11262, %v11619
  %v11767 = vadd.f32 %v11263, %v11621
  %v11768 = vadd.f32 %v11264, %v11623
  %v11769 = vadd.f32 %v11265, %v11625
  %v11770 = vadd.f32 %v11266, %v11627
  %v11771 = vadd.f32 %v11267, %v11629
  %v11772 = vadd.f32 %v11268, %v11631
  %v11773 = vadd.f32 %v11269, %v11633
  %v11774 = vadd.f32 %v11270, %v11635
  %v11775 = vadd.f32 %v11271, %v11637
  %v11776 = vadd.f32 %v11272, %v11639
  %v11777 = vadd.f32 %v11273, %v11641
  %v11778 = vadd.f32 %v11274, %v11643
  %v11779 = vadd.f32 %v11275, %v11645
  %v11780 = vadd.f32 %v11276, %v11647
  %v11781 = vadd.f32 %v11277, %v11649
  %v11782 = vadd.f32 %v11278, %v11651
  %v11783 = vadd.f32 %v11279, %v11653
  %v11784 = vadd.f32 %v11280, %v11655
  %v11785 = vadd.f32 %v11281, %v11657
  %v11786 = vadd.f32 %v11282, %v11659
  %v11787 = vadd.f32 %v11283, %v11661
  %v11788 = vmul.f32 %v10406, %v3975
  %v11789 = vmul.f32 %v10409, %v3977
  %v11790 = vmul.f32 %v10414, %v3979
  %v11791 = vmul.f32 %v10417, %v3981
  %v11792 = vmul.f32 %v10422, %v3983
  %v11793 = vmul.f32 %v10425, %v3985
  %v11794 = vmul.f32 %v10430, %v3987
  %v11795 = vmul.f32 %v10433, %v3989
  %v11796 = vmul.f32 %v10438, %v3991
  %v11797 = vmul.f32 %v10441, %v3993
  %v11798 = vmul.f32 %v10446, %v3995
  %v11799 = vmul.f32 %v10449, %v3997
  %v11800 = vmul.f32 %v10454, %v3999
  %v11801 = vmul.f32 %v10457, %v4001
  %v11802 = vmul.f32 %v10462, %v4003
  %v11803 = vmul.f32 %v10465, %v4005
  %v11804 = vmul.f32 %v10470, %v4007
  %v11805 = vmul.f32 %v10473, %v4009
  %v11806 = vmul.f32 %v10478, %v4011
  %v11807 = vmul.f32 %v10481, %v4013
  %v11808 = vmul.f32 %v10486, %v4015
  %v11809 = vmul.f32 %v10489, %v4017
  %v11810 = vmul.f32 %v10494, %v4019
  %v11811 = vmul.f32 %v10497, %v4021
  %v11812 = vmul.f32 %v10502, %v4023
  %v11813 = vmul.f32 %v10505, %v4025
  %v11814 = vmul.f32 %v10510, %v4027
  %v11815 = vmul.f32 %v10513, %v4029
  %v11816 = vmul.f32 %v10518, %v4031
  %v11817 = vmul.f32 %v10521, %v4033
  %v11818 = vmul.f32 %v10526, %v4035
  %v11819 = vmul.f32 %v10529, %v4037
  %v11820 = vmul.f32 %v10534, %v4039
  %v11821 = vmul.f32 %v10537, %v4041
  %v11822 = vmul.f32 %v10542, %v4043
  %v11823 = vmul.f32 %v10545, %v4045
  %v11824 = vmul.f32 %v10550, %v4047
  %v11825 = vmul.f32 %v10553, %v4049
  %v11826 = vmul.f32 %v10558, %v4051
  %v11827 = vmul.f32 %v10561, %v4053
  %v11828 = vmul.f32 %v10566, %v4055
  %v11829 = vmul.f32 %v10569, %v4057
  %v11830 = vmul.f32 %v10574, %v4059
  %v11831 = vmul.f32 %v10577, %v4061
  %v11832 = vmul.f32 %v10582, %v4063
  %v11833 = vmul.f32 %v10585, %v4065
  %v11834 = vmul.f32 %v10590, %v4067
  %v11835 = vmul.f32 %v10593, %v4069
  %v11836 = vmul.f32 %v10598, %v4071
  %v11837 = vmul.f32 %v10601, %v4073
  %v11838 = vmul.f32 %v10606, %v4075
  %v11839 = vmul.f32 %v10609, %v4077
  %v11840 = vmul.f32 %v10614, %v4079
  %v11841 = vmul.f32 %v10617, %v4081
  %v11842 = vmul.f32 %v10622, %v4083
  %v11843 = vmul.f32 %v10625, %v4085
  %v11844 = vmul.f32 %v10630, %v4087
  %v11845 = vmul.f32 %v10633, %v4089
  %v11846 = vmul.f32 %v10638, %v4091
  %v11847 = vmul.f32 %v10641, %v4093
  %v11848 = vmul.f32 %v10646, %v4095
  %v11849 = vmul.f32 %v10649, %v4097
  %v11850 = vmul.f32 %v10654, %v4099
  %v11851 = vmul.f32 %v10657, %v4098
  %11916 = vrot.lane.b32.xlu0 %v11788, 116
  %v11917 = vpop.permute.xlu0 %11916
  %11918 = vrot.lane.b32.xlu0 %v11789, 116
  %v11919 = vpop.permute.xlu0 %11918
  %11920 = vrot.lane.b32.xlu0 %v11790, 116
  %v11921 = vpop.permute.xlu0 %11920
  %11922 = vrot.lane.b32.xlu0 %v11791, 116
  %v11923 = vpop.permute.xlu0 %11922
  %11924 = vrot.lane.b32.xlu0 %v11792, 116
  %v11925 = vpop.permute.xlu0 %11924
  %11926 = vrot.lane.b32.xlu0 %v11793, 116
  %v11927 = vpop.permute.xlu0 %11926
  %11928 = vrot.lane.b32.xlu0 %v11794, 116
  %v11929 = vpop.permute.xlu0 %11928
  %11930 = vrot.lane.b32.xlu0 %v11795, 116
  %v11931 = vpop.permute.xlu0 %11930
  %11932 = vrot.lane.b32.xlu0 %v11796, 116
  %v11933 = vpop.permute.xlu0 %11932
  %11934 = vrot.lane.b32.xlu0 %v11797, 116
  %v11935 = vpop.permute.xlu0 %11934
  %11936 = vrot.lane.b32.xlu0 %v11798, 116
  %v11937 = vpop.permute.xlu0 %11936
  %11938 = vrot.lane.b32.xlu0 %v11799, 116
  %v11939 = vpop.permute.xlu0 %11938
  %11940 = vrot.lane.b32.xlu0 %v11800, 116
  %v11941 = vpop.permute.xlu0 %11940
  %11942 = vrot.lane.b32.xlu0 %v11801, 116
  %v11943 = vpop.permute.xlu0 %11942
  %11944 = vrot.lane.b32.xlu0 %v11802, 116
  %v11945 = vpop.permute.xlu0 %11944
  %11946 = vrot.lane.b32.xlu0 %v11803, 116
  %v11947 = vpop.permute.xlu0 %11946
  %11948 = vrot.lane.b32.xlu0 %v11804, 116
  %v11949 = vpop.permute.xlu0 %11948
  %11950 = vrot.lane.b32.xlu0 %v11805, 116
  %v11951 = vpop.permute.xlu0 %11950
  %11952 = vrot.lane.b32.xlu0 %v11806, 116
  %v11953 = vpop.permute.xlu0 %11952
  %11954 = vrot.lane.b32.xlu0 %v11807, 116
  %v11955 = vpop.permute.xlu0 %11954
  %11956 = vrot.lane.b32.xlu0 %v11808, 116
  %v11957 = vpop.permute.xlu0 %11956
  %11958 = vrot.lane.b32.xlu0 %v11809, 116
  %v11959 = vpop.permute.xlu0 %11958
  %11960 = vrot.lane.b32.xlu0 %v11810, 116
  %v11961 = vpop.permute.xlu0 %11960
  %11962 = vrot.lane.b32.xlu0 %v11811, 116
  %v11963 = vpop.permute.xlu0 %11962
  %11964 = vrot.lane.b32.xlu0 %v11812, 116
  %v11965 = vpop.permute.xlu0 %11964
  %11966 = vrot.lane.b32.xlu0 %v11813, 116
  %v11967 = vpop.permute.xlu0 %11966
  %11968 = vrot.lane.b32.xlu0 %v11814, 116
  %v11969 = vpop.permute.xlu0 %11968
  %11970 = vrot.lane.b32.xlu0 %v11815, 116
  %v11971 = vpop.permute.xlu0 %11970
  %11972 = vrot.lane.b32.xlu0 %v11816, 116
  %v11973 = vpop.permute.xlu0 %11972
  %11974 = vrot.lane.b32.xlu0 %v11817, 116
  %v11975 = vpop.permute.xlu0 %11974
  %11976 = vrot.lane.b32.xlu0 %v11818, 116
  %v11977 = vpop.permute.xlu0 %11976
  %11978 = vrot.lane.b32.xlu0 %v11819, 116
  %v11979 = vpop.permute.xlu0 %11978
  %11980 = vrot.lane.b32.xlu0 %v11820, 116
  %v11981 = vpop.permute.xlu0 %11980
  %11982 = vrot.lane.b32.xlu0 %v11821, 116
  %v11983 = vpop.permute.xlu0 %11982
  %11984 = vrot.lane.b32.xlu0 %v11822, 116
  %v11985 = vpop.permute.xlu0 %11984
  %11986 = vrot.lane.b32.xlu0 %v11823, 116
  %v11987 = vpop.permute.xlu0 %11986
  %11988 = vrot.lane.b32.xlu0 %v11824, 116
  %v11989 = vpop.permute.xlu0 %11988
  %11990 = vrot.lane.b32.xlu0 %v11825, 116
  %v11991 = vpop.permute.xlu0 %11990
  %11992 = vrot.lane.b32.xlu0 %v11826, 116
  %v11993 = vpop.permute.xlu0 %11992
  %11994 = vrot.lane.b32.xlu0 %v11827, 116
  %v11995 = vpop.permute.xlu0 %11994
  %11996 = vrot.lane.b32.xlu0 %v11828, 116
  %v11997 = vpop.permute.xlu0 %11996
  %11998 = vrot.lane.b32.xlu0 %v11829, 116
  %v11999 = vpop.permute.xlu0 %11998
  %12000 = vrot.lane.b32.xlu0 %v11830, 116
  %v12001 = vpop.permute.xlu0 %12000
  %12002 = vrot.lane.b32.xlu0 %v11831, 116
  %v12003 = vpop.permute.xlu0 %12002
  %12004 = vrot.lane.b32.xlu0 %v11832, 116
  %v12005 = vpop.permute.xlu0 %12004
  %12006 = vrot.lane.b32.xlu0 %v11833, 116
  %v12007 = vpop.permute.xlu0 %12006
  %12008 = vrot.lane.b32.xlu0 %v11834, 116
  %v12009 = vpop.permute.xlu0 %12008
  %12010 = vrot.lane.b32.xlu0 %v11835, 116
  %v12011 = vpop.permute.xlu0 %12010
  %12012 = vrot.lane.b32.xlu0 %v11836, 116
  %v12013 = vpop.permute.xlu0 %12012
  %12014 = vrot.lane.b32.xlu0 %v11837, 116
  %v12015 = vpop.permute.xlu0 %12014
  %12016 = vrot.lane.b32.xlu0 %v11838, 116
  %v12017 = vpop.permute.xlu0 %12016
  %12018 = vrot.lane.b32.xlu0 %v11839, 116
  %v12019 = vpop.permute.xlu0 %12018
  %12020 = vrot.lane.b32.xlu0 %v11840, 116
  %v12021 = vpop.permute.xlu0 %12020
  %12022 = vrot.lane.b32.xlu0 %v11841, 116
  %v12023 = vpop.permute.xlu0 %12022
  %12024 = vrot.lane.b32.xlu0 %v11842, 116
  %v12025 = vpop.permute.xlu0 %12024
  %12026 = vrot.lane.b32.xlu0 %v11843, 116
  %v12027 = vpop.permute.xlu0 %12026
  %12028 = vrot.lane.b32.xlu0 %v11844, 116
  %v12029 = vpop.permute.xlu0 %12028
  %12030 = vrot.lane.b32.xlu0 %v11845, 116
  %v12031 = vpop.permute.xlu0 %12030
  %12032 = vrot.lane.b32.xlu0 %v11846, 116
  %v12033 = vpop.permute.xlu0 %12032
  %12034 = vrot.lane.b32.xlu0 %v11847, 116
  %v12035 = vpop.permute.xlu0 %12034
  %12036 = vrot.lane.b32.xlu0 %v11848, 116
  %v12037 = vpop.permute.xlu0 %12036
  %12038 = vrot.lane.b32.xlu0 %v11849, 116
  %v12039 = vpop.permute.xlu0 %12038
  %12040 = vrot.lane.b32.xlu0 %v11850, 116
  %v12041 = vpop.permute.xlu0 %12040
  %12042 = vrot.lane.b32.xlu0 %v11851, 116
  %v12043 = vpop.permute.xlu0 %12042
  %v12108 = vadd.f32 %v3717, %v11917
  %v12109 = vadd.f32 %v11725, %v11919
  %v12110 = vadd.f32 %v11726, %v11921
  %v12111 = vadd.f32 %v11727, %v11923
  %v12112 = vadd.f32 %v11728, %v11925
  %v12113 = vadd.f32 %v11729, %v11927
  %v12114 = vadd.f32 %v11730, %v11929
  %v12115 = vadd.f32 %v11731, %v11931
  %v12116 = vadd.f32 %v11732, %v11933
  %v12117 = vadd.f32 %v11733, %v11935
  %v12118 = vadd.f32 %v11734, %v11937
  %v12119 = vadd.f32 %v11735, %v11939
  %v12120 = vadd.f32 %v11736, %v11941
  %v12121 = vadd.f32 %v11737, %v11943
  %v12122 = vadd.f32 %v11738, %v11945
  %v12123 = vadd.f32 %v11739, %v11947
  %v12124 = vadd.f32 %v11740, %v11949
  %v12125 = vadd.f32 %v11741, %v11951
  %v12126 = vadd.f32 %v11742, %v11953
  %v12127 = vadd.f32 %v11743, %v11955
  %v12128 = vadd.f32 %v11744, %v11957
  %v12129 = vadd.f32 %v11745, %v11959
  %v12130 = vadd.f32 %v11746, %v11961
  %v12131 = vadd.f32 %v11747, %v11963
  %v12132 = vadd.f32 %v11748, %v11965
  %v12133 = vadd.f32 %v11749, %v11967
  %v12134 = vadd.f32 %v11750, %v11969
  %v12135 = vadd.f32 %v11751, %v11971
  %v12136 = vadd.f32 %v11752, %v11973
  %v12137 = vadd.f32 %v11753, %v11975
  %v12138 = vadd.f32 %v11754, %v11977
  %v12139 = vadd.f32 %v11755, %v11979
  %v12140 = vadd.f32 %v11756, %v11981
  %v12141 = vadd.f32 %v11757, %v11983
  %v12142 = vadd.f32 %v11758, %v11985
  %v12143 = vadd.f32 %v11759, %v11987
  %v12144 = vadd.f32 %v11760, %v11989
  %v12145 = vadd.f32 %v11761, %v11991
  %v12146 = vadd.f32 %v11762, %v11993
  %v12147 = vadd.f32 %v11763, %v11995
  %v12148 = vadd.f32 %v11764, %v11997
  %v12149 = vadd.f32 %v11765, %v11999
  %v12150 = vadd.f32 %v11766, %v12001
  %v12151 = vadd.f32 %v11767, %v12003
  %v12152 = vadd.f32 %v11768, %v12005
  %v12153 = vadd.f32 %v11769, %v12007
  %v12154 = vadd.f32 %v11770, %v12009
  %v12155 = vadd.f32 %v11771, %v12011
  %v12156 = vadd.f32 %v11772, %v12013
  %v12157 = vadd.f32 %v11773, %v12015
  %v12158 = vadd.f32 %v11774, %v12017
  %v12159 = vadd.f32 %v11775, %v12019
  %v12160 = vadd.f32 %v11776, %v12021
  %v12161 = vadd.f32 %v11777, %v12023
  %v12162 = vadd.f32 %v11778, %v12025
  %v12163 = vadd.f32 %v11779, %v12027
  %v12164 = vadd.f32 %v11780, %v12029
  %v12165 = vadd.f32 %v11781, %v12031
  %v12166 = vadd.f32 %v11782, %v12033
  %v12167 = vadd.f32 %v11783, %v12035
  %v12168 = vadd.f32 %v11784, %v12037
  %v12169 = vadd.f32 %v11785, %v12039
  %v12170 = vadd.f32 %v11786, %v12041
  %v12171 = vadd.f32 %v11787, %v12043
  %v12172 = vmul.f32 %v10406, %v4557
  %v12173 = vmul.f32 %v10409, %v4561
  %v12174 = vmul.f32 %v10414, %v4565
  %v12175 = vmul.f32 %v10417, %v4569
  %v12176 = vmul.f32 %v10422, %v4573
  %v12177 = vmul.f32 %v10425, %v4577
  %v12178 = vmul.f32 %v10430, %v4581
  %v12179 = vmul.f32 %v10433, %v4585
  %v12180 = vmul.f32 %v10438, %v4589
  %v12181 = vmul.f32 %v10441, %v4593
  %v12182 = vmul.f32 %v10446, %v4597
  %v12183 = vmul.f32 %v10449, %v4601
  %v12184 = vmul.f32 %v10454, %v4605
  %v12185 = vmul.f32 %v10457, %v4609
  %v12186 = vmul.f32 %v10462, %v4613
  %v12187 = vmul.f32 %v10465, %v4617
  %v12188 = vmul.f32 %v10470, %v4621
  %v12189 = vmul.f32 %v10473, %v4625
  %v12190 = vmul.f32 %v10478, %v4629
  %v12191 = vmul.f32 %v10481, %v4633
  %v12192 = vmul.f32 %v10486, %v4637
  %v12193 = vmul.f32 %v10489, %v4641
  %v12194 = vmul.f32 %v10494, %v4645
  %v12195 = vmul.f32 %v10497, %v4649
  %v12196 = vmul.f32 %v10502, %v4653
  %v12197 = vmul.f32 %v10505, %v4657
  %v12198 = vmul.f32 %v10510, %v4661
  %v12199 = vmul.f32 %v10513, %v4665
  %v12200 = vmul.f32 %v10518, %v4669
  %v12201 = vmul.f32 %v10521, %v4673
  %v12202 = vmul.f32 %v10526, %v4677
  %v12203 = vmul.f32 %v10529, %v4681
  %v12204 = vmul.f32 %v10534, %v4685
  %v12205 = vmul.f32 %v10537, %v4689
  %v12206 = vmul.f32 %v10542, %v4693
  %v12207 = vmul.f32 %v10545, %v4697
  %v12208 = vmul.f32 %v10550, %v4701
  %v12209 = vmul.f32 %v10553, %v4705
  %v12210 = vmul.f32 %v10558, %v4709
  %v12211 = vmul.f32 %v10561, %v4713
  %v12212 = vmul.f32 %v10566, %v4717
  %v12213 = vmul.f32 %v10569, %v4721
  %v12214 = vmul.f32 %v10574, %v4725
  %v12215 = vmul.f32 %v10577, %v4729
  %v12216 = vmul.f32 %v10582, %v4733
  %v12217 = vmul.f32 %v10585, %v4737
  %v12218 = vmul.f32 %v10590, %v4741
  %v12219 = vmul.f32 %v10593, %v4745
  %v12220 = vmul.f32 %v10598, %v4749
  %v12221 = vmul.f32 %v10601, %v4753
  %v12222 = vmul.f32 %v10606, %v4757
  %v12223 = vmul.f32 %v10609, %v4761
  %v12224 = vmul.f32 %v10614, %v4765
  %v12225 = vmul.f32 %v10617, %v4769
  %v12226 = vmul.f32 %v10622, %v4773
  %v12227 = vmul.f32 %v10625, %v4777
  %v12228 = vmul.f32 %v10630, %v4781
  %v12229 = vmul.f32 %v10633, %v4785
  %v12230 = vmul.f32 %v10638, %v4789
  %v12231 = vmul.f32 %v10641, %v4793
  %v12232 = vmul.f32 %v10646, %v4797
  %v12233 = vmul.f32 %v10649, %v4801
  %v12234 = vmul.f32 %v10654, %v4805
  %v12235 = vmul.f32 %v10657, %v4809
  %v12300 = vrot.slane %v12172, 1
  %v12301 = vrot.slane %v12173, 1
  %v12302 = vsel %vm1782, %v12300, %v12301
  %v12303 = vrot.slane %v12174, 1
  %v12304 = vsel %vm1782, %v12301, %v12303
  %v12305 = vrot.slane %v12175, 1
  %v12306 = vsel %vm1782, %v12303, %v12305
  %v12307 = vrot.slane %v12176, 1
  %v12308 = vsel %vm1782, %v12305, %v12307
  %v12309 = vrot.slane %v12177, 1
  %v12310 = vsel %vm1782, %v12307, %v12309
  %v12311 = vrot.slane %v12178, 1
  %v12312 = vsel %vm1782, %v12309, %v12311
  %v12313 = vrot.slane %v12179, 1
  %v12314 = vsel %vm1782, %v12311, %v12313
  %v12315 = vrot.slane %v12180, 1
  %v12316 = vsel %vm1782, %v12313, %v12315
  %v12317 = vrot.slane %v12181, 1
  %v12318 = vsel %vm1782, %v12315, %v12317
  %v12319 = vrot.slane %v12182, 1
  %v12320 = vsel %vm1782, %v12317, %v12319
  %v12321 = vrot.slane %v12183, 1
  %v12322 = vsel %vm1782, %v12319, %v12321
  %v12323 = vrot.slane %v12184, 1
  %v12324 = vsel %vm1782, %v12321, %v12323
  %v12325 = vrot.slane %v12185, 1
  %v12326 = vsel %vm1782, %v12323, %v12325
  %v12327 = vrot.slane %v12186, 1
  %v12328 = vsel %vm1782, %v12325, %v12327
  %v12329 = vrot.slane %v12187, 1
  %v12330 = vsel %vm1782, %v12327, %v12329
  %v12331 = vrot.slane %v12188, 1
  %v12332 = vsel %vm1782, %v12329, %v12331
  %v12333 = vrot.slane %v12189, 1
  %v12334 = vsel %vm1782, %v12331, %v12333
  %v12335 = vrot.slane %v12190, 1
  %v12336 = vsel %vm1782, %v12333, %v12335
  %v12337 = vrot.slane %v12191, 1
  %v12338 = vsel %vm1782, %v12335, %v12337
  %v12339 = vrot.slane %v12192, 1
  %v12340 = vsel %vm1782, %v12337, %v12339
  %v12341 = vrot.slane %v12193, 1
  %v12342 = vsel %vm1782, %v12339, %v12341
  %v12343 = vrot.slane %v12194, 1
  %v12344 = vsel %vm1782, %v12341, %v12343
  %v12345 = vrot.slane %v12195, 1
  %v12346 = vsel %vm1782, %v12343, %v12345
  %v12347 = vrot.slane %v12196, 1
  %v12348 = vsel %vm1782, %v12345, %v12347
  %v12349 = vrot.slane %v12197, 1
  %v12350 = vsel %vm1782, %v12347, %v12349
  %v12351 = vrot.slane %v12198, 1
  %v12352 = vsel %vm1782, %v12349, %v12351
  %v12353 = vrot.slane %v12199, 1
  %v12354 = vsel %vm1782, %v12351, %v12353
  %v12355 = vrot.slane %v12200, 1
  %v12356 = vsel %vm1782, %v12353, %v12355
  %v12357 = vrot.slane %v12201, 1
  %v12358 = vsel %vm1782, %v12355, %v12357
  %v12359 = vrot.slane %v12202, 1
  %v12360 = vsel %vm1782, %v12357, %v12359
  %v12361 = vrot.slane %v12203, 1
  %v12362 = vsel %vm1782, %v12359, %v12361
  %v12363 = vrot.slane %v12204, 1
  %v12364 = vsel %vm1782, %v12361, %v12363
  %v12365 = vrot.slane %v12205, 1
  %v12366 = vsel %vm1782, %v12363, %v12365
  %v12367 = vrot.slane %v12206, 1
  %v12368 = vsel %vm1782, %v12365, %v12367
  %v12369 = vrot.slane %v12207, 1
  %v12370 = vsel %vm1782, %v12367, %v12369
  %v12371 = vrot.slane %v12208, 1
  %v12372 = vsel %vm1782, %v12369, %v12371
  %v12373 = vrot.slane %v12209, 1
  %v12374 = vsel %vm1782, %v12371, %v12373
  %v12375 = vrot.slane %v12210, 1
  %v12376 = vsel %vm1782, %v12373, %v12375
  %v12377 = vrot.slane %v12211, 1
  %v12378 = vsel %vm1782, %v12375, %v12377
  %v12379 = vrot.slane %v12212, 1
  %v12380 = vsel %vm1782, %v12377, %v12379
  %v12381 = vrot.slane %v12213, 1
  %v12382 = vsel %vm1782, %v12379, %v12381
  %v12383 = vrot.slane %v12214, 1
  %v12384 = vsel %vm1782, %v12381, %v12383
  %v12385 = vrot.slane %v12215, 1
  %v12386 = vsel %vm1782, %v12383, %v12385
  %v12387 = vrot.slane %v12216, 1
  %v12388 = vsel %vm1782, %v12385, %v12387
  %v12389 = vrot.slane %v12217, 1
  %v12390 = vsel %vm1782, %v12387, %v12389
  %v12391 = vrot.slane %v12218, 1
  %v12392 = vsel %vm1782, %v12389, %v12391
  %v12393 = vrot.slane %v12219, 1
  %v12394 = vsel %vm1782, %v12391, %v12393
  %v12395 = vrot.slane %v12220, 1
  %v12396 = vsel %vm1782, %v12393, %v12395
  %v12397 = vrot.slane %v12221, 1
  %v12398 = vsel %vm1782, %v12395, %v12397
  %v12399 = vrot.slane %v12222, 1
  %v12400 = vsel %vm1782, %v12397, %v12399
  %v12401 = vrot.slane %v12223, 1
  %v12402 = vsel %vm1782, %v12399, %v12401
  %v12403 = vrot.slane %v12224, 1
  %v12404 = vsel %vm1782, %v12401, %v12403
  %v12405 = vrot.slane %v12225, 1
  %v12406 = vsel %vm1782, %v12403, %v12405
  %v12407 = vrot.slane %v12226, 1
  %v12408 = vsel %vm1782, %v12405, %v12407
  %v12409 = vrot.slane %v12227, 1
  %v12410 = vsel %vm1782, %v12407, %v12409
  %v12411 = vrot.slane %v12228, 1
  %v12412 = vsel %vm1782, %v12409, %v12411
  %v12413 = vrot.slane %v12229, 1
  %v12414 = vsel %vm1782, %v12411, %v12413
  %v12415 = vrot.slane %v12230, 1
  %v12416 = vsel %vm1782, %v12413, %v12415
  %v12417 = vrot.slane %v12231, 1
  %v12418 = vsel %vm1782, %v12415, %v12417
  %v12419 = vrot.slane %v12232, 1
  %v12420 = vsel %vm1782, %v12417, %v12419
  %v12421 = vrot.slane %v12233, 1
  %v12422 = vsel %vm1782, %v12419, %v12421
  %v12423 = vrot.slane %v12234, 1
  %v12424 = vsel %vm1782, %v12421, %v12423
  %v12425 = vrot.slane %v12235, 1
  %v12426 = vsel %vm1782, %v12423, %v12425
  %12427 = vrot.lane.b32.xlu0 %v12300, 112
  %v12428 = vpop.permute.xlu0 %12427
  %12429 = vrot.lane.b32.xlu0 %v12302, 112
  %v12430 = vpop.permute.xlu0 %12429
  %12431 = vrot.lane.b32.xlu0 %v12304, 112
  %v12432 = vpop.permute.xlu0 %12431
  %12433 = vrot.lane.b32.xlu0 %v12306, 112
  %v12434 = vpop.permute.xlu0 %12433
  %12435 = vrot.lane.b32.xlu0 %v12308, 112
  %v12436 = vpop.permute.xlu0 %12435
  %12437 = vrot.lane.b32.xlu0 %v12310, 112
  %v12438 = vpop.permute.xlu0 %12437
  %12439 = vrot.lane.b32.xlu0 %v12312, 112
  %v12440 = vpop.permute.xlu0 %12439
  %12441 = vrot.lane.b32.xlu0 %v12314, 112
  %v12442 = vpop.permute.xlu0 %12441
  %12443 = vrot.lane.b32.xlu0 %v12316, 112
  %v12444 = vpop.permute.xlu0 %12443
  %12445 = vrot.lane.b32.xlu0 %v12318, 112
  %v12446 = vpop.permute.xlu0 %12445
  %12447 = vrot.lane.b32.xlu0 %v12320, 112
  %v12448 = vpop.permute.xlu0 %12447
  %12449 = vrot.lane.b32.xlu0 %v12322, 112
  %v12450 = vpop.permute.xlu0 %12449
  %12451 = vrot.lane.b32.xlu0 %v12324, 112
  %v12452 = vpop.permute.xlu0 %12451
  %12453 = vrot.lane.b32.xlu0 %v12326, 112
  %v12454 = vpop.permute.xlu0 %12453
  %12455 = vrot.lane.b32.xlu0 %v12328, 112
  %v12456 = vpop.permute.xlu0 %12455
  %12457 = vrot.lane.b32.xlu0 %v12330, 112
  %v12458 = vpop.permute.xlu0 %12457
  %12459 = vrot.lane.b32.xlu0 %v12332, 112
  %v12460 = vpop.permute.xlu0 %12459
  %12461 = vrot.lane.b32.xlu0 %v12334, 112
  %v12462 = vpop.permute.xlu0 %12461
  %12463 = vrot.lane.b32.xlu0 %v12336, 112
  %v12464 = vpop.permute.xlu0 %12463
  %12465 = vrot.lane.b32.xlu0 %v12338, 112
  %v12466 = vpop.permute.xlu0 %12465
  %12467 = vrot.lane.b32.xlu0 %v12340, 112
  %v12468 = vpop.permute.xlu0 %12467
  %12469 = vrot.lane.b32.xlu0 %v12342, 112
  %v12470 = vpop.permute.xlu0 %12469
  %12471 = vrot.lane.b32.xlu0 %v12344, 112
  %v12472 = vpop.permute.xlu0 %12471
  %12473 = vrot.lane.b32.xlu0 %v12346, 112
  %v12474 = vpop.permute.xlu0 %12473
  %12475 = vrot.lane.b32.xlu0 %v12348, 112
  %v12476 = vpop.permute.xlu0 %12475
  %12477 = vrot.lane.b32.xlu0 %v12350, 112
  %v12478 = vpop.permute.xlu0 %12477
  %12479 = vrot.lane.b32.xlu0 %v12352, 112
  %v12480 = vpop.permute.xlu0 %12479
  %12481 = vrot.lane.b32.xlu0 %v12354, 112
  %v12482 = vpop.permute.xlu0 %12481
  %12483 = vrot.lane.b32.xlu0 %v12356, 112
  %v12484 = vpop.permute.xlu0 %12483
  %12485 = vrot.lane.b32.xlu0 %v12358, 112
  %v12486 = vpop.permute.xlu0 %12485
  %12487 = vrot.lane.b32.xlu0 %v12360, 112
  %v12488 = vpop.permute.xlu0 %12487
  %12489 = vrot.lane.b32.xlu0 %v12362, 112
  %v12490 = vpop.permute.xlu0 %12489
  %12491 = vrot.lane.b32.xlu0 %v12364, 112
  %v12492 = vpop.permute.xlu0 %12491
  %12493 = vrot.lane.b32.xlu0 %v12366, 112
  %v12494 = vpop.permute.xlu0 %12493
  %12495 = vrot.lane.b32.xlu0 %v12368, 112
  %v12496 = vpop.permute.xlu0 %12495
  %12497 = vrot.lane.b32.xlu0 %v12370, 112
  %v12498 = vpop.permute.xlu0 %12497
  %12499 = vrot.lane.b32.xlu0 %v12372, 112
  %v12500 = vpop.permute.xlu0 %12499
  %12501 = vrot.lane.b32.xlu0 %v12374, 112
  %v12502 = vpop.permute.xlu0 %12501
  %12503 = vrot.lane.b32.xlu0 %v12376, 112
  %v12504 = vpop.permute.xlu0 %12503
  %12505 = vrot.lane.b32.xlu0 %v12378, 112
  %v12506 = vpop.permute.xlu0 %12505
  %12507 = vrot.lane.b32.xlu0 %v12380, 112
  %v12508 = vpop.permute.xlu0 %12507
  %12509 = vrot.lane.b32.xlu0 %v12382, 112
  %v12510 = vpop.permute.xlu0 %12509
  %12511 = vrot.lane.b32.xlu0 %v12384, 112
  %v12512 = vpop.permute.xlu0 %12511
  %12513 = vrot.lane.b32.xlu0 %v12386, 112
  %v12514 = vpop.permute.xlu0 %12513
  %12515 = vrot.lane.b32.xlu0 %v12388, 112
  %v12516 = vpop.permute.xlu0 %12515
  %12517 = vrot.lane.b32.xlu0 %v12390, 112
  %v12518 = vpop.permute.xlu0 %12517
  %12519 = vrot.lane.b32.xlu0 %v12392, 112
  %v12520 = vpop.permute.xlu0 %12519
  %12521 = vrot.lane.b32.xlu0 %v12394, 112
  %v12522 = vpop.permute.xlu0 %12521
  %12523 = vrot.lane.b32.xlu0 %v12396, 112
  %v12524 = vpop.permute.xlu0 %12523
  %12525 = vrot.lane.b32.xlu0 %v12398, 112
  %v12526 = vpop.permute.xlu0 %12525
  %12527 = vrot.lane.b32.xlu0 %v12400, 112
  %v12528 = vpop.permute.xlu0 %12527
  %12529 = vrot.lane.b32.xlu0 %v12402, 112
  %v12530 = vpop.permute.xlu0 %12529
  %12531 = vrot.lane.b32.xlu0 %v12404, 112
  %v12532 = vpop.permute.xlu0 %12531
  %12533 = vrot.lane.b32.xlu0 %v12406, 112
  %v12534 = vpop.permute.xlu0 %12533
  %12535 = vrot.lane.b32.xlu0 %v12408, 112
  %v12536 = vpop.permute.xlu0 %12535
  %12537 = vrot.lane.b32.xlu0 %v12410, 112
  %v12538 = vpop.permute.xlu0 %12537
  %12539 = vrot.lane.b32.xlu0 %v12412, 112
  %v12540 = vpop.permute.xlu0 %12539
  %12541 = vrot.lane.b32.xlu0 %v12414, 112
  %v12542 = vpop.permute.xlu0 %12541
  %12543 = vrot.lane.b32.xlu0 %v12416, 112
  %v12544 = vpop.permute.xlu0 %12543
  %12545 = vrot.lane.b32.xlu0 %v12418, 112
  %v12546 = vpop.permute.xlu0 %12545
  %12547 = vrot.lane.b32.xlu0 %v12420, 112
  %v12548 = vpop.permute.xlu0 %12547
  %12549 = vrot.lane.b32.xlu0 %v12422, 112
  %v12550 = vpop.permute.xlu0 %12549
  %12551 = vrot.lane.b32.xlu0 %v12424, 112
  %v12552 = vpop.permute.xlu0 %12551
  %12553 = vrot.lane.b32.xlu0 %v12426, 112
  %v12554 = vpop.permute.xlu0 %12553
  %12555 = vrot.lane.b32.xlu0 %v12425, 112
  %v12556 = vpop.permute.xlu0 %12555
  %v12622 = vadd.f32 %v4490, %v12428
  %v12623 = vadd.f32 %v12108, %v12430
  %v12624 = vadd.f32 %v12109, %v12432
  %v12625 = vadd.f32 %v12110, %v12434
  %v12626 = vadd.f32 %v12111, %v12436
  %v12627 = vadd.f32 %v12112, %v12438
  %v12628 = vadd.f32 %v12113, %v12440
  %v12629 = vadd.f32 %v12114, %v12442
  %v12630 = vadd.f32 %v12115, %v12444
  %v12631 = vadd.f32 %v12116, %v12446
  %v12632 = vadd.f32 %v12117, %v12448
  %v12633 = vadd.f32 %v12118, %v12450
  %v12634 = vadd.f32 %v12119, %v12452
  %v12635 = vadd.f32 %v12120, %v12454
  %v12636 = vadd.f32 %v12121, %v12456
  %v12637 = vadd.f32 %v12122, %v12458
  %v12638 = vadd.f32 %v12123, %v12460
  %v12639 = vadd.f32 %v12124, %v12462
  %v12640 = vadd.f32 %v12125, %v12464
  %v12641 = vadd.f32 %v12126, %v12466
  %v12642 = vadd.f32 %v12127, %v12468
  %v12643 = vadd.f32 %v12128, %v12470
  %v12644 = vadd.f32 %v12129, %v12472
  %v12645 = vadd.f32 %v12130, %v12474
  %v12646 = vadd.f32 %v12131, %v12476
  %v12647 = vadd.f32 %v12132, %v12478
  %v12648 = vadd.f32 %v12133, %v12480
  %v12649 = vadd.f32 %v12134, %v12482
  %v12650 = vadd.f32 %v12135, %v12484
  %v12651 = vadd.f32 %v12136, %v12486
  %v12652 = vadd.f32 %v12137, %v12488
  %v12653 = vadd.f32 %v12138, %v12490
  %v12654 = vadd.f32 %v12139, %v12492
  %v12655 = vadd.f32 %v12140, %v12494
  %v12656 = vadd.f32 %v12141, %v12496
  %v12657 = vadd.f32 %v12142, %v12498
  %v12658 = vadd.f32 %v12143, %v12500
  %v12659 = vadd.f32 %v12144, %v12502
  %v12660 = vadd.f32 %v12145, %v12504
  %v12661 = vadd.f32 %v12146, %v12506
  %v12662 = vadd.f32 %v12147, %v12508
  %v12663 = vadd.f32 %v12148, %v12510
  %v12664 = vadd.f32 %v12149, %v12512
  %v12665 = vadd.f32 %v12150, %v12514
  %v12666 = vadd.f32 %v12151, %v12516
  %v12667 = vadd.f32 %v12152, %v12518
  %v12668 = vadd.f32 %v12153, %v12520
  %v12669 = vadd.f32 %v12154, %v12522
  %v12670 = vadd.f32 %v12155, %v12524
  %v12671 = vadd.f32 %v12156, %v12526
  %v12672 = vadd.f32 %v12157, %v12528
  %v12673 = vadd.f32 %v12158, %v12530
  %v12674 = vadd.f32 %v12159, %v12532
  %v12675 = vadd.f32 %v12160, %v12534
  %v12676 = vadd.f32 %v12161, %v12536
  %v12677 = vadd.f32 %v12162, %v12538
  %v12678 = vadd.f32 %v12163, %v12540
  %v12679 = vadd.f32 %v12164, %v12542
  %v12680 = vadd.f32 %v12165, %v12544
  %v12681 = vadd.f32 %v12166, %v12546
  %v12682 = vadd.f32 %v12167, %v12548
  %v12683 = vadd.f32 %v12168, %v12550
  %v12684 = vadd.f32 %v12169, %v12552
  %v12685 = vadd.f32 %v12170, %v12554
  %v12686 = vadd.f32 %v12171, %v12556
  %v12687 = vmul.f32 %v10406, %v5518
  %v12688 = vmul.f32 %v10409, %v5520
  %v12689 = vmul.f32 %v10414, %v5522
  %v12690 = vmul.f32 %v10417, %v5524
  %v12691 = vmul.f32 %v10422, %v5526
  %v12692 = vmul.f32 %v10425, %v5528
  %v12693 = vmul.f32 %v10430, %v5530
  %v12694 = vmul.f32 %v10433, %v5532
  %v12695 = vmul.f32 %v10438, %v5534
  %v12696 = vmul.f32 %v10441, %v5536
  %v12697 = vmul.f32 %v10446, %v5538
  %v12698 = vmul.f32 %v10449, %v5540
  %v12699 = vmul.f32 %v10454, %v5542
  %v12700 = vmul.f32 %v10457, %v5544
  %v12701 = vmul.f32 %v10462, %v5546
  %v12702 = vmul.f32 %v10465, %v5548
  %v12703 = vmul.f32 %v10470, %v5550
  %v12704 = vmul.f32 %v10473, %v5552
  %v12705 = vmul.f32 %v10478, %v5554
  %v12706 = vmul.f32 %v10481, %v5556
  %v12707 = vmul.f32 %v10486, %v5558
  %v12708 = vmul.f32 %v10489, %v5560
  %v12709 = vmul.f32 %v10494, %v5562
  %v12710 = vmul.f32 %v10497, %v5564
  %v12711 = vmul.f32 %v10502, %v5566
  %v12712 = vmul.f32 %v10505, %v5568
  %v12713 = vmul.f32 %v10510, %v5570
  %v12714 = vmul.f32 %v10513, %v5572
  %v12715 = vmul.f32 %v10518, %v5574
  %v12716 = vmul.f32 %v10521, %v5576
  %v12717 = vmul.f32 %v10526, %v5578
  %v12718 = vmul.f32 %v10529, %v5580
  %v12719 = vmul.f32 %v10534, %v5582
  %v12720 = vmul.f32 %v10537, %v5584
  %v12721 = vmul.f32 %v10542, %v5586
  %v12722 = vmul.f32 %v10545, %v5588
  %v12723 = vmul.f32 %v10550, %v5590
  %v12724 = vmul.f32 %v10553, %v5592
  %v12725 = vmul.f32 %v10558, %v5594
  %v12726 = vmul.f32 %v10561, %v5596
  %v12727 = vmul.f32 %v10566, %v5598
  %v12728 = vmul.f32 %v10569, %v5600
  %v12729 = vmul.f32 %v10574, %v5602
  %v12730 = vmul.f32 %v10577, %v5604
  %v12731 = vmul.f32 %v10582, %v5606
  %v12732 = vmul.f32 %v10585, %v5608
  %v12733 = vmul.f32 %v10590, %v5610
  %v12734 = vmul.f32 %v10593, %v5612
  %v12735 = vmul.f32 %v10598, %v5614
  %v12736 = vmul.f32 %v10601, %v5616
  %v12737 = vmul.f32 %v10606, %v5618
  %v12738 = vmul.f32 %v10609, %v5620
  %v12739 = vmul.f32 %v10614, %v5622
  %v12740 = vmul.f32 %v10617, %v5624
  %v12741 = vmul.f32 %v10622, %v5626
  %v12742 = vmul.f32 %v10625, %v5628
  %v12743 = vmul.f32 %v10630, %v5630
  %v12744 = vmul.f32 %v10633, %v5632
  %v12745 = vmul.f32 %v10638, %v5634
  %v12746 = vmul.f32 %v10641, %v5636
  %v12747 = vmul.f32 %v10646, %v5638
  %v12748 = vmul.f32 %v10649, %v5640
  %v12749 = vmul.f32 %v10654, %v5642
  %v12750 = vmul.f32 %v10657, %v5644
  %v12815 = vrot.slane %v12687, 2
  %v12816 = vrot.slane %v12688, 2
  %v12817 = vsel %vm3391, %v12815, %v12816
  %v12818 = vrot.slane %v12689, 2
  %v12819 = vsel %vm3391, %v12816, %v12818
  %v12820 = vrot.slane %v12690, 2
  %v12821 = vsel %vm3391, %v12818, %v12820
  %v12822 = vrot.slane %v12691, 2
  %v12823 = vsel %vm3391, %v12820, %v12822
  %v12824 = vrot.slane %v12692, 2
  %v12825 = vsel %vm3391, %v12822, %v12824
  %v12826 = vrot.slane %v12693, 2
  %v12827 = vsel %vm3391, %v12824, %v12826
  %v12828 = vrot.slane %v12694, 2
  %v12829 = vsel %vm3391, %v12826, %v12828
  %v12830 = vrot.slane %v12695, 2
  %v12831 = vsel %vm3391, %v12828, %v12830
  %v12832 = vrot.slane %v12696, 2
  %v12833 = vsel %vm3391, %v12830, %v12832
  %v12834 = vrot.slane %v12697, 2
  %v12835 = vsel %vm3391, %v12832, %v12834
  %v12836 = vrot.slane %v12698, 2
  %v12837 = vsel %vm3391, %v12834, %v12836
  %v12838 = vrot.slane %v12699, 2
  %v12839 = vsel %vm3391, %v12836, %v12838
  %v12840 = vrot.slane %v12700, 2
  %v12841 = vsel %vm3391, %v12838, %v12840
  %v12842 = vrot.slane %v12701, 2
  %v12843 = vsel %vm3391, %v12840, %v12842
  %v12844 = vrot.slane %v12702, 2
  %v12845 = vsel %vm3391, %v12842, %v12844
  %v12846 = vrot.slane %v12703, 2
  %v12847 = vsel %vm3391, %v12844, %v12846
  %v12848 = vrot.slane %v12704, 2
  %v12849 = vsel %vm3391, %v12846, %v12848
  %v12850 = vrot.slane %v12705, 2
  %v12851 = vsel %vm3391, %v12848, %v12850
  %v12852 = vrot.slane %v12706, 2
  %v12853 = vsel %vm3391, %v12850, %v12852
  %v12854 = vrot.slane %v12707, 2
  %v12855 = vsel %vm3391, %v12852, %v12854
  %v12856 = vrot.slane %v12708, 2
  %v12857 = vsel %vm3391, %v12854, %v12856
  %v12858 = vrot.slane %v12709, 2
  %v12859 = vsel %vm3391, %v12856, %v12858
  %v12860 = vrot.slane %v12710, 2
  %v12861 = vsel %vm3391, %v12858, %v12860
  %v12862 = vrot.slane %v12711, 2
  %v12863 = vsel %vm3391, %v12860, %v12862
  %v12864 = vrot.slane %v12712, 2
  %v12865 = vsel %vm3391, %v12862, %v12864
  %v12866 = vrot.slane %v12713, 2
  %v12867 = vsel %vm3391, %v12864, %v12866
  %v12868 = vrot.slane %v12714, 2
  %v12869 = vsel %vm3391, %v12866, %v12868
  %v12870 = vrot.slane %v12715, 2
  %v12871 = vsel %vm3391, %v12868, %v12870
  %v12872 = vrot.slane %v12716, 2
  %v12873 = vsel %vm3391, %v12870, %v12872
  %v12874 = vrot.slane %v12717, 2
  %v12875 = vsel %vm3391, %v12872, %v12874
  %v12876 = vrot.slane %v12718, 2
  %v12877 = vsel %vm3391, %v12874, %v12876
  %v12878 = vrot.slane %v12719, 2
  %v12879 = vsel %vm3391, %v12876, %v12878
  %v12880 = vrot.slane %v12720, 2
  %v12881 = vsel %vm3391, %v12878, %v12880
  %v12882 = vrot.slane %v12721, 2
  %v12883 = vsel %vm3391, %v12880, %v12882
  %v12884 = vrot.slane %v12722, 2
  %v12885 = vsel %vm3391, %v12882, %v12884
  %v12886 = vrot.slane %v12723, 2
  %v12887 = vsel %vm3391, %v12884, %v12886
  %v12888 = vrot.slane %v12724, 2
  %v12889 = vsel %vm3391, %v12886, %v12888
  %v12890 = vrot.slane %v12725, 2
  %v12891 = vsel %vm3391, %v12888, %v12890
  %v12892 = vrot.slane %v12726, 2
  %v12893 = vsel %vm3391, %v12890, %v12892
  %v12894 = vrot.slane %v12727, 2
  %v12895 = vsel %vm3391, %v12892, %v12894
  %v12896 = vrot.slane %v12728, 2
  %v12897 = vsel %vm3391, %v12894, %v12896
  %v12898 = vrot.slane %v12729, 2
  %v12899 = vsel %vm3391, %v12896, %v12898
  %v12900 = vrot.slane %v12730, 2
  %v12901 = vsel %vm3391, %v12898, %v12900
  %v12902 = vrot.slane %v12731, 2
  %v12903 = vsel %vm3391, %v12900, %v12902
  %v12904 = vrot.slane %v12732, 2
  %v12905 = vsel %vm3391, %v12902, %v12904
  %v12906 = vrot.slane %v12733, 2
  %v12907 = vsel %vm3391, %v12904, %v12906
  %v12908 = vrot.slane %v12734, 2
  %v12909 = vsel %vm3391, %v12906, %v12908
  %v12910 = vrot.slane %v12735, 2
  %v12911 = vsel %vm3391, %v12908, %v12910
  %v12912 = vrot.slane %v12736, 2
  %v12913 = vsel %vm3391, %v12910, %v12912
  %v12914 = vrot.slane %v12737, 2
  %v12915 = vsel %vm3391, %v12912, %v12914
  %v12916 = vrot.slane %v12738, 2
  %v12917 = vsel %vm3391, %v12914, %v12916
  %v12918 = vrot.slane %v12739, 2
  %v12919 = vsel %vm3391, %v12916, %v12918
  %v12920 = vrot.slane %v12740, 2
  %v12921 = vsel %vm3391, %v12918, %v12920
  %v12922 = vrot.slane %v12741, 2
  %v12923 = vsel %vm3391, %v12920, %v12922
  %v12924 = vrot.slane %v12742, 2
  %v12925 = vsel %vm3391, %v12922, %v12924
  %v12926 = vrot.slane %v12743, 2
  %v12927 = vsel %vm3391, %v12924, %v12926
  %v12928 = vrot.slane %v12744, 2
  %v12929 = vsel %vm3391, %v12926, %v12928
  %v12930 = vrot.slane %v12745, 2
  %v12931 = vsel %vm3391, %v12928, %v12930
  %v12932 = vrot.slane %v12746, 2
  %v12933 = vsel %vm3391, %v12930, %v12932
  %v12934 = vrot.slane %v12747, 2
  %v12935 = vsel %vm3391, %v12932, %v12934
  %v12936 = vrot.slane %v12748, 2
  %v12937 = vsel %vm3391, %v12934, %v12936
  %v12938 = vrot.slane %v12749, 2
  %v12939 = vsel %vm3391, %v12936, %v12938
  %v12940 = vrot.slane %v12750, 2
  %v12941 = vsel %vm3391, %v12938, %v12940
  %v12942 = vsel %vm3391, %v12940, %v5967
  %12943 = vrot.lane.b32.xlu0 %v12815, 108
  %v12944 = vpop.permute.xlu0 %12943
  %12945 = vrot.lane.b32.xlu0 %v12817, 108
  %v12946 = vpop.permute.xlu0 %12945
  %12947 = vrot.lane.b32.xlu0 %v12819, 108
  %v12948 = vpop.permute.xlu0 %12947
  %12949 = vrot.lane.b32.xlu0 %v12821, 108
  %v12950 = vpop.permute.xlu0 %12949
  %12951 = vrot.lane.b32.xlu0 %v12823, 108
  %v12952 = vpop.permute.xlu0 %12951
  %12953 = vrot.lane.b32.xlu0 %v12825, 108
  %v12954 = vpop.permute.xlu0 %12953
  %12955 = vrot.lane.b32.xlu0 %v12827, 108
  %v12956 = vpop.permute.xlu0 %12955
  %12957 = vrot.lane.b32.xlu0 %v12829, 108
  %v12958 = vpop.permute.xlu0 %12957
  %12959 = vrot.lane.b32.xlu0 %v12831, 108
  %v12960 = vpop.permute.xlu0 %12959
  %12961 = vrot.lane.b32.xlu0 %v12833, 108
  %v12962 = vpop.permute.xlu0 %12961
  %12963 = vrot.lane.b32.xlu0 %v12835, 108
  %v12964 = vpop.permute.xlu0 %12963
  %12965 = vrot.lane.b32.xlu0 %v12837, 108
  %v12966 = vpop.permute.xlu0 %12965
  %12967 = vrot.lane.b32.xlu0 %v12839, 108
  %v12968 = vpop.permute.xlu0 %12967
  %12969 = vrot.lane.b32.xlu0 %v12841, 108
  %v12970 = vpop.permute.xlu0 %12969
  %12971 = vrot.lane.b32.xlu0 %v12843, 108
  %v12972 = vpop.permute.xlu0 %12971
  %12973 = vrot.lane.b32.xlu0 %v12845, 108
  %v12974 = vpop.permute.xlu0 %12973
  %12975 = vrot.lane.b32.xlu0 %v12847, 108
  %v12976 = vpop.permute.xlu0 %12975
  %12977 = vrot.lane.b32.xlu0 %v12849, 108
  %v12978 = vpop.permute.xlu0 %12977
  %12979 = vrot.lane.b32.xlu0 %v12851, 108
  %v12980 = vpop.permute.xlu0 %12979
  %12981 = vrot.lane.b32.xlu0 %v12853, 108
  %v12982 = vpop.permute.xlu0 %12981
  %12983 = vrot.lane.b32.xlu0 %v12855, 108
  %v12984 = vpop.permute.xlu0 %12983
  %12985 = vrot.lane.b32.xlu0 %v12857, 108
  %v12986 = vpop.permute.xlu0 %12985
  %12987 = vrot.lane.b32.xlu0 %v12859, 108
  %v12988 = vpop.permute.xlu0 %12987
  %12989 = vrot.lane.b32.xlu0 %v12861, 108
  %v12990 = vpop.permute.xlu0 %12989
  %12991 = vrot.lane.b32.xlu0 %v12863, 108
  %v12992 = vpop.permute.xlu0 %12991
  %12993 = vrot.lane.b32.xlu0 %v12865, 108
  %v12994 = vpop.permute.xlu0 %12993
  %12995 = vrot.lane.b32.xlu0 %v12867, 108
  %v12996 = vpop.permute.xlu0 %12995
  %12997 = vrot.lane.b32.xlu0 %v12869, 108
  %v12998 = vpop.permute.xlu0 %12997
  %12999 = vrot.lane.b32.xlu0 %v12871, 108
  %v13000 = vpop.permute.xlu0 %12999
  %13001 = vrot.lane.b32.xlu0 %v12873, 108
  %v13002 = vpop.permute.xlu0 %13001
  %13003 = vrot.lane.b32.xlu0 %v12875, 108
  %v13004 = vpop.permute.xlu0 %13003
  %13005 = vrot.lane.b32.xlu0 %v12877, 108
  %v13006 = vpop.permute.xlu0 %13005
  %13007 = vrot.lane.b32.xlu0 %v12879, 108
  %v13008 = vpop.permute.xlu0 %13007
  %13009 = vrot.lane.b32.xlu0 %v12881, 108
  %v13010 = vpop.permute.xlu0 %13009
  %13011 = vrot.lane.b32.xlu0 %v12883, 108
  %v13012 = vpop.permute.xlu0 %13011
  %13013 = vrot.lane.b32.xlu0 %v12885, 108
  %v13014 = vpop.permute.xlu0 %13013
  %13015 = vrot.lane.b32.xlu0 %v12887, 108
  %v13016 = vpop.permute.xlu0 %13015
  %13017 = vrot.lane.b32.xlu0 %v12889, 108
  %v13018 = vpop.permute.xlu0 %13017
  %13019 = vrot.lane.b32.xlu0 %v12891, 108
  %v13020 = vpop.permute.xlu0 %13019
  %13021 = vrot.lane.b32.xlu0 %v12893, 108
  %v13022 = vpop.permute.xlu0 %13021
  %13023 = vrot.lane.b32.xlu0 %v12895, 108
  %v13024 = vpop.permute.xlu0 %13023
  %13025 = vrot.lane.b32.xlu0 %v12897, 108
  %v13026 = vpop.permute.xlu0 %13025
  %13027 = vrot.lane.b32.xlu0 %v12899, 108
  %v13028 = vpop.permute.xlu0 %13027
  %13029 = vrot.lane.b32.xlu0 %v12901, 108
  %v13030 = vpop.permute.xlu0 %13029
  %13031 = vrot.lane.b32.xlu0 %v12903, 108
  %v13032 = vpop.permute.xlu0 %13031
  %13033 = vrot.lane.b32.xlu0 %v12905, 108
  %v13034 = vpop.permute.xlu0 %13033
  %13035 = vrot.lane.b32.xlu0 %v12907, 108
  %v13036 = vpop.permute.xlu0 %13035
  %13037 = vrot.lane.b32.xlu0 %v12909, 108
  %v13038 = vpop.permute.xlu0 %13037
  %13039 = vrot.lane.b32.xlu0 %v12911, 108
  %v13040 = vpop.permute.xlu0 %13039
  %13041 = vrot.lane.b32.xlu0 %v12913, 108
  %v13042 = vpop.permute.xlu0 %13041
  %13043 = vrot.lane.b32.xlu0 %v12915, 108
  %v13044 = vpop.permute.xlu0 %13043
  %13045 = vrot.lane.b32.xlu0 %v12917, 108
  %v13046 = vpop.permute.xlu0 %13045
  %13047 = vrot.lane.b32.xlu0 %v12919, 108
  %v13048 = vpop.permute.xlu0 %13047
  %13049 = vrot.lane.b32.xlu0 %v12921, 108
  %v13050 = vpop.permute.xlu0 %13049
  %13051 = vrot.lane.b32.xlu0 %v12923, 108
  %v13052 = vpop.permute.xlu0 %13051
  %13053 = vrot.lane.b32.xlu0 %v12925, 108
  %v13054 = vpop.permute.xlu0 %13053
  %13055 = vrot.lane.b32.xlu0 %v12927, 108
  %v13056 = vpop.permute.xlu0 %13055
  %13057 = vrot.lane.b32.xlu0 %v12929, 108
  %v13058 = vpop.permute.xlu0 %13057
  %13059 = vrot.lane.b32.xlu0 %v12931, 108
  %v13060 = vpop.permute.xlu0 %13059
  %13061 = vrot.lane.b32.xlu0 %v12933, 108
  %v13062 = vpop.permute.xlu0 %13061
  %13063 = vrot.lane.b32.xlu0 %v12935, 108
  %v13064 = vpop.permute.xlu0 %13063
  %13065 = vrot.lane.b32.xlu0 %v12937, 108
  %v13066 = vpop.permute.xlu0 %13065
  %13067 = vrot.lane.b32.xlu0 %v12939, 108
  %v13068 = vpop.permute.xlu0 %13067
  %13069 = vrot.lane.b32.xlu0 %v12941, 108
  %v13070 = vpop.permute.xlu0 %13069
  %13071 = vrot.lane.b32.xlu0 %v12942, 108
  %v13072 = vpop.permute.xlu0 %13071
  %v13138 = vadd.f32 %v12622, %v12944
  %v13139 = vadd.f32 %v12623, %v12946
  %v13140 = vadd.f32 %v12624, %v12948
  %v13141 = vadd.f32 %v12625, %v12950
  %v13142 = vadd.f32 %v12626, %v12952
  %v13143 = vadd.f32 %v12627, %v12954
  %v13144 = vadd.f32 %v12628, %v12956
  %v13145 = vadd.f32 %v12629, %v12958
  %v13146 = vadd.f32 %v12630, %v12960
  %v13147 = vadd.f32 %v12631, %v12962
  %v13148 = vadd.f32 %v12632, %v12964
  %v13149 = vadd.f32 %v12633, %v12966
  %v13150 = vadd.f32 %v12634, %v12968
  %v13151 = vadd.f32 %v12635, %v12970
  %v13152 = vadd.f32 %v12636, %v12972
  %v13153 = vadd.f32 %v12637, %v12974
  %v13154 = vadd.f32 %v12638, %v12976
  %v13155 = vadd.f32 %v12639, %v12978
  %v13156 = vadd.f32 %v12640, %v12980
  %v13157 = vadd.f32 %v12641, %v12982
  %v13158 = vadd.f32 %v12642, %v12984
  %v13159 = vadd.f32 %v12643, %v12986
  %v13160 = vadd.f32 %v12644, %v12988
  %v13161 = vadd.f32 %v12645, %v12990
  %v13162 = vadd.f32 %v12646, %v12992
  %v13163 = vadd.f32 %v12647, %v12994
  %v13164 = vadd.f32 %v12648, %v12996
  %v13165 = vadd.f32 %v12649, %v12998
  %v13166 = vadd.f32 %v12650, %v13000
  %v13167 = vadd.f32 %v12651, %v13002
  %v13168 = vadd.f32 %v12652, %v13004
  %v13169 = vadd.f32 %v12653, %v13006
  %v13170 = vadd.f32 %v12654, %v13008
  %v13171 = vadd.f32 %v12655, %v13010
  %v13172 = vadd.f32 %v12656, %v13012
  %v13173 = vadd.f32 %v12657, %v13014
  %v13174 = vadd.f32 %v12658, %v13016
  %v13175 = vadd.f32 %v12659, %v13018
  %v13176 = vadd.f32 %v12660, %v13020
  %v13177 = vadd.f32 %v12661, %v13022
  %v13178 = vadd.f32 %v12662, %v13024
  %v13179 = vadd.f32 %v12663, %v13026
  %v13180 = vadd.f32 %v12664, %v13028
  %v13181 = vadd.f32 %v12665, %v13030
  %v13182 = vadd.f32 %v12666, %v13032
  %v13183 = vadd.f32 %v12667, %v13034
  %v13184 = vadd.f32 %v12668, %v13036
  %v13185 = vadd.f32 %v12669, %v13038
  %v13186 = vadd.f32 %v12670, %v13040
  %v13187 = vadd.f32 %v12671, %v13042
  %v13188 = vadd.f32 %v12672, %v13044
  %v13189 = vadd.f32 %v12673, %v13046
  %v13190 = vadd.f32 %v12674, %v13048
  %v13191 = vadd.f32 %v12675, %v13050
  %v13192 = vadd.f32 %v12676, %v13052
  %v13193 = vadd.f32 %v12677, %v13054
  %v13194 = vadd.f32 %v12678, %v13056
  %v13195 = vadd.f32 %v12679, %v13058
  %v13196 = vadd.f32 %v12680, %v13060
  %v13197 = vadd.f32 %v12681, %v13062
  %v13198 = vadd.f32 %v12682, %v13064
  %v13199 = vadd.f32 %v12683, %v13066
  %v13200 = vadd.f32 %v12684, %v13068
  %v13201 = vadd.f32 %v12685, %v13070
  %v13202 = vadd.f32 %v12686, %v13072
  %v13203 = vmul.f32 %v10409, %v6421
  %v13204 = vmul.f32 %v10414, %v6423
  %v13205 = vmul.f32 %v10417, %v6425
  %v13206 = vmul.f32 %v10422, %v6427
  %v13207 = vmul.f32 %v10425, %v6429
  %v13208 = vmul.f32 %v10430, %v6431
  %v13209 = vmul.f32 %v10433, %v6433
  %v13210 = vmul.f32 %v10438, %v6435
  %v13211 = vmul.f32 %v10441, %v6437
  %v13212 = vmul.f32 %v10446, %v6439
  %v13213 = vmul.f32 %v10449, %v6441
  %v13214 = vmul.f32 %v10454, %v6443
  %v13215 = vmul.f32 %v10457, %v6445
  %v13216 = vmul.f32 %v10462, %v6447
  %v13217 = vmul.f32 %v10465, %v6449
  %v13218 = vmul.f32 %v10470, %v6451
  %v13219 = vmul.f32 %v10473, %v6453
  %v13220 = vmul.f32 %v10478, %v6455
  %v13221 = vmul.f32 %v10481, %v6457
  %v13222 = vmul.f32 %v10486, %v6459
  %v13223 = vmul.f32 %v10489, %v6461
  %v13224 = vmul.f32 %v10494, %v6463
  %v13225 = vmul.f32 %v10497, %v6465
  %v13226 = vmul.f32 %v10502, %v6467
  %v13227 = vmul.f32 %v10505, %v6469
  %v13228 = vmul.f32 %v10510, %v6471
  %v13229 = vmul.f32 %v10513, %v6473
  %v13230 = vmul.f32 %v10518, %v6475
  %v13231 = vmul.f32 %v10521, %v6477
  %v13232 = vmul.f32 %v10526, %v6479
  %v13233 = vmul.f32 %v10529, %v6481
  %v13234 = vmul.f32 %v10534, %v6483
  %v13235 = vmul.f32 %v10537, %v6485
  %v13236 = vmul.f32 %v10542, %v6487
  %v13237 = vmul.f32 %v10545, %v6489
  %v13238 = vmul.f32 %v10550, %v6491
  %v13239 = vmul.f32 %v10553, %v6493
  %v13240 = vmul.f32 %v10558, %v6495
  %v13241 = vmul.f32 %v10561, %v6497
  %v13242 = vmul.f32 %v10566, %v6499
  %v13243 = vmul.f32 %v10569, %v6501
  %v13244 = vmul.f32 %v10574, %v6503
  %v13245 = vmul.f32 %v10577, %v6505
  %v13246 = vmul.f32 %v10582, %v6507
  %v13247 = vmul.f32 %v10585, %v6509
  %v13248 = vmul.f32 %v10590, %v6511
  %v13249 = vmul.f32 %v10593, %v6513
  %v13250 = vmul.f32 %v10598, %v6515
  %v13251 = vmul.f32 %v10601, %v6517
  %v13252 = vmul.f32 %v10606, %v6519
  %v13253 = vmul.f32 %v10609, %v6521
  %v13254 = vmul.f32 %v10614, %v6523
  %v13255 = vmul.f32 %v10617, %v6525
  %v13256 = vmul.f32 %v10622, %v6527
  %v13257 = vmul.f32 %v10625, %v6529
  %v13258 = vmul.f32 %v10630, %v6531
  %v13259 = vmul.f32 %v10633, %v6533
  %v13260 = vmul.f32 %v10638, %v6535
  %v13261 = vmul.f32 %v10641, %v6537
  %v13262 = vmul.f32 %v10646, %v6539
  %v13263 = vmul.f32 %v10649, %v6541
  %v13264 = vmul.f32 %v10654, %v6543
  %v13265 = vmul.f32 %v10657, %v6545
  %13329 = vrot.lane.b32.xlu0 %v13203, 104
  %v13330 = vpop.permute.xlu0 %13329
  %13331 = vrot.lane.b32.xlu0 %v13204, 104
  %v13332 = vpop.permute.xlu0 %13331
  %13333 = vrot.lane.b32.xlu0 %v13205, 104
  %v13334 = vpop.permute.xlu0 %13333
  %13335 = vrot.lane.b32.xlu0 %v13206, 104
  %v13336 = vpop.permute.xlu0 %13335
  %13337 = vrot.lane.b32.xlu0 %v13207, 104
  %v13338 = vpop.permute.xlu0 %13337
  %13339 = vrot.lane.b32.xlu0 %v13208, 104
  %v13340 = vpop.permute.xlu0 %13339
  %13341 = vrot.lane.b32.xlu0 %v13209, 104
  %v13342 = vpop.permute.xlu0 %13341
  %13343 = vrot.lane.b32.xlu0 %v13210, 104
  %v13344 = vpop.permute.xlu0 %13343
  %13345 = vrot.lane.b32.xlu0 %v13211, 104
  %v13346 = vpop.permute.xlu0 %13345
  %13347 = vrot.lane.b32.xlu0 %v13212, 104
  %v13348 = vpop.permute.xlu0 %13347
  %13349 = vrot.lane.b32.xlu0 %v13213, 104
  %v13350 = vpop.permute.xlu0 %13349
  %13351 = vrot.lane.b32.xlu0 %v13214, 104
  %v13352 = vpop.permute.xlu0 %13351
  %13353 = vrot.lane.b32.xlu0 %v13215, 104
  %v13354 = vpop.permute.xlu0 %13353
  %13355 = vrot.lane.b32.xlu0 %v13216, 104
  %v13356 = vpop.permute.xlu0 %13355
  %13357 = vrot.lane.b32.xlu0 %v13217, 104
  %v13358 = vpop.permute.xlu0 %13357
  %13359 = vrot.lane.b32.xlu0 %v13218, 104
  %v13360 = vpop.permute.xlu0 %13359
  %13361 = vrot.lane.b32.xlu0 %v13219, 104
  %v13362 = vpop.permute.xlu0 %13361
  %13363 = vrot.lane.b32.xlu0 %v13220, 104
  %v13364 = vpop.permute.xlu0 %13363
  %13365 = vrot.lane.b32.xlu0 %v13221, 104
  %v13366 = vpop.permute.xlu0 %13365
  %13367 = vrot.lane.b32.xlu0 %v13222, 104
  %v13368 = vpop.permute.xlu0 %13367
  %13369 = vrot.lane.b32.xlu0 %v13223, 104
  %v13370 = vpop.permute.xlu0 %13369
  %13371 = vrot.lane.b32.xlu0 %v13224, 104
  %v13372 = vpop.permute.xlu0 %13371
  %13373 = vrot.lane.b32.xlu0 %v13225, 104
  %v13374 = vpop.permute.xlu0 %13373
  %13375 = vrot.lane.b32.xlu0 %v13226, 104
  %v13376 = vpop.permute.xlu0 %13375
  %13377 = vrot.lane.b32.xlu0 %v13227, 104
  %v13378 = vpop.permute.xlu0 %13377
  %13379 = vrot.lane.b32.xlu0 %v13228, 104
  %v13380 = vpop.permute.xlu0 %13379
  %13381 = vrot.lane.b32.xlu0 %v13229, 104
  %v13382 = vpop.permute.xlu0 %13381
  %13383 = vrot.lane.b32.xlu0 %v13230, 104
  %v13384 = vpop.permute.xlu0 %13383
  %13385 = vrot.lane.b32.xlu0 %v13231, 104
  %v13386 = vpop.permute.xlu0 %13385
  %13387 = vrot.lane.b32.xlu0 %v13232, 104
  %v13388 = vpop.permute.xlu0 %13387
  %13389 = vrot.lane.b32.xlu0 %v13233, 104
  %v13390 = vpop.permute.xlu0 %13389
  %13391 = vrot.lane.b32.xlu0 %v13234, 104
  %v13392 = vpop.permute.xlu0 %13391
  %13393 = vrot.lane.b32.xlu0 %v13235, 104
  %v13394 = vpop.permute.xlu0 %13393
  %13395 = vrot.lane.b32.xlu0 %v13236, 104
  %v13396 = vpop.permute.xlu0 %13395
  %13397 = vrot.lane.b32.xlu0 %v13237, 104
  %v13398 = vpop.permute.xlu0 %13397
  %13399 = vrot.lane.b32.xlu0 %v13238, 104
  %v13400 = vpop.permute.xlu0 %13399
  %13401 = vrot.lane.b32.xlu0 %v13239, 104
  %v13402 = vpop.permute.xlu0 %13401
  %13403 = vrot.lane.b32.xlu0 %v13240, 104
  %v13404 = vpop.permute.xlu0 %13403
  %13405 = vrot.lane.b32.xlu0 %v13241, 104
  %v13406 = vpop.permute.xlu0 %13405
  %13407 = vrot.lane.b32.xlu0 %v13242, 104
  %v13408 = vpop.permute.xlu0 %13407
  %13409 = vrot.lane.b32.xlu0 %v13243, 104
  %v13410 = vpop.permute.xlu0 %13409
  %13411 = vrot.lane.b32.xlu0 %v13244, 104
  %v13412 = vpop.permute.xlu0 %13411
  %13413 = vrot.lane.b32.xlu0 %v13245, 104
  %v13414 = vpop.permute.xlu0 %13413
  %13415 = vrot.lane.b32.xlu0 %v13246, 104
  %v13416 = vpop.permute.xlu0 %13415
  %13417 = vrot.lane.b32.xlu0 %v13247, 104
  %v13418 = vpop.permute.xlu0 %13417
  %13419 = vrot.lane.b32.xlu0 %v13248, 104
  %v13420 = vpop.permute.xlu0 %13419
  %13421 = vrot.lane.b32.xlu0 %v13249, 104
  %v13422 = vpop.permute.xlu0 %13421
  %13423 = vrot.lane.b32.xlu0 %v13250, 104
  %v13424 = vpop.permute.xlu0 %13423
  %13425 = vrot.lane.b32.xlu0 %v13251, 104
  %v13426 = vpop.permute.xlu0 %13425
  %13427 = vrot.lane.b32.xlu0 %v13252, 104
  %v13428 = vpop.permute.xlu0 %13427
  %13429 = vrot.lane.b32.xlu0 %v13253, 104
  %v13430 = vpop.permute.xlu0 %13429
  %13431 = vrot.lane.b32.xlu0 %v13254, 104
  %v13432 = vpop.permute.xlu0 %13431
  %13433 = vrot.lane.b32.xlu0 %v13255, 104
  %v13434 = vpop.permute.xlu0 %13433
  %13435 = vrot.lane.b32.xlu0 %v13256, 104
  %v13436 = vpop.permute.xlu0 %13435
  %13437 = vrot.lane.b32.xlu0 %v13257, 104
  %v13438 = vpop.permute.xlu0 %13437
  %13439 = vrot.lane.b32.xlu0 %v13258, 104
  %v13440 = vpop.permute.xlu0 %13439
  %13441 = vrot.lane.b32.xlu0 %v13259, 104
  %v13442 = vpop.permute.xlu0 %13441
  %13443 = vrot.lane.b32.xlu0 %v13260, 104
  %v13444 = vpop.permute.xlu0 %13443
  %13445 = vrot.lane.b32.xlu0 %v13261, 104
  %v13446 = vpop.permute.xlu0 %13445
  %13447 = vrot.lane.b32.xlu0 %v13262, 104
  %v13448 = vpop.permute.xlu0 %13447
  %13449 = vrot.lane.b32.xlu0 %v13263, 104
  %v13450 = vpop.permute.xlu0 %13449
  %13451 = vrot.lane.b32.xlu0 %v13264, 104
  %v13452 = vpop.permute.xlu0 %13451
  %13453 = vrot.lane.b32.xlu0 %v13265, 104
  %v13454 = vpop.permute.xlu0 %13453
  %v13518 = vadd.f32 %v13138, %v13330
  %v13519 = vadd.f32 %v13139, %v13332
  %v13520 = vadd.f32 %v13140, %v13334
  %v13521 = vadd.f32 %v13141, %v13336
  %v13522 = vadd.f32 %v13142, %v13338
  %v13523 = vadd.f32 %v13143, %v13340
  %v13524 = vadd.f32 %v13144, %v13342
  %v13525 = vadd.f32 %v13145, %v13344
  %v13526 = vadd.f32 %v13146, %v13346
  %v13527 = vadd.f32 %v13147, %v13348
  %v13528 = vadd.f32 %v13148, %v13350
  %v13529 = vadd.f32 %v13149, %v13352
  %v13530 = vadd.f32 %v13150, %v13354
  %v13531 = vadd.f32 %v13151, %v13356
  %v13532 = vadd.f32 %v13152, %v13358
  %v13533 = vadd.f32 %v13153, %v13360
  %v13534 = vadd.f32 %v13154, %v13362
  %v13535 = vadd.f32 %v13155, %v13364
  %v13536 = vadd.f32 %v13156, %v13366
  %v13537 = vadd.f32 %v13157, %v13368
  %v13538 = vadd.f32 %v13158, %v13370
  %v13539 = vadd.f32 %v13159, %v13372
  %v13540 = vadd.f32 %v13160, %v13374
  %v13541 = vadd.f32 %v13161, %v13376
  %v13542 = vadd.f32 %v13162, %v13378
  %v13543 = vadd.f32 %v13163, %v13380
  %v13544 = vadd.f32 %v13164, %v13382
  %v13545 = vadd.f32 %v13165, %v13384
  %v13546 = vadd.f32 %v13166, %v13386
  %v13547 = vadd.f32 %v13167, %v13388
  %v13548 = vadd.f32 %v13168, %v13390
  %v13549 = vadd.f32 %v13169, %v13392
  %v13550 = vadd.f32 %v13170, %v13394
  %v13551 = vadd.f32 %v13171, %v13396
  %v13552 = vadd.f32 %v13172, %v13398
  %v13553 = vadd.f32 %v13173, %v13400
  %v13554 = vadd.f32 %v13174, %v13402
  %v13555 = vadd.f32 %v13175, %v13404
  %v13556 = vadd.f32 %v13176, %v13406
  %v13557 = vadd.f32 %v13177, %v13408
  %v13558 = vadd.f32 %v13178, %v13410
  %v13559 = vadd.f32 %v13179, %v13412
  %v13560 = vadd.f32 %v13180, %v13414
  %v13561 = vadd.f32 %v13181, %v13416
  %v13562 = vadd.f32 %v13182, %v13418
  %v13563 = vadd.f32 %v13183, %v13420
  %v13564 = vadd.f32 %v13184, %v13422
  %v13565 = vadd.f32 %v13185, %v13424
  %v13566 = vadd.f32 %v13186, %v13426
  %v13567 = vadd.f32 %v13187, %v13428
  %v13568 = vadd.f32 %v13188, %v13430
  %v13569 = vadd.f32 %v13189, %v13432
  %v13570 = vadd.f32 %v13190, %v13434
  %v13571 = vadd.f32 %v13191, %v13436
  %v13572 = vadd.f32 %v13192, %v13438
  %v13573 = vadd.f32 %v13193, %v13440
  %v13574 = vadd.f32 %v13194, %v13442
  %v13575 = vadd.f32 %v13195, %v13444
  %v13576 = vadd.f32 %v13196, %v13446
  %v13577 = vadd.f32 %v13197, %v13448
  %v13578 = vadd.f32 %v13198, %v13450
  %v13579 = vadd.f32 %v13199, %v13452
  %v13580 = vadd.f32 %v13200, %v13454
  %v13581 = vadd.f32 %v13201, %v6870
  %v13582 = vadd.f32 %v13202, %v6872
  %v13583 = vmul.f32 %v10414, %v7005
  %v13584 = vmul.f32 %v10417, %v7009
  %v13585 = vmul.f32 %v10422, %v7013
  %v13586 = vmul.f32 %v10425, %v7017
  %v13587 = vmul.f32 %v10430, %v7021
  %v13588 = vmul.f32 %v10433, %v7025
  %v13589 = vmul.f32 %v10438, %v7029
  %v13590 = vmul.f32 %v10441, %v7033
  %v13591 = vmul.f32 %v10446, %v7037
  %v13592 = vmul.f32 %v10449, %v7041
  %v13593 = vmul.f32 %v10454, %v7045
  %v13594 = vmul.f32 %v10457, %v7049
  %v13595 = vmul.f32 %v10462, %v7053
  %v13596 = vmul.f32 %v10465, %v7057
  %v13597 = vmul.f32 %v10470, %v7061
  %v13598 = vmul.f32 %v10473, %v7065
  %v13599 = vmul.f32 %v10478, %v7069
  %v13600 = vmul.f32 %v10481, %v7073
  %v13601 = vmul.f32 %v10486, %v7077
  %v13602 = vmul.f32 %v10489, %v7081
  %v13603 = vmul.f32 %v10494, %v7085
  %v13604 = vmul.f32 %v10497, %v7089
  %v13605 = vmul.f32 %v10502, %v7093
  %v13606 = vmul.f32 %v10505, %v7097
  %v13607 = vmul.f32 %v10510, %v7101
  %v13608 = vmul.f32 %v10513, %v7105
  %v13609 = vmul.f32 %v10518, %v7109
  %v13610 = vmul.f32 %v10521, %v7113
  %v13611 = vmul.f32 %v10526, %v7117
  %v13612 = vmul.f32 %v10529, %v7121
  %v13613 = vmul.f32 %v10534, %v7125
  %v13614 = vmul.f32 %v10537, %v7129
  %v13615 = vmul.f32 %v10542, %v7133
  %v13616 = vmul.f32 %v10545, %v7137
  %v13617 = vmul.f32 %v10550, %v7141
  %v13618 = vmul.f32 %v10553, %v7145
  %v13619 = vmul.f32 %v10558, %v7149
  %v13620 = vmul.f32 %v10561, %v7153
  %v13621 = vmul.f32 %v10566, %v7157
  %v13622 = vmul.f32 %v10569, %v7161
  %v13623 = vmul.f32 %v10574, %v7165
  %v13624 = vmul.f32 %v10577, %v7169
  %v13625 = vmul.f32 %v10582, %v7173
  %v13626 = vmul.f32 %v10585, %v7177
  %v13627 = vmul.f32 %v10590, %v7181
  %v13628 = vmul.f32 %v10593, %v7185
  %v13629 = vmul.f32 %v10598, %v7189
  %v13630 = vmul.f32 %v10601, %v7193
  %v13631 = vmul.f32 %v10606, %v7197
  %v13632 = vmul.f32 %v10609, %v7201
  %v13633 = vmul.f32 %v10614, %v7205
  %v13634 = vmul.f32 %v10617, %v7209
  %v13635 = vmul.f32 %v10622, %v7213
  %v13636 = vmul.f32 %v10625, %v7217
  %v13637 = vmul.f32 %v10630, %v7221
  %v13638 = vmul.f32 %v10633, %v7225
  %v13639 = vmul.f32 %v10638, %v7229
  %v13640 = vmul.f32 %v10641, %v7233
  %v13641 = vmul.f32 %v10646, %v7237
  %v13642 = vmul.f32 %v10649, %v7241
  %v13643 = vmul.f32 %v10654, %v7245
  %v13644 = vmul.f32 %v10657, %v7249
  %v13707 = vrot.slane %v13583, 1
  %v13708 = vrot.slane %v13584, 1
  %v13709 = vsel %vm1782, %v13707, %v13708
  %v13710 = vrot.slane %v13585, 1
  %v13711 = vsel %vm1782, %v13708, %v13710
  %v13712 = vrot.slane %v13586, 1
  %v13713 = vsel %vm1782, %v13710, %v13712
  %v13714 = vrot.slane %v13587, 1
  %v13715 = vsel %vm1782, %v13712, %v13714
  %v13716 = vrot.slane %v13588, 1
  %v13717 = vsel %vm1782, %v13714, %v13716
  %v13718 = vrot.slane %v13589, 1
  %v13719 = vsel %vm1782, %v13716, %v13718
  %v13720 = vrot.slane %v13590, 1
  %v13721 = vsel %vm1782, %v13718, %v13720
  %v13722 = vrot.slane %v13591, 1
  %v13723 = vsel %vm1782, %v13720, %v13722
  %v13724 = vrot.slane %v13592, 1
  %v13725 = vsel %vm1782, %v13722, %v13724
  %v13726 = vrot.slane %v13593, 1
  %v13727 = vsel %vm1782, %v13724, %v13726
  %v13728 = vrot.slane %v13594, 1
  %v13729 = vsel %vm1782, %v13726, %v13728
  %v13730 = vrot.slane %v13595, 1
  %v13731 = vsel %vm1782, %v13728, %v13730
  %v13732 = vrot.slane %v13596, 1
  %v13733 = vsel %vm1782, %v13730, %v13732
  %v13734 = vrot.slane %v13597, 1
  %v13735 = vsel %vm1782, %v13732, %v13734
  %v13736 = vrot.slane %v13598, 1
  %v13737 = vsel %vm1782, %v13734, %v13736
  %v13738 = vrot.slane %v13599, 1
  %v13739 = vsel %vm1782, %v13736, %v13738
  %v13740 = vrot.slane %v13600, 1
  %v13741 = vsel %vm1782, %v13738, %v13740
  %v13742 = vrot.slane %v13601, 1
  %v13743 = vsel %vm1782, %v13740, %v13742
  %v13744 = vrot.slane %v13602, 1
  %v13745 = vsel %vm1782, %v13742, %v13744
  %v13746 = vrot.slane %v13603, 1
  %v13747 = vsel %vm1782, %v13744, %v13746
  %v13748 = vrot.slane %v13604, 1
  %v13749 = vsel %vm1782, %v13746, %v13748
  %v13750 = vrot.slane %v13605, 1
  %v13751 = vsel %vm1782, %v13748, %v13750
  %v13752 = vrot.slane %v13606, 1
  %v13753 = vsel %vm1782, %v13750, %v13752
  %v13754 = vrot.slane %v13607, 1
  %v13755 = vsel %vm1782, %v13752, %v13754
  %v13756 = vrot.slane %v13608, 1
  %v13757 = vsel %vm1782, %v13754, %v13756
  %v13758 = vrot.slane %v13609, 1
  %v13759 = vsel %vm1782, %v13756, %v13758
  %v13760 = vrot.slane %v13610, 1
  %v13761 = vsel %vm1782, %v13758, %v13760
  %v13762 = vrot.slane %v13611, 1
  %v13763 = vsel %vm1782, %v13760, %v13762
  %v13764 = vrot.slane %v13612, 1
  %v13765 = vsel %vm1782, %v13762, %v13764
  %v13766 = vrot.slane %v13613, 1
  %v13767 = vsel %vm1782, %v13764, %v13766
  %v13768 = vrot.slane %v13614, 1
  %v13769 = vsel %vm1782, %v13766, %v13768
  %v13770 = vrot.slane %v13615, 1
  %v13771 = vsel %vm1782, %v13768, %v13770
  %v13772 = vrot.slane %v13616, 1
  %v13773 = vsel %vm1782, %v13770, %v13772
  %v13774 = vrot.slane %v13617, 1
  %v13775 = vsel %vm1782, %v13772, %v13774
  %v13776 = vrot.slane %v13618, 1
  %v13777 = vsel %vm1782, %v13774, %v13776
  %v13778 = vrot.slane %v13619, 1
  %v13779 = vsel %vm1782, %v13776, %v13778
  %v13780 = vrot.slane %v13620, 1
  %v13781 = vsel %vm1782, %v13778, %v13780
  %v13782 = vrot.slane %v13621, 1
  %v13783 = vsel %vm1782, %v13780, %v13782
  %v13784 = vrot.slane %v13622, 1
  %v13785 = vsel %vm1782, %v13782, %v13784
  %v13786 = vrot.slane %v13623, 1
  %v13787 = vsel %vm1782, %v13784, %v13786
  %v13788 = vrot.slane %v13624, 1
  %v13789 = vsel %vm1782, %v13786, %v13788
  %v13790 = vrot.slane %v13625, 1
  %v13791 = vsel %vm1782, %v13788, %v13790
  %v13792 = vrot.slane %v13626, 1
  %v13793 = vsel %vm1782, %v13790, %v13792
  %v13794 = vrot.slane %v13627, 1
  %v13795 = vsel %vm1782, %v13792, %v13794
  %v13796 = vrot.slane %v13628, 1
  %v13797 = vsel %vm1782, %v13794, %v13796
  %v13798 = vrot.slane %v13629, 1
  %v13799 = vsel %vm1782, %v13796, %v13798
  %v13800 = vrot.slane %v13630, 1
  %v13801 = vsel %vm1782, %v13798, %v13800
  %v13802 = vrot.slane %v13631, 1
  %v13803 = vsel %vm1782, %v13800, %v13802
  %v13804 = vrot.slane %v13632, 1
  %v13805 = vsel %vm1782, %v13802, %v13804
  %v13806 = vrot.slane %v13633, 1
  %v13807 = vsel %vm1782, %v13804, %v13806
  %v13808 = vrot.slane %v13634, 1
  %v13809 = vsel %vm1782, %v13806, %v13808
  %v13810 = vrot.slane %v13635, 1
  %v13811 = vsel %vm1782, %v13808, %v13810
  %v13812 = vrot.slane %v13636, 1
  %v13813 = vsel %vm1782, %v13810, %v13812
  %v13814 = vrot.slane %v13637, 1
  %v13815 = vsel %vm1782, %v13812, %v13814
  %v13816 = vrot.slane %v13638, 1
  %v13817 = vsel %vm1782, %v13814, %v13816
  %v13818 = vrot.slane %v13639, 1
  %v13819 = vsel %vm1782, %v13816, %v13818
  %v13820 = vrot.slane %v13640, 1
  %v13821 = vsel %vm1782, %v13818, %v13820
  %v13822 = vrot.slane %v13641, 1
  %v13823 = vsel %vm1782, %v13820, %v13822
  %v13824 = vrot.slane %v13642, 1
  %v13825 = vsel %vm1782, %v13822, %v13824
  %v13826 = vrot.slane %v13643, 1
  %v13827 = vsel %vm1782, %v13824, %v13826
  %v13828 = vrot.slane %v13644, 1
  %v13829 = vsel %vm1782, %v13826, %v13828
  %v13830 = vsel %vm1782, %v13828, %v7510
  %13831 = vrot.lane.b32.xlu0 %v13707, 100
  %v13832 = vpop.permute.xlu0 %13831
  %13833 = vrot.lane.b32.xlu0 %v13709, 100
  %v13834 = vpop.permute.xlu0 %13833
  %13835 = vrot.lane.b32.xlu0 %v13711, 100
  %v13836 = vpop.permute.xlu0 %13835
  %13837 = vrot.lane.b32.xlu0 %v13713, 100
  %v13838 = vpop.permute.xlu0 %13837
  %13839 = vrot.lane.b32.xlu0 %v13715, 100
  %v13840 = vpop.permute.xlu0 %13839
  %13841 = vrot.lane.b32.xlu0 %v13717, 100
  %v13842 = vpop.permute.xlu0 %13841
  %13843 = vrot.lane.b32.xlu0 %v13719, 100
  %v13844 = vpop.permute.xlu0 %13843
  %13845 = vrot.lane.b32.xlu0 %v13721, 100
  %v13846 = vpop.permute.xlu0 %13845
  %13847 = vrot.lane.b32.xlu0 %v13723, 100
  %v13848 = vpop.permute.xlu0 %13847
  %13849 = vrot.lane.b32.xlu0 %v13725, 100
  %v13850 = vpop.permute.xlu0 %13849
  %13851 = vrot.lane.b32.xlu0 %v13727, 100
  %v13852 = vpop.permute.xlu0 %13851
  %13853 = vrot.lane.b32.xlu0 %v13729, 100
  %v13854 = vpop.permute.xlu0 %13853
  %13855 = vrot.lane.b32.xlu0 %v13731, 100
  %v13856 = vpop.permute.xlu0 %13855
  %13857 = vrot.lane.b32.xlu0 %v13733, 100
  %v13858 = vpop.permute.xlu0 %13857
  %13859 = vrot.lane.b32.xlu0 %v13735, 100
  %v13860 = vpop.permute.xlu0 %13859
  %13861 = vrot.lane.b32.xlu0 %v13737, 100
  %v13862 = vpop.permute.xlu0 %13861
  %13863 = vrot.lane.b32.xlu0 %v13739, 100
  %v13864 = vpop.permute.xlu0 %13863
  %13865 = vrot.lane.b32.xlu0 %v13741, 100
  %v13866 = vpop.permute.xlu0 %13865
  %13867 = vrot.lane.b32.xlu0 %v13743, 100
  %v13868 = vpop.permute.xlu0 %13867
  %13869 = vrot.lane.b32.xlu0 %v13745, 100
  %v13870 = vpop.permute.xlu0 %13869
  %13871 = vrot.lane.b32.xlu0 %v13747, 100
  %v13872 = vpop.permute.xlu0 %13871
  %13873 = vrot.lane.b32.xlu0 %v13749, 100
  %v13874 = vpop.permute.xlu0 %13873
  %13875 = vrot.lane.b32.xlu0 %v13751, 100
  %v13876 = vpop.permute.xlu0 %13875
  %13877 = vrot.lane.b32.xlu0 %v13753, 100
  %v13878 = vpop.permute.xlu0 %13877
  %13879 = vrot.lane.b32.xlu0 %v13755, 100
  %v13880 = vpop.permute.xlu0 %13879
  %13881 = vrot.lane.b32.xlu0 %v13757, 100
  %v13882 = vpop.permute.xlu0 %13881
  %13883 = vrot.lane.b32.xlu0 %v13759, 100
  %v13884 = vpop.permute.xlu0 %13883
  %13885 = vrot.lane.b32.xlu0 %v13761, 100
  %v13886 = vpop.permute.xlu0 %13885
  %13887 = vrot.lane.b32.xlu0 %v13763, 100
  %v13888 = vpop.permute.xlu0 %13887
  %13889 = vrot.lane.b32.xlu0 %v13765, 100
  %v13890 = vpop.permute.xlu0 %13889
  %13891 = vrot.lane.b32.xlu0 %v13767, 100
  %v13892 = vpop.permute.xlu0 %13891
  %13893 = vrot.lane.b32.xlu0 %v13769, 100
  %v13894 = vpop.permute.xlu0 %13893
  %13895 = vrot.lane.b32.xlu0 %v13771, 100
  %v13896 = vpop.permute.xlu0 %13895
  %13897 = vrot.lane.b32.xlu0 %v13773, 100
  %v13898 = vpop.permute.xlu0 %13897
  %13899 = vrot.lane.b32.xlu0 %v13775, 100
  %v13900 = vpop.permute.xlu0 %13899
  %13901 = vrot.lane.b32.xlu0 %v13777, 100
  %v13902 = vpop.permute.xlu0 %13901
  %13903 = vrot.lane.b32.xlu0 %v13779, 100
  %v13904 = vpop.permute.xlu0 %13903
  %13905 = vrot.lane.b32.xlu0 %v13781, 100
  %v13906 = vpop.permute.xlu0 %13905
  %13907 = vrot.lane.b32.xlu0 %v13783, 100
  %v13908 = vpop.permute.xlu0 %13907
  %13909 = vrot.lane.b32.xlu0 %v13785, 100
  %v13910 = vpop.permute.xlu0 %13909
  %13911 = vrot.lane.b32.xlu0 %v13787, 100
  %v13912 = vpop.permute.xlu0 %13911
  %13913 = vrot.lane.b32.xlu0 %v13789, 100
  %v13914 = vpop.permute.xlu0 %13913
  %13915 = vrot.lane.b32.xlu0 %v13791, 100
  %v13916 = vpop.permute.xlu0 %13915
  %13917 = vrot.lane.b32.xlu0 %v13793, 100
  %v13918 = vpop.permute.xlu0 %13917
  %13919 = vrot.lane.b32.xlu0 %v13795, 100
  %v13920 = vpop.permute.xlu0 %13919
  %13921 = vrot.lane.b32.xlu0 %v13797, 100
  %v13922 = vpop.permute.xlu0 %13921
  %13923 = vrot.lane.b32.xlu0 %v13799, 100
  %v13924 = vpop.permute.xlu0 %13923
  %13925 = vrot.lane.b32.xlu0 %v13801, 100
  %v13926 = vpop.permute.xlu0 %13925
  %13927 = vrot.lane.b32.xlu0 %v13803, 100
  %v13928 = vpop.permute.xlu0 %13927
  %13929 = vrot.lane.b32.xlu0 %v13805, 100
  %v13930 = vpop.permute.xlu0 %13929
  %13931 = vrot.lane.b32.xlu0 %v13807, 100
  %v13932 = vpop.permute.xlu0 %13931
  %13933 = vrot.lane.b32.xlu0 %v13809, 100
  %v13934 = vpop.permute.xlu0 %13933
  %13935 = vrot.lane.b32.xlu0 %v13811, 100
  %v13936 = vpop.permute.xlu0 %13935
  %13937 = vrot.lane.b32.xlu0 %v13813, 100
  %v13938 = vpop.permute.xlu0 %13937
  %13939 = vrot.lane.b32.xlu0 %v13815, 100
  %v13940 = vpop.permute.xlu0 %13939
  %13941 = vrot.lane.b32.xlu0 %v13817, 100
  %v13942 = vpop.permute.xlu0 %13941
  %13943 = vrot.lane.b32.xlu0 %v13819, 100
  %v13944 = vpop.permute.xlu0 %13943
  %13945 = vrot.lane.b32.xlu0 %v13821, 100
  %v13946 = vpop.permute.xlu0 %13945
  %13947 = vrot.lane.b32.xlu0 %v13823, 100
  %v13948 = vpop.permute.xlu0 %13947
  %13949 = vrot.lane.b32.xlu0 %v13825, 100
  %v13950 = vpop.permute.xlu0 %13949
  %13951 = vrot.lane.b32.xlu0 %v13827, 100
  %v13952 = vpop.permute.xlu0 %13951
  %13953 = vrot.lane.b32.xlu0 %v13829, 100
  %v13954 = vpop.permute.xlu0 %13953
  %13955 = vrot.lane.b32.xlu0 %v13830, 100
  %v13956 = vpop.permute.xlu0 %13955
  %v14020 = vadd.f32 %v13518, %v13832
  %v14021 = vadd.f32 %v13519, %v13834
  %v14022 = vadd.f32 %v13520, %v13836
  %v14023 = vadd.f32 %v13521, %v13838
  %v14024 = vadd.f32 %v13522, %v13840
  %v14025 = vadd.f32 %v13523, %v13842
  %v14026 = vadd.f32 %v13524, %v13844
  %v14027 = vadd.f32 %v13525, %v13846
  %v14028 = vadd.f32 %v13526, %v13848
  %v14029 = vadd.f32 %v13527, %v13850
  %v14030 = vadd.f32 %v13528, %v13852
  %v14031 = vadd.f32 %v13529, %v13854
  %v14032 = vadd.f32 %v13530, %v13856
  %v14033 = vadd.f32 %v13531, %v13858
  %v14034 = vadd.f32 %v13532, %v13860
  %v14035 = vadd.f32 %v13533, %v13862
  %v14036 = vadd.f32 %v13534, %v13864
  %v14037 = vadd.f32 %v13535, %v13866
  %v14038 = vadd.f32 %v13536, %v13868
  %v14039 = vadd.f32 %v13537, %v13870
  %v14040 = vadd.f32 %v13538, %v13872
  %v14041 = vadd.f32 %v13539, %v13874
  %v14042 = vadd.f32 %v13540, %v13876
  %v14043 = vadd.f32 %v13541, %v13878
  %v14044 = vadd.f32 %v13542, %v13880
  %v14045 = vadd.f32 %v13543, %v13882
  %v14046 = vadd.f32 %v13544, %v13884
  %v14047 = vadd.f32 %v13545, %v13886
  %v14048 = vadd.f32 %v13546, %v13888
  %v14049 = vadd.f32 %v13547, %v13890
  %v14050 = vadd.f32 %v13548, %v13892
  %v14051 = vadd.f32 %v13549, %v13894
  %v14052 = vadd.f32 %v13550, %v13896
  %v14053 = vadd.f32 %v13551, %v13898
  %v14054 = vadd.f32 %v13552, %v13900
  %v14055 = vadd.f32 %v13553, %v13902
  %v14056 = vadd.f32 %v13554, %v13904
  %v14057 = vadd.f32 %v13555, %v13906
  %v14058 = vadd.f32 %v13556, %v13908
  %v14059 = vadd.f32 %v13557, %v13910
  %v14060 = vadd.f32 %v13558, %v13912
  %v14061 = vadd.f32 %v13559, %v13914
  %v14062 = vadd.f32 %v13560, %v13916
  %v14063 = vadd.f32 %v13561, %v13918
  %v14064 = vadd.f32 %v13562, %v13920
  %v14065 = vadd.f32 %v13563, %v13922
  %v14066 = vadd.f32 %v13564, %v13924
  %v14067 = vadd.f32 %v13565, %v13926
  %v14068 = vadd.f32 %v13566, %v13928
  %v14069 = vadd.f32 %v13567, %v13930
  %v14070 = vadd.f32 %v13568, %v13932
  %v14071 = vadd.f32 %v13569, %v13934
  %v14072 = vadd.f32 %v13570, %v13936
  %v14073 = vadd.f32 %v13571, %v13938
  %v14074 = vadd.f32 %v13572, %v13940
  %v14075 = vadd.f32 %v13573, %v13942
  %v14076 = vadd.f32 %v13574, %v13944
  %v14077 = vadd.f32 %v13575, %v13946
  %v14078 = vadd.f32 %v13576, %v13948
  %v14079 = vadd.f32 %v13577, %v13950
  %v14080 = vadd.f32 %v13578, %v13952
  %v14081 = vadd.f32 %v13579, %v13954
  %v14082 = vadd.f32 %v13580, %v13956
  %v14083 = vadd.f32 %v13581, %v7641
  %v14084 = vadd.f32 %v13582, %v7643
  %v14085 = vmul.f32 %v10414, %v7966
  %v14086 = vmul.f32 %v10417, %v7968
  %v14087 = vmul.f32 %v10422, %v7970
  %v14088 = vmul.f32 %v10425, %v7972
  %v14089 = vmul.f32 %v10430, %v7974
  %v14090 = vmul.f32 %v10433, %v7976
  %v14091 = vmul.f32 %v10438, %v7978
  %v14092 = vmul.f32 %v10441, %v7980
  %v14093 = vmul.f32 %v10446, %v7982
  %v14094 = vmul.f32 %v10449, %v7984
  %v14095 = vmul.f32 %v10454, %v7986
  %v14096 = vmul.f32 %v10457, %v7988
  %v14097 = vmul.f32 %v10462, %v7990
  %v14098 = vmul.f32 %v10465, %v7992
  %v14099 = vmul.f32 %v10470, %v7994
  %v14100 = vmul.f32 %v10473, %v7996
  %v14101 = vmul.f32 %v10478, %v7998
  %v14102 = vmul.f32 %v10481, %v8000
  %v14103 = vmul.f32 %v10486, %v8002
  %v14104 = vmul.f32 %v10489, %v8004
  %v14105 = vmul.f32 %v10494, %v8006
  %v14106 = vmul.f32 %v10497, %v8008
  %v14107 = vmul.f32 %v10502, %v8010
  %v14108 = vmul.f32 %v10505, %v8012
  %v14109 = vmul.f32 %v10510, %v8014
  %v14110 = vmul.f32 %v10513, %v8016
  %v14111 = vmul.f32 %v10518, %v8018
  %v14112 = vmul.f32 %v10521, %v8020
  %v14113 = vmul.f32 %v10526, %v8022
  %v14114 = vmul.f32 %v10529, %v8024
  %v14115 = vmul.f32 %v10534, %v8026
  %v14116 = vmul.f32 %v10537, %v8028
  %v14117 = vmul.f32 %v10542, %v8030
  %v14118 = vmul.f32 %v10545, %v8032
  %v14119 = vmul.f32 %v10550, %v8034
  %v14120 = vmul.f32 %v10553, %v8036
  %v14121 = vmul.f32 %v10558, %v8038
  %v14122 = vmul.f32 %v10561, %v8040
  %v14123 = vmul.f32 %v10566, %v8042
  %v14124 = vmul.f32 %v10569, %v8044
  %v14125 = vmul.f32 %v10574, %v8046
  %v14126 = vmul.f32 %v10577, %v8048
  %v14127 = vmul.f32 %v10582, %v8050
  %v14128 = vmul.f32 %v10585, %v8052
  %v14129 = vmul.f32 %v10590, %v8054
  %v14130 = vmul.f32 %v10593, %v8056
  %v14131 = vmul.f32 %v10598, %v8058
  %v14132 = vmul.f32 %v10601, %v8060
  %v14133 = vmul.f32 %v10606, %v8062
  %v14134 = vmul.f32 %v10609, %v8064
  %v14135 = vmul.f32 %v10614, %v8066
  %v14136 = vmul.f32 %v10617, %v8068
  %v14137 = vmul.f32 %v10622, %v8070
  %v14138 = vmul.f32 %v10625, %v8072
  %v14139 = vmul.f32 %v10630, %v8074
  %v14140 = vmul.f32 %v10633, %v8076
  %v14141 = vmul.f32 %v10638, %v8078
  %v14142 = vmul.f32 %v10641, %v8080
  %v14143 = vmul.f32 %v10646, %v8082
  %v14144 = vmul.f32 %v10649, %v8084
  %v14145 = vmul.f32 %v10654, %v8086
  %v14146 = vmul.f32 %v10657, %v8088
  %v14209 = vrot.slane %v14085, 2
  %v14210 = vrot.slane %v14086, 2
  %v14211 = vsel %vm3391, %v14209, %v14210
  %v14212 = vrot.slane %v14087, 2
  %v14213 = vsel %vm3391, %v14210, %v14212
  %v14214 = vrot.slane %v14088, 2
  %v14215 = vsel %vm3391, %v14212, %v14214
  %v14216 = vrot.slane %v14089, 2
  %v14217 = vsel %vm3391, %v14214, %v14216
  %v14218 = vrot.slane %v14090, 2
  %v14219 = vsel %vm3391, %v14216, %v14218
  %v14220 = vrot.slane %v14091, 2
  %v14221 = vsel %vm3391, %v14218, %v14220
  %v14222 = vrot.slane %v14092, 2
  %v14223 = vsel %vm3391, %v14220, %v14222
  %v14224 = vrot.slane %v14093, 2
  %v14225 = vsel %vm3391, %v14222, %v14224
  %v14226 = vrot.slane %v14094, 2
  %v14227 = vsel %vm3391, %v14224, %v14226
  %v14228 = vrot.slane %v14095, 2
  %v14229 = vsel %vm3391, %v14226, %v14228
  %v14230 = vrot.slane %v14096, 2
  %v14231 = vsel %vm3391, %v14228, %v14230
  %v14232 = vrot.slane %v14097, 2
  %v14233 = vsel %vm3391, %v14230, %v14232
  %v14234 = vrot.slane %v14098, 2
  %v14235 = vsel %vm3391, %v14232, %v14234
  %v14236 = vrot.slane %v14099, 2
  %v14237 = vsel %vm3391, %v14234, %v14236
  %v14238 = vrot.slane %v14100, 2
  %v14239 = vsel %vm3391, %v14236, %v14238
  %v14240 = vrot.slane %v14101, 2
  %v14241 = vsel %vm3391, %v14238, %v14240
  %v14242 = vrot.slane %v14102, 2
  %v14243 = vsel %vm3391, %v14240, %v14242
  %v14244 = vrot.slane %v14103, 2
  %v14245 = vsel %vm3391, %v14242, %v14244
  %v14246 = vrot.slane %v14104, 2
  %v14247 = vsel %vm3391, %v14244, %v14246
  %v14248 = vrot.slane %v14105, 2
  %v14249 = vsel %vm3391, %v14246, %v14248
  %v14250 = vrot.slane %v14106, 2
  %v14251 = vsel %vm3391, %v14248, %v14250
  %v14252 = vrot.slane %v14107, 2
  %v14253 = vsel %vm3391, %v14250, %v14252
  %v14254 = vrot.slane %v14108, 2
  %v14255 = vsel %vm3391, %v14252, %v14254
  %v14256 = vrot.slane %v14109, 2
  %v14257 = vsel %vm3391, %v14254, %v14256
  %v14258 = vrot.slane %v14110, 2
  %v14259 = vsel %vm3391, %v14256, %v14258
  %v14260 = vrot.slane %v14111, 2
  %v14261 = vsel %vm3391, %v14258, %v14260
  %v14262 = vrot.slane %v14112, 2
  %v14263 = vsel %vm3391, %v14260, %v14262
  %v14264 = vrot.slane %v14113, 2
  %v14265 = vsel %vm3391, %v14262, %v14264
  %v14266 = vrot.slane %v14114, 2
  %v14267 = vsel %vm3391, %v14264, %v14266
  %v14268 = vrot.slane %v14115, 2
  %v14269 = vsel %vm3391, %v14266, %v14268
  %v14270 = vrot.slane %v14116, 2
  %v14271 = vsel %vm3391, %v14268, %v14270
  %v14272 = vrot.slane %v14117, 2
  %v14273 = vsel %vm3391, %v14270, %v14272
  %v14274 = vrot.slane %v14118, 2
  %v14275 = vsel %vm3391, %v14272, %v14274
  %v14276 = vrot.slane %v14119, 2
  %v14277 = vsel %vm3391, %v14274, %v14276
  %v14278 = vrot.slane %v14120, 2
  %v14279 = vsel %vm3391, %v14276, %v14278
  %v14280 = vrot.slane %v14121, 2
  %v14281 = vsel %vm3391, %v14278, %v14280
  %v14282 = vrot.slane %v14122, 2
  %v14283 = vsel %vm3391, %v14280, %v14282
  %v14284 = vrot.slane %v14123, 2
  %v14285 = vsel %vm3391, %v14282, %v14284
  %v14286 = vrot.slane %v14124, 2
  %v14287 = vsel %vm3391, %v14284, %v14286
  %v14288 = vrot.slane %v14125, 2
  %v14289 = vsel %vm3391, %v14286, %v14288
  %v14290 = vrot.slane %v14126, 2
  %v14291 = vsel %vm3391, %v14288, %v14290
  %v14292 = vrot.slane %v14127, 2
  %v14293 = vsel %vm3391, %v14290, %v14292
  %v14294 = vrot.slane %v14128, 2
  %v14295 = vsel %vm3391, %v14292, %v14294
  %v14296 = vrot.slane %v14129, 2
  %v14297 = vsel %vm3391, %v14294, %v14296
  %v14298 = vrot.slane %v14130, 2
  %v14299 = vsel %vm3391, %v14296, %v14298
  %v14300 = vrot.slane %v14131, 2
  %v14301 = vsel %vm3391, %v14298, %v14300
  %v14302 = vrot.slane %v14132, 2
  %v14303 = vsel %vm3391, %v14300, %v14302
  %v14304 = vrot.slane %v14133, 2
  %v14305 = vsel %vm3391, %v14302, %v14304
  %v14306 = vrot.slane %v14134, 2
  %v14307 = vsel %vm3391, %v14304, %v14306
  %v14308 = vrot.slane %v14135, 2
  %v14309 = vsel %vm3391, %v14306, %v14308
  %v14310 = vrot.slane %v14136, 2
  %v14311 = vsel %vm3391, %v14308, %v14310
  %v14312 = vrot.slane %v14137, 2
  %v14313 = vsel %vm3391, %v14310, %v14312
  %v14314 = vrot.slane %v14138, 2
  %v14315 = vsel %vm3391, %v14312, %v14314
  %v14316 = vrot.slane %v14139, 2
  %v14317 = vsel %vm3391, %v14314, %v14316
  %v14318 = vrot.slane %v14140, 2
  %v14319 = vsel %vm3391, %v14316, %v14318
  %v14320 = vrot.slane %v14141, 2
  %v14321 = vsel %vm3391, %v14318, %v14320
  %v14322 = vrot.slane %v14142, 2
  %v14323 = vsel %vm3391, %v14320, %v14322
  %v14324 = vrot.slane %v14143, 2
  %v14325 = vsel %vm3391, %v14322, %v14324
  %v14326 = vrot.slane %v14144, 2
  %v14327 = vsel %vm3391, %v14324, %v14326
  %v14328 = vrot.slane %v14145, 2
  %v14329 = vsel %vm3391, %v14326, %v14328
  %v14330 = vrot.slane %v14146, 2
  %v14331 = vsel %vm3391, %v14328, %v14330
  %v14332 = vsel %vm3391, %v14330, %v8411
  %14333 = vrot.lane.b32.xlu0 %v14209, 96
  %v14334 = vpop.permute.xlu0 %14333
  %14335 = vrot.lane.b32.xlu0 %v14211, 96
  %v14336 = vpop.permute.xlu0 %14335
  %14337 = vrot.lane.b32.xlu0 %v14213, 96
  %v14338 = vpop.permute.xlu0 %14337
  %14339 = vrot.lane.b32.xlu0 %v14215, 96
  %v14340 = vpop.permute.xlu0 %14339
  %14341 = vrot.lane.b32.xlu0 %v14217, 96
  %v14342 = vpop.permute.xlu0 %14341
  %14343 = vrot.lane.b32.xlu0 %v14219, 96
  %v14344 = vpop.permute.xlu0 %14343
  %14345 = vrot.lane.b32.xlu0 %v14221, 96
  %v14346 = vpop.permute.xlu0 %14345
  %14347 = vrot.lane.b32.xlu0 %v14223, 96
  %v14348 = vpop.permute.xlu0 %14347
  %14349 = vrot.lane.b32.xlu0 %v14225, 96
  %v14350 = vpop.permute.xlu0 %14349
  %14351 = vrot.lane.b32.xlu0 %v14227, 96
  %v14352 = vpop.permute.xlu0 %14351
  %14353 = vrot.lane.b32.xlu0 %v14229, 96
  %v14354 = vpop.permute.xlu0 %14353
  %14355 = vrot.lane.b32.xlu0 %v14231, 96
  %v14356 = vpop.permute.xlu0 %14355
  %14357 = vrot.lane.b32.xlu0 %v14233, 96
  %v14358 = vpop.permute.xlu0 %14357
  %14359 = vrot.lane.b32.xlu0 %v14235, 96
  %v14360 = vpop.permute.xlu0 %14359
  %14361 = vrot.lane.b32.xlu0 %v14237, 96
  %v14362 = vpop.permute.xlu0 %14361
  %14363 = vrot.lane.b32.xlu0 %v14239, 96
  %v14364 = vpop.permute.xlu0 %14363
  %14365 = vrot.lane.b32.xlu0 %v14241, 96
  %v14366 = vpop.permute.xlu0 %14365
  %14367 = vrot.lane.b32.xlu0 %v14243, 96
  %v14368 = vpop.permute.xlu0 %14367
  %14369 = vrot.lane.b32.xlu0 %v14245, 96
  %v14370 = vpop.permute.xlu0 %14369
  %14371 = vrot.lane.b32.xlu0 %v14247, 96
  %v14372 = vpop.permute.xlu0 %14371
  %14373 = vrot.lane.b32.xlu0 %v14249, 96
  %v14374 = vpop.permute.xlu0 %14373
  %14375 = vrot.lane.b32.xlu0 %v14251, 96
  %v14376 = vpop.permute.xlu0 %14375
  %14377 = vrot.lane.b32.xlu0 %v14253, 96
  %v14378 = vpop.permute.xlu0 %14377
  %14379 = vrot.lane.b32.xlu0 %v14255, 96
  %v14380 = vpop.permute.xlu0 %14379
  %14381 = vrot.lane.b32.xlu0 %v14257, 96
  %v14382 = vpop.permute.xlu0 %14381
  %14383 = vrot.lane.b32.xlu0 %v14259, 96
  %v14384 = vpop.permute.xlu0 %14383
  %14385 = vrot.lane.b32.xlu0 %v14261, 96
  %v14386 = vpop.permute.xlu0 %14385
  %14387 = vrot.lane.b32.xlu0 %v14263, 96
  %v14388 = vpop.permute.xlu0 %14387
  %14389 = vrot.lane.b32.xlu0 %v14265, 96
  %v14390 = vpop.permute.xlu0 %14389
  %14391 = vrot.lane.b32.xlu0 %v14267, 96
  %v14392 = vpop.permute.xlu0 %14391
  %14393 = vrot.lane.b32.xlu0 %v14269, 96
  %v14394 = vpop.permute.xlu0 %14393
  %14395 = vrot.lane.b32.xlu0 %v14271, 96
  %v14396 = vpop.permute.xlu0 %14395
  %14397 = vrot.lane.b32.xlu0 %v14273, 96
  %v14398 = vpop.permute.xlu0 %14397
  %14399 = vrot.lane.b32.xlu0 %v14275, 96
  %v14400 = vpop.permute.xlu0 %14399
  %14401 = vrot.lane.b32.xlu0 %v14277, 96
  %v14402 = vpop.permute.xlu0 %14401
  %14403 = vrot.lane.b32.xlu0 %v14279, 96
  %v14404 = vpop.permute.xlu0 %14403
  %14405 = vrot.lane.b32.xlu0 %v14281, 96
  %v14406 = vpop.permute.xlu0 %14405
  %14407 = vrot.lane.b32.xlu0 %v14283, 96
  %v14408 = vpop.permute.xlu0 %14407
  %14409 = vrot.lane.b32.xlu0 %v14285, 96
  %v14410 = vpop.permute.xlu0 %14409
  %14411 = vrot.lane.b32.xlu0 %v14287, 96
  %v14412 = vpop.permute.xlu0 %14411
  %14413 = vrot.lane.b32.xlu0 %v14289, 96
  %v14414 = vpop.permute.xlu0 %14413
  %14415 = vrot.lane.b32.xlu0 %v14291, 96
  %v14416 = vpop.permute.xlu0 %14415
  %14417 = vrot.lane.b32.xlu0 %v14293, 96
  %v14418 = vpop.permute.xlu0 %14417
  %14419 = vrot.lane.b32.xlu0 %v14295, 96
  %v14420 = vpop.permute.xlu0 %14419
  %14421 = vrot.lane.b32.xlu0 %v14297, 96
  %v14422 = vpop.permute.xlu0 %14421
  %14423 = vrot.lane.b32.xlu0 %v14299, 96
  %v14424 = vpop.permute.xlu0 %14423
  %14425 = vrot.lane.b32.xlu0 %v14301, 96
  %v14426 = vpop.permute.xlu0 %14425
  %14427 = vrot.lane.b32.xlu0 %v14303, 96
  %v14428 = vpop.permute.xlu0 %14427
  %14429 = vrot.lane.b32.xlu0 %v14305, 96
  %v14430 = vpop.permute.xlu0 %14429
  %14431 = vrot.lane.b32.xlu0 %v14307, 96
  %v14432 = vpop.permute.xlu0 %14431
  %14433 = vrot.lane.b32.xlu0 %v14309, 96
  %v14434 = vpop.permute.xlu0 %14433
  %14435 = vrot.lane.b32.xlu0 %v14311, 96
  %v14436 = vpop.permute.xlu0 %14435
  %14437 = vrot.lane.b32.xlu0 %v14313, 96
  %v14438 = vpop.permute.xlu0 %14437
  %14439 = vrot.lane.b32.xlu0 %v14315, 96
  %v14440 = vpop.permute.xlu0 %14439
  %14441 = vrot.lane.b32.xlu0 %v14317, 96
  %v14442 = vpop.permute.xlu0 %14441
  %14443 = vrot.lane.b32.xlu0 %v14319, 96
  %v14444 = vpop.permute.xlu0 %14443
  %14445 = vrot.lane.b32.xlu0 %v14321, 96
  %v14446 = vpop.permute.xlu0 %14445
  %14447 = vrot.lane.b32.xlu0 %v14323, 96
  %v14448 = vpop.permute.xlu0 %14447
  %14449 = vrot.lane.b32.xlu0 %v14325, 96
  %v14450 = vpop.permute.xlu0 %14449
  %14451 = vrot.lane.b32.xlu0 %v14327, 96
  %v14452 = vpop.permute.xlu0 %14451
  %14453 = vrot.lane.b32.xlu0 %v14329, 96
  %v14454 = vpop.permute.xlu0 %14453
  %14455 = vrot.lane.b32.xlu0 %v14331, 96
  %v14456 = vpop.permute.xlu0 %14455
  %14457 = vrot.lane.b32.xlu0 %v14332, 96
  %v14458 = vpop.permute.xlu0 %14457
  %v14522 = vadd.f32 %v14020, %v14334
  %v14523 = vadd.f32 %v14021, %v14336
  %v14524 = vadd.f32 %v14022, %v14338
  %v14525 = vadd.f32 %v14023, %v14340
  %v14526 = vadd.f32 %v14024, %v14342
  %v14527 = vadd.f32 %v14025, %v14344
  %v14528 = vadd.f32 %v14026, %v14346
  %v14529 = vadd.f32 %v14027, %v14348
  %v14530 = vadd.f32 %v14028, %v14350
  %v14531 = vadd.f32 %v14029, %v14352
  %v14532 = vadd.f32 %v14030, %v14354
  %v14533 = vadd.f32 %v14031, %v14356
  %v14534 = vadd.f32 %v14032, %v14358
  %v14535 = vadd.f32 %v14033, %v14360
  %v14536 = vadd.f32 %v14034, %v14362
  %v14537 = vadd.f32 %v14035, %v14364
  %v14538 = vadd.f32 %v14036, %v14366
  %v14539 = vadd.f32 %v14037, %v14368
  %v14540 = vadd.f32 %v14038, %v14370
  %v14541 = vadd.f32 %v14039, %v14372
  %v14542 = vadd.f32 %v14040, %v14374
  %v14543 = vadd.f32 %v14041, %v14376
  %v14544 = vadd.f32 %v14042, %v14378
  %v14545 = vadd.f32 %v14043, %v14380
  %v14546 = vadd.f32 %v14044, %v14382
  %v14547 = vadd.f32 %v14045, %v14384
  %v14548 = vadd.f32 %v14046, %v14386
  %v14549 = vadd.f32 %v14047, %v14388
  %v14550 = vadd.f32 %v14048, %v14390
  %v14551 = vadd.f32 %v14049, %v14392
  %v14552 = vadd.f32 %v14050, %v14394
  %v14553 = vadd.f32 %v14051, %v14396
  %v14554 = vadd.f32 %v14052, %v14398
  %v14555 = vadd.f32 %v14053, %v14400
  %v14556 = vadd.f32 %v14054, %v14402
  %v14557 = vadd.f32 %v14055, %v14404
  %v14558 = vadd.f32 %v14056, %v14406
  %v14559 = vadd.f32 %v14057, %v14408
  %v14560 = vadd.f32 %v14058, %v14410
  %v14561 = vadd.f32 %v14059, %v14412
  %v14562 = vadd.f32 %v14060, %v14414
  %v14563 = vadd.f32 %v14061, %v14416
  %v14564 = vadd.f32 %v14062, %v14418
  %v14565 = vadd.f32 %v14063, %v14420
  %v14566 = vadd.f32 %v14064, %v14422
  %v14567 = vadd.f32 %v14065, %v14424
  %v14568 = vadd.f32 %v14066, %v14426
  %v14569 = vadd.f32 %v14067, %v14428
  %v14570 = vadd.f32 %v14068, %v14430
  %v14571 = vadd.f32 %v14069, %v14432
  %v14572 = vadd.f32 %v14070, %v14434
  %v14573 = vadd.f32 %v14071, %v14436
  %v14574 = vadd.f32 %v14072, %v14438
  %v14575 = vadd.f32 %v14073, %v14440
  %v14576 = vadd.f32 %v14074, %v14442
  %v14577 = vadd.f32 %v14075, %v14444
  %v14578 = vadd.f32 %v14076, %v14446
  %v14579 = vadd.f32 %v14077, %v14448
  %v14580 = vadd.f32 %v14078, %v14450
  %v14581 = vadd.f32 %v14079, %v14452
  %v14582 = vadd.f32 %v14080, %v14454
  %v14583 = vadd.f32 %v14081, %v14456
  %v14584 = vadd.f32 %v14082, %v14458
  %v14585 = vadd.f32 %v14083, %v8544
  %v14586 = vadd.f32 %v14084, %v8546
  %v14587 = vld [vmem:[%s9] sm:$0x1]
  %v14589 = vlaneseq
  %v14590 = vshrl.u32 %v14589, 7
  %v14591 = vsub.s32 0, %v14590
  %v14592 = vrot.slane %v14587, %v14591
  %v14594 = vadd.f32 %v14522, %v14592
  %v14595 = vadd.f32 %v14523, %v14592
  %v14596 = vadd.f32 %v14524, %v14592
  %v14597 = vadd.f32 %v14525, %v14592
  %v14598 = vadd.f32 %v14526, %v14592
  %v14599 = vadd.f32 %v14527, %v14592
  %v14600 = vadd.f32 %v14528, %v14592
  %v14601 = vadd.f32 %v14529, %v14592
  %v14602 = vadd.f32 %v14530, %v14592
  %v14603 = vadd.f32 %v14531, %v14592
  %v14604 = vadd.f32 %v14532, %v14592
  %v14605 = vadd.f32 %v14533, %v14592
  %v14606 = vadd.f32 %v14534, %v14592
  %v14607 = vadd.f32 %v14535, %v14592
  %v14608 = vadd.f32 %v14536, %v14592
  %v14609 = vadd.f32 %v14537, %v14592
  %v14610 = vadd.f32 %v14538, %v14592
  %v14611 = vadd.f32 %v14539, %v14592
  %v14612 = vadd.f32 %v14540, %v14592
  %v14613 = vadd.f32 %v14541, %v14592
  %v14614 = vadd.f32 %v14542, %v14592
  %v14615 = vadd.f32 %v14543, %v14592
  %v14616 = vadd.f32 %v14544, %v14592
  %v14617 = vadd.f32 %v14545, %v14592
  %v14618 = vadd.f32 %v14546, %v14592
  %v14619 = vadd.f32 %v14547, %v14592
  %v14620 = vadd.f32 %v14548, %v14592
  %v14621 = vadd.f32 %v14549, %v14592
  %v14622 = vadd.f32 %v14550, %v14592
  %v14623 = vadd.f32 %v14551, %v14592
  %v14624 = vadd.f32 %v14552, %v14592
  %v14625 = vadd.f32 %v14553, %v14592
  %v14626 = vadd.f32 %v14554, %v14592
  %v14627 = vadd.f32 %v14555, %v14592
  %v14628 = vadd.f32 %v14556, %v14592
  %v14629 = vadd.f32 %v14557, %v14592
  %v14630 = vadd.f32 %v14558, %v14592
  %v14631 = vadd.f32 %v14559, %v14592
  %v14632 = vadd.f32 %v14560, %v14592
  %v14633 = vadd.f32 %v14561, %v14592
  %v14634 = vadd.f32 %v14562, %v14592
  %v14635 = vadd.f32 %v14563, %v14592
  %v14636 = vadd.f32 %v14564, %v14592
  %v14637 = vadd.f32 %v14565, %v14592
  %v14638 = vadd.f32 %v14566, %v14592
  %v14639 = vadd.f32 %v14567, %v14592
  %v14640 = vadd.f32 %v14568, %v14592
  %v14641 = vadd.f32 %v14569, %v14592
  %v14642 = vadd.f32 %v14570, %v14592
  %v14643 = vadd.f32 %v14571, %v14592
  %v14644 = vadd.f32 %v14572, %v14592
  %v14645 = vadd.f32 %v14573, %v14592
  %v14646 = vadd.f32 %v14574, %v14592
  %v14647 = vadd.f32 %v14575, %v14592
  %v14648 = vadd.f32 %v14576, %v14592
  %v14649 = vadd.f32 %v14577, %v14592
  %v14650 = vadd.f32 %v14578, %v14592
  %v14651 = vadd.f32 %v14579, %v14592
  %v14652 = vadd.f32 %v14580, %v14592
  %v14653 = vadd.f32 %v14581, %v14592
  %v14654 = vadd.f32 %v14582, %v14592
  %v14655 = vadd.f32 %v14583, %v14592
  %v14656 = vadd.f32 %v14584, %v14592
  %v14657 = vadd.f32 %v14585, %v14592
  %v14658 = vadd.f32 %v14586, %v14592
  %v14659 = vld [vmem:[%s10] sm:$0x1]
  %v14660 = vld [vmem:[%s11] sm:$0x1]
  %v14726 = vrot.slane %v14594, 7
  %v14727 = vrot.slane %v14595, 7
  %v14728 = vsel %vm3068, %v14726, %v14727
  %v14729 = vrot.slane %v14596, 7
  %v14730 = vsel %vm3068, %v14727, %v14729
  %v14731 = vrot.slane %v14597, 7
  %v14732 = vsel %vm3068, %v14729, %v14731
  %v14733 = vrot.slane %v14598, 7
  %v14734 = vsel %vm3068, %v14731, %v14733
  %v14735 = vrot.slane %v14599, 7
  %v14736 = vsel %vm3068, %v14733, %v14735
  %v14737 = vrot.slane %v14600, 7
  %v14738 = vsel %vm3068, %v14735, %v14737
  %v14739 = vrot.slane %v14601, 7
  %v14740 = vsel %vm3068, %v14737, %v14739
  %v14741 = vrot.slane %v14602, 7
  %v14742 = vsel %vm3068, %v14739, %v14741
  %v14743 = vrot.slane %v14603, 7
  %v14744 = vsel %vm3068, %v14741, %v14743
  %v14745 = vrot.slane %v14604, 7
  %v14746 = vsel %vm3068, %v14743, %v14745
  %v14747 = vrot.slane %v14605, 7
  %v14748 = vsel %vm3068, %v14745, %v14747
  %v14749 = vrot.slane %v14606, 7
  %v14750 = vsel %vm3068, %v14747, %v14749
  %v14751 = vrot.slane %v14607, 7
  %v14752 = vsel %vm3068, %v14749, %v14751
  %v14753 = vrot.slane %v14608, 7
  %v14754 = vsel %vm3068, %v14751, %v14753
  %v14755 = vrot.slane %v14609, 7
  %v14756 = vsel %vm3068, %v14753, %v14755
  %v14757 = vrot.slane %v14610, 7
  %v14758 = vsel %vm3068, %v14755, %v14757
  %v14759 = vrot.slane %v14611, 7
  %v14760 = vsel %vm3068, %v14757, %v14759
  %v14761 = vrot.slane %v14612, 7
  %v14762 = vsel %vm3068, %v14759, %v14761
  %v14763 = vrot.slane %v14613, 7
  %v14764 = vsel %vm3068, %v14761, %v14763
  %v14765 = vrot.slane %v14614, 7
  %v14766 = vsel %vm3068, %v14763, %v14765
  %v14767 = vrot.slane %v14615, 7
  %v14768 = vsel %vm3068, %v14765, %v14767
  %v14769 = vrot.slane %v14616, 7
  %v14770 = vsel %vm3068, %v14767, %v14769
  %v14771 = vrot.slane %v14617, 7
  %v14772 = vsel %vm3068, %v14769, %v14771
  %v14773 = vrot.slane %v14618, 7
  %v14774 = vsel %vm3068, %v14771, %v14773
  %v14775 = vrot.slane %v14619, 7
  %v14776 = vsel %vm3068, %v14773, %v14775
  %v14777 = vrot.slane %v14620, 7
  %v14778 = vsel %vm3068, %v14775, %v14777
  %v14779 = vrot.slane %v14621, 7
  %v14780 = vsel %vm3068, %v14777, %v14779
  %v14781 = vrot.slane %v14622, 7
  %v14782 = vsel %vm3068, %v14779, %v14781
  %v14783 = vrot.slane %v14623, 7
  %v14784 = vsel %vm3068, %v14781, %v14783
  %v14785 = vrot.slane %v14624, 7
  %v14786 = vsel %vm3068, %v14783, %v14785
  %v14787 = vrot.slane %v14625, 7
  %v14788 = vsel %vm3068, %v14785, %v14787
  %v14789 = vrot.slane %v14626, 7
  %v14790 = vsel %vm3068, %v14787, %v14789
  %v14791 = vrot.slane %v14627, 7
  %v14792 = vsel %vm3068, %v14789, %v14791
  %v14793 = vrot.slane %v14628, 7
  %v14794 = vsel %vm3068, %v14791, %v14793
  %v14795 = vrot.slane %v14629, 7
  %v14796 = vsel %vm3068, %v14793, %v14795
  %v14797 = vrot.slane %v14630, 7
  %v14798 = vsel %vm3068, %v14795, %v14797
  %v14799 = vrot.slane %v14631, 7
  %v14800 = vsel %vm3068, %v14797, %v14799
  %v14801 = vrot.slane %v14632, 7
  %v14802 = vsel %vm3068, %v14799, %v14801
  %v14803 = vrot.slane %v14633, 7
  %v14804 = vsel %vm3068, %v14801, %v14803
  %v14805 = vrot.slane %v14634, 7
  %v14806 = vsel %vm3068, %v14803, %v14805
  %v14807 = vrot.slane %v14635, 7
  %v14808 = vsel %vm3068, %v14805, %v14807
  %v14809 = vrot.slane %v14636, 7
  %v14810 = vsel %vm3068, %v14807, %v14809
  %v14811 = vrot.slane %v14637, 7
  %v14812 = vsel %vm3068, %v14809, %v14811
  %v14813 = vrot.slane %v14638, 7
  %v14814 = vsel %vm3068, %v14811, %v14813
  %v14815 = vrot.slane %v14639, 7
  %v14816 = vsel %vm3068, %v14813, %v14815
  %v14817 = vrot.slane %v14640, 7
  %v14818 = vsel %vm3068, %v14815, %v14817
  %v14819 = vrot.slane %v14641, 7
  %v14820 = vsel %vm3068, %v14817, %v14819
  %v14821 = vrot.slane %v14642, 7
  %v14822 = vsel %vm3068, %v14819, %v14821
  %v14823 = vrot.slane %v14643, 7
  %v14824 = vsel %vm3068, %v14821, %v14823
  %v14825 = vrot.slane %v14644, 7
  %v14826 = vsel %vm3068, %v14823, %v14825
  %v14827 = vrot.slane %v14645, 7
  %v14828 = vsel %vm3068, %v14825, %v14827
  %v14829 = vrot.slane %v14646, 7
  %v14830 = vsel %vm3068, %v14827, %v14829
  %v14831 = vrot.slane %v14647, 7
  %v14832 = vsel %vm3068, %v14829, %v14831
  %v14833 = vrot.slane %v14648, 7
  %v14834 = vsel %vm3068, %v14831, %v14833
  %v14835 = vrot.slane %v14649, 7
  %v14836 = vsel %vm3068, %v14833, %v14835
  %v14837 = vrot.slane %v14650, 7
  %v14838 = vsel %vm3068, %v14835, %v14837
  %v14839 = vrot.slane %v14651, 7
  %v14840 = vsel %vm3068, %v14837, %v14839
  %v14841 = vrot.slane %v14652, 7
  %v14842 = vsel %vm3068, %v14839, %v14841
  %v14843 = vrot.slane %v14653, 7
  %v14844 = vsel %vm3068, %v14841, %v14843
  %v14845 = vrot.slane %v14654, 7
  %v14846 = vsel %vm3068, %v14843, %v14845
  %v14847 = vrot.slane %v14655, 7
  %v14848 = vsel %vm3068, %v14845, %v14847
  %v14849 = vrot.slane %v14656, 7
  %v14850 = vsel %vm3068, %v14847, %v14849
  %v14851 = vrot.slane %v14657, 7
  %v14852 = vsel %vm3068, %v14849, %v14851
  %v14853 = vrot.slane %v14658, 7
  %v14854 = vsel %vm3068, %v14851, %v14853
  %v14919 = vsel %vm974, %v14728, 0.0
  %v14920 = vsel %vm974, %v14730, 0.0
  %v14921 = vadd.f32 %v14919, %v14920
  %v14922 = vsel %vm974, %v14732, 0.0
  %v14923 = vadd.f32 %v14921, %v14922
  %v14924 = vsel %vm974, %v14734, 0.0
  %v14925 = vadd.f32 %v14923, %v14924
  %v14926 = vsel %vm974, %v14736, 0.0
  %v14927 = vadd.f32 %v14925, %v14926
  %v14928 = vsel %vm974, %v14738, 0.0
  %v14929 = vadd.f32 %v14927, %v14928
  %v14930 = vsel %vm974, %v14740, 0.0
  %v14931 = vadd.f32 %v14929, %v14930
  %v14932 = vsel %vm974, %v14742, 0.0
  %v14933 = vadd.f32 %v14931, %v14932
  %v14934 = vsel %vm974, %v14744, 0.0
  %v14935 = vadd.f32 %v14933, %v14934
  %v14936 = vsel %vm974, %v14746, 0.0
  %v14937 = vadd.f32 %v14935, %v14936
  %v14938 = vsel %vm974, %v14748, 0.0
  %v14939 = vadd.f32 %v14937, %v14938
  %v14940 = vsel %vm974, %v14750, 0.0
  %v14941 = vadd.f32 %v14939, %v14940
  %v14942 = vsel %vm974, %v14752, 0.0
  %v14943 = vadd.f32 %v14941, %v14942
  %v14944 = vsel %vm974, %v14754, 0.0
  %v14945 = vadd.f32 %v14943, %v14944
  %v14946 = vsel %vm974, %v14756, 0.0
  %v14947 = vadd.f32 %v14945, %v14946
  %v14948 = vsel %vm974, %v14758, 0.0
  %v14949 = vadd.f32 %v14947, %v14948
  %v14950 = vsel %vm974, %v14760, 0.0
  %v14951 = vadd.f32 %v14949, %v14950
  %v14952 = vsel %vm974, %v14762, 0.0
  %v14953 = vadd.f32 %v14951, %v14952
  %v14954 = vsel %vm974, %v14764, 0.0
  %v14955 = vadd.f32 %v14953, %v14954
  %v14956 = vsel %vm974, %v14766, 0.0
  %v14957 = vadd.f32 %v14955, %v14956
  %v14958 = vsel %vm974, %v14768, 0.0
  %v14959 = vadd.f32 %v14957, %v14958
  %v14960 = vsel %vm974, %v14770, 0.0
  %v14961 = vadd.f32 %v14959, %v14960
  %v14962 = vsel %vm974, %v14772, 0.0
  %v14963 = vadd.f32 %v14961, %v14962
  %v14964 = vsel %vm974, %v14774, 0.0
  %v14965 = vadd.f32 %v14963, %v14964
  %v14966 = vsel %vm974, %v14776, 0.0
  %v14967 = vadd.f32 %v14965, %v14966
  %v14968 = vsel %vm974, %v14778, 0.0
  %v14969 = vadd.f32 %v14967, %v14968
  %v14970 = vsel %vm974, %v14780, 0.0
  %v14971 = vadd.f32 %v14969, %v14970
  %v14972 = vsel %vm974, %v14782, 0.0
  %v14973 = vadd.f32 %v14971, %v14972
  %v14974 = vsel %vm974, %v14784, 0.0
  %v14975 = vadd.f32 %v14973, %v14974
  %v14976 = vsel %vm974, %v14786, 0.0
  %v14977 = vadd.f32 %v14975, %v14976
  %v14978 = vsel %vm974, %v14788, 0.0
  %v14979 = vadd.f32 %v14977, %v14978
  %v14980 = vsel %vm974, %v14790, 0.0
  %v14981 = vadd.f32 %v14979, %v14980
  %v14982 = vsel %vm974, %v14792, 0.0
  %v14983 = vadd.f32 %v14981, %v14982
  %v14984 = vsel %vm974, %v14794, 0.0
  %v14985 = vadd.f32 %v14983, %v14984
  %v14986 = vsel %vm974, %v14796, 0.0
  %v14987 = vadd.f32 %v14985, %v14986
  %v14988 = vsel %vm974, %v14798, 0.0
  %v14989 = vadd.f32 %v14987, %v14988
  %v14990 = vsel %vm974, %v14800, 0.0
  %v14991 = vadd.f32 %v14989, %v14990
  %v14992 = vsel %vm974, %v14802, 0.0
  %v14993 = vadd.f32 %v14991, %v14992
  %v14994 = vsel %vm974, %v14804, 0.0
  %v14995 = vadd.f32 %v14993, %v14994
  %v14996 = vsel %vm974, %v14806, 0.0
  %v14997 = vadd.f32 %v14995, %v14996
  %v14998 = vsel %vm974, %v14808, 0.0
  %v14999 = vadd.f32 %v14997, %v14998
  %v15000 = vsel %vm974, %v14810, 0.0
  %v15001 = vadd.f32 %v14999, %v15000
  %v15002 = vsel %vm974, %v14812, 0.0
  %v15003 = vadd.f32 %v15001, %v15002
  %v15004 = vsel %vm974, %v14814, 0.0
  %v15005 = vadd.f32 %v15003, %v15004
  %v15006 = vsel %vm974, %v14816, 0.0
  %v15007 = vadd.f32 %v15005, %v15006
  %v15008 = vsel %vm974, %v14818, 0.0
  %v15009 = vadd.f32 %v15007, %v15008
  %v15010 = vsel %vm974, %v14820, 0.0
  %v15011 = vadd.f32 %v15009, %v15010
  %v15012 = vsel %vm974, %v14822, 0.0
  %v15013 = vadd.f32 %v15011, %v15012
  %v15014 = vsel %vm974, %v14824, 0.0
  %v15015 = vadd.f32 %v15013, %v15014
  %v15016 = vsel %vm974, %v14826, 0.0
  %v15017 = vadd.f32 %v15015, %v15016
  %v15018 = vsel %vm974, %v14828, 0.0
  %v15019 = vadd.f32 %v15017, %v15018
  %v15020 = vsel %vm974, %v14830, 0.0
  %v15021 = vadd.f32 %v15019, %v15020
  %v15022 = vsel %vm974, %v14832, 0.0
  %v15023 = vadd.f32 %v15021, %v15022
  %v15024 = vsel %vm974, %v14834, 0.0
  %v15025 = vadd.f32 %v15023, %v15024
  %v15026 = vsel %vm974, %v14836, 0.0
  %v15027 = vadd.f32 %v15025, %v15026
  %v15028 = vsel %vm974, %v14838, 0.0
  %v15029 = vadd.f32 %v15027, %v15028
  %v15030 = vsel %vm974, %v14840, 0.0
  %v15031 = vadd.f32 %v15029, %v15030
  %v15032 = vsel %vm974, %v14842, 0.0
  %v15033 = vadd.f32 %v15031, %v15032
  %v15034 = vsel %vm974, %v14844, 0.0
  %v15035 = vadd.f32 %v15033, %v15034
  %v15036 = vsel %vm974, %v14846, 0.0
  %v15037 = vadd.f32 %v15035, %v15036
  %v15038 = vsel %vm974, %v14848, 0.0
  %v15039 = vadd.f32 %v15037, %v15038
  %v15040 = vsel %vm974, %v14850, 0.0
  %v15041 = vadd.f32 %v15039, %v15040
  %v15042 = vsel %vm974, %v14852, 0.0
  %v15043 = vadd.f32 %v15041, %v15042
  %v15044 = vsel %vm974, %v14854, 0.0
  %v15045 = vadd.f32 %v15043, %v15044
  %v15046 = vrot.slane %v15045, 4
  %v15047 = vadd.f32 %v15045, %v15046
  %v15048 = vrot.slane %v15047, 2
  %v15049 = vadd.f32 %v15047, %v15048
  %v15050 = vrot.slane %v15049, 1
  %v15051 = vadd.f32 %v15049, %v15050
  %v15052 = vmul.f32 %v15051, %v9142
  %v15053 = vsub.f32 %v14594, %v15052
  %v15054 = vsub.f32 %v14595, %v15052
  %v15055 = vsub.f32 %v14596, %v15052
  %v15056 = vsub.f32 %v14597, %v15052
  %v15057 = vsub.f32 %v14598, %v15052
  %v15058 = vsub.f32 %v14599, %v15052
  %v15059 = vsub.f32 %v14600, %v15052
  %v15060 = vsub.f32 %v14601, %v15052
  %v15061 = vsub.f32 %v14602, %v15052
  %v15062 = vsub.f32 %v14603, %v15052
  %v15063 = vsub.f32 %v14604, %v15052
  %v15064 = vsub.f32 %v14605, %v15052
  %v15065 = vsub.f32 %v14606, %v15052
  %v15066 = vsub.f32 %v14607, %v15052
  %v15067 = vsub.f32 %v14608, %v15052
  %v15068 = vsub.f32 %v14609, %v15052
  %v15069 = vsub.f32 %v14610, %v15052
  %v15070 = vsub.f32 %v14611, %v15052
  %v15071 = vsub.f32 %v14612, %v15052
  %v15072 = vsub.f32 %v14613, %v15052
  %v15073 = vsub.f32 %v14614, %v15052
  %v15074 = vsub.f32 %v14615, %v15052
  %v15075 = vsub.f32 %v14616, %v15052
  %v15076 = vsub.f32 %v14617, %v15052
  %v15077 = vsub.f32 %v14618, %v15052
  %v15078 = vsub.f32 %v14619, %v15052
  %v15079 = vsub.f32 %v14620, %v15052
  %v15080 = vsub.f32 %v14621, %v15052
  %v15081 = vsub.f32 %v14622, %v15052
  %v15082 = vsub.f32 %v14623, %v15052
  %v15083 = vsub.f32 %v14624, %v15052
  %v15084 = vsub.f32 %v14625, %v15052
  %v15085 = vsub.f32 %v14626, %v15052
  %v15086 = vsub.f32 %v14627, %v15052
  %v15087 = vsub.f32 %v14628, %v15052
  %v15088 = vsub.f32 %v14629, %v15052
  %v15089 = vsub.f32 %v14630, %v15052
  %v15090 = vsub.f32 %v14631, %v15052
  %v15091 = vsub.f32 %v14632, %v15052
  %v15092 = vsub.f32 %v14633, %v15052
  %v15093 = vsub.f32 %v14634, %v15052
  %v15094 = vsub.f32 %v14635, %v15052
  %v15095 = vsub.f32 %v14636, %v15052
  %v15096 = vsub.f32 %v14637, %v15052
  %v15097 = vsub.f32 %v14638, %v15052
  %v15098 = vsub.f32 %v14639, %v15052
  %v15099 = vsub.f32 %v14640, %v15052
  %v15100 = vsub.f32 %v14641, %v15052
  %v15101 = vsub.f32 %v14642, %v15052
  %v15102 = vsub.f32 %v14643, %v15052
  %v15103 = vsub.f32 %v14644, %v15052
  %v15104 = vsub.f32 %v14645, %v15052
  %v15105 = vsub.f32 %v14646, %v15052
  %v15106 = vsub.f32 %v14647, %v15052
  %v15107 = vsub.f32 %v14648, %v15052
  %v15108 = vsub.f32 %v14649, %v15052
  %v15109 = vsub.f32 %v14650, %v15052
  %v15110 = vsub.f32 %v14651, %v15052
  %v15111 = vsub.f32 %v14652, %v15052
  %v15112 = vsub.f32 %v14653, %v15052
  %v15113 = vsub.f32 %v14654, %v15052
  %v15114 = vsub.f32 %v14655, %v15052
  %v15115 = vsub.f32 %v14656, %v15052
  %v15116 = vsub.f32 %v14657, %v15052
  %v15117 = vsub.f32 %v14658, %v15052
  %v15118 = vmul.f32 %v15053, %v15053
  %v15119 = vmul.f32 %v15054, %v15054
  %v15120 = vmul.f32 %v15055, %v15055
  %v15121 = vmul.f32 %v15056, %v15056
  %v15122 = vmul.f32 %v15057, %v15057
  %v15123 = vmul.f32 %v15058, %v15058
  %v15124 = vmul.f32 %v15059, %v15059
  %v15125 = vmul.f32 %v15060, %v15060
  %v15126 = vmul.f32 %v15061, %v15061
  %v15127 = vmul.f32 %v15062, %v15062
  %v15128 = vmul.f32 %v15063, %v15063
  %v15129 = vmul.f32 %v15064, %v15064
  %v15130 = vmul.f32 %v15065, %v15065
  %v15131 = vmul.f32 %v15066, %v15066
  %v15132 = vmul.f32 %v15067, %v15067
  %v15133 = vmul.f32 %v15068, %v15068
  %v15134 = vmul.f32 %v15069, %v15069
  %v15135 = vmul.f32 %v15070, %v15070
  %v15136 = vmul.f32 %v15071, %v15071
  %v15137 = vmul.f32 %v15072, %v15072
  %v15138 = vmul.f32 %v15073, %v15073
  %v15139 = vmul.f32 %v15074, %v15074
  %v15140 = vmul.f32 %v15075, %v15075
  %v15141 = vmul.f32 %v15076, %v15076
  %v15142 = vmul.f32 %v15077, %v15077
  %v15143 = vmul.f32 %v15078, %v15078
  %v15144 = vmul.f32 %v15079, %v15079
  %v15145 = vmul.f32 %v15080, %v15080
  %v15146 = vmul.f32 %v15081, %v15081
  %v15147 = vmul.f32 %v15082, %v15082
  %v15148 = vmul.f32 %v15083, %v15083
  %v15149 = vmul.f32 %v15084, %v15084
  %v15150 = vmul.f32 %v15085, %v15085
  %v15151 = vmul.f32 %v15086, %v15086
  %v15152 = vmul.f32 %v15087, %v15087
  %v15153 = vmul.f32 %v15088, %v15088
  %v15154 = vmul.f32 %v15089, %v15089
  %v15155 = vmul.f32 %v15090, %v15090
  %v15156 = vmul.f32 %v15091, %v15091
  %v15157 = vmul.f32 %v15092, %v15092
  %v15158 = vmul.f32 %v15093, %v15093
  %v15159 = vmul.f32 %v15094, %v15094
  %v15160 = vmul.f32 %v15095, %v15095
  %v15161 = vmul.f32 %v15096, %v15096
  %v15162 = vmul.f32 %v15097, %v15097
  %v15163 = vmul.f32 %v15098, %v15098
  %v15164 = vmul.f32 %v15099, %v15099
  %v15165 = vmul.f32 %v15100, %v15100
  %v15166 = vmul.f32 %v15101, %v15101
  %v15167 = vmul.f32 %v15102, %v15102
  %v15168 = vmul.f32 %v15103, %v15103
  %v15169 = vmul.f32 %v15104, %v15104
  %v15170 = vmul.f32 %v15105, %v15105
  %v15171 = vmul.f32 %v15106, %v15106
  %v15172 = vmul.f32 %v15107, %v15107
  %v15173 = vmul.f32 %v15108, %v15108
  %v15174 = vmul.f32 %v15109, %v15109
  %v15175 = vmul.f32 %v15110, %v15110
  %v15176 = vmul.f32 %v15111, %v15111
  %v15177 = vmul.f32 %v15112, %v15112
  %v15178 = vmul.f32 %v15113, %v15113
  %v15179 = vmul.f32 %v15114, %v15114
  %v15180 = vmul.f32 %v15115, %v15115
  %v15181 = vmul.f32 %v15116, %v15116
  %v15182 = vmul.f32 %v15117, %v15117
  %v15248 = vrot.slane %v15118, 7
  %v15249 = vrot.slane %v15119, 7
  %v15250 = vsel %vm3068, %v15248, %v15249
  %v15251 = vrot.slane %v15120, 7
  %v15252 = vsel %vm3068, %v15249, %v15251
  %v15253 = vrot.slane %v15121, 7
  %v15254 = vsel %vm3068, %v15251, %v15253
  %v15255 = vrot.slane %v15122, 7
  %v15256 = vsel %vm3068, %v15253, %v15255
  %v15257 = vrot.slane %v15123, 7
  %v15258 = vsel %vm3068, %v15255, %v15257
  %v15259 = vrot.slane %v15124, 7
  %v15260 = vsel %vm3068, %v15257, %v15259
  %v15261 = vrot.slane %v15125, 7
  %v15262 = vsel %vm3068, %v15259, %v15261
  %v15263 = vrot.slane %v15126, 7
  %v15264 = vsel %vm3068, %v15261, %v15263
  %v15265 = vrot.slane %v15127, 7
  %v15266 = vsel %vm3068, %v15263, %v15265
  %v15267 = vrot.slane %v15128, 7
  %v15268 = vsel %vm3068, %v15265, %v15267
  %v15269 = vrot.slane %v15129, 7
  %v15270 = vsel %vm3068, %v15267, %v15269
  %v15271 = vrot.slane %v15130, 7
  %v15272 = vsel %vm3068, %v15269, %v15271
  %v15273 = vrot.slane %v15131, 7
  %v15274 = vsel %vm3068, %v15271, %v15273
  %v15275 = vrot.slane %v15132, 7
  %v15276 = vsel %vm3068, %v15273, %v15275
  %v15277 = vrot.slane %v15133, 7
  %v15278 = vsel %vm3068, %v15275, %v15277
  %v15279 = vrot.slane %v15134, 7
  %v15280 = vsel %vm3068, %v15277, %v15279
  %v15281 = vrot.slane %v15135, 7
  %v15282 = vsel %vm3068, %v15279, %v15281
  %v15283 = vrot.slane %v15136, 7
  %v15284 = vsel %vm3068, %v15281, %v15283
  %v15285 = vrot.slane %v15137, 7
  %v15286 = vsel %vm3068, %v15283, %v15285
  %v15287 = vrot.slane %v15138, 7
  %v15288 = vsel %vm3068, %v15285, %v15287
  %v15289 = vrot.slane %v15139, 7
  %v15290 = vsel %vm3068, %v15287, %v15289
  %v15291 = vrot.slane %v15140, 7
  %v15292 = vsel %vm3068, %v15289, %v15291
  %v15293 = vrot.slane %v15141, 7
  %v15294 = vsel %vm3068, %v15291, %v15293
  %v15295 = vrot.slane %v15142, 7
  %v15296 = vsel %vm3068, %v15293, %v15295
  %v15297 = vrot.slane %v15143, 7
  %v15298 = vsel %vm3068, %v15295, %v15297
  %v15299 = vrot.slane %v15144, 7
  %v15300 = vsel %vm3068, %v15297, %v15299
  %v15301 = vrot.slane %v15145, 7
  %v15302 = vsel %vm3068, %v15299, %v15301
  %v15303 = vrot.slane %v15146, 7
  %v15304 = vsel %vm3068, %v15301, %v15303
  %v15305 = vrot.slane %v15147, 7
  %v15306 = vsel %vm3068, %v15303, %v15305
  %v15307 = vrot.slane %v15148, 7
  %v15308 = vsel %vm3068, %v15305, %v15307
  %v15309 = vrot.slane %v15149, 7
  %v15310 = vsel %vm3068, %v15307, %v15309
  %v15311 = vrot.slane %v15150, 7
  %v15312 = vsel %vm3068, %v15309, %v15311
  %v15313 = vrot.slane %v15151, 7
  %v15314 = vsel %vm3068, %v15311, %v15313
  %v15315 = vrot.slane %v15152, 7
  %v15316 = vsel %vm3068, %v15313, %v15315
  %v15317 = vrot.slane %v15153, 7
  %v15318 = vsel %vm3068, %v15315, %v15317
  %v15319 = vrot.slane %v15154, 7
  %v15320 = vsel %vm3068, %v15317, %v15319
  %v15321 = vrot.slane %v15155, 7
  %v15322 = vsel %vm3068, %v15319, %v15321
  %v15323 = vrot.slane %v15156, 7
  %v15324 = vsel %vm3068, %v15321, %v15323
  %v15325 = vrot.slane %v15157, 7
  %v15326 = vsel %vm3068, %v15323, %v15325
  %v15327 = vrot.slane %v15158, 7
  %v15328 = vsel %vm3068, %v15325, %v15327
  %v15329 = vrot.slane %v15159, 7
  %v15330 = vsel %vm3068, %v15327, %v15329
  %v15331 = vrot.slane %v15160, 7
  %v15332 = vsel %vm3068, %v15329, %v15331
  %v15333 = vrot.slane %v15161, 7
  %v15334 = vsel %vm3068, %v15331, %v15333
  %v15335 = vrot.slane %v15162, 7
  %v15336 = vsel %vm3068, %v15333, %v15335
  %v15337 = vrot.slane %v15163, 7
  %v15338 = vsel %vm3068, %v15335, %v15337
  %v15339 = vrot.slane %v15164, 7
  %v15340 = vsel %vm3068, %v15337, %v15339
  %v15341 = vrot.slane %v15165, 7
  %v15342 = vsel %vm3068, %v15339, %v15341
  %v15343 = vrot.slane %v15166, 7
  %v15344 = vsel %vm3068, %v15341, %v15343
  %v15345 = vrot.slane %v15167, 7
  %v15346 = vsel %vm3068, %v15343, %v15345
  %v15347 = vrot.slane %v15168, 7
  %v15348 = vsel %vm3068, %v15345, %v15347
  %v15349 = vrot.slane %v15169, 7
  %v15350 = vsel %vm3068, %v15347, %v15349
  %v15351 = vrot.slane %v15170, 7
  %v15352 = vsel %vm3068, %v15349, %v15351
  %v15353 = vrot.slane %v15171, 7
  %v15354 = vsel %vm3068, %v15351, %v15353
  %v15355 = vrot.slane %v15172, 7
  %v15356 = vsel %vm3068, %v15353, %v15355
  %v15357 = vrot.slane %v15173, 7
  %v15358 = vsel %vm3068, %v15355, %v15357
  %v15359 = vrot.slane %v15174, 7
  %v15360 = vsel %vm3068, %v15357, %v15359
  %v15361 = vrot.slane %v15175, 7
  %v15362 = vsel %vm3068, %v15359, %v15361
  %v15363 = vrot.slane %v15176, 7
  %v15364 = vsel %vm3068, %v15361, %v15363
  %v15365 = vrot.slane %v15177, 7
  %v15366 = vsel %vm3068, %v15363, %v15365
  %v15367 = vrot.slane %v15178, 7
  %v15368 = vsel %vm3068, %v15365, %v15367
  %v15369 = vrot.slane %v15179, 7
  %v15370 = vsel %vm3068, %v15367, %v15369
  %v15371 = vrot.slane %v15180, 7
  %v15372 = vsel %vm3068, %v15369, %v15371
  %v15373 = vrot.slane %v15181, 7
  %v15374 = vsel %vm3068, %v15371, %v15373
  %v15375 = vrot.slane %v15182, 7
  %v15376 = vsel %vm3068, %v15373, %v15375
  %v15441 = vsel %vm974, %v15250, 0.0
  %v15442 = vsel %vm974, %v15252, 0.0
  %v15443 = vadd.f32 %v15441, %v15442
  %v15444 = vsel %vm974, %v15254, 0.0
  %v15445 = vadd.f32 %v15443, %v15444
  %v15446 = vsel %vm974, %v15256, 0.0
  %v15447 = vadd.f32 %v15445, %v15446
  %v15448 = vsel %vm974, %v15258, 0.0
  %v15449 = vadd.f32 %v15447, %v15448
  %v15450 = vsel %vm974, %v15260, 0.0
  %v15451 = vadd.f32 %v15449, %v15450
  %v15452 = vsel %vm974, %v15262, 0.0
  %v15453 = vadd.f32 %v15451, %v15452
  %v15454 = vsel %vm974, %v15264, 0.0
  %v15455 = vadd.f32 %v15453, %v15454
  %v15456 = vsel %vm974, %v15266, 0.0
  %v15457 = vadd.f32 %v15455, %v15456
  %v15458 = vsel %vm974, %v15268, 0.0
  %v15459 = vadd.f32 %v15457, %v15458
  %v15460 = vsel %vm974, %v15270, 0.0
  %v15461 = vadd.f32 %v15459, %v15460
  %v15462 = vsel %vm974, %v15272, 0.0
  %v15463 = vadd.f32 %v15461, %v15462
  %v15464 = vsel %vm974, %v15274, 0.0
  %v15465 = vadd.f32 %v15463, %v15464
  %v15466 = vsel %vm974, %v15276, 0.0
  %v15467 = vadd.f32 %v15465, %v15466
  %v15468 = vsel %vm974, %v15278, 0.0
  %v15469 = vadd.f32 %v15467, %v15468
  %v15470 = vsel %vm974, %v15280, 0.0
  %v15471 = vadd.f32 %v15469, %v15470
  %v15472 = vsel %vm974, %v15282, 0.0
  %v15473 = vadd.f32 %v15471, %v15472
  %v15474 = vsel %vm974, %v15284, 0.0
  %v15475 = vadd.f32 %v15473, %v15474
  %v15476 = vsel %vm974, %v15286, 0.0
  %v15477 = vadd.f32 %v15475, %v15476
  %v15478 = vsel %vm974, %v15288, 0.0
  %v15479 = vadd.f32 %v15477, %v15478
  %v15480 = vsel %vm974, %v15290, 0.0
  %v15481 = vadd.f32 %v15479, %v15480
  %v15482 = vsel %vm974, %v15292, 0.0
  %v15483 = vadd.f32 %v15481, %v15482
  %v15484 = vsel %vm974, %v15294, 0.0
  %v15485 = vadd.f32 %v15483, %v15484
  %v15486 = vsel %vm974, %v15296, 0.0
  %v15487 = vadd.f32 %v15485, %v15486
  %v15488 = vsel %vm974, %v15298, 0.0
  %v15489 = vadd.f32 %v15487, %v15488
  %v15490 = vsel %vm974, %v15300, 0.0
  %v15491 = vadd.f32 %v15489, %v15490
  %v15492 = vsel %vm974, %v15302, 0.0
  %v15493 = vadd.f32 %v15491, %v15492
  %v15494 = vsel %vm974, %v15304, 0.0
  %v15495 = vadd.f32 %v15493, %v15494
  %v15496 = vsel %vm974, %v15306, 0.0
  %v15497 = vadd.f32 %v15495, %v15496
  %v15498 = vsel %vm974, %v15308, 0.0
  %v15499 = vadd.f32 %v15497, %v15498
  %v15500 = vsel %vm974, %v15310, 0.0
  %v15501 = vadd.f32 %v15499, %v15500
  %v15502 = vsel %vm974, %v15312, 0.0
  %v15503 = vadd.f32 %v15501, %v15502
  %v15504 = vsel %vm974, %v15314, 0.0
  %v15505 = vadd.f32 %v15503, %v15504
  %v15506 = vsel %vm974, %v15316, 0.0
  %v15507 = vadd.f32 %v15505, %v15506
  %v15508 = vsel %vm974, %v15318, 0.0
  %v15509 = vadd.f32 %v15507, %v15508
  %v15510 = vsel %vm974, %v15320, 0.0
  %v15511 = vadd.f32 %v15509, %v15510
  %v15512 = vsel %vm974, %v15322, 0.0
  %v15513 = vadd.f32 %v15511, %v15512
  %v15514 = vsel %vm974, %v15324, 0.0
  %v15515 = vadd.f32 %v15513, %v15514
  %v15516 = vsel %vm974, %v15326, 0.0
  %v15517 = vadd.f32 %v15515, %v15516
  %v15518 = vsel %vm974, %v15328, 0.0
  %v15519 = vadd.f32 %v15517, %v15518
  %v15520 = vsel %vm974, %v15330, 0.0
  %v15521 = vadd.f32 %v15519, %v15520
  %v15522 = vsel %vm974, %v15332, 0.0
  %v15523 = vadd.f32 %v15521, %v15522
  %v15524 = vsel %vm974, %v15334, 0.0
  %v15525 = vadd.f32 %v15523, %v15524
  %v15526 = vsel %vm974, %v15336, 0.0
  %v15527 = vadd.f32 %v15525, %v15526
  %v15528 = vsel %vm974, %v15338, 0.0
  %v15529 = vadd.f32 %v15527, %v15528
  %v15530 = vsel %vm974, %v15340, 0.0
  %v15531 = vadd.f32 %v15529, %v15530
  %v15532 = vsel %vm974, %v15342, 0.0
  %v15533 = vadd.f32 %v15531, %v15532
  %v15534 = vsel %vm974, %v15344, 0.0
  %v15535 = vadd.f32 %v15533, %v15534
  %v15536 = vsel %vm974, %v15346, 0.0
  %v15537 = vadd.f32 %v15535, %v15536
  %v15538 = vsel %vm974, %v15348, 0.0
  %v15539 = vadd.f32 %v15537, %v15538
  %v15540 = vsel %vm974, %v15350, 0.0
  %v15541 = vadd.f32 %v15539, %v15540
  %v15542 = vsel %vm974, %v15352, 0.0
  %v15543 = vadd.f32 %v15541, %v15542
  %v15544 = vsel %vm974, %v15354, 0.0
  %v15545 = vadd.f32 %v15543, %v15544
  %v15546 = vsel %vm974, %v15356, 0.0
  %v15547 = vadd.f32 %v15545, %v15546
  %v15548 = vsel %vm974, %v15358, 0.0
  %v15549 = vadd.f32 %v15547, %v15548
  %v15550 = vsel %vm974, %v15360, 0.0
  %v15551 = vadd.f32 %v15549, %v15550
  %v15552 = vsel %vm974, %v15362, 0.0
  %v15553 = vadd.f32 %v15551, %v15552
  %v15554 = vsel %vm974, %v15364, 0.0
  %v15555 = vadd.f32 %v15553, %v15554
  %v15556 = vsel %vm974, %v15366, 0.0
  %v15557 = vadd.f32 %v15555, %v15556
  %v15558 = vsel %vm974, %v15368, 0.0
  %v15559 = vadd.f32 %v15557, %v15558
  %v15560 = vsel %vm974, %v15370, 0.0
  %v15561 = vadd.f32 %v15559, %v15560
  %v15562 = vsel %vm974, %v15372, 0.0
  %v15563 = vadd.f32 %v15561, %v15562
  %v15564 = vsel %vm974, %v15374, 0.0
  %v15565 = vadd.f32 %v15563, %v15564
  %v15566 = vsel %vm974, %v15376, 0.0
  %v15567 = vadd.f32 %v15565, %v15566
  %v15568 = vrot.slane %v15567, 4
  %v15569 = vadd.f32 %v15567, %v15568
  %v15570 = vrot.slane %v15569, 2
  %v15571 = vadd.f32 %v15569, %v15570
  %v15572 = vrot.slane %v15571, 1
  %v15573 = vadd.f32 %v15571, %v15572
  %v15574 = vmul.f32 %v15573, %v9142
  %v15575 = vadd.f32 %v15574, 1e-05
  %v15576 = vrsqrt.pop %v15575
  %v15577 = vmul.f32 %v15053, %v15576
  %v15578 = vmul.f32 %v15054, %v15576
  %v15579 = vmul.f32 %v15055, %v15576
  %v15580 = vmul.f32 %v15056, %v15576
  %v15581 = vmul.f32 %v15057, %v15576
  %v15582 = vmul.f32 %v15058, %v15576
  %v15583 = vmul.f32 %v15059, %v15576
  %v15584 = vmul.f32 %v15060, %v15576
  %v15585 = vmul.f32 %v15061, %v15576
  %v15586 = vmul.f32 %v15062, %v15576
  %v15587 = vmul.f32 %v15063, %v15576
  %v15588 = vmul.f32 %v15064, %v15576
  %v15589 = vmul.f32 %v15065, %v15576
  %v15590 = vmul.f32 %v15066, %v15576
  %v15591 = vmul.f32 %v15067, %v15576
  %v15592 = vmul.f32 %v15068, %v15576
  %v15593 = vmul.f32 %v15069, %v15576
  %v15594 = vmul.f32 %v15070, %v15576
  %v15595 = vmul.f32 %v15071, %v15576
  %v15596 = vmul.f32 %v15072, %v15576
  %v15597 = vmul.f32 %v15073, %v15576
  %v15598 = vmul.f32 %v15074, %v15576
  %v15599 = vmul.f32 %v15075, %v15576
  %v15600 = vmul.f32 %v15076, %v15576
  %v15601 = vmul.f32 %v15077, %v15576
  %v15602 = vmul.f32 %v15078, %v15576
  %v15603 = vmul.f32 %v15079, %v15576
  %v15604 = vmul.f32 %v15080, %v15576
  %v15605 = vmul.f32 %v15081, %v15576
  %v15606 = vmul.f32 %v15082, %v15576
  %v15607 = vmul.f32 %v15083, %v15576
  %v15608 = vmul.f32 %v15084, %v15576
  %v15609 = vmul.f32 %v15085, %v15576
  %v15610 = vmul.f32 %v15086, %v15576
  %v15611 = vmul.f32 %v15087, %v15576
  %v15612 = vmul.f32 %v15088, %v15576
  %v15613 = vmul.f32 %v15089, %v15576
  %v15614 = vmul.f32 %v15090, %v15576
  %v15615 = vmul.f32 %v15091, %v15576
  %v15616 = vmul.f32 %v15092, %v15576
  %v15617 = vmul.f32 %v15093, %v15576
  %v15618 = vmul.f32 %v15094, %v15576
  %v15619 = vmul.f32 %v15095, %v15576
  %v15620 = vmul.f32 %v15096, %v15576
  %v15621 = vmul.f32 %v15097, %v15576
  %v15622 = vmul.f32 %v15098, %v15576
  %v15623 = vmul.f32 %v15099, %v15576
  %v15624 = vmul.f32 %v15100, %v15576
  %v15625 = vmul.f32 %v15101, %v15576
  %v15626 = vmul.f32 %v15102, %v15576
  %v15627 = vmul.f32 %v15103, %v15576
  %v15628 = vmul.f32 %v15104, %v15576
  %v15629 = vmul.f32 %v15105, %v15576
  %v15630 = vmul.f32 %v15106, %v15576
  %v15631 = vmul.f32 %v15107, %v15576
  %v15632 = vmul.f32 %v15108, %v15576
  %v15633 = vmul.f32 %v15109, %v15576
  %v15634 = vmul.f32 %v15110, %v15576
  %v15635 = vmul.f32 %v15111, %v15576
  %v15636 = vmul.f32 %v15112, %v15576
  %v15637 = vmul.f32 %v15113, %v15576
  %v15638 = vmul.f32 %v15114, %v15576
  %v15639 = vmul.f32 %v15115, %v15576
  %v15640 = vmul.f32 %v15116, %v15576
  %v15641 = vmul.f32 %v15117, %v15576
  %v15643 = vlaneseq
  %v15644 = vshrl.u32 %v15643, 7
  %v15645 = vsub.s32 0, %v15644
  %v15646 = vrot.slane %v14659, %v15645
  %v15648 = vmul.f32 %v15577, %v15646
  %v15649 = vmul.f32 %v15578, %v15646
  %v15650 = vmul.f32 %v15579, %v15646
  %v15651 = vmul.f32 %v15580, %v15646
  %v15652 = vmul.f32 %v15581, %v15646
  %v15653 = vmul.f32 %v15582, %v15646
  %v15654 = vmul.f32 %v15583, %v15646
  %v15655 = vmul.f32 %v15584, %v15646
  %v15656 = vmul.f32 %v15585, %v15646
  %v15657 = vmul.f32 %v15586, %v15646
  %v15658 = vmul.f32 %v15587, %v15646
  %v15659 = vmul.f32 %v15588, %v15646
  %v15660 = vmul.f32 %v15589, %v15646
  %v15661 = vmul.f32 %v15590, %v15646
  %v15662 = vmul.f32 %v15591, %v15646
  %v15663 = vmul.f32 %v15592, %v15646
  %v15664 = vmul.f32 %v15593, %v15646
  %v15665 = vmul.f32 %v15594, %v15646
  %v15666 = vmul.f32 %v15595, %v15646
  %v15667 = vmul.f32 %v15596, %v15646
  %v15668 = vmul.f32 %v15597, %v15646
  %v15669 = vmul.f32 %v15598, %v15646
  %v15670 = vmul.f32 %v15599, %v15646
  %v15671 = vmul.f32 %v15600, %v15646
  %v15672 = vmul.f32 %v15601, %v15646
  %v15673 = vmul.f32 %v15602, %v15646
  %v15674 = vmul.f32 %v15603, %v15646
  %v15675 = vmul.f32 %v15604, %v15646
  %v15676 = vmul.f32 %v15605, %v15646
  %v15677 = vmul.f32 %v15606, %v15646
  %v15678 = vmul.f32 %v15607, %v15646
  %v15679 = vmul.f32 %v15608, %v15646
  %v15680 = vmul.f32 %v15609, %v15646
  %v15681 = vmul.f32 %v15610, %v15646
  %v15682 = vmul.f32 %v15611, %v15646
  %v15683 = vmul.f32 %v15612, %v15646
  %v15684 = vmul.f32 %v15613, %v15646
  %v15685 = vmul.f32 %v15614, %v15646
  %v15686 = vmul.f32 %v15615, %v15646
  %v15687 = vmul.f32 %v15616, %v15646
  %v15688 = vmul.f32 %v15617, %v15646
  %v15689 = vmul.f32 %v15618, %v15646
  %v15690 = vmul.f32 %v15619, %v15646
  %v15691 = vmul.f32 %v15620, %v15646
  %v15692 = vmul.f32 %v15621, %v15646
  %v15693 = vmul.f32 %v15622, %v15646
  %v15694 = vmul.f32 %v15623, %v15646
  %v15695 = vmul.f32 %v15624, %v15646
  %v15696 = vmul.f32 %v15625, %v15646
  %v15697 = vmul.f32 %v15626, %v15646
  %v15698 = vmul.f32 %v15627, %v15646
  %v15699 = vmul.f32 %v15628, %v15646
  %v15700 = vmul.f32 %v15629, %v15646
  %v15701 = vmul.f32 %v15630, %v15646
  %v15702 = vmul.f32 %v15631, %v15646
  %v15703 = vmul.f32 %v15632, %v15646
  %v15704 = vmul.f32 %v15633, %v15646
  %v15705 = vmul.f32 %v15634, %v15646
  %v15706 = vmul.f32 %v15635, %v15646
  %v15707 = vmul.f32 %v15636, %v15646
  %v15708 = vmul.f32 %v15637, %v15646
  %v15709 = vmul.f32 %v15638, %v15646
  %v15710 = vmul.f32 %v15639, %v15646
  %v15711 = vmul.f32 %v15640, %v15646
  %v15712 = vmul.f32 %v15641, %v15646
  %v15714 = vlaneseq
  %v15715 = vshrl.u32 %v15714, 7
  %v15716 = vsub.s32 0, %v15715
  %v15717 = vrot.slane %v14660, %v15716
  %v15719 = vadd.f32 %v15648, %v15717
  %v15720 = vadd.f32 %v15649, %v15717
  %v15721 = vadd.f32 %v15650, %v15717
  %v15722 = vadd.f32 %v15651, %v15717
  %v15723 = vadd.f32 %v15652, %v15717
  %v15724 = vadd.f32 %v15653, %v15717
  %v15725 = vadd.f32 %v15654, %v15717
  %v15726 = vadd.f32 %v15655, %v15717
  %v15727 = vadd.f32 %v15656, %v15717
  %v15728 = vadd.f32 %v15657, %v15717
  %v15729 = vadd.f32 %v15658, %v15717
  %v15730 = vadd.f32 %v15659, %v15717
  %v15731 = vadd.f32 %v15660, %v15717
  %v15732 = vadd.f32 %v15661, %v15717
  %v15733 = vadd.f32 %v15662, %v15717
  %v15734 = vadd.f32 %v15663, %v15717
  %v15735 = vadd.f32 %v15664, %v15717
  %v15736 = vadd.f32 %v15665, %v15717
  %v15737 = vadd.f32 %v15666, %v15717
  %v15738 = vadd.f32 %v15667, %v15717
  %v15739 = vadd.f32 %v15668, %v15717
  %v15740 = vadd.f32 %v15669, %v15717
  %v15741 = vadd.f32 %v15670, %v15717
  %v15742 = vadd.f32 %v15671, %v15717
  %v15743 = vadd.f32 %v15672, %v15717
  %v15744 = vadd.f32 %v15673, %v15717
  %v15745 = vadd.f32 %v15674, %v15717
  %v15746 = vadd.f32 %v15675, %v15717
  %v15747 = vadd.f32 %v15676, %v15717
  %v15748 = vadd.f32 %v15677, %v15717
  %v15749 = vadd.f32 %v15678, %v15717
  %v15750 = vadd.f32 %v15679, %v15717
  %v15751 = vadd.f32 %v15680, %v15717
  %v15752 = vadd.f32 %v15681, %v15717
  %v15753 = vadd.f32 %v15682, %v15717
  %v15754 = vadd.f32 %v15683, %v15717
  %v15755 = vadd.f32 %v15684, %v15717
  %v15756 = vadd.f32 %v15685, %v15717
  %v15757 = vadd.f32 %v15686, %v15717
  %v15758 = vadd.f32 %v15687, %v15717
  %v15759 = vadd.f32 %v15688, %v15717
  %v15760 = vadd.f32 %v15689, %v15717
  %v15761 = vadd.f32 %v15690, %v15717
  %v15762 = vadd.f32 %v15691, %v15717
  %v15763 = vadd.f32 %v15692, %v15717
  %v15764 = vadd.f32 %v15693, %v15717
  %v15765 = vadd.f32 %v15694, %v15717
  %v15766 = vadd.f32 %v15695, %v15717
  %v15767 = vadd.f32 %v15696, %v15717
  %v15768 = vadd.f32 %v15697, %v15717
  %v15769 = vadd.f32 %v15698, %v15717
  %v15770 = vadd.f32 %v15699, %v15717
  %v15771 = vadd.f32 %v15700, %v15717
  %v15772 = vadd.f32 %v15701, %v15717
  %v15773 = vadd.f32 %v15702, %v15717
  %v15774 = vadd.f32 %v15703, %v15717
  %v15775 = vadd.f32 %v15704, %v15717
  %v15776 = vadd.f32 %v15705, %v15717
  %v15777 = vadd.f32 %v15706, %v15717
  %v15778 = vadd.f32 %v15707, %v15717
  %v15779 = vadd.f32 %v15708, %v15717
  %v15780 = vadd.f32 %v15709, %v15717
  %v15781 = vadd.f32 %v15710, %v15717
  %v15782 = vadd.f32 %v15711, %v15717
  %v15783 = vadd.f32 %v15712, %v15717
  %v15784 = vmax.f32 %v15719, 0.0
  %v15785 = vmax.f32 %v15720, 0.0
  %v15786 = vmax.f32 %v15721, 0.0
  %v15787 = vmax.f32 %v15722, 0.0
  %v15788 = vmax.f32 %v15723, 0.0
  %v15789 = vmax.f32 %v15724, 0.0
  %v15790 = vmax.f32 %v15725, 0.0
  %v15791 = vmax.f32 %v15726, 0.0
  %v15792 = vmax.f32 %v15727, 0.0
  %v15793 = vmax.f32 %v15728, 0.0
  %v15794 = vmax.f32 %v15729, 0.0
  %v15795 = vmax.f32 %v15730, 0.0
  %v15796 = vmax.f32 %v15731, 0.0
  %v15797 = vmax.f32 %v15732, 0.0
  %v15798 = vmax.f32 %v15733, 0.0
  %v15799 = vmax.f32 %v15734, 0.0
  %v15800 = vmax.f32 %v15735, 0.0
  %v15801 = vmax.f32 %v15736, 0.0
  %v15802 = vmax.f32 %v15737, 0.0
  %v15803 = vmax.f32 %v15738, 0.0
  %v15804 = vmax.f32 %v15739, 0.0
  %v15805 = vmax.f32 %v15740, 0.0
  %v15806 = vmax.f32 %v15741, 0.0
  %v15807 = vmax.f32 %v15742, 0.0
  %v15808 = vmax.f32 %v15743, 0.0
  %v15809 = vmax.f32 %v15744, 0.0
  %v15810 = vmax.f32 %v15745, 0.0
  %v15811 = vmax.f32 %v15746, 0.0
  %v15812 = vmax.f32 %v15747, 0.0
  %v15813 = vmax.f32 %v15748, 0.0
  %v15814 = vmax.f32 %v15749, 0.0
  %v15815 = vmax.f32 %v15750, 0.0
  %v15816 = vmax.f32 %v15751, 0.0
  %v15817 = vmax.f32 %v15752, 0.0
  %v15818 = vmax.f32 %v15753, 0.0
  %v15819 = vmax.f32 %v15754, 0.0
  %v15820 = vmax.f32 %v15755, 0.0
  %v15821 = vmax.f32 %v15756, 0.0
  %v15822 = vmax.f32 %v15757, 0.0
  %v15823 = vmax.f32 %v15758, 0.0
  %v15824 = vmax.f32 %v15759, 0.0
  %v15825 = vmax.f32 %v15760, 0.0
  %v15826 = vmax.f32 %v15761, 0.0
  %v15827 = vmax.f32 %v15762, 0.0
  %v15828 = vmax.f32 %v15763, 0.0
  %v15829 = vmax.f32 %v15764, 0.0
  %v15830 = vmax.f32 %v15765, 0.0
  %v15831 = vmax.f32 %v15766, 0.0
  %v15832 = vmax.f32 %v15767, 0.0
  %v15833 = vmax.f32 %v15768, 0.0
  %v15834 = vmax.f32 %v15769, 0.0
  %v15835 = vmax.f32 %v15770, 0.0
  %v15836 = vmax.f32 %v15771, 0.0
  %v15837 = vmax.f32 %v15772, 0.0
  %v15838 = vmax.f32 %v15773, 0.0
  %v15839 = vmax.f32 %v15774, 0.0
  %v15840 = vmax.f32 %v15775, 0.0
  %v15841 = vmax.f32 %v15776, 0.0
  %v15842 = vmax.f32 %v15777, 0.0
  %v15843 = vmax.f32 %v15778, 0.0
  %v15844 = vmax.f32 %v15779, 0.0
  %v15845 = vmax.f32 %v15780, 0.0
  %v15846 = vmax.f32 %v15781, 0.0
  %v15847 = vmax.f32 %v15782, 0.0
  %v15848 = vmax.f32 %v15783, 0.0
  %vm15849 = vcmask 31751
  %15850 = vst.msk [vmem:[%s12 - $0x7] sm:$0x80] %vm15849, %v15784
  %15851 = vst.msk [vmem:[%s12 + $0x1] sm:$0xff] %vm974, %v15785
  %15852 = vst.msk [vmem:[%s12 + $0x9] sm:$0xff] %vm974, %v15786
  %15853 = vst.msk [vmem:[%s12 + $0x11] sm:$0xff] %vm974, %v15787
  %15854 = vst.msk [vmem:[%s12 + $0x19] sm:$0xff] %vm974, %v15788
  %15855 = vst.msk [vmem:[%s12 + $0x21] sm:$0xff] %vm974, %v15789
  %15856 = vst.msk [vmem:[%s12 + $0x29] sm:$0xff] %vm974, %v15790
  %15857 = vst.msk [vmem:[%s12 + $0x31] sm:$0xff] %vm974, %v15791
  %15858 = vst.msk [vmem:[%s12 + $0x39] sm:$0xff] %vm974, %v15792
  %15859 = vst.msk [vmem:[%s12 + $0x41] sm:$0xff] %vm974, %v15793
  %15860 = vst.msk [vmem:[%s12 + $0x49] sm:$0xff] %vm974, %v15794
  %15861 = vst.msk [vmem:[%s12 + $0x51] sm:$0xff] %vm974, %v15795
  %15862 = vst.msk [vmem:[%s12 + $0x59] sm:$0xff] %vm974, %v15796
  %15863 = vst.msk [vmem:[%s12 + $0x61] sm:$0xff] %vm974, %v15797
  %15864 = vst.msk [vmem:[%s12 + $0x69] sm:$0xff] %vm974, %v15798
  %15865 = vst.msk [vmem:[%s12 + $0x71] sm:$0xff] %vm974, %v15799
  %15866 = vst.msk [vmem:[%s12 + $0x79] sm:$0xff] %vm974, %v15800
  %15867 = vst.msk [vmem:[%s12 + $0x81] sm:$0xff] %vm974, %v15801
  %15868 = vst.msk [vmem:[%s12 + $0x89] sm:$0xff] %vm974, %v15802
  %15869 = vst.msk [vmem:[%s12 + $0x91] sm:$0xff] %vm974, %v15803
  %15870 = vst.msk [vmem:[%s12 + $0x99] sm:$0xff] %vm974, %v15804
  %15871 = vst.msk [vmem:[%s12 + $0xa1] sm:$0xff] %vm974, %v15805
  %15872 = vst.msk [vmem:[%s12 + $0xa9] sm:$0xff] %vm974, %v15806
  %15873 = vst.msk [vmem:[%s12 + $0xb1] sm:$0xff] %vm974, %v15807
  %15874 = vst.msk [vmem:[%s12 + $0xb9] sm:$0xff] %vm974, %v15808
  %15875 = vst.msk [vmem:[%s12 + $0xc1] sm:$0xff] %vm974, %v15809
  %15876 = vst.msk [vmem:[%s12 + $0xc9] sm:$0xff] %vm974, %v15810
  %15877 = vst.msk [vmem:[%s12 + $0xd1] sm:$0xff] %vm974, %v15811
  %15878 = vst.msk [vmem:[%s12 + $0xd9] sm:$0xff] %vm974, %v15812
  %15879 = vst.msk [vmem:[%s12 + $0xe1] sm:$0xff] %vm974, %v15813
  %15880 = vst.msk [vmem:[%s12 + $0xe9] sm:$0xff] %vm974, %v15814
  %15881 = vst.msk [vmem:[%s12 + $0xf1] sm:$0xff] %vm974, %v15815
  %15882 = vst.msk [vmem:[%s12 + $0xf9] sm:$0xff] %vm974, %v15816
  %15883 = vst.msk [vmem:[%s12 + $0x101] sm:$0xff] %vm974, %v15817
  %15884 = vst.msk [vmem:[%s12 + $0x109] sm:$0xff] %vm974, %v15818
  %15885 = vst.msk [vmem:[%s12 + $0x111] sm:$0xff] %vm974, %v15819
  %15886 = vst.msk [vmem:[%s12 + $0x119] sm:$0xff] %vm974, %v15820
  %15887 = vst.msk [vmem:[%s12 + $0x121] sm:$0xff] %vm974, %v15821
  %15888 = vst.msk [vmem:[%s12 + $0x129] sm:$0xff] %vm974, %v15822
  %15889 = vst.msk [vmem:[%s12 + $0x131] sm:$0xff] %vm974, %v15823
  %15890 = vst.msk [vmem:[%s12 + $0x139] sm:$0xff] %vm974, %v15824
  %15891 = vst.msk [vmem:[%s12 + $0x141] sm:$0xff] %vm974, %v15825
  %15892 = vst.msk [vmem:[%s12 + $0x149] sm:$0xff] %vm974, %v15826
  %15893 = vst.msk [vmem:[%s12 + $0x151] sm:$0xff] %vm974, %v15827
  %15894 = vst.msk [vmem:[%s12 + $0x159] sm:$0xff] %vm974, %v15828
  %15895 = vst.msk [vmem:[%s12 + $0x161] sm:$0xff] %vm974, %v15829
  %15896 = vst.msk [vmem:[%s12 + $0x169] sm:$0xff] %vm974, %v15830
  %15897 = vst.msk [vmem:[%s12 + $0x171] sm:$0xff] %vm974, %v15831
  %15898 = vst.msk [vmem:[%s12 + $0x179] sm:$0xff] %vm974, %v15832
  %15899 = vst.msk [vmem:[%s12 + $0x181] sm:$0xff] %vm974, %v15833
  %15900 = vst.msk [vmem:[%s12 + $0x189] sm:$0xff] %vm974, %v15834
  %15901 = vst.msk [vmem:[%s12 + $0x191] sm:$0xff] %vm974, %v15835
  %15902 = vst.msk [vmem:[%s12 + $0x199] sm:$0xff] %vm974, %v15836
  %15903 = vst.msk [vmem:[%s12 + $0x1a1] sm:$0xff] %vm974, %v15837
  %15904 = vst.msk [vmem:[%s12 + $0x1a9] sm:$0xff] %vm974, %v15838
  %15905 = vst.msk [vmem:[%s12 + $0x1b1] sm:$0xff] %vm974, %v15839
  %15906 = vst.msk [vmem:[%s12 + $0x1b9] sm:$0xff] %vm974, %v15840
  %15907 = vst.msk [vmem:[%s12 + $0x1c1] sm:$0xff] %vm974, %v15841
  %15908 = vst.msk [vmem:[%s12 + $0x1c9] sm:$0xff] %vm974, %v15842
  %15909 = vst.msk [vmem:[%s12 + $0x1d1] sm:$0xff] %vm974, %v15843
  %15910 = vst.msk [vmem:[%s12 + $0x1d9] sm:$0xff] %vm974, %v15844
  %15911 = vst.msk [vmem:[%s12 + $0x1e1] sm:$0xff] %vm974, %v15845
  %15912 = vst.msk [vmem:[%s12 + $0x1e9] sm:$0xff] %vm974, %v15846
  %15913 = vst.msk [vmem:[%s12 + $0x1f1] sm:$0xff] %vm974, %v15847
  %vm15914 = vcmask 30720
  %15915 = vst.msk [vmem:[%s12 + $0x1f9] sm:$0x7f] %vm15914, %v15848
  // Predicated region
  $region50: #{tpu_custom_call.1} parent=0 // pred_check
    _
  $region51: #{tpu_custom_call.1} parent=0 // pred_check_branch
    %15917 = sbr.rel (0) target = $region53
  $region52: #{tpu_custom_call.1} parent=0 // pred_region
    _
  $region53: #{tpu_custom_call.1} parent=0 // pred_fallthru
    _
  // Predicated region
  $region54: #{tpu_custom_call.1} parent=0 // pred_check
    _
  $region55: #{tpu_custom_call.1} parent=0 // pred_check_branch
    %15919 = sbr.rel (0) target = $region57
  $region56: #{tpu_custom_call.1} parent=0 // pred_region
    _
  $region57: #{tpu_custom_call.1} parent=0 // pred_fallthru
    _

</llo_original>
